<compile_context>
chip_gen: v7x
topology: tpu7x:2x2x1
jax: 0.10.0
libtpu: 0.0.40
codegen_flags: <defaults>
</compile_context>

<pallas_src>
import functools

import jax
import jax.numpy as jnp
from jax.experimental import pallas as pl
from jax.experimental.pallas import tpu as pltpu

# efficient-kan defaults
GRID_SIZE = 5
SPLINE_ORDER = 3
N_BASIS = GRID_SIZE + SPLINE_ORDER          # 8 spline basis functions per feature
GRID_MIN, GRID_MAX = -1.0, 1.0

LANE = 128                                  # TPU lane width
NODE_TILE_PREF = 512                        # adj row/col tile for large graphs
SUPPORT_ROW_TILE_PREF = 256                 # row tile for the support kernel
IN_TILE_PREF = 256                          # feature (reduction) tile for support
VMEM_LIMIT_BYTES = 32 * 1024 * 1024         # fits v7x (32 MiB scoped)


def _round_up(a, b):
    return (a + b - 1) // b * b


def _tiles_for(n):
    """Pick (node_tile, support_row_tile, padded_node_count)."""
    if n >= NODE_TILE_PREF:
        return NODE_TILE_PREF, SUPPORT_ROW_TILE_PREF, _round_up(n, NODE_TILE_PREF)
    t = _round_up(n, LANE)                  # small graph: one lane-aligned block
    return t, t, t


def _in_tiling(width):
    """Return (padded_feature_width, feature_tile) for a KAN-input dim."""
    if width <= 2 * IN_TILE_PREF:
        eff = _round_up(width, 8)           # single full-width block
        return eff, eff
    eff = _round_up(width, IN_TILE_PREF)
    return eff, IN_TILE_PREF


# --------------------------------------------------------------------------
# In-kernel B-spline basis (Cox-de Boor on a uniform grid)
# --------------------------------------------------------------------------
def _bspline_bases(x):
    """x: (tile, in) f32 -> list of N_BASIS arrays, each (tile, in) f32.

    Knot positions and reciprocal knot spacings are Python constants, so this
    is pure VPU elementwise work that co-issues under the MXU matmuls.
    """
    h = (GRID_MAX - GRID_MIN) / GRID_SIZE
    knots = [GRID_MIN + (j - SPLINE_ORDER) * h
             for j in range(GRID_SIZE + 2 * SPLINE_ORDER + 1)]
    bases = [((x >= knots[j]) & (x < knots[j + 1])).astype(x.dtype)
             for j in range(len(knots) - 1)]
    for k in range(1, SPLINE_ORDER + 1):
        inv = 1.0 / (k * h)                 # uniform grid -> constant denominator
        bases = [((x - knots[j]) * inv) * bases[j]
                 + ((knots[j + k + 1] - x) * inv) * bases[j + 1]
                 for j in range(len(bases) - 1)]
    return bases                            # N_BASIS arrays of shape x.shape


# --------------------------------------------------------------------------
# Kernel 1: KAN feature transform (support), tiled over (rows, in-features)
# --------------------------------------------------------------------------
def _kan_support_kernel(x_ref, wb_ref, ws_ref, sup_ref, acc_ref):
    kin = pl.program_id(1)

    @pl.when(kin == 0)
    def _():
        acc_ref[...] = jnp.zeros_like(acc_ref)

    x = x_ref[...]                                            # (TM, TIN) f32
    # SiLU: exp + approx reciprocal both land in the EUP slot (free under MXU).
    silu_x = x * pl.reciprocal(1.0 + jnp.exp(-x), approx=True)
    part = jnp.dot(silu_x.astype(jnp.bfloat16), wb_ref[...],
                   preferred_element_type=jnp.float32)        # (TM, OUT_PAD)
    for k, basis_k in enumerate(_bspline_bases(x)):
        part = part + jnp.dot(basis_k.astype(jnp.bfloat16), ws_ref[k],
                              preferred_element_type=jnp.float32)
    acc_ref[...] += part

    @pl.when(kin == pl.num_programs(1) - 1)
    def _():
        sup_ref[...] = acc_ref[...].astype(sup_ref.dtype)


def kan_support(x, wb, ws, *, row_tile, in_tile):
    """support = silu(x) @ wb + sum_k B_k(x) @ ws[k].

    x: (Np, IN_EFF) f32   wb: (IN_EFF, OUT_PAD) bf16
    ws: (N_BASIS, IN_EFF, OUT_PAD) bf16   -> (Np, OUT_PAD) bf16
    """
    n_rows, in_eff = x.shape
    out_pad = wb.shape[1]
    return pl.pallas_call(
        _kan_support_kernel,
        grid=(n_rows // row_tile, in_eff // in_tile),
        in_specs=[
            pl.BlockSpec((row_tile, in_tile), lambda i, k: (i, k)),
            pl.BlockSpec((in_tile, out_pad), lambda i, k: (k, 0)),
            pl.BlockSpec((N_BASIS, in_tile, out_pad), lambda i, k: (0, k, 0)),
        ],
        out_specs=pl.BlockSpec((row_tile, out_pad), lambda i, k: (i, 0)),
        out_shape=jax.ShapeDtypeStruct((n_rows, out_pad), jnp.bfloat16),
        scratch_shapes=[pltpu.VMEM((row_tile, out_pad), jnp.float32)],
        compiler_params=pltpu.CompilerParams(
            dimension_semantics=("parallel", "arbitrary"),
            vmem_limit_bytes=VMEM_LIMIT_BYTES),
    )(x, wb, ws)


# --------------------------------------------------------------------------
# Kernel 2: graph aggregation adj @ support (+ fused ReLU / log_softmax)
# --------------------------------------------------------------------------
def _aggregate_kernel(adj_ref, sup_ref, out_ref, acc_ref, *,
                      apply_relu, apply_log_softmax, valid_cols):
    k = pl.program_id(1)

    @pl.when(k == 0)
    def _():
        acc_ref[...] = jnp.zeros_like(acc_ref)

    acc_ref[...] += jnp.dot(adj_ref[...], sup_ref[...],
                            preferred_element_type=jnp.float32)

    @pl.when(k == pl.num_programs(1) - 1)
    def _():
        out = acc_ref[...]
        if apply_relu:
            out = jnp.maximum(out, 0.0)
        if apply_log_softmax:
            # exclude the lane-padding columns from the softmax reduction
            cols = jax.lax.broadcasted_iota(jnp.int32, out.shape, 1)
            out = jnp.where(cols < valid_cols, out, -1e30)
            m = jnp.max(out, axis=1, keepdims=True)
            z = out - m
            lse = jnp.log(jnp.sum(jnp.exp(z), axis=1, keepdims=True))
            out = z - lse
        out_ref[...] = out.astype(out_ref.dtype)


def aggregate(adj, sup, *, node_tile, apply_relu, apply_log_softmax,
              valid_cols, out_dtype):
    n = adj.shape[0]
    out_pad = sup.shape[1]
    kernel = functools.partial(_aggregate_kernel,
                               apply_relu=apply_relu,
                               apply_log_softmax=apply_log_softmax,
                               valid_cols=valid_cols)
    return pl.pallas_call(
        kernel,
        grid=(n // node_tile, n // node_tile),     # (row tiles, reduction tiles)
        in_specs=[
            pl.BlockSpec((node_tile, node_tile), lambda i, k: (i, k)),
            pl.BlockSpec((node_tile, out_pad), lambda i, k: (k, 0)),
        ],
        out_specs=pl.BlockSpec((node_tile, out_pad), lambda i, k: (i, 0)),
        out_shape=jax.ShapeDtypeStruct((n, out_pad), out_dtype),
        scratch_shapes=[pltpu.VMEM((node_tile, out_pad), jnp.float32)],
        compiler_params=pltpu.CompilerParams(
            dimension_semantics=("parallel", "arbitrary"),
            vmem_limit_bytes=VMEM_LIMIT_BYTES),
    )(adj, sup)


# --------------------------------------------------------------------------
# Parameters (PyTorch layout) + kernel-layout prep
# --------------------------------------------------------------------------
def init_kan_layer_params(key, in_features, out_features):
    """KANLinear params, PyTorch layout: base_w (out, in), spline_w (out, in, K)."""
    k1, k2 = jax.random.split(key)
    bound = (1.0 / in_features) ** 0.5
    base_w = jax.random.uniform(k1, (out_features, in_features),
                                jnp.float32, -bound, bound)
    spline_w = 0.1 * jax.random.normal(
        k2, (out_features, in_features, N_BASIS), jnp.float32) / in_features
    return base_w, spline_w


def _prep_layer(base_w, spline_w, in_eff, out_pad):
    """Transpose to (in, out), zero-pad to (in_eff, out_pad), cast to bf16."""
    out_f, in_f = base_w.shape
    wb = jnp.zeros((in_eff, out_pad), jnp.float32).at[:in_f, :out_f].set(base_w.T)
    ws = jnp.zeros((N_BASIS, in_eff, out_pad), jnp.float32)
    ws = ws.at[:, :in_f, :out_f].set(jnp.transpose(spline_w, (2, 1, 0)))
    return wb.astype(jnp.bfloat16), ws.astype(jnp.bfloat16)


# --------------------------------------------------------------------------
# GCNWithKAN forward
# --------------------------------------------------------------------------
def gcn_with_kan_forward(x, adj, raw_params):
    (bw1, sw1), (bw2, sw2) = raw_params
    n, nfeat = x.shape
    nhid, nclass = bw1.shape[0], bw2.shape[0]

    node_tile, sup_tile, n_pad = _tiles_for(n)
    in_eff1, in_tile1 = _in_tiling(nfeat)
    hid_pad, in_tile2 = _in_tiling(_round_up(nhid, LANE))   # layer-2 input width
    cls_pad = _round_up(nclass, LANE)

    x_p = jnp.zeros((n_pad, in_eff1), jnp.float32).at[:n, :nfeat].set(x)
    adj_p = (jnp.zeros((n_pad, n_pad), jnp.float32).at[:n, :n].set(adj)
             .astype(jnp.bfloat16))                 # bf16 adj: half the HBM traffic

    # Padded node rows / feature columns are exactly zero and the matching
    # weight rows are zero-padded, so they contribute nothing.
    wb1, ws1 = _prep_layer(bw1, sw1, in_eff1, hid_pad)
    wb2, ws2 = _prep_layer(bw2, sw2, hid_pad, cls_pad)

    # layer 1: h = relu(adj @ KAN1(x))
    sup1 = kan_support(x_p, wb1, ws1, row_tile=sup_tile, in_tile=in_tile1)
    h = aggregate(adj_p, sup1, node_tile=node_tile, apply_relu=True,
                  apply_log_softmax=False, valid_cols=hid_pad,
                  out_dtype=jnp.float32)

    # TODO(synk): F.dropout is only active in training mode; eval-mode
    # (identity) forward is implemented here.

    # layer 2: log_softmax(adj @ KAN2(h), dim=1)
    sup2 = kan_support(h, wb2, ws2, row_tile=sup_tile, in_tile=in_tile2)
    logits = aggregate(adj_p, sup2, node_tile=node_tile, apply_relu=False,
                       apply_log_softmax=True, valid_cols=nclass,
                       out_dtype=jnp.float32)
    return logits[:n, :nclass]


# --------------------------------------------------------------------------
# Pure-JAX f32 reference (for correctness cross-check)
# --------------------------------------------------------------------------
def _b_spline_basis_ref(x):
    h = (GRID_MAX - GRID_MIN) / GRID_SIZE
    g = (jnp.arange(-SPLINE_ORDER, GRID_SIZE + SPLINE_ORDER + 1,
                    dtype=jnp.float32) * h + GRID_MIN)[None, None, :]
    xg = x[:, :, None]
    bases = ((xg >= g[..., :-1]) & (xg < g[..., 1:])).astype(x.dtype)
    for k in range(1, SPLINE_ORDER + 1):
        left = (xg - g[..., :-(k + 1)]) / (g[..., k:-1] - g[..., :-(k + 1)])
        right = (g[..., k + 1:] - xg) / (g[..., k + 1:] - g[..., 1:-k])
        bases = left * bases[..., :-1] + right * bases[..., 1:]
    return bases                                              # (N, in, K)


def gcn_with_kan_forward_ref(x, adj, raw_params):
    def kan(v, bw, sw):
        base = jax.nn.silu(v) @ bw.T
        b = _b_spline_basis_ref(v).reshape(v.shape[0], -1)
        return base + b @ sw.reshape(sw.shape[0], -1).T
    (bw1, sw1), (bw2, sw2) = raw_params
    h = jax.nn.relu(adj @ kan(x, bw1, sw1))
    return jax.nn.log_softmax(adj @ kan(h, bw2, sw2), axis=1)


def make_normalized_adj(key, n):
    a = (jax.random.uniform(key, (n, n)) < 0.2).astype(jnp.float32)
    a = jnp.maximum(a, a.T) + jnp.eye(n, dtype=jnp.float32)   # symmetric + self loops
    d_inv_sqrt = 1.0 / jnp.sqrt(jnp.sum(a, axis=1))
    return a * d_inv_sqrt[:, None] * d_inv_sqrt[None, :]      # D^-1/2 A D^-1/2


if __name__ == "__main__":
    key = jax.random.PRNGKey(0)
    k_x, k_adj, k_p1, k_p2 = jax.random.split(key, 4)

    n_nodes, nfeat, nhid, nclass = 16, 32, 16, 8

    x = jax.random.uniform(k_x, (n_nodes, nfeat), jnp.float32, -1.0, 1.0)
    adj = make_normalized_adj(k_adj, n_nodes)
    raw_params = (init_kan_layer_params(k_p1, nfeat, nhid),
                  init_kan_layer_params(k_p2, nhid, nclass))

    out = jax.jit(gcn_with_kan_forward)(x, adj, raw_params)
    out = jax.block_until_ready(out)

    assert out.shape == (n_nodes, nclass)
    # log_softmax rows must sum (in prob space) to ~1
    assert bool(jnp.allclose(jnp.sum(jnp.exp(out), axis=1), 1.0, atol=1e-4))
    # cross-check vs pure-JAX f32 reference (bf16 MXU operands -> loose tolerance)
    ref = gcn_with_kan_forward_ref(x, adj, raw_params)
    assert bool(jnp.allclose(out, ref, atol=3e-2, rtol=3e-2)), \
        float(jnp.max(jnp.abs(out - ref)))
    print("KERNEL_OK")
</pallas_src>

<mosaic_0001>
module attributes {stable_mosaic.version = 11 : i64} {
  func.func @_aggregate_kernel(%arg0: i32, %arg1: i32, %arg2: memref<128x128xbf16, #tpu.memory_space<vmem>>, %arg3: memref<128x128xbf16, #tpu.memory_space<vmem>>, %arg4: memref<128x128xf32, #tpu.memory_space<vmem>>, %arg5: memref<128x128xf32, #tpu.memory_space<vmem>>) attributes {dimension_semantics = [#tpu.dimension_semantics<parallel>, #tpu.dimension_semantics<arbitrary>], iteration_bounds = array<i64: 1, 1>, scalar_prefetch = 0 : i64, scratch_operands = 1 : i64, tpu.core_type = #tpu.core_type<tc>, window_params = [{transform_indices = @transform_0, window_bounds = array<i64: 128, 128>}, {transform_indices = @transform_1, window_bounds = array<i64: 128, 128>}, {transform_indices = @transform_2, window_bounds = array<i64: 128, 128>}]} {
    %c0_i32 = arith.constant 0 : i32
    %0 = arith.cmpi eq, %arg1, %c0_i32 : i32
    %1 = arith.extui %0 : i1 to i32
    %c0_i32_0 = arith.constant 0 : i32
    %2 = arith.cmpi ne, %1, %c0_i32_0 : i32
    scf.if %2 {
      %cst_10 = arith.constant 0.000000e+00 : f32
      %12 = vector.broadcast %cst_10 : f32 to vector<128x128xf32>
      %c0_11 = arith.constant 0 : index
      %c0_12 = arith.constant 0 : index
      %13 = vector.load %arg5[%c0_11, %c0_12] : memref<128x128xf32, #tpu.memory_space<vmem>>, vector<128x128xf32>
      tpu.vector_store %arg5[%c0_11, %c0_12], %12 {strides = array<i32>} : memref<128x128xf32, #tpu.memory_space<vmem>>, vector<128x128xf32>,
    } else {
    }
    %c0 = arith.constant 0 : index
    %c0_1 = arith.constant 0 : index
    %3 = vector.load %arg5[%c0, %c0_1] : memref<128x128xf32, #tpu.memory_space<vmem>>, vector<128x128xf32>
    %c0_2 = arith.constant 0 : index
    %c0_3 = arith.constant 0 : index
    %4 = vector.load %arg2[%c0_2, %c0_3] : memref<128x128xbf16, #tpu.memory_space<vmem>>, vector<128x128xbf16>
    %c0_4 = arith.constant 0 : index
    %c0_5 = arith.constant 0 : index
    %5 = vector.load %arg3[%c0_4, %c0_5] : memref<128x128xbf16, #tpu.memory_space<vmem>>, vector<128x128xbf16>
    %cst = arith.constant dense<0.000000e+00> : vector<128x128xf32>
    %6 = tpu.matmul %4, %5, %cst {dimension_numbers = #tpu.dot_dimension_numbers<[1], [0], [0], [1], [0, 0, 1, 1], [], []>} : vector<128x128xbf16>, vector<128x128xbf16>, vector<128x128xf32> -> vector<128x128xf32>
    %7 = arith.addf %3, %6 : vector<128x128xf32>
    %c0_6 = arith.constant 0 : index
    %c0_7 = arith.constant 0 : index
    %8 = vector.load %arg5[%c0_6, %c0_7] : memref<128x128xf32, #tpu.memory_space<vmem>>, vector<128x128xf32>
    tpu.vector_store %arg5[%c0_6, %c0_7], %7 {strides = array<i32>} : memref<128x128xf32, #tpu.memory_space<vmem>>, vector<128x128xf32>,
    %c0_i32_8 = arith.constant 0 : i32
    %9 = arith.cmpi eq, %arg1, %c0_i32_8 : i32
    %10 = arith.extui %9 : i1 to i32
    %c0_i32_9 = arith.constant 0 : i32
    %11 = arith.cmpi ne, %10, %c0_i32_9 : i32
    scf.if %11 {
      %c0_10 = arith.constant 0 : index
      %c0_11 = arith.constant 0 : index
      %12 = vector.load %arg5[%c0_10, %c0_11] : memref<128x128xf32, #tpu.memory_space<vmem>>, vector<128x128xf32>
      %cst_12 = arith.constant 0.000000e+00 : f32
      %13 = vector.broadcast %cst_12 : f32 to vector<128x128xf32>
      %14 = arith.maximumf %12, %13 : vector<128x128xf32>
      %c0_13 = arith.constant 0 : index
      %c0_14 = arith.constant 0 : index
      %15 = vector.load %arg4[%c0_13, %c0_14] : memref<128x128xf32, #tpu.memory_space<vmem>>, vector<128x128xf32>
      tpu.vector_store %arg4[%c0_13, %c0_14], %14 {strides = array<i32>} : memref<128x128xf32, #tpu.memory_space<vmem>>, vector<128x128xf32>,
    } else {
    }
    return
  }
  func.func @transform_0(%arg0: i32, %arg1: i32) -> (i32, i32) {
    %c0_i32 = arith.constant 0 : i32
    return %arg0, %arg1 : i32, i32
  }
  func.func @transform_1(%arg0: i32, %arg1: i32) -> (i32, i32) {
    %c0_i32 = arith.constant 0 : i32
    %c0_i32_0 = arith.constant 0 : i32
    return %arg1, %c0_i32 : i32, i32
  }
  func.func @transform_2(%arg0: i32, %arg1: i32) -> (i32, i32) {
    %c0_i32 = arith.constant 0 : i32
    %c0_i32_0 = arith.constant 0 : i32
    return %arg0, %c0_i32 : i32, i32
  }
}

module attributes {stable_mosaic.version = 11 : i64} {
  func.func @_kan_support_kernel(%arg0: i32, %arg1: i32, %arg2: memref<128x32xf32, #tpu.memory_space<vmem>>, %arg3: memref<32x128xbf16, #tpu.memory_space<vmem>>, %arg4: memref<8x32x128xbf16, #tpu.memory_space<vmem>>, %arg5: memref<128x128xbf16, #tpu.memory_space<vmem>>, %arg6: memref<128x128xf32, #tpu.memory_space<vmem>>) attributes {dimension_semantics = [#tpu.dimension_semantics<parallel>, #tpu.dimension_semantics<arbitrary>], iteration_bounds = array<i64: 1, 1>, scalar_prefetch = 0 : i64, scratch_operands = 1 : i64, tpu.core_type = #tpu.core_type<tc>, window_params = [{transform_indices = @transform_0, window_bounds = array<i64: 128, 32>}, {transform_indices = @transform_1, window_bounds = array<i64: 32, 128>}, {transform_indices = @transform_2, window_bounds = array<i64: 8, 32, 128>}, {transform_indices = @transform_3, window_bounds = array<i64: 128, 128>}]} {
    %c0_i32 = arith.constant 0 : i32
    %0 = arith.cmpi eq, %arg1, %c0_i32 : i32
    %1 = arith.extui %0 : i1 to i32
    %c0_i32_0 = arith.constant 0 : i32
    %2 = arith.cmpi ne, %1, %c0_i32_0 : i32
    scf.if %2 {
      %cst_167 = arith.constant 0.000000e+00 : f32
      %434 = vector.broadcast %cst_167 : f32 to vector<128x128xf32>
      %c0_168 = arith.constant 0 : index
      %c0_169 = arith.constant 0 : index
      %435 = vector.load %arg6[%c0_168, %c0_169] : memref<128x128xf32, #tpu.memory_space<vmem>>, vector<128x128xf32>
      tpu.vector_store %arg6[%c0_168, %c0_169], %434 {strides = array<i32>} : memref<128x128xf32, #tpu.memory_space<vmem>>, vector<128x128xf32>,
    } else {
    }
    %c0 = arith.constant 0 : index
    %c0_1 = arith.constant 0 : index
    %3 = vector.load %arg2[%c0, %c0_1] : memref<128x32xf32, #tpu.memory_space<vmem>>, vector<128x32xf32>
    %cst = arith.constant 0.000000e+00 : f32
    %4 = vector.broadcast %cst : f32 to vector<128x32xf32>
    %5 = arith.subf %4, %3 : vector<128x32xf32>
    %6 = math.exp %5 : vector<128x32xf32>
    %cst_2 = arith.constant 1.000000e+00 : f32
    %7 = vector.broadcast %cst_2 : f32 to vector<128x32xf32>
    %8 = arith.addf %7, %6 : vector<128x32xf32>
    %9 = tpu.reciprocal %8 {approx = true} : vector<128x32xf32> -> vector<128x32xf32>
    %10 = arith.mulf %3, %9 : vector<128x32xf32>
    %11 = arith.truncf %10 : vector<128x32xf32> to vector<128x32xbf16>
    %c0_3 = arith.constant 0 : index
    %c0_4 = arith.constant 0 : index
    %12 = vector.load %arg3[%c0_3, %c0_4] : memref<32x128xbf16, #tpu.memory_space<vmem>>, vector<32x128xbf16>
    %cst_5 = arith.constant dense<0.000000e+00> : vector<128x128xf32>
    %13 = tpu.matmul %11, %12, %cst_5 {dimension_numbers = #tpu.dot_dimension_numbers<[1], [0], [0], [1], [0, 0, 1, 1], [], []>} : vector<128x32xbf16>, vector<32x128xbf16>, vector<128x128xf32> -> vector<128x128xf32>
    %cst_6 = arith.constant -2.200000e+00 : f32
    %14 = vector.broadcast %cst_6 : f32 to vector<128x32xf32>
    %15 = arith.cmpf oge, %3, %14 : vector<128x32xf32>
    %cst_7 = arith.constant -1.800000e+00 : f32
    %16 = vector.broadcast %cst_7 : f32 to vector<128x32xf32>
    %17 = arith.cmpf olt, %3, %16 : vector<128x32xf32>
    %18 = arith.andi %15, %17 : vector<128x32xi1>
    %19 = arith.extui %18 : vector<128x32xi1> to vector<128x32xi32>
    %20 = arith.sitofp %19 : vector<128x32xi32> to vector<128x32xf32>
    %cst_8 = arith.constant -1.800000e+00 : f32
    %21 = vector.broadcast %cst_8 : f32 to vector<128x32xf32>
    %22 = arith.cmpf oge, %3, %21 : vector<128x32xf32>
    %cst_9 = arith.constant -1.400000e+00 : f32
    %23 = vector.broadcast %cst_9 : f32 to vector<128x32xf32>
    %24 = arith.cmpf olt, %3, %23 : vector<128x32xf32>
    %25 = arith.andi %22, %24 : vector<128x32xi1>
    %26 = arith.extui %25 : vector<128x32xi1> to vector<128x32xi32>
    %27 = arith.sitofp %26 : vector<128x32xi32> to vector<128x32xf32>
    %cst_10 = arith.constant -1.400000e+00 : f32
    %28 = vector.broadcast %cst_10 : f32 to vector<128x32xf32>
    %29 = arith.cmpf oge, %3, %28 : vector<128x32xf32>
    %cst_11 = arith.constant -1.000000e+00 : f32
    %30 = vector.broadcast %cst_11 : f32 to vector<128x32xf32>
    %31 = arith.cmpf olt, %3, %30 : vector<128x32xf32>
    %32 = arith.andi %29, %31 : vector<128x32xi1>
    %33 = arith.extui %32 : vector<128x32xi1> to vector<128x32xi32>
    %34 = arith.sitofp %33 : vector<128x32xi32> to vector<128x32xf32>
    %cst_12 = arith.constant -1.000000e+00 : f32
    %35 = vector.broadcast %cst_12 : f32 to vector<128x32xf32>
    %36 = arith.cmpf oge, %3, %35 : vector<128x32xf32>
    %cst_13 = arith.constant -6.000000e-01 : f32
    %37 = vector.broadcast %cst_13 : f32 to vector<128x32xf32>
    %38 = arith.cmpf olt, %3, %37 : vector<128x32xf32>
    %39 = arith.andi %36, %38 : vector<128x32xi1>
    %40 = arith.extui %39 : vector<128x32xi1> to vector<128x32xi32>
    %41 = arith.sitofp %40 : vector<128x32xi32> to vector<128x32xf32>
    %cst_14 = arith.constant -6.000000e-01 : f32
    %42 = vector.broadcast %cst_14 : f32 to vector<128x32xf32>
    %43 = arith.cmpf oge, %3, %42 : vector<128x32xf32>
    %cst_15 = arith.constant -2.000000e-01 : f32
    %44 = vector.broadcast %cst_15 : f32 to vector<128x32xf32>
    %45 = arith.cmpf olt, %3, %44 : vector<128x32xf32>
    %46 = arith.andi %43, %45 : vector<128x32xi1>
    %47 = arith.extui %46 : vector<128x32xi1> to vector<128x32xi32>
    %48 = arith.sitofp %47 : vector<128x32xi32> to vector<128x32xf32>
    %cst_16 = arith.constant -2.000000e-01 : f32
    %49 = vector.broadcast %cst_16 : f32 to vector<128x32xf32>
    %50 = arith.cmpf oge, %3, %49 : vector<128x32xf32>
    %cst_17 = arith.constant 2.000000e-01 : f32
    %51 = vector.broadcast %cst_17 : f32 to vector<128x32xf32>
    %52 = arith.cmpf olt, %3, %51 : vector<128x32xf32>
    %53 = arith.andi %50, %52 : vector<128x32xi1>
    %54 = arith.extui %53 : vector<128x32xi1> to vector<128x32xi32>
    %55 = arith.sitofp %54 : vector<128x32xi32> to vector<128x32xf32>
    %cst_18 = arith.constant 2.000000e-01 : f32
    %56 = vector.broadcast %cst_18 : f32 to vector<128x32xf32>
    %57 = arith.cmpf oge, %3, %56 : vector<128x32xf32>
    %cst_19 = arith.constant 6.000000e-01 : f32
    %58 = vector.broadcast %cst_19 : f32 to vector<128x32xf32>
    %59 = arith.cmpf olt, %3, %58 : vector<128x32xf32>
    %60 = arith.andi %57, %59 : vector<128x32xi1>
    %61 = arith.extui %60 : vector<128x32xi1> to vector<128x32xi32>
    %62 = arith.sitofp %61 : vector<128x32xi32> to vector<128x32xf32>
    %cst_20 = arith.constant 6.000000e-01 : f32
    %63 = vector.broadcast %cst_20 : f32 to vector<128x32xf32>
    %64 = arith.cmpf oge, %3, %63 : vector<128x32xf32>
    %cst_21 = arith.constant 1.000000e+00 : f32
    %65 = vector.broadcast %cst_21 : f32 to vector<128x32xf32>
    %66 = arith.cmpf olt, %3, %65 : vector<128x32xf32>
    %67 = arith.andi %64, %66 : vector<128x32xi1>
    %68 = arith.extui %67 : vector<128x32xi1> to vector<128x32xi32>
    %69 = arith.sitofp %68 : vector<128x32xi32> to vector<128x32xf32>
    %cst_22 = arith.constant 1.000000e+00 : f32
    %70 = vector.broadcast %cst_22 : f32 to vector<128x32xf32>
    %71 = arith.cmpf oge, %3, %70 : vector<128x32xf32>
    %cst_23 = arith.constant 1.400000e+00 : f32
    %72 = vector.broadcast %cst_23 : f32 to vector<128x32xf32>
    %73 = arith.cmpf olt, %3, %72 : vector<128x32xf32>
    %74 = arith.andi %71, %73 : vector<128x32xi1>
    %75 = arith.extui %74 : vector<128x32xi1> to vector<128x32xi32>
    %76 = arith.sitofp %75 : vector<128x32xi32> to vector<128x32xf32>
    %cst_24 = arith.constant 1.400000e+00 : f32
    %77 = vector.broadcast %cst_24 : f32 to vector<128x32xf32>
    %78 = arith.cmpf oge, %3, %77 : vector<128x32xf32>
    %cst_25 = arith.constant 1.800000e+00 : f32
    %79 = vector.broadcast %cst_25 : f32 to vector<128x32xf32>
    %80 = arith.cmpf olt, %3, %79 : vector<128x32xf32>
    %81 = arith.andi %78, %80 : vector<128x32xi1>
    %82 = arith.extui %81 : vector<128x32xi1> to vector<128x32xi32>
    %83 = arith.sitofp %82 : vector<128x32xi32> to vector<128x32xf32>
    %cst_26 = arith.constant 1.800000e+00 : f32
    %84 = vector.broadcast %cst_26 : f32 to vector<128x32xf32>
    %85 = arith.cmpf oge, %3, %84 : vector<128x32xf32>
    %cst_27 = arith.constant 2.200000e+00 : f32
    %86 = vector.broadcast %cst_27 : f32 to vector<128x32xf32>
    %87 = arith.cmpf olt, %3, %86 : vector<128x32xf32>
    %88 = arith.andi %85, %87 : vector<128x32xi1>
    %89 = arith.extui %88 : vector<128x32xi1> to vector<128x32xi32>
    %90 = arith.sitofp %89 : vector<128x32xi32> to vector<128x32xf32>
    %cst_28 = arith.constant -2.200000e+00 : f32
    %91 = vector.broadcast %cst_28 : f32 to vector<128x32xf32>
    %92 = arith.subf %3, %91 : vector<128x32xf32>
    %cst_29 = arith.constant 2.500000e+00 : f32
    %93 = vector.broadcast %cst_29 : f32 to vector<128x32xf32>
    %94 = arith.mulf %92, %93 : vector<128x32xf32>
    %95 = arith.mulf %94, %20 : vector<128x32xf32>
    %cst_30 = arith.constant -1.400000e+00 : f32
    %96 = vector.broadcast %cst_30 : f32 to vector<128x32xf32>
    %97 = arith.subf %96, %3 : vector<128x32xf32>
    %cst_31 = arith.constant 2.500000e+00 : f32
    %98 = vector.broadcast %cst_31 : f32 to vector<128x32xf32>
    %99 = arith.mulf %97, %98 : vector<128x32xf32>
    %100 = arith.mulf %99, %27 : vector<128x32xf32>
    %101 = arith.addf %95, %100 : vector<128x32xf32>
    %cst_32 = arith.constant -1.800000e+00 : f32
    %102 = vector.broadcast %cst_32 : f32 to vector<128x32xf32>
    %103 = arith.subf %3, %102 : vector<128x32xf32>
    %cst_33 = arith.constant 2.500000e+00 : f32
    %104 = vector.broadcast %cst_33 : f32 to vector<128x32xf32>
    %105 = arith.mulf %103, %104 : vector<128x32xf32>
    %106 = arith.mulf %105, %27 : vector<128x32xf32>
    %cst_34 = arith.constant -1.000000e+00 : f32
    %107 = vector.broadcast %cst_34 : f32 to vector<128x32xf32>
    %108 = arith.subf %107, %3 : vector<128x32xf32>
    %cst_35 = arith.constant 2.500000e+00 : f32
    %109 = vector.broadcast %cst_35 : f32 to vector<128x32xf32>
    %110 = arith.mulf %108, %109 : vector<128x32xf32>
    %111 = arith.mulf %110, %34 : vector<128x32xf32>
    %112 = arith.addf %106, %111 : vector<128x32xf32>
    %cst_36 = arith.constant -1.400000e+00 : f32
    %113 = vector.broadcast %cst_36 : f32 to vector<128x32xf32>
    %114 = arith.subf %3, %113 : vector<128x32xf32>
    %cst_37 = arith.constant 2.500000e+00 : f32
    %115 = vector.broadcast %cst_37 : f32 to vector<128x32xf32>
    %116 = arith.mulf %114, %115 : vector<128x32xf32>
    %117 = arith.mulf %116, %34 : vector<128x32xf32>
    %cst_38 = arith.constant -6.000000e-01 : f32
    %118 = vector.broadcast %cst_38 : f32 to vector<128x32xf32>
    %119 = arith.subf %118, %3 : vector<128x32xf32>
    %cst_39 = arith.constant 2.500000e+00 : f32
    %120 = vector.broadcast %cst_39 : f32 to vector<128x32xf32>
    %121 = arith.mulf %119, %120 : vector<128x32xf32>
    %122 = arith.mulf %121, %41 : vector<128x32xf32>
    %123 = arith.addf %117, %122 : vector<128x32xf32>
    %cst_40 = arith.constant -1.000000e+00 : f32
    %124 = vector.broadcast %cst_40 : f32 to vector<128x32xf32>
    %125 = arith.subf %3, %124 : vector<128x32xf32>
    %cst_41 = arith.constant 2.500000e+00 : f32
    %126 = vector.broadcast %cst_41 : f32 to vector<128x32xf32>
    %127 = arith.mulf %125, %126 : vector<128x32xf32>
    %128 = arith.mulf %127, %41 : vector<128x32xf32>
    %cst_42 = arith.constant -2.000000e-01 : f32
    %129 = vector.broadcast %cst_42 : f32 to vector<128x32xf32>
    %130 = arith.subf %129, %3 : vector<128x32xf32>
    %cst_43 = arith.constant 2.500000e+00 : f32
    %131 = vector.broadcast %cst_43 : f32 to vector<128x32xf32>
    %132 = arith.mulf %130, %131 : vector<128x32xf32>
    %133 = arith.mulf %132, %48 : vector<128x32xf32>
    %134 = arith.addf %128, %133 : vector<128x32xf32>
    %cst_44 = arith.constant -6.000000e-01 : f32
    %135 = vector.broadcast %cst_44 : f32 to vector<128x32xf32>
    %136 = arith.subf %3, %135 : vector<128x32xf32>
    %cst_45 = arith.constant 2.500000e+00 : f32
    %137 = vector.broadcast %cst_45 : f32 to vector<128x32xf32>
    %138 = arith.mulf %136, %137 : vector<128x32xf32>
    %139 = arith.mulf %138, %48 : vector<128x32xf32>
    %cst_46 = arith.constant 2.000000e-01 : f32
    %140 = vector.broadcast %cst_46 : f32 to vector<128x32xf32>
    %141 = arith.subf %140, %3 : vector<128x32xf32>
    %cst_47 = arith.constant 2.500000e+00 : f32
    %142 = vector.broadcast %cst_47 : f32 to vector<128x32xf32>
    %143 = arith.mulf %141, %142 : vector<128x32xf32>
    %144 = arith.mulf %143, %55 : vector<128x32xf32>
    %145 = arith.addf %139, %144 : vector<128x32xf32>
    %cst_48 = arith.constant -2.000000e-01 : f32
    %146 = vector.broadcast %cst_48 : f32 to vector<128x32xf32>
    %147 = arith.subf %3, %146 : vector<128x32xf32>
    %cst_49 = arith.constant 2.500000e+00 : f32
    %148 = vector.broadcast %cst_49 : f32 to vector<128x32xf32>
    %149 = arith.mulf %147, %148 : vector<128x32xf32>
    %150 = arith.mulf %149, %55 : vector<128x32xf32>
    %cst_50 = arith.constant 6.000000e-01 : f32
    %151 = vector.broadcast %cst_50 : f32 to vector<128x32xf32>
    %152 = arith.subf %151, %3 : vector<128x32xf32>
    %cst_51 = arith.constant 2.500000e+00 : f32
    %153 = vector.broadcast %cst_51 : f32 to vector<128x32xf32>
    %154 = arith.mulf %152, %153 : vector<128x32xf32>
    %155 = arith.mulf %154, %62 : vector<128x32xf32>
    %156 = arith.addf %150, %155 : vector<128x32xf32>
    %cst_52 = arith.constant 2.000000e-01 : f32
    %157 = vector.broadcast %cst_52 : f32 to vector<128x32xf32>
    %158 = arith.subf %3, %157 : vector<128x32xf32>
    %cst_53 = arith.constant 2.500000e+00 : f32
    %159 = vector.broadcast %cst_53 : f32 to vector<128x32xf32>
    %160 = arith.mulf %158, %159 : vector<128x32xf32>
    %161 = arith.mulf %160, %62 : vector<128x32xf32>
    %cst_54 = arith.constant 1.000000e+00 : f32
    %162 = vector.broadcast %cst_54 : f32 to vector<128x32xf32>
    %163 = arith.subf %162, %3 : vector<128x32xf32>
    %cst_55 = arith.constant 2.500000e+00 : f32
    %164 = vector.broadcast %cst_55 : f32 to vector<128x32xf32>
    %165 = arith.mulf %163, %164 : vector<128x32xf32>
    %166 = arith.mulf %165, %69 : vector<128x32xf32>
    %167 = arith.addf %161, %166 : vector<128x32xf32>
    %cst_56 = arith.constant 6.000000e-01 : f32
    %168 = vector.broadcast %cst_56 : f32 to vector<128x32xf32>
    %169 = arith.subf %3, %168 : vector<128x32xf32>
    %cst_57 = arith.constant 2.500000e+00 : f32
    %170 = vector.broadcast %cst_57 : f32 to vector<128x32xf32>
    %171 = arith.mulf %169, %170 : vector<128x32xf32>
    %172 = arith.mulf %171, %69 : vector<128x32xf32>
    %cst_58 = arith.constant 1.400000e+00 : f32
    %173 = vector.broadcast %cst_58 : f32 to vector<128x32xf32>
    %174 = arith.subf %173, %3 : vector<128x32xf32>
    %cst_59 = arith.constant 2.500000e+00 : f32
    %175 = vector.broadcast %cst_59 : f32 to vector<128x32xf32>
    %176 = arith.mulf %174, %175 : vector<128x32xf32>
    %177 = arith.mulf %176, %76 : vector<128x32xf32>
    %178 = arith.addf %172, %177 : vector<128x32xf32>
    %cst_60 = arith.constant 1.000000e+00 : f32
    %179 = vector.broadcast %cst_60 : f32 to vector<128x32xf32>
    %180 = arith.subf %3, %179 : vector<128x32xf32>
    %cst_61 = arith.constant 2.500000e+00 : f32
    %181 = vector.broadcast %cst_61 : f32 to vector<128x32xf32>
    %182 = arith.mulf %180, %181 : vector<128x32xf32>
    %183 = arith.mulf %182, %76 : vector<128x32xf32>
    %cst_62 = arith.constant 1.800000e+00 : f32
    %184 = vector.broadcast %cst_62 : f32 to vector<128x32xf32>
    %185 = arith.subf %184, %3 : vector<128x32xf32>
    %cst_63 = arith.constant 2.500000e+00 : f32
    %186 = vector.broadcast %cst_63 : f32 to vector<128x32xf32>
    %187 = arith.mulf %185, %186 : vector<128x32xf32>
    %188 = arith.mulf %187, %83 : vector<128x32xf32>
    %189 = arith.addf %183, %188 : vector<128x32xf32>
    %cst_64 = arith.constant 1.400000e+00 : f32
    %190 = vector.broadcast %cst_64 : f32 to vector<128x32xf32>
    %191 = arith.subf %3, %190 : vector<128x32xf32>
    %cst_65 = arith.constant 2.500000e+00 : f32
    %192 = vector.broadcast %cst_65 : f32 to vector<128x32xf32>
    %193 = arith.mulf %191, %192 : vector<128x32xf32>
    %194 = arith.mulf %193, %83 : vector<128x32xf32>
    %cst_66 = arith.constant 2.200000e+00 : f32
    %195 = vector.broadcast %cst_66 : f32 to vector<128x32xf32>
    %196 = arith.subf %195, %3 : vector<128x32xf32>
    %cst_67 = arith.constant 2.500000e+00 : f32
    %197 = vector.broadcast %cst_67 : f32 to vector<128x32xf32>
    %198 = arith.mulf %196, %197 : vector<128x32xf32>
    %199 = arith.mulf %198, %90 : vector<128x32xf32>
    %200 = arith.addf %194, %199 : vector<128x32xf32>
    %cst_68 = arith.constant -2.200000e+00 : f32
    %201 = vector.broadcast %cst_68 : f32 to vector<128x32xf32>
    %202 = arith.subf %3, %201 : vector<128x32xf32>
    %cst_69 = arith.constant 1.250000e+00 : f32
    %203 = vector.broadcast %cst_69 : f32 to vector<128x32xf32>
    %204 = arith.mulf %202, %203 : vector<128x32xf32>
    %205 = arith.mulf %204, %101 : vector<128x32xf32>
    %cst_70 = arith.constant -1.000000e+00 : f32
    %206 = vector.broadcast %cst_70 : f32 to vector<128x32xf32>
    %207 = arith.subf %206, %3 : vector<128x32xf32>
    %cst_71 = arith.constant 1.250000e+00 : f32
    %208 = vector.broadcast %cst_71 : f32 to vector<128x32xf32>
    %209 = arith.mulf %207, %208 : vector<128x32xf32>
    %210 = arith.mulf %209, %112 : vector<128x32xf32>
    %211 = arith.addf %205, %210 : vector<128x32xf32>
    %cst_72 = arith.constant -1.800000e+00 : f32
    %212 = vector.broadcast %cst_72 : f32 to vector<128x32xf32>
    %213 = arith.subf %3, %212 : vector<128x32xf32>
    %cst_73 = arith.constant 1.250000e+00 : f32
    %214 = vector.broadcast %cst_73 : f32 to vector<128x32xf32>
    %215 = arith.mulf %213, %214 : vector<128x32xf32>
    %216 = arith.mulf %215, %112 : vector<128x32xf32>
    %cst_74 = arith.constant -6.000000e-01 : f32
    %217 = vector.broadcast %cst_74 : f32 to vector<128x32xf32>
    %218 = arith.subf %217, %3 : vector<128x32xf32>
    %cst_75 = arith.constant 1.250000e+00 : f32
    %219 = vector.broadcast %cst_75 : f32 to vector<128x32xf32>
    %220 = arith.mulf %218, %219 : vector<128x32xf32>
    %221 = arith.mulf %220, %123 : vector<128x32xf32>
    %222 = arith.addf %216, %221 : vector<128x32xf32>
    %cst_76 = arith.constant -1.400000e+00 : f32
    %223 = vector.broadcast %cst_76 : f32 to vector<128x32xf32>
    %224 = arith.subf %3, %223 : vector<128x32xf32>
    %cst_77 = arith.constant 1.250000e+00 : f32
    %225 = vector.broadcast %cst_77 : f32 to vector<128x32xf32>
    %226 = arith.mulf %224, %225 : vector<128x32xf32>
    %227 = arith.mulf %226, %123 : vector<128x32xf32>
    %cst_78 = arith.constant -2.000000e-01 : f32
    %228 = vector.broadcast %cst_78 : f32 to vector<128x32xf32>
    %229 = arith.subf %228, %3 : vector<128x32xf32>
    %cst_79 = arith.constant 1.250000e+00 : f32
    %230 = vector.broadcast %cst_79 : f32 to vector<128x32xf32>
    %231 = arith.mulf %229, %230 : vector<128x32xf32>
    %232 = arith.mulf %231, %134 : vector<128x32xf32>
    %233 = arith.addf %227, %232 : vector<128x32xf32>
    %cst_80 = arith.constant -1.000000e+00 : f32
    %234 = vector.broadcast %cst_80 : f32 to vector<128x32xf32>
    %235 = arith.subf %3, %234 : vector<128x32xf32>
    %cst_81 = arith.constant 1.250000e+00 : f32
    %236 = vector.broadcast %cst_81 : f32 to vector<128x32xf32>
    %237 = arith.mulf %235, %236 : vector<128x32xf32>
    %238 = arith.mulf %237, %134 : vector<128x32xf32>
    %cst_82 = arith.constant 2.000000e-01 : f32
    %239 = vector.broadcast %cst_82 : f32 to vector<128x32xf32>
    %240 = arith.subf %239, %3 : vector<128x32xf32>
    %cst_83 = arith.constant 1.250000e+00 : f32
    %241 = vector.broadcast %cst_83 : f32 to vector<128x32xf32>
    %242 = arith.mulf %240, %241 : vector<128x32xf32>
    %243 = arith.mulf %242, %145 : vector<128x32xf32>
    %244 = arith.addf %238, %243 : vector<128x32xf32>
    %cst_84 = arith.constant -6.000000e-01 : f32
    %245 = vector.broadcast %cst_84 : f32 to vector<128x32xf32>
    %246 = arith.subf %3, %245 : vector<128x32xf32>
    %cst_85 = arith.constant 1.250000e+00 : f32
    %247 = vector.broadcast %cst_85 : f32 to vector<128x32xf32>
    %248 = arith.mulf %246, %247 : vector<128x32xf32>
    %249 = arith.mulf %248, %145 : vector<128x32xf32>
    %cst_86 = arith.constant 6.000000e-01 : f32
    %250 = vector.broadcast %cst_86 : f32 to vector<128x32xf32>
    %251 = arith.subf %250, %3 : vector<128x32xf32>
    %cst_87 = arith.constant 1.250000e+00 : f32
    %252 = vector.broadcast %cst_87 : f32 to vector<128x32xf32>
    %253 = arith.mulf %251, %252 : vector<128x32xf32>
    %254 = arith.mulf %253, %156 : vector<128x32xf32>
    %255 = arith.addf %249, %254 : vector<128x32xf32>
    %cst_88 = arith.constant -2.000000e-01 : f32
    %256 = vector.broadcast %cst_88 : f32 to vector<128x32xf32>
    %257 = arith.subf %3, %256 : vector<128x32xf32>
    %cst_89 = arith.constant 1.250000e+00 : f32
    %258 = vector.broadcast %cst_89 : f32 to vector<128x32xf32>
    %259 = arith.mulf %257, %258 : vector<128x32xf32>
    %260 = arith.mulf %259, %156 : vector<128x32xf32>
    %cst_90 = arith.constant 1.000000e+00 : f32
    %261 = vector.broadcast %cst_90 : f32 to vector<128x32xf32>
    %262 = arith.subf %261, %3 : vector<128x32xf32>
    %cst_91 = arith.constant 1.250000e+00 : f32
    %263 = vector.broadcast %cst_91 : f32 to vector<128x32xf32>
    %264 = arith.mulf %262, %263 : vector<128x32xf32>
    %265 = arith.mulf %264, %167 : vector<128x32xf32>
    %266 = arith.addf %260, %265 : vector<128x32xf32>
    %cst_92 = arith.constant 2.000000e-01 : f32
    %267 = vector.broadcast %cst_92 : f32 to vector<128x32xf32>
    %268 = arith.subf %3, %267 : vector<128x32xf32>
    %cst_93 = arith.constant 1.250000e+00 : f32
    %269 = vector.broadcast %cst_93 : f32 to vector<128x32xf32>
    %270 = arith.mulf %268, %269 : vector<128x32xf32>
    %271 = arith.mulf %270, %167 : vector<128x32xf32>
    %cst_94 = arith.constant 1.400000e+00 : f32
    %272 = vector.broadcast %cst_94 : f32 to vector<128x32xf32>
    %273 = arith.subf %272, %3 : vector<128x32xf32>
    %cst_95 = arith.constant 1.250000e+00 : f32
    %274 = vector.broadcast %cst_95 : f32 to vector<128x32xf32>
    %275 = arith.mulf %273, %274 : vector<128x32xf32>
    %276 = arith.mulf %275, %178 : vector<128x32xf32>
    %277 = arith.addf %271, %276 : vector<128x32xf32>
    %cst_96 = arith.constant 6.000000e-01 : f32
    %278 = vector.broadcast %cst_96 : f32 to vector<128x32xf32>
    %279 = arith.subf %3, %278 : vector<128x32xf32>
    %cst_97 = arith.constant 1.250000e+00 : f32
    %280 = vector.broadcast %cst_97 : f32 to vector<128x32xf32>
    %281 = arith.mulf %279, %280 : vector<128x32xf32>
    %282 = arith.mulf %281, %178 : vector<128x32xf32>
    %cst_98 = arith.constant 1.800000e+00 : f32
    %283 = vector.broadcast %cst_98 : f32 to vector<128x32xf32>
    %284 = arith.subf %283, %3 : vector<128x32xf32>
    %cst_99 = arith.constant 1.250000e+00 : f32
    %285 = vector.broadcast %cst_99 : f32 to vector<128x32xf32>
    %286 = arith.mulf %284, %285 : vector<128x32xf32>
    %287 = arith.mulf %286, %189 : vector<128x32xf32>
    %288 = arith.addf %282, %287 : vector<128x32xf32>
    %cst_100 = arith.constant 1.000000e+00 : f32
    %289 = vector.broadcast %cst_100 : f32 to vector<128x32xf32>
    %290 = arith.subf %3, %289 : vector<128x32xf32>
    %cst_101 = arith.constant 1.250000e+00 : f32
    %291 = vector.broadcast %cst_101 : f32 to vector<128x32xf32>
    %292 = arith.mulf %290, %291 : vector<128x32xf32>
    %293 = arith.mulf %292, %189 : vector<128x32xf32>
    %cst_102 = arith.constant 2.200000e+00 : f32
    %294 = vector.broadcast %cst_102 : f32 to vector<128x32xf32>
    %295 = arith.subf %294, %3 : vector<128x32xf32>
    %cst_103 = arith.constant 1.250000e+00 : f32
    %296 = vector.broadcast %cst_103 : f32 to vector<128x32xf32>
    %297 = arith.mulf %295, %296 : vector<128x32xf32>
    %298 = arith.mulf %297, %200 : vector<128x32xf32>
    %299 = arith.addf %293, %298 : vector<128x32xf32>
    %cst_104 = arith.constant -2.200000e+00 : f32
    %300 = vector.broadcast %cst_104 : f32 to vector<128x32xf32>
    %301 = arith.subf %3, %300 : vector<128x32xf32>
    %cst_105 = arith.constant 0.833333313 : f32
    %302 = vector.broadcast %cst_105 : f32 to vector<128x32xf32>
    %303 = arith.mulf %301, %302 : vector<128x32xf32>
    %304 = arith.mulf %303, %211 : vector<128x32xf32>
    %cst_106 = arith.constant -6.000000e-01 : f32
    %305 = vector.broadcast %cst_106 : f32 to vector<128x32xf32>
    %306 = arith.subf %305, %3 : vector<128x32xf32>
    %cst_107 = arith.constant 0.833333313 : f32
    %307 = vector.broadcast %cst_107 : f32 to vector<128x32xf32>
    %308 = arith.mulf %306, %307 : vector<128x32xf32>
    %309 = arith.mulf %308, %222 : vector<128x32xf32>
    %310 = arith.addf %304, %309 : vector<128x32xf32>
    %cst_108 = arith.constant -1.800000e+00 : f32
    %311 = vector.broadcast %cst_108 : f32 to vector<128x32xf32>
    %312 = arith.subf %3, %311 : vector<128x32xf32>
    %cst_109 = arith.constant 0.833333313 : f32
    %313 = vector.broadcast %cst_109 : f32 to vector<128x32xf32>
    %314 = arith.mulf %312, %313 : vector<128x32xf32>
    %315 = arith.mulf %314, %222 : vector<128x32xf32>
    %cst_110 = arith.constant -2.000000e-01 : f32
    %316 = vector.broadcast %cst_110 : f32 to vector<128x32xf32>
    %317 = arith.subf %316, %3 : vector<128x32xf32>
    %cst_111 = arith.constant 0.833333313 : f32
    %318 = vector.broadcast %cst_111 : f32 to vector<128x32xf32>
    %319 = arith.mulf %317, %318 : vector<128x32xf32>
    %320 = arith.mulf %319, %233 : vector<128x32xf32>
    %321 = arith.addf %315, %320 : vector<128x32xf32>
    %cst_112 = arith.constant -1.400000e+00 : f32
    %322 = vector.broadcast %cst_112 : f32 to vector<128x32xf32>
    %323 = arith.subf %3, %322 : vector<128x32xf32>
    %cst_113 = arith.constant 0.833333313 : f32
    %324 = vector.broadcast %cst_113 : f32 to vector<128x32xf32>
    %325 = arith.mulf %323, %324 : vector<128x32xf32>
    %326 = arith.mulf %325, %233 : vector<128x32xf32>
    %cst_114 = arith.constant 2.000000e-01 : f32
    %327 = vector.broadcast %cst_114 : f32 to vector<128x32xf32>
    %328 = arith.subf %327, %3 : vector<128x32xf32>
    %cst_115 = arith.constant 0.833333313 : f32
    %329 = vector.broadcast %cst_115 : f32 to vector<128x32xf32>
    %330 = arith.mulf %328, %329 : vector<128x32xf32>
    %331 = arith.mulf %330, %244 : vector<128x32xf32>
    %332 = arith.addf %326, %331 : vector<128x32xf32>
    %cst_116 = arith.constant -1.000000e+00 : f32
    %333 = vector.broadcast %cst_116 : f32 to vector<128x32xf32>
    %334 = arith.subf %3, %333 : vector<128x32xf32>
    %cst_117 = arith.constant 0.833333313 : f32
    %335 = vector.broadcast %cst_117 : f32 to vector<128x32xf32>
    %336 = arith.mulf %334, %335 : vector<128x32xf32>
    %337 = arith.mulf %336, %244 : vector<128x32xf32>
    %cst_118 = arith.constant 6.000000e-01 : f32
    %338 = vector.broadcast %cst_118 : f32 to vector<128x32xf32>
    %339 = arith.subf %338, %3 : vector<128x32xf32>
    %cst_119 = arith.constant 0.833333313 : f32
    %340 = vector.broadcast %cst_119 : f32 to vector<128x32xf32>
    %341 = arith.mulf %339, %340 : vector<128x32xf32>
    %342 = arith.mulf %341, %255 : vector<128x32xf32>
    %343 = arith.addf %337, %342 : vector<128x32xf32>
    %cst_120 = arith.constant -6.000000e-01 : f32
    %344 = vector.broadcast %cst_120 : f32 to vector<128x32xf32>
    %345 = arith.subf %3, %344 : vector<128x32xf32>
    %cst_121 = arith.constant 0.833333313 : f32
    %346 = vector.broadcast %cst_121 : f32 to vector<128x32xf32>
    %347 = arith.mulf %345, %346 : vector<128x32xf32>
    %348 = arith.mulf %347, %255 : vector<128x32xf32>
    %cst_122 = arith.constant 1.000000e+00 : f32
    %349 = vector.broadcast %cst_122 : f32 to vector<128x32xf32>
    %350 = arith.subf %349, %3 : vector<128x32xf32>
    %cst_123 = arith.constant 0.833333313 : f32
    %351 = vector.broadcast %cst_123 : f32 to vector<128x32xf32>
    %352 = arith.mulf %350, %351 : vector<128x32xf32>
    %353 = arith.mulf %352, %266 : vector<128x32xf32>
    %354 = arith.addf %348, %353 : vector<128x32xf32>
    %cst_124 = arith.constant -2.000000e-01 : f32
    %355 = vector.broadcast %cst_124 : f32 to vector<128x32xf32>
    %356 = arith.subf %3, %355 : vector<128x32xf32>
    %cst_125 = arith.constant 0.833333313 : f32
    %357 = vector.broadcast %cst_125 : f32 to vector<128x32xf32>
    %358 = arith.mulf %356, %357 : vector<128x32xf32>
    %359 = arith.mulf %358, %266 : vector<128x32xf32>
    %cst_126 = arith.constant 1.400000e+00 : f32
    %360 = vector.broadcast %cst_126 : f32 to vector<128x32xf32>
    %361 = arith.subf %360, %3 : vector<128x32xf32>
    %cst_127 = arith.constant 0.833333313 : f32
    %362 = vector.broadcast %cst_127 : f32 to vector<128x32xf32>
    %363 = arith.mulf %361, %362 : vector<128x32xf32>
    %364 = arith.mulf %363, %277 : vector<128x32xf32>
    %365 = arith.addf %359, %364 : vector<128x32xf32>
    %cst_128 = arith.constant 2.000000e-01 : f32
    %366 = vector.broadcast %cst_128 : f32 to vector<128x32xf32>
    %367 = arith.subf %3, %366 : vector<128x32xf32>
    %cst_129 = arith.constant 0.833333313 : f32
    %368 = vector.broadcast %cst_129 : f32 to vector<128x32xf32>
    %369 = arith.mulf %367, %368 : vector<128x32xf32>
    %370 = arith.mulf %369, %277 : vector<128x32xf32>
    %cst_130 = arith.constant 1.800000e+00 : f32
    %371 = vector.broadcast %cst_130 : f32 to vector<128x32xf32>
    %372 = arith.subf %371, %3 : vector<128x32xf32>
    %cst_131 = arith.constant 0.833333313 : f32
    %373 = vector.broadcast %cst_131 : f32 to vector<128x32xf32>
    %374 = arith.mulf %372, %373 : vector<128x32xf32>
    %375 = arith.mulf %374, %288 : vector<128x32xf32>
    %376 = arith.addf %370, %375 : vector<128x32xf32>
    %cst_132 = arith.constant 6.000000e-01 : f32
    %377 = vector.broadcast %cst_132 : f32 to vector<128x32xf32>
    %378 = arith.subf %3, %377 : vector<128x32xf32>
    %cst_133 = arith.constant 0.833333313 : f32
    %379 = vector.broadcast %cst_133 : f32 to vector<128x32xf32>
    %380 = arith.mulf %378, %379 : vector<128x32xf32>
    %381 = arith.mulf %380, %288 : vector<128x32xf32>
    %cst_134 = arith.constant 2.200000e+00 : f32
    %382 = vector.broadcast %cst_134 : f32 to vector<128x32xf32>
    %383 = arith.subf %382, %3 : vector<128x32xf32>
    %cst_135 = arith.constant 0.833333313 : f32
    %384 = vector.broadcast %cst_135 : f32 to vector<128x32xf32>
    %385 = arith.mulf %383, %384 : vector<128x32xf32>
    %386 = arith.mulf %385, %299 : vector<128x32xf32>
    %387 = arith.addf %381, %386 : vector<128x32xf32>
    %388 = arith.truncf %310 : vector<128x32xf32> to vector<128x32xbf16>
    %c0_136 = arith.constant 0 : index
    %c0_137 = arith.constant 0 : index
    %c0_138 = arith.constant 0 : index
    %389 = vector.load %arg4[%c0_136, %c0_137, %c0_138] : memref<8x32x128xbf16, #tpu.memory_space<vmem>>, vector<1x32x128xbf16>
    %390 = vector.shape_cast %389 : vector<1x32x128xbf16> to vector<32x128xbf16>
    %cst_139 = arith.constant dense<0.000000e+00> : vector<128x128xf32>
    %391 = tpu.matmul %388, %390, %cst_139 {dimension_numbers = #tpu.dot_dimension_numbers<[1], [0], [0], [1], [0, 0, 1, 1], [], []>} : vector<128x32xbf16>, vector<32x128xbf16>, vector<128x128xf32> -> vector<128x128xf32>
    %392 = arith.addf %13, %391 : vector<128x128xf32>
    %393 = arith.truncf %321 : vector<128x32xf32> to vector<128x32xbf16>
    %c1 = arith.constant 1 : index
    %c0_140 = arith.constant 0 : index
    %c0_141 = arith.constant 0 : index
    %394 = vector.load %arg4[%c1, %c0_140, %c0_141] : memref<8x32x128xbf16, #tpu.memory_space<vmem>>, vector<1x32x128xbf16>
    %395 = vector.shape_cast %394 : vector<1x32x128xbf16> to vector<32x128xbf16>
    %cst_142 = arith.constant dense<0.000000e+00> : vector<128x128xf32>
    %396 = tpu.matmul %393, %395, %cst_142 {dimension_numbers = #tpu.dot_dimension_numbers<[1], [0], [0], [1], [0, 0, 1, 1], [], []>} : vector<128x32xbf16>, vector<32x128xbf16>, vector<128x128xf32> -> vector<128x128xf32>
    %397 = arith.addf %392, %396 : vector<128x128xf32>
    %398 = arith.truncf %332 : vector<128x32xf32> to vector<128x32xbf16>
    %c2 = arith.constant 2 : index
    %c0_143 = arith.constant 0 : index
    %c0_144 = arith.constant 0 : index
    %399 = vector.load %arg4[%c2, %c0_143, %c0_144] : memref<8x32x128xbf16, #tpu.memory_space<vmem>>, vector<1x32x128xbf16>
    %400 = vector.shape_cast %399 : vector<1x32x128xbf16> to vector<32x128xbf16>
    %cst_145 = arith.constant dense<0.000000e+00> : vector<128x128xf32>
    %401 = tpu.matmul %398, %400, %cst_145 {dimension_numbers = #tpu.dot_dimension_numbers<[1], [0], [0], [1], [0, 0, 1, 1], [], []>} : vector<128x32xbf16>, vector<32x128xbf16>, vector<128x128xf32> -> vector<128x128xf32>
    %402 = arith.addf %397, %401 : vector<128x128xf32>
    %403 = arith.truncf %343 : vector<128x32xf32> to vector<128x32xbf16>
    %c3 = arith.constant 3 : index
    %c0_146 = arith.constant 0 : index
    %c0_147 = arith.constant 0 : index
    %404 = vector.load %arg4[%c3, %c0_146, %c0_147] : memref<8x32x128xbf16, #tpu.memory_space<vmem>>, vector<1x32x128xbf16>
    %405 = vector.shape_cast %404 : vector<1x32x128xbf16> to vector<32x128xbf16>
    %cst_148 = arith.constant dense<0.000000e+00> : vector<128x128xf32>
    %406 = tpu.matmul %403, %405, %cst_148 {dimension_numbers = #tpu.dot_dimension_numbers<[1], [0], [0], [1], [0, 0, 1, 1], [], []>} : vector<128x32xbf16>, vector<32x128xbf16>, vector<128x128xf32> -> vector<128x128xf32>
    %407 = arith.addf %402, %406 : vector<128x128xf32>
    %408 = arith.truncf %354 : vector<128x32xf32> to vector<128x32xbf16>
    %c4 = arith.constant 4 : index
    %c0_149 = arith.constant 0 : index
    %c0_150 = arith.constant 0 : index
    %409 = vector.load %arg4[%c4, %c0_149, %c0_150] : memref<8x32x128xbf16, #tpu.memory_space<vmem>>, vector<1x32x128xbf16>
    %410 = vector.shape_cast %409 : vector<1x32x128xbf16> to vector<32x128xbf16>
    %cst_151 = arith.constant dense<0.000000e+00> : vector<128x128xf32>
    %411 = tpu.matmul %408, %410, %cst_151 {dimension_numbers = #tpu.dot_dimension_numbers<[1], [0], [0], [1], [0, 0, 1, 1], [], []>} : vector<128x32xbf16>, vector<32x128xbf16>, vector<128x128xf32> -> vector<128x128xf32>
    %412 = arith.addf %407, %411 : vector<128x128xf32>
    %413 = arith.truncf %365 : vector<128x32xf32> to vector<128x32xbf16>
    %c5 = arith.constant 5 : index
    %c0_152 = arith.constant 0 : index
    %c0_153 = arith.constant 0 : index
    %414 = vector.load %arg4[%c5, %c0_152, %c0_153] : memref<8x32x128xbf16, #tpu.memory_space<vmem>>, vector<1x32x128xbf16>
    %415 = vector.shape_cast %414 : vector<1x32x128xbf16> to vector<32x128xbf16>
    %cst_154 = arith.constant dense<0.000000e+00> : vector<128x128xf32>
    %416 = tpu.matmul %413, %415, %cst_154 {dimension_numbers = #tpu.dot_dimension_numbers<[1], [0], [0], [1], [0, 0, 1, 1], [], []>} : vector<128x32xbf16>, vector<32x128xbf16>, vector<128x128xf32> -> vector<128x128xf32>
    %417 = arith.addf %412, %416 : vector<128x128xf32>
    %418 = arith.truncf %376 : vector<128x32xf32> to vector<128x32xbf16>
    %c6 = arith.constant 6 : index
    %c0_155 = arith.constant 0 : index
    %c0_156 = arith.constant 0 : index
    %419 = vector.load %arg4[%c6, %c0_155, %c0_156] : memref<8x32x128xbf16, #tpu.memory_space<vmem>>, vector<1x32x128xbf16>
    %420 = vector.shape_cast %419 : vector<1x32x128xbf16> to vector<32x128xbf16>
    %cst_157 = arith.constant dense<0.000000e+00> : vector<128x128xf32>
    %421 = tpu.matmul %418, %420, %cst_157 {dimension_numbers = #tpu.dot_dimension_numbers<[1], [0], [0], [1], [0, 0, 1, 1], [], []>} : vector<128x32xbf16>, vector<32x128xbf16>, vector<128x128xf32> -> vector<128x128xf32>
    %422 = arith.addf %417, %421 : vector<128x128xf32>
    %423 = arith.truncf %387 : vector<128x32xf32> to vector<128x32xbf16>
    %c7 = arith.constant 7 : index
    %c0_158 = arith.constant 0 : index
    %c0_159 = arith.constant 0 : index
    %424 = vector.load %arg4[%c7, %c0_158, %c0_159] : memref<8x32x128xbf16, #tpu.memory_space<vmem>>, vector<1x32x128xbf16>
    %425 = vector.shape_cast %424 : vector<1x32x128xbf16> to vector<32x128xbf16>
    %cst_160 = arith.constant dense<0.000000e+00> : vector<128x128xf32>
    %426 = tpu.matmul %423, %425, %cst_160 {dimension_numbers = #tpu.dot_dimension_numbers<[1], [0], [0], [1], [0, 0, 1, 1], [], []>} : vector<128x32xbf16>, vector<32x128xbf16>, vector<128x128xf32> -> vector<128x128xf32>
    %427 = arith.addf %422, %426 : vector<128x128xf32>
    %c0_161 = arith.constant 0 : index
    %c0_162 = arith.constant 0 : index
    %428 = vector.load %arg6[%c0_161, %c0_162] : memref<128x128xf32, #tpu.memory_space<vmem>>, vector<128x128xf32>
    %429 = arith.addf %428, %427 : vector<128x128xf32>
    %c0_163 = arith.constant 0 : index
    %c0_164 = arith.constant 0 : index
    %430 = vector.load %arg6[%c0_163, %c0_164] : memref<128x128xf32, #tpu.memory_space<vmem>>, vector<128x128xf32>
    tpu.vector_store %arg6[%c0_163, %c0_164], %429 {strides = array<i32>} : memref<128x128xf32, #tpu.memory_space<vmem>>, vector<128x128xf32>,
    %c0_i32_165 = arith.constant 0 : i32
    %431 = arith.cmpi eq, %arg1, %c0_i32_165 : i32
    %432 = arith.extui %431 : i1 to i32
    %c0_i32_166 = arith.constant 0 : i32
    %433 = arith.cmpi ne, %432, %c0_i32_166 : i32
    scf.if %433 {
      %c0_167 = arith.constant 0 : index
      %c0_168 = arith.constant 0 : index
      %434 = vector.load %arg6[%c0_167, %c0_168] : memref<128x128xf32, #tpu.memory_space<vmem>>, vector<128x128xf32>
      %435 = arith.truncf %434 : vector<128x128xf32> to vector<128x128xbf16>
      %c0_169 = arith.constant 0 : index
      %c0_170 = arith.constant 0 : index
      %436 = vector.load %arg5[%c0_169, %c0_170] : memref<128x128xbf16, #tpu.memory_space<vmem>>, vector<128x128xbf16>
      tpu.vector_store %arg5[%c0_169, %c0_170], %435 {strides = array<i32>} : memref<128x128xbf16, #tpu.memory_space<vmem>>, vector<128x128xbf16>,
    } else {
    }
    return
  }
  func.func @transform_0(%arg0: i32, %arg1: i32) -> (i32, i32) {
    %c0_i32 = arith.constant 0 : i32
    return %arg0, %arg1 : i32, i32
  }
  func.func @transform_1(%arg0: i32, %arg1: i32) -> (i32, i32) {
    %c0_i32 = arith.constant 0 : i32
    %c0_i32_0 = arith.constant 0 : i32
    return %arg1, %c0_i32 : i32, i32
  }
  func.func @transform_2(%arg0: i32, %arg1: i32) -> (i32, i32, i32) {
    %c0_i32 = arith.constant 0 : i32
    %c0_i32_0 = arith.constant 0 : i32
    %c0_i32_1 = arith.constant 0 : i32
    return %c0_i32, %arg1, %c0_i32_0 : i32, i32, i32
  }
  func.func @transform_3(%arg0: i32, %arg1: i32) -> (i32, i32) {
    %c0_i32 = arith.constant 0 : i32
    %c0_i32_0 = arith.constant 0 : i32
    return %arg0, %c0_i32 : i32, i32
  }
}

module attributes {stable_mosaic.version = 11 : i64} {
  func.func @_kan_support_kernel(%arg0: i32, %arg1: i32, %arg2: memref<128x128xf32, #tpu.memory_space<vmem>>, %arg3: memref<128x128xbf16, #tpu.memory_space<vmem>>, %arg4: memref<8x128x128xbf16, #tpu.memory_space<vmem>>, %arg5: memref<128x128xbf16, #tpu.memory_space<vmem>>, %arg6: memref<128x128xf32, #tpu.memory_space<vmem>>) attributes {dimension_semantics = [#tpu.dimension_semantics<parallel>, #tpu.dimension_semantics<arbitrary>], iteration_bounds = array<i64: 1, 1>, scalar_prefetch = 0 : i64, scratch_operands = 1 : i64, tpu.core_type = #tpu.core_type<tc>, window_params = [{transform_indices = @transform_0, window_bounds = array<i64: 128, 128>}, {transform_indices = @transform_1, window_bounds = array<i64: 128, 128>}, {transform_indices = @transform_2, window_bounds = array<i64: 8, 128, 128>}, {transform_indices = @transform_3, window_bounds = array<i64: 128, 128>}]} {
    %c0_i32 = arith.constant 0 : i32
    %0 = arith.cmpi eq, %arg1, %c0_i32 : i32
    %1 = arith.extui %0 : i1 to i32
    %c0_i32_0 = arith.constant 0 : i32
    %2 = arith.cmpi ne, %1, %c0_i32_0 : i32
    scf.if %2 {
      %cst_167 = arith.constant 0.000000e+00 : f32
      %434 = vector.broadcast %cst_167 : f32 to vector<128x128xf32>
      %c0_168 = arith.constant 0 : index
      %c0_169 = arith.constant 0 : index
      %435 = vector.load %arg6[%c0_168, %c0_169] : memref<128x128xf32, #tpu.memory_space<vmem>>, vector<128x128xf32>
      tpu.vector_store %arg6[%c0_168, %c0_169], %434 {strides = array<i32>} : memref<128x128xf32, #tpu.memory_space<vmem>>, vector<128x128xf32>,
    } else {
    }
    %c0 = arith.constant 0 : index
    %c0_1 = arith.constant 0 : index
    %3 = vector.load %arg2[%c0, %c0_1] : memref<128x128xf32, #tpu.memory_space<vmem>>, vector<128x128xf32>
    %cst = arith.constant 0.000000e+00 : f32
    %4 = vector.broadcast %cst : f32 to vector<128x128xf32>
    %5 = arith.subf %4, %3 : vector<128x128xf32>
    %6 = math.exp %5 : vector<128x128xf32>
    %cst_2 = arith.constant 1.000000e+00 : f32
    %7 = vector.broadcast %cst_2 : f32 to vector<128x128xf32>
    %8 = arith.addf %7, %6 : vector<128x128xf32>
    %9 = tpu.reciprocal %8 {approx = true} : vector<128x128xf32> -> vector<128x128xf32>
    %10 = arith.mulf %3, %9 : vector<128x128xf32>
    %11 = arith.truncf %10 : vector<128x128xf32> to vector<128x128xbf16>
    %c0_3 = arith.constant 0 : index
    %c0_4 = arith.constant 0 : index
    %12 = vector.load %arg3[%c0_3, %c0_4] : memref<128x128xbf16, #tpu.memory_space<vmem>>, vector<128x128xbf16>
    %cst_5 = arith.constant dense<0.000000e+00> : vector<128x128xf32>
    %13 = tpu.matmul %11, %12, %cst_5 {dimension_numbers = #tpu.dot_dimension_numbers<[1], [0], [0], [1], [0, 0, 1, 1], [], []>} : vector<128x128xbf16>, vector<128x128xbf16>, vector<128x128xf32> -> vector<128x128xf32>
    %cst_6 = arith.constant -2.200000e+00 : f32
    %14 = vector.broadcast %cst_6 : f32 to vector<128x128xf32>
    %15 = arith.cmpf oge, %3, %14 : vector<128x128xf32>
    %cst_7 = arith.constant -1.800000e+00 : f32
    %16 = vector.broadcast %cst_7 : f32 to vector<128x128xf32>
    %17 = arith.cmpf olt, %3, %16 : vector<128x128xf32>
    %18 = arith.andi %15, %17 : vector<128x128xi1>
    %19 = arith.extui %18 : vector<128x128xi1> to vector<128x128xi32>
    %20 = arith.sitofp %19 : vector<128x128xi32> to vector<128x128xf32>
    %cst_8 = arith.constant -1.800000e+00 : f32
    %21 = vector.broadcast %cst_8 : f32 to vector<128x128xf32>
    %22 = arith.cmpf oge, %3, %21 : vector<128x128xf32>
    %cst_9 = arith.constant -1.400000e+00 : f32
    %23 = vector.broadcast %cst_9 : f32 to vector<128x128xf32>
    %24 = arith.cmpf olt, %3, %23 : vector<128x128xf32>
    %25 = arith.andi %22, %24 : vector<128x128xi1>
    %26 = arith.extui %25 : vector<128x128xi1> to vector<128x128xi32>
    %27 = arith.sitofp %26 : vector<128x128xi32> to vector<128x128xf32>
    %cst_10 = arith.constant -1.400000e+00 : f32
    %28 = vector.broadcast %cst_10 : f32 to vector<128x128xf32>
    %29 = arith.cmpf oge, %3, %28 : vector<128x128xf32>
    %cst_11 = arith.constant -1.000000e+00 : f32
    %30 = vector.broadcast %cst_11 : f32 to vector<128x128xf32>
    %31 = arith.cmpf olt, %3, %30 : vector<128x128xf32>
    %32 = arith.andi %29, %31 : vector<128x128xi1>
    %33 = arith.extui %32 : vector<128x128xi1> to vector<128x128xi32>
    %34 = arith.sitofp %33 : vector<128x128xi32> to vector<128x128xf32>
    %cst_12 = arith.constant -1.000000e+00 : f32
    %35 = vector.broadcast %cst_12 : f32 to vector<128x128xf32>
    %36 = arith.cmpf oge, %3, %35 : vector<128x128xf32>
    %cst_13 = arith.constant -6.000000e-01 : f32
    %37 = vector.broadcast %cst_13 : f32 to vector<128x128xf32>
    %38 = arith.cmpf olt, %3, %37 : vector<128x128xf32>
    %39 = arith.andi %36, %38 : vector<128x128xi1>
    %40 = arith.extui %39 : vector<128x128xi1> to vector<128x128xi32>
    %41 = arith.sitofp %40 : vector<128x128xi32> to vector<128x128xf32>
    %cst_14 = arith.constant -6.000000e-01 : f32
    %42 = vector.broadcast %cst_14 : f32 to vector<128x128xf32>
    %43 = arith.cmpf oge, %3, %42 : vector<128x128xf32>
    %cst_15 = arith.constant -2.000000e-01 : f32
    %44 = vector.broadcast %cst_15 : f32 to vector<128x128xf32>
    %45 = arith.cmpf olt, %3, %44 : vector<128x128xf32>
    %46 = arith.andi %43, %45 : vector<128x128xi1>
    %47 = arith.extui %46 : vector<128x128xi1> to vector<128x128xi32>
    %48 = arith.sitofp %47 : vector<128x128xi32> to vector<128x128xf32>
    %cst_16 = arith.constant -2.000000e-01 : f32
    %49 = vector.broadcast %cst_16 : f32 to vector<128x128xf32>
    %50 = arith.cmpf oge, %3, %49 : vector<128x128xf32>
    %cst_17 = arith.constant 2.000000e-01 : f32
    %51 = vector.broadcast %cst_17 : f32 to vector<128x128xf32>
    %52 = arith.cmpf olt, %3, %51 : vector<128x128xf32>
    %53 = arith.andi %50, %52 : vector<128x128xi1>
    %54 = arith.extui %53 : vector<128x128xi1> to vector<128x128xi32>
    %55 = arith.sitofp %54 : vector<128x128xi32> to vector<128x128xf32>
    %cst_18 = arith.constant 2.000000e-01 : f32
    %56 = vector.broadcast %cst_18 : f32 to vector<128x128xf32>
    %57 = arith.cmpf oge, %3, %56 : vector<128x128xf32>
    %cst_19 = arith.constant 6.000000e-01 : f32
    %58 = vector.broadcast %cst_19 : f32 to vector<128x128xf32>
    %59 = arith.cmpf olt, %3, %58 : vector<128x128xf32>
    %60 = arith.andi %57, %59 : vector<128x128xi1>
    %61 = arith.extui %60 : vector<128x128xi1> to vector<128x128xi32>
    %62 = arith.sitofp %61 : vector<128x128xi32> to vector<128x128xf32>
    %cst_20 = arith.constant 6.000000e-01 : f32
    %63 = vector.broadcast %cst_20 : f32 to vector<128x128xf32>
    %64 = arith.cmpf oge, %3, %63 : vector<128x128xf32>
    %cst_21 = arith.constant 1.000000e+00 : f32
    %65 = vector.broadcast %cst_21 : f32 to vector<128x128xf32>
    %66 = arith.cmpf olt, %3, %65 : vector<128x128xf32>
    %67 = arith.andi %64, %66 : vector<128x128xi1>
    %68 = arith.extui %67 : vector<128x128xi1> to vector<128x128xi32>
    %69 = arith.sitofp %68 : vector<128x128xi32> to vector<128x128xf32>
    %cst_22 = arith.constant 1.000000e+00 : f32
    %70 = vector.broadcast %cst_22 : f32 to vector<128x128xf32>
    %71 = arith.cmpf oge, %3, %70 : vector<128x128xf32>
    %cst_23 = arith.constant 1.400000e+00 : f32
    %72 = vector.broadcast %cst_23 : f32 to vector<128x128xf32>
    %73 = arith.cmpf olt, %3, %72 : vector<128x128xf32>
    %74 = arith.andi %71, %73 : vector<128x128xi1>
    %75 = arith.extui %74 : vector<128x128xi1> to vector<128x128xi32>
    %76 = arith.sitofp %75 : vector<128x128xi32> to vector<128x128xf32>
    %cst_24 = arith.constant 1.400000e+00 : f32
    %77 = vector.broadcast %cst_24 : f32 to vector<128x128xf32>
    %78 = arith.cmpf oge, %3, %77 : vector<128x128xf32>
    %cst_25 = arith.constant 1.800000e+00 : f32
    %79 = vector.broadcast %cst_25 : f32 to vector<128x128xf32>
    %80 = arith.cmpf olt, %3, %79 : vector<128x128xf32>
    %81 = arith.andi %78, %80 : vector<128x128xi1>
    %82 = arith.extui %81 : vector<128x128xi1> to vector<128x128xi32>
    %83 = arith.sitofp %82 : vector<128x128xi32> to vector<128x128xf32>
    %cst_26 = arith.constant 1.800000e+00 : f32
    %84 = vector.broadcast %cst_26 : f32 to vector<128x128xf32>
    %85 = arith.cmpf oge, %3, %84 : vector<128x128xf32>
    %cst_27 = arith.constant 2.200000e+00 : f32
    %86 = vector.broadcast %cst_27 : f32 to vector<128x128xf32>
    %87 = arith.cmpf olt, %3, %86 : vector<128x128xf32>
    %88 = arith.andi %85, %87 : vector<128x128xi1>
    %89 = arith.extui %88 : vector<128x128xi1> to vector<128x128xi32>
    %90 = arith.sitofp %89 : vector<128x128xi32> to vector<128x128xf32>
    %cst_28 = arith.constant -2.200000e+00 : f32
    %91 = vector.broadcast %cst_28 : f32 to vector<128x128xf32>
    %92 = arith.subf %3, %91 : vector<128x128xf32>
    %cst_29 = arith.constant 2.500000e+00 : f32
    %93 = vector.broadcast %cst_29 : f32 to vector<128x128xf32>
    %94 = arith.mulf %92, %93 : vector<128x128xf32>
    %95 = arith.mulf %94, %20 : vector<128x128xf32>
    %cst_30 = arith.constant -1.400000e+00 : f32
    %96 = vector.broadcast %cst_30 : f32 to vector<128x128xf32>
    %97 = arith.subf %96, %3 : vector<128x128xf32>
    %cst_31 = arith.constant 2.500000e+00 : f32
    %98 = vector.broadcast %cst_31 : f32 to vector<128x128xf32>
    %99 = arith.mulf %97, %98 : vector<128x128xf32>
    %100 = arith.mulf %99, %27 : vector<128x128xf32>
    %101 = arith.addf %95, %100 : vector<128x128xf32>
    %cst_32 = arith.constant -1.800000e+00 : f32
    %102 = vector.broadcast %cst_32 : f32 to vector<128x128xf32>
    %103 = arith.subf %3, %102 : vector<128x128xf32>
    %cst_33 = arith.constant 2.500000e+00 : f32
    %104 = vector.broadcast %cst_33 : f32 to vector<128x128xf32>
    %105 = arith.mulf %103, %104 : vector<128x128xf32>
    %106 = arith.mulf %105, %27 : vector<128x128xf32>
    %cst_34 = arith.constant -1.000000e+00 : f32
    %107 = vector.broadcast %cst_34 : f32 to vector<128x128xf32>
    %108 = arith.subf %107, %3 : vector<128x128xf32>
    %cst_35 = arith.constant 2.500000e+00 : f32
    %109 = vector.broadcast %cst_35 : f32 to vector<128x128xf32>
    %110 = arith.mulf %108, %109 : vector<128x128xf32>
    %111 = arith.mulf %110, %34 : vector<128x128xf32>
    %112 = arith.addf %106, %111 : vector<128x128xf32>
    %cst_36 = arith.constant -1.400000e+00 : f32
    %113 = vector.broadcast %cst_36 : f32 to vector<128x128xf32>
    %114 = arith.subf %3, %113 : vector<128x128xf32>
    %cst_37 = arith.constant 2.500000e+00 : f32
    %115 = vector.broadcast %cst_37 : f32 to vector<128x128xf32>
    %116 = arith.mulf %114, %115 : vector<128x128xf32>
    %117 = arith.mulf %116, %34 : vector<128x128xf32>
    %cst_38 = arith.constant -6.000000e-01 : f32
    %118 = vector.broadcast %cst_38 : f32 to vector<128x128xf32>
    %119 = arith.subf %118, %3 : vector<128x128xf32>
    %cst_39 = arith.constant 2.500000e+00 : f32
    %120 = vector.broadcast %cst_39 : f32 to vector<128x128xf32>
    %121 = arith.mulf %119, %120 : vector<128x128xf32>
    %122 = arith.mulf %121, %41 : vector<128x128xf32>
    %123 = arith.addf %117, %122 : vector<128x128xf32>
    %cst_40 = arith.constant -1.000000e+00 : f32
    %124 = vector.broadcast %cst_40 : f32 to vector<128x128xf32>
    %125 = arith.subf %3, %124 : vector<128x128xf32>
    %cst_41 = arith.constant 2.500000e+00 : f32
    %126 = vector.broadcast %cst_41 : f32 to vector<128x128xf32>
    %127 = arith.mulf %125, %126 : vector<128x128xf32>
    %128 = arith.mulf %127, %41 : vector<128x128xf32>
    %cst_42 = arith.constant -2.000000e-01 : f32
    %129 = vector.broadcast %cst_42 : f32 to vector<128x128xf32>
    %130 = arith.subf %129, %3 : vector<128x128xf32>
    %cst_43 = arith.constant 2.500000e+00 : f32
    %131 = vector.broadcast %cst_43 : f32 to vector<128x128xf32>
    %132 = arith.mulf %130, %131 : vector<128x128xf32>
    %133 = arith.mulf %132, %48 : vector<128x128xf32>
    %134 = arith.addf %128, %133 : vector<128x128xf32>
    %cst_44 = arith.constant -6.000000e-01 : f32
    %135 = vector.broadcast %cst_44 : f32 to vector<128x128xf32>
    %136 = arith.subf %3, %135 : vector<128x128xf32>
    %cst_45 = arith.constant 2.500000e+00 : f32
    %137 = vector.broadcast %cst_45 : f32 to vector<128x128xf32>
    %138 = arith.mulf %136, %137 : vector<128x128xf32>
    %139 = arith.mulf %138, %48 : vector<128x128xf32>
    %cst_46 = arith.constant 2.000000e-01 : f32
    %140 = vector.broadcast %cst_46 : f32 to vector<128x128xf32>
    %141 = arith.subf %140, %3 : vector<128x128xf32>
    %cst_47 = arith.constant 2.500000e+00 : f32
    %142 = vector.broadcast %cst_47 : f32 to vector<128x128xf32>
    %143 = arith.mulf %141, %142 : vector<128x128xf32>
    %144 = arith.mulf %143, %55 : vector<128x128xf32>
    %145 = arith.addf %139, %144 : vector<128x128xf32>
    %cst_48 = arith.constant -2.000000e-01 : f32
    %146 = vector.broadcast %cst_48 : f32 to vector<128x128xf32>
    %147 = arith.subf %3, %146 : vector<128x128xf32>
    %cst_49 = arith.constant 2.500000e+00 : f32
    %148 = vector.broadcast %cst_49 : f32 to vector<128x128xf32>
    %149 = arith.mulf %147, %148 : vector<128x128xf32>
    %150 = arith.mulf %149, %55 : vector<128x128xf32>
    %cst_50 = arith.constant 6.000000e-01 : f32
    %151 = vector.broadcast %cst_50 : f32 to vector<128x128xf32>
    %152 = arith.subf %151, %3 : vector<128x128xf32>
    %cst_51 = arith.constant 2.500000e+00 : f32
    %153 = vector.broadcast %cst_51 : f32 to vector<128x128xf32>
    %154 = arith.mulf %152, %153 : vector<128x128xf32>
    %155 = arith.mulf %154, %62 : vector<128x128xf32>
    %156 = arith.addf %150, %155 : vector<128x128xf32>
    %cst_52 = arith.constant 2.000000e-01 : f32
    %157 = vector.broadcast %cst_52 : f32 to vector<128x128xf32>
    %158 = arith.subf %3, %157 : vector<128x128xf32>
    %cst_53 = arith.constant 2.500000e+00 : f32
    %159 = vector.broadcast %cst_53 : f32 to vector<128x128xf32>
    %160 = arith.mulf %158, %159 : vector<128x128xf32>
    %161 = arith.mulf %160, %62 : vector<128x128xf32>
    %cst_54 = arith.constant 1.000000e+00 : f32
    %162 = vector.broadcast %cst_54 : f32 to vector<128x128xf32>
    %163 = arith.subf %162, %3 : vector<128x128xf32>
    %cst_55 = arith.constant 2.500000e+00 : f32
    %164 = vector.broadcast %cst_55 : f32 to vector<128x128xf32>
    %165 = arith.mulf %163, %164 : vector<128x128xf32>
    %166 = arith.mulf %165, %69 : vector<128x128xf32>
    %167 = arith.addf %161, %166 : vector<128x128xf32>
    %cst_56 = arith.constant 6.000000e-01 : f32
    %168 = vector.broadcast %cst_56 : f32 to vector<128x128xf32>
    %169 = arith.subf %3, %168 : vector<128x128xf32>
    %cst_57 = arith.constant 2.500000e+00 : f32
    %170 = vector.broadcast %cst_57 : f32 to vector<128x128xf32>
    %171 = arith.mulf %169, %170 : vector<128x128xf32>
    %172 = arith.mulf %171, %69 : vector<128x128xf32>
    %cst_58 = arith.constant 1.400000e+00 : f32
    %173 = vector.broadcast %cst_58 : f32 to vector<128x128xf32>
    %174 = arith.subf %173, %3 : vector<128x128xf32>
    %cst_59 = arith.constant 2.500000e+00 : f32
    %175 = vector.broadcast %cst_59 : f32 to vector<128x128xf32>
    %176 = arith.mulf %174, %175 : vector<128x128xf32>
    %177 = arith.mulf %176, %76 : vector<128x128xf32>
    %178 = arith.addf %172, %177 : vector<128x128xf32>
    %cst_60 = arith.constant 1.000000e+00 : f32
    %179 = vector.broadcast %cst_60 : f32 to vector<128x128xf32>
    %180 = arith.subf %3, %179 : vector<128x128xf32>
    %cst_61 = arith.constant 2.500000e+00 : f32
    %181 = vector.broadcast %cst_61 : f32 to vector<128x128xf32>
    %182 = arith.mulf %180, %181 : vector<128x128xf32>
    %183 = arith.mulf %182, %76 : vector<128x128xf32>
    %cst_62 = arith.constant 1.800000e+00 : f32
    %184 = vector.broadcast %cst_62 : f32 to vector<128x128xf32>
    %185 = arith.subf %184, %3 : vector<128x128xf32>
    %cst_63 = arith.constant 2.500000e+00 : f32
    %186 = vector.broadcast %cst_63 : f32 to vector<128x128xf32>
    %187 = arith.mulf %185, %186 : vector<128x128xf32>
    %188 = arith.mulf %187, %83 : vector<128x128xf32>
    %189 = arith.addf %183, %188 : vector<128x128xf32>
    %cst_64 = arith.constant 1.400000e+00 : f32
    %190 = vector.broadcast %cst_64 : f32 to vector<128x128xf32>
    %191 = arith.subf %3, %190 : vector<128x128xf32>
    %cst_65 = arith.constant 2.500000e+00 : f32
    %192 = vector.broadcast %cst_65 : f32 to vector<128x128xf32>
    %193 = arith.mulf %191, %192 : vector<128x128xf32>
    %194 = arith.mulf %193, %83 : vector<128x128xf32>
    %cst_66 = arith.constant 2.200000e+00 : f32
    %195 = vector.broadcast %cst_66 : f32 to vector<128x128xf32>
    %196 = arith.subf %195, %3 : vector<128x128xf32>
    %cst_67 = arith.constant 2.500000e+00 : f32
    %197 = vector.broadcast %cst_67 : f32 to vector<128x128xf32>
    %198 = arith.mulf %196, %197 : vector<128x128xf32>
    %199 = arith.mulf %198, %90 : vector<128x128xf32>
    %200 = arith.addf %194, %199 : vector<128x128xf32>
    %cst_68 = arith.constant -2.200000e+00 : f32
    %201 = vector.broadcast %cst_68 : f32 to vector<128x128xf32>
    %202 = arith.subf %3, %201 : vector<128x128xf32>
    %cst_69 = arith.constant 1.250000e+00 : f32
    %203 = vector.broadcast %cst_69 : f32 to vector<128x128xf32>
    %204 = arith.mulf %202, %203 : vector<128x128xf32>
    %205 = arith.mulf %204, %101 : vector<128x128xf32>
    %cst_70 = arith.constant -1.000000e+00 : f32
    %206 = vector.broadcast %cst_70 : f32 to vector<128x128xf32>
    %207 = arith.subf %206, %3 : vector<128x128xf32>
    %cst_71 = arith.constant 1.250000e+00 : f32
    %208 = vector.broadcast %cst_71 : f32 to vector<128x128xf32>
    %209 = arith.mulf %207, %208 : vector<128x128xf32>
    %210 = arith.mulf %209, %112 : vector<128x128xf32>
    %211 = arith.addf %205, %210 : vector<128x128xf32>
    %cst_72 = arith.constant -1.800000e+00 : f32
    %212 = vector.broadcast %cst_72 : f32 to vector<128x128xf32>
    %213 = arith.subf %3, %212 : vector<128x128xf32>
    %cst_73 = arith.constant 1.250000e+00 : f32
    %214 = vector.broadcast %cst_73 : f32 to vector<128x128xf32>
    %215 = arith.mulf %213, %214 : vector<128x128xf32>
    %216 = arith.mulf %215, %112 : vector<128x128xf32>
    %cst_74 = arith.constant -6.000000e-01 : f32
    %217 = vector.broadcast %cst_74 : f32 to vector<128x128xf32>
    %218 = arith.subf %217, %3 : vector<128x128xf32>
    %cst_75 = arith.constant 1.250000e+00 : f32
    %219 = vector.broadcast %cst_75 : f32 to vector<128x128xf32>
    %220 = arith.mulf %218, %219 : vector<128x128xf32>
    %221 = arith.mulf %220, %123 : vector<128x128xf32>
    %222 = arith.addf %216, %221 : vector<128x128xf32>
    %cst_76 = arith.constant -1.400000e+00 : f32
    %223 = vector.broadcast %cst_76 : f32 to vector<128x128xf32>
    %224 = arith.subf %3, %223 : vector<128x128xf32>
    %cst_77 = arith.constant 1.250000e+00 : f32
    %225 = vector.broadcast %cst_77 : f32 to vector<128x128xf32>
    %226 = arith.mulf %224, %225 : vector<128x128xf32>
    %227 = arith.mulf %226, %123 : vector<128x128xf32>
    %cst_78 = arith.constant -2.000000e-01 : f32
    %228 = vector.broadcast %cst_78 : f32 to vector<128x128xf32>
    %229 = arith.subf %228, %3 : vector<128x128xf32>
    %cst_79 = arith.constant 1.250000e+00 : f32
    %230 = vector.broadcast %cst_79 : f32 to vector<128x128xf32>
    %231 = arith.mulf %229, %230 : vector<128x128xf32>
    %232 = arith.mulf %231, %134 : vector<128x128xf32>
    %233 = arith.addf %227, %232 : vector<128x128xf32>
    %cst_80 = arith.constant -1.000000e+00 : f32
    %234 = vector.broadcast %cst_80 : f32 to vector<128x128xf32>
    %235 = arith.subf %3, %234 : vector<128x128xf32>
    %cst_81 = arith.constant 1.250000e+00 : f32
    %236 = vector.broadcast %cst_81 : f32 to vector<128x128xf32>
    %237 = arith.mulf %235, %236 : vector<128x128xf32>
    %238 = arith.mulf %237, %134 : vector<128x128xf32>
    %cst_82 = arith.constant 2.000000e-01 : f32
    %239 = vector.broadcast %cst_82 : f32 to vector<128x128xf32>
    %240 = arith.subf %239, %3 : vector<128x128xf32>
    %cst_83 = arith.constant 1.250000e+00 : f32
    %241 = vector.broadcast %cst_83 : f32 to vector<128x128xf32>
    %242 = arith.mulf %240, %241 : vector<128x128xf32>
    %243 = arith.mulf %242, %145 : vector<128x128xf32>
    %244 = arith.addf %238, %243 : vector<128x128xf32>
    %cst_84 = arith.constant -6.000000e-01 : f32
    %245 = vector.broadcast %cst_84 : f32 to vector<128x128xf32>
    %246 = arith.subf %3, %245 : vector<128x128xf32>
    %cst_85 = arith.constant 1.250000e+00 : f32
    %247 = vector.broadcast %cst_85 : f32 to vector<128x128xf32>
    %248 = arith.mulf %246, %247 : vector<128x128xf32>
    %249 = arith.mulf %248, %145 : vector<128x128xf32>
    %cst_86 = arith.constant 6.000000e-01 : f32
    %250 = vector.broadcast %cst_86 : f32 to vector<128x128xf32>
    %251 = arith.subf %250, %3 : vector<128x128xf32>
    %cst_87 = arith.constant 1.250000e+00 : f32
    %252 = vector.broadcast %cst_87 : f32 to vector<128x128xf32>
    %253 = arith.mulf %251, %252 : vector<128x128xf32>
    %254 = arith.mulf %253, %156 : vector<128x128xf32>
    %255 = arith.addf %249, %254 : vector<128x128xf32>
    %cst_88 = arith.constant -2.000000e-01 : f32
    %256 = vector.broadcast %cst_88 : f32 to vector<128x128xf32>
    %257 = arith.subf %3, %256 : vector<128x128xf32>
    %cst_89 = arith.constant 1.250000e+00 : f32
    %258 = vector.broadcast %cst_89 : f32 to vector<128x128xf32>
    %259 = arith.mulf %257, %258 : vector<128x128xf32>
    %260 = arith.mulf %259, %156 : vector<128x128xf32>
    %cst_90 = arith.constant 1.000000e+00 : f32
    %261 = vector.broadcast %cst_90 : f32 to vector<128x128xf32>
    %262 = arith.subf %261, %3 : vector<128x128xf32>
    %cst_91 = arith.constant 1.250000e+00 : f32
    %263 = vector.broadcast %cst_91 : f32 to vector<128x128xf32>
    %264 = arith.mulf %262, %263 : vector<128x128xf32>
    %265 = arith.mulf %264, %167 : vector<128x128xf32>
    %266 = arith.addf %260, %265 : vector<128x128xf32>
    %cst_92 = arith.constant 2.000000e-01 : f32
    %267 = vector.broadcast %cst_92 : f32 to vector<128x128xf32>
    %268 = arith.subf %3, %267 : vector<128x128xf32>
    %cst_93 = arith.constant 1.250000e+00 : f32
    %269 = vector.broadcast %cst_93 : f32 to vector<128x128xf32>
    %270 = arith.mulf %268, %269 : vector<128x128xf32>
    %271 = arith.mulf %270, %167 : vector<128x128xf32>
    %cst_94 = arith.constant 1.400000e+00 : f32
    %272 = vector.broadcast %cst_94 : f32 to vector<128x128xf32>
    %273 = arith.subf %272, %3 : vector<128x128xf32>
    %cst_95 = arith.constant 1.250000e+00 : f32
    %274 = vector.broadcast %cst_95 : f32 to vector<128x128xf32>
    %275 = arith.mulf %273, %274 : vector<128x128xf32>
    %276 = arith.mulf %275, %178 : vector<128x128xf32>
    %277 = arith.addf %271, %276 : vector<128x128xf32>
    %cst_96 = arith.constant 6.000000e-01 : f32
    %278 = vector.broadcast %cst_96 : f32 to vector<128x128xf32>
    %279 = arith.subf %3, %278 : vector<128x128xf32>
    %cst_97 = arith.constant 1.250000e+00 : f32
    %280 = vector.broadcast %cst_97 : f32 to vector<128x128xf32>
    %281 = arith.mulf %279, %280 : vector<128x128xf32>
    %282 = arith.mulf %281, %178 : vector<128x128xf32>
    %cst_98 = arith.constant 1.800000e+00 : f32
    %283 = vector.broadcast %cst_98 : f32 to vector<128x128xf32>
    %284 = arith.subf %283, %3 : vector<128x128xf32>
    %cst_99 = arith.constant 1.250000e+00 : f32
    %285 = vector.broadcast %cst_99 : f32 to vector<128x128xf32>
    %286 = arith.mulf %284, %285 : vector<128x128xf32>
    %287 = arith.mulf %286, %189 : vector<128x128xf32>
    %288 = arith.addf %282, %287 : vector<128x128xf32>
    %cst_100 = arith.constant 1.000000e+00 : f32
    %289 = vector.broadcast %cst_100 : f32 to vector<128x128xf32>
    %290 = arith.subf %3, %289 : vector<128x128xf32>
    %cst_101 = arith.constant 1.250000e+00 : f32
    %291 = vector.broadcast %cst_101 : f32 to vector<128x128xf32>
    %292 = arith.mulf %290, %291 : vector<128x128xf32>
    %293 = arith.mulf %292, %189 : vector<128x128xf32>
    %cst_102 = arith.constant 2.200000e+00 : f32
    %294 = vector.broadcast %cst_102 : f32 to vector<128x128xf32>
    %295 = arith.subf %294, %3 : vector<128x128xf32>
    %cst_103 = arith.constant 1.250000e+00 : f32
    %296 = vector.broadcast %cst_103 : f32 to vector<128x128xf32>
    %297 = arith.mulf %295, %296 : vector<128x128xf32>
    %298 = arith.mulf %297, %200 : vector<128x128xf32>
    %299 = arith.addf %293, %298 : vector<128x128xf32>
    %cst_104 = arith.constant -2.200000e+00 : f32
    %300 = vector.broadcast %cst_104 : f32 to vector<128x128xf32>
    %301 = arith.subf %3, %300 : vector<128x128xf32>
    %cst_105 = arith.constant 0.833333313 : f32
    %302 = vector.broadcast %cst_105 : f32 to vector<128x128xf32>
    %303 = arith.mulf %301, %302 : vector<128x128xf32>
    %304 = arith.mulf %303, %211 : vector<128x128xf32>
    %cst_106 = arith.constant -6.000000e-01 : f32
    %305 = vector.broadcast %cst_106 : f32 to vector<128x128xf32>
    %306 = arith.subf %305, %3 : vector<128x128xf32>
    %cst_107 = arith.constant 0.833333313 : f32
    %307 = vector.broadcast %cst_107 : f32 to vector<128x128xf32>
    %308 = arith.mulf %306, %307 : vector<128x128xf32>
    %309 = arith.mulf %308, %222 : vector<128x128xf32>
    %310 = arith.addf %304, %309 : vector<128x128xf32>
    %cst_108 = arith.constant -1.800000e+00 : f32
    %311 = vector.broadcast %cst_108 : f32 to vector<128x128xf32>
    %312 = arith.subf %3, %311 : vector<128x128xf32>
    %cst_109 = arith.constant 0.833333313 : f32
    %313 = vector.broadcast %cst_109 : f32 to vector<128x128xf32>
    %314 = arith.mulf %312, %313 : vector<128x128xf32>
    %315 = arith.mulf %314, %222 : vector<128x128xf32>
    %cst_110 = arith.constant -2.000000e-01 : f32
    %316 = vector.broadcast %cst_110 : f32 to vector<128x128xf32>
    %317 = arith.subf %316, %3 : vector<128x128xf32>
    %cst_111 = arith.constant 0.833333313 : f32
    %318 = vector.broadcast %cst_111 : f32 to vector<128x128xf32>
    %319 = arith.mulf %317, %318 : vector<128x128xf32>
    %320 = arith.mulf %319, %233 : vector<128x128xf32>
    %321 = arith.addf %315, %320 : vector<128x128xf32>
    %cst_112 = arith.constant -1.400000e+00 : f32
    %322 = vector.broadcast %cst_112 : f32 to vector<128x128xf32>
    %323 = arith.subf %3, %322 : vector<128x128xf32>
    %cst_113 = arith.constant 0.833333313 : f32
    %324 = vector.broadcast %cst_113 : f32 to vector<128x128xf32>
    %325 = arith.mulf %323, %324 : vector<128x128xf32>
    %326 = arith.mulf %325, %233 : vector<128x128xf32>
    %cst_114 = arith.constant 2.000000e-01 : f32
    %327 = vector.broadcast %cst_114 : f32 to vector<128x128xf32>
    %328 = arith.subf %327, %3 : vector<128x128xf32>
    %cst_115 = arith.constant 0.833333313 : f32
    %329 = vector.broadcast %cst_115 : f32 to vector<128x128xf32>
    %330 = arith.mulf %328, %329 : vector<128x128xf32>
    %331 = arith.mulf %330, %244 : vector<128x128xf32>
    %332 = arith.addf %326, %331 : vector<128x128xf32>
    %cst_116 = arith.constant -1.000000e+00 : f32
    %333 = vector.broadcast %cst_116 : f32 to vector<128x128xf32>
    %334 = arith.subf %3, %333 : vector<128x128xf32>
    %cst_117 = arith.constant 0.833333313 : f32
    %335 = vector.broadcast %cst_117 : f32 to vector<128x128xf32>
    %336 = arith.mulf %334, %335 : vector<128x128xf32>
    %337 = arith.mulf %336, %244 : vector<128x128xf32>
    %cst_118 = arith.constant 6.000000e-01 : f32
    %338 = vector.broadcast %cst_118 : f32 to vector<128x128xf32>
    %339 = arith.subf %338, %3 : vector<128x128xf32>
    %cst_119 = arith.constant 0.833333313 : f32
    %340 = vector.broadcast %cst_119 : f32 to vector<128x128xf32>
    %341 = arith.mulf %339, %340 : vector<128x128xf32>
    %342 = arith.mulf %341, %255 : vector<128x128xf32>
    %343 = arith.addf %337, %342 : vector<128x128xf32>
    %cst_120 = arith.constant -6.000000e-01 : f32
    %344 = vector.broadcast %cst_120 : f32 to vector<128x128xf32>
    %345 = arith.subf %3, %344 : vector<128x128xf32>
    %cst_121 = arith.constant 0.833333313 : f32
    %346 = vector.broadcast %cst_121 : f32 to vector<128x128xf32>
    %347 = arith.mulf %345, %346 : vector<128x128xf32>
    %348 = arith.mulf %347, %255 : vector<128x128xf32>
    %cst_122 = arith.constant 1.000000e+00 : f32
    %349 = vector.broadcast %cst_122 : f32 to vector<128x128xf32>
    %350 = arith.subf %349, %3 : vector<128x128xf32>
    %cst_123 = arith.constant 0.833333313 : f32
    %351 = vector.broadcast %cst_123 : f32 to vector<128x128xf32>
    %352 = arith.mulf %350, %351 : vector<128x128xf32>
    %353 = arith.mulf %352, %266 : vector<128x128xf32>
    %354 = arith.addf %348, %353 : vector<128x128xf32>
    %cst_124 = arith.constant -2.000000e-01 : f32
    %355 = vector.broadcast %cst_124 : f32 to vector<128x128xf32>
    %356 = arith.subf %3, %355 : vector<128x128xf32>
    %cst_125 = arith.constant 0.833333313 : f32
    %357 = vector.broadcast %cst_125 : f32 to vector<128x128xf32>
    %358 = arith.mulf %356, %357 : vector<128x128xf32>
    %359 = arith.mulf %358, %266 : vector<128x128xf32>
    %cst_126 = arith.constant 1.400000e+00 : f32
    %360 = vector.broadcast %cst_126 : f32 to vector<128x128xf32>
    %361 = arith.subf %360, %3 : vector<128x128xf32>
    %cst_127 = arith.constant 0.833333313 : f32
    %362 = vector.broadcast %cst_127 : f32 to vector<128x128xf32>
    %363 = arith.mulf %361, %362 : vector<128x128xf32>
    %364 = arith.mulf %363, %277 : vector<128x128xf32>
    %365 = arith.addf %359, %364 : vector<128x128xf32>
    %cst_128 = arith.constant 2.000000e-01 : f32
    %366 = vector.broadcast %cst_128 : f32 to vector<128x128xf32>
    %367 = arith.subf %3, %366 : vector<128x128xf32>
    %cst_129 = arith.constant 0.833333313 : f32
    %368 = vector.broadcast %cst_129 : f32 to vector<128x128xf32>
    %369 = arith.mulf %367, %368 : vector<128x128xf32>
    %370 = arith.mulf %369, %277 : vector<128x128xf32>
    %cst_130 = arith.constant 1.800000e+00 : f32
    %371 = vector.broadcast %cst_130 : f32 to vector<128x128xf32>
    %372 = arith.subf %371, %3 : vector<128x128xf32>
    %cst_131 = arith.constant 0.833333313 : f32
    %373 = vector.broadcast %cst_131 : f32 to vector<128x128xf32>
    %374 = arith.mulf %372, %373 : vector<128x128xf32>
    %375 = arith.mulf %374, %288 : vector<128x128xf32>
    %376 = arith.addf %370, %375 : vector<128x128xf32>
    %cst_132 = arith.constant 6.000000e-01 : f32
    %377 = vector.broadcast %cst_132 : f32 to vector<128x128xf32>
    %378 = arith.subf %3, %377 : vector<128x128xf32>
    %cst_133 = arith.constant 0.833333313 : f32
    %379 = vector.broadcast %cst_133 : f32 to vector<128x128xf32>
    %380 = arith.mulf %378, %379 : vector<128x128xf32>
    %381 = arith.mulf %380, %288 : vector<128x128xf32>
    %cst_134 = arith.constant 2.200000e+00 : f32
    %382 = vector.broadcast %cst_134 : f32 to vector<128x128xf32>
    %383 = arith.subf %382, %3 : vector<128x128xf32>
    %cst_135 = arith.constant 0.833333313 : f32
    %384 = vector.broadcast %cst_135 : f32 to vector<128x128xf32>
    %385 = arith.mulf %383, %384 : vector<128x128xf32>
    %386 = arith.mulf %385, %299 : vector<128x128xf32>
    %387 = arith.addf %381, %386 : vector<128x128xf32>
    %388 = arith.truncf %310 : vector<128x128xf32> to vector<128x128xbf16>
    %c0_136 = arith.constant 0 : index
    %c0_137 = arith.constant 0 : index
    %c0_138 = arith.constant 0 : index
    %389 = vector.load %arg4[%c0_136, %c0_137, %c0_138] : memref<8x128x128xbf16, #tpu.memory_space<vmem>>, vector<1x128x128xbf16>
    %390 = vector.shape_cast %389 : vector<1x128x128xbf16> to vector<128x128xbf16>
    %cst_139 = arith.constant dense<0.000000e+00> : vector<128x128xf32>
    %391 = tpu.matmul %388, %390, %cst_139 {dimension_numbers = #tpu.dot_dimension_numbers<[1], [0], [0], [1], [0, 0, 1, 1], [], []>} : vector<128x128xbf16>, vector<128x128xbf16>, vector<128x128xf32> -> vector<128x128xf32>
    %392 = arith.addf %13, %391 : vector<128x128xf32>
    %393 = arith.truncf %321 : vector<128x128xf32> to vector<128x128xbf16>
    %c1 = arith.constant 1 : index
    %c0_140 = arith.constant 0 : index
    %c0_141 = arith.constant 0 : index
    %394 = vector.load %arg4[%c1, %c0_140, %c0_141] : memref<8x128x128xbf16, #tpu.memory_space<vmem>>, vector<1x128x128xbf16>
    %395 = vector.shape_cast %394 : vector<1x128x128xbf16> to vector<128x128xbf16>
    %cst_142 = arith.constant dense<0.000000e+00> : vector<128x128xf32>
    %396 = tpu.matmul %393, %395, %cst_142 {dimension_numbers = #tpu.dot_dimension_numbers<[1], [0], [0], [1], [0, 0, 1, 1], [], []>} : vector<128x128xbf16>, vector<128x128xbf16>, vector<128x128xf32> -> vector<128x128xf32>
    %397 = arith.addf %392, %396 : vector<128x128xf32>
    %398 = arith.truncf %332 : vector<128x128xf32> to vector<128x128xbf16>
    %c2 = arith.constant 2 : index
    %c0_143 = arith.constant 0 : index
    %c0_144 = arith.constant 0 : index
    %399 = vector.load %arg4[%c2, %c0_143, %c0_144] : memref<8x128x128xbf16, #tpu.memory_space<vmem>>, vector<1x128x128xbf16>
    %400 = vector.shape_cast %399 : vector<1x128x128xbf16> to vector<128x128xbf16>
    %cst_145 = arith.constant dense<0.000000e+00> : vector<128x128xf32>
    %401 = tpu.matmul %398, %400, %cst_145 {dimension_numbers = #tpu.dot_dimension_numbers<[1], [0], [0], [1], [0, 0, 1, 1], [], []>} : vector<128x128xbf16>, vector<128x128xbf16>, vector<128x128xf32> -> vector<128x128xf32>
    %402 = arith.addf %397, %401 : vector<128x128xf32>
    %403 = arith.truncf %343 : vector<128x128xf32> to vector<128x128xbf16>
    %c3 = arith.constant 3 : index
    %c0_146 = arith.constant 0 : index
    %c0_147 = arith.constant 0 : index
    %404 = vector.load %arg4[%c3, %c0_146, %c0_147] : memref<8x128x128xbf16, #tpu.memory_space<vmem>>, vector<1x128x128xbf16>
    %405 = vector.shape_cast %404 : vector<1x128x128xbf16> to vector<128x128xbf16>
    %cst_148 = arith.constant dense<0.000000e+00> : vector<128x128xf32>
    %406 = tpu.matmul %403, %405, %cst_148 {dimension_numbers = #tpu.dot_dimension_numbers<[1], [0], [0], [1], [0, 0, 1, 1], [], []>} : vector<128x128xbf16>, vector<128x128xbf16>, vector<128x128xf32> -> vector<128x128xf32>
    %407 = arith.addf %402, %406 : vector<128x128xf32>
    %408 = arith.truncf %354 : vector<128x128xf32> to vector<128x128xbf16>
    %c4 = arith.constant 4 : index
    %c0_149 = arith.constant 0 : index
    %c0_150 = arith.constant 0 : index
    %409 = vector.load %arg4[%c4, %c0_149, %c0_150] : memref<8x128x128xbf16, #tpu.memory_space<vmem>>, vector<1x128x128xbf16>
    %410 = vector.shape_cast %409 : vector<1x128x128xbf16> to vector<128x128xbf16>
    %cst_151 = arith.constant dense<0.000000e+00> : vector<128x128xf32>
    %411 = tpu.matmul %408, %410, %cst_151 {dimension_numbers = #tpu.dot_dimension_numbers<[1], [0], [0], [1], [0, 0, 1, 1], [], []>} : vector<128x128xbf16>, vector<128x128xbf16>, vector<128x128xf32> -> vector<128x128xf32>
    %412 = arith.addf %407, %411 : vector<128x128xf32>
    %413 = arith.truncf %365 : vector<128x128xf32> to vector<128x128xbf16>
    %c5 = arith.constant 5 : index
    %c0_152 = arith.constant 0 : index
    %c0_153 = arith.constant 0 : index
    %414 = vector.load %arg4[%c5, %c0_152, %c0_153] : memref<8x128x128xbf16, #tpu.memory_space<vmem>>, vector<1x128x128xbf16>
    %415 = vector.shape_cast %414 : vector<1x128x128xbf16> to vector<128x128xbf16>
    %cst_154 = arith.constant dense<0.000000e+00> : vector<128x128xf32>
    %416 = tpu.matmul %413, %415, %cst_154 {dimension_numbers = #tpu.dot_dimension_numbers<[1], [0], [0], [1], [0, 0, 1, 1], [], []>} : vector<128x128xbf16>, vector<128x128xbf16>, vector<128x128xf32> -> vector<128x128xf32>
    %417 = arith.addf %412, %416 : vector<128x128xf32>
    %418 = arith.truncf %376 : vector<128x128xf32> to vector<128x128xbf16>
    %c6 = arith.constant 6 : index
    %c0_155 = arith.constant 0 : index
    %c0_156 = arith.constant 0 : index
    %419 = vector.load %arg4[%c6, %c0_155, %c0_156] : memref<8x128x128xbf16, #tpu.memory_space<vmem>>, vector<1x128x128xbf16>
    %420 = vector.shape_cast %419 : vector<1x128x128xbf16> to vector<128x128xbf16>
    %cst_157 = arith.constant dense<0.000000e+00> : vector<128x128xf32>
    %421 = tpu.matmul %418, %420, %cst_157 {dimension_numbers = #tpu.dot_dimension_numbers<[1], [0], [0], [1], [0, 0, 1, 1], [], []>} : vector<128x128xbf16>, vector<128x128xbf16>, vector<128x128xf32> -> vector<128x128xf32>
    %422 = arith.addf %417, %421 : vector<128x128xf32>
    %423 = arith.truncf %387 : vector<128x128xf32> to vector<128x128xbf16>
    %c7 = arith.constant 7 : index
    %c0_158 = arith.constant 0 : index
    %c0_159 = arith.constant 0 : index
    %424 = vector.load %arg4[%c7, %c0_158, %c0_159] : memref<8x128x128xbf16, #tpu.memory_space<vmem>>, vector<1x128x128xbf16>
    %425 = vector.shape_cast %424 : vector<1x128x128xbf16> to vector<128x128xbf16>
    %cst_160 = arith.constant dense<0.000000e+00> : vector<128x128xf32>
    %426 = tpu.matmul %423, %425, %cst_160 {dimension_numbers = #tpu.dot_dimension_numbers<[1], [0], [0], [1], [0, 0, 1, 1], [], []>} : vector<128x128xbf16>, vector<128x128xbf16>, vector<128x128xf32> -> vector<128x128xf32>
    %427 = arith.addf %422, %426 : vector<128x128xf32>
    %c0_161 = arith.constant 0 : index
    %c0_162 = arith.constant 0 : index
    %428 = vector.load %arg6[%c0_161, %c0_162] : memref<128x128xf32, #tpu.memory_space<vmem>>, vector<128x128xf32>
    %429 = arith.addf %428, %427 : vector<128x128xf32>
    %c0_163 = arith.constant 0 : index
    %c0_164 = arith.constant 0 : index
    %430 = vector.load %arg6[%c0_163, %c0_164] : memref<128x128xf32, #tpu.memory_space<vmem>>, vector<128x128xf32>
    tpu.vector_store %arg6[%c0_163, %c0_164], %429 {strides = array<i32>} : memref<128x128xf32, #tpu.memory_space<vmem>>, vector<128x128xf32>,
    %c0_i32_165 = arith.constant 0 : i32
    %431 = arith.cmpi eq, %arg1, %c0_i32_165 : i32
    %432 = arith.extui %431 : i1 to i32
    %c0_i32_166 = arith.constant 0 : i32
    %433 = arith.cmpi ne, %432, %c0_i32_166 : i32
    scf.if %433 {
      %c0_167 = arith.constant 0 : index
      %c0_168 = arith.constant 0 : index
      %434 = vector.load %arg6[%c0_167, %c0_168] : memref<128x128xf32, #tpu.memory_space<vmem>>, vector<128x128xf32>
      %435 = arith.truncf %434 : vector<128x128xf32> to vector<128x128xbf16>
      %c0_169 = arith.constant 0 : index
      %c0_170 = arith.constant 0 : index
      %436 = vector.load %arg5[%c0_169, %c0_170] : memref<128x128xbf16, #tpu.memory_space<vmem>>, vector<128x128xbf16>
      tpu.vector_store %arg5[%c0_169, %c0_170], %435 {strides = array<i32>} : memref<128x128xbf16, #tpu.memory_space<vmem>>, vector<128x128xbf16>,
    } else {
    }
    return
  }
  func.func @transform_0(%arg0: i32, %arg1: i32) -> (i32, i32) {
    %c0_i32 = arith.constant 0 : i32
    return %arg0, %arg1 : i32, i32
  }
  func.func @transform_1(%arg0: i32, %arg1: i32) -> (i32, i32) {
    %c0_i32 = arith.constant 0 : i32
    %c0_i32_0 = arith.constant 0 : i32
    return %arg1, %c0_i32 : i32, i32
  }
  func.func @transform_2(%arg0: i32, %arg1: i32) -> (i32, i32, i32) {
    %c0_i32 = arith.constant 0 : i32
    %c0_i32_0 = arith.constant 0 : i32
    %c0_i32_1 = arith.constant 0 : i32
    return %c0_i32, %arg1, %c0_i32_0 : i32, i32, i32
  }
  func.func @transform_3(%arg0: i32, %arg1: i32) -> (i32, i32) {
    %c0_i32 = arith.constant 0 : i32
    %c0_i32_0 = arith.constant 0 : i32
    return %arg0, %c0_i32 : i32, i32
  }
}

module attributes {stable_mosaic.version = 11 : i64} {
  func.func @_aggregate_kernel(%arg0: i32, %arg1: i32, %arg2: memref<128x128xbf16, #tpu.memory_space<vmem>>, %arg3: memref<128x128xbf16, #tpu.memory_space<vmem>>, %arg4: memref<128x128xf32, #tpu.memory_space<vmem>>, %arg5: memref<128x128xf32, #tpu.memory_space<vmem>>) attributes {dimension_semantics = [#tpu.dimension_semantics<parallel>, #tpu.dimension_semantics<arbitrary>], iteration_bounds = array<i64: 1, 1>, scalar_prefetch = 0 : i64, scratch_operands = 1 : i64, tpu.core_type = #tpu.core_type<tc>, window_params = [{transform_indices = @transform_0, window_bounds = array<i64: 128, 128>}, {transform_indices = @transform_1, window_bounds = array<i64: 128, 128>}, {transform_indices = @transform_2, window_bounds = array<i64: 128, 128>}]} {
    %c0_i32 = arith.constant 0 : i32
    %0 = arith.cmpi eq, %arg1, %c0_i32 : i32
    %1 = arith.extui %0 : i1 to i32
    %c0_i32_0 = arith.constant 0 : i32
    %2 = arith.cmpi ne, %1, %c0_i32_0 : i32
    scf.if %2 {
      %cst_10 = arith.constant 0.000000e+00 : f32
      %12 = vector.broadcast %cst_10 : f32 to vector<128x128xf32>
      %c0_11 = arith.constant 0 : index
      %c0_12 = arith.constant 0 : index
      %13 = vector.load %arg5[%c0_11, %c0_12] : memref<128x128xf32, #tpu.memory_space<vmem>>, vector<128x128xf32>
      tpu.vector_store %arg5[%c0_11, %c0_12], %12 {strides = array<i32>} : memref<128x128xf32, #tpu.memory_space<vmem>>, vector<128x128xf32>,
    } else {
    }
    %c0 = arith.constant 0 : index
    %c0_1 = arith.constant 0 : index
    %3 = vector.load %arg5[%c0, %c0_1] : memref<128x128xf32, #tpu.memory_space<vmem>>, vector<128x128xf32>
    %c0_2 = arith.constant 0 : index
    %c0_3 = arith.constant 0 : index
    %4 = vector.load %arg2[%c0_2, %c0_3] : memref<128x128xbf16, #tpu.memory_space<vmem>>, vector<128x128xbf16>
    %c0_4 = arith.constant 0 : index
    %c0_5 = arith.constant 0 : index
    %5 = vector.load %arg3[%c0_4, %c0_5] : memref<128x128xbf16, #tpu.memory_space<vmem>>, vector<128x128xbf16>
    %cst = arith.constant dense<0.000000e+00> : vector<128x128xf32>
    %6 = tpu.matmul %4, %5, %cst {dimension_numbers = #tpu.dot_dimension_numbers<[1], [0], [0], [1], [0, 0, 1, 1], [], []>} : vector<128x128xbf16>, vector<128x128xbf16>, vector<128x128xf32> -> vector<128x128xf32>
    %7 = arith.addf %3, %6 : vector<128x128xf32>
    %c0_6 = arith.constant 0 : index
    %c0_7 = arith.constant 0 : index
    %8 = vector.load %arg5[%c0_6, %c0_7] : memref<128x128xf32, #tpu.memory_space<vmem>>, vector<128x128xf32>
    tpu.vector_store %arg5[%c0_6, %c0_7], %7 {strides = array<i32>} : memref<128x128xf32, #tpu.memory_space<vmem>>, vector<128x128xf32>,
    %c0_i32_8 = arith.constant 0 : i32
    %9 = arith.cmpi eq, %arg1, %c0_i32_8 : i32
    %10 = arith.extui %9 : i1 to i32
    %c0_i32_9 = arith.constant 0 : i32
    %11 = arith.cmpi ne, %10, %c0_i32_9 : i32
    scf.if %11 {
      %c0_10 = arith.constant 0 : index
      %c0_11 = arith.constant 0 : index
      %12 = vector.load %arg5[%c0_10, %c0_11] : memref<128x128xf32, #tpu.memory_space<vmem>>, vector<128x128xf32>
      %13 = tpu.iota {dimensions = array<i32: 1>} : vector<128x128xi32>
      %c8_i32 = arith.constant 8 : i32
      %14 = vector.broadcast %c8_i32 : i32 to vector<128x128xi32>
      %15 = arith.cmpi slt, %13, %14 : vector<128x128xi32>
      %cst_12 = arith.constant -1.000000e+30 : f32
      %16 = vector.broadcast %cst_12 : f32 to vector<128x128xf32>
      %17 = arith.select %15, %12, %16 : vector<128x128xi1>, vector<128x128xf32>
      %cst_13 = arith.constant dense<0xFF800000> : vector<128xf32>
      %18 = vector.multi_reduction <maximumf>, %17, %cst_13 [1] : vector<128x128xf32> to vector<128xf32>
      %19 = vector.shape_cast %18 : vector<128xf32> to vector<128x1xf32>
      %20 = vector.broadcast %19 : vector<128x1xf32> to vector<128x128xf32>
      %21 = arith.subf %17, %20 : vector<128x128xf32>
      %22 = math.exp %21 : vector<128x128xf32>
      %cst_14 = arith.constant dense<0.000000e+00> : vector<128xf32>
      %23 = vector.multi_reduction <add>, %22, %cst_14 [1] : vector<128x128xf32> to vector<128xf32>
      %24 = vector.shape_cast %23 : vector<128xf32> to vector<128x1xf32>
      %25 = math.log %24 : vector<128x1xf32>
      %26 = vector.broadcast %25 : vector<128x1xf32> to vector<128x128xf32>
      %27 = arith.subf %21, %26 : vector<128x128xf32>
      %c0_15 = arith.constant 0 : index
      %c0_16 = arith.constant 0 : index
      %28 = vector.load %arg4[%c0_15, %c0_16] : memref<128x128xf32, #tpu.memory_space<vmem>>, vector<128x128xf32>
      tpu.vector_store %arg4[%c0_15, %c0_16], %27 {strides = array<i32>} : memref<128x128xf32, #tpu.memory_space<vmem>>, vector<128x128xf32>,
    } else {
    }
    return
  }
  func.func @transform_0(%arg0: i32, %arg1: i32) -> (i32, i32) {
    %c0_i32 = arith.constant 0 : i32
    return %arg0, %arg1 : i32, i32
  }
  func.func @transform_1(%arg0: i32, %arg1: i32) -> (i32, i32) {
    %c0_i32 = arith.constant 0 : i32
    %c0_i32_0 = arith.constant 0 : i32
    return %arg1, %c0_i32 : i32, i32
  }
  func.func @transform_2(%arg0: i32, %arg1: i32) -> (i32, i32) {
    %c0_i32 = arith.constant 0 : i32
    %c0_i32_0 = arith.constant 0 : i32
    return %arg0, %c0_i32 : i32, i32
  }
}

</mosaic_0001>

<llo_original>
// kernel: gcn_with_kan_forward.7
$region0: #{gcn_with_kan_forward.7}
  #allocation0 [shape = 'u32[]', space=smem, size = 0x4, offset = 0x4, fixed_abs, tag = 'smem constant byte address 0x4 - core index']
  #allocation1 [shape = 'u32[144,128]{1,0:T(1,128)}', space=vmem, size = 0x12000, scoped, tag = 'internal scratch']
  #allocation2 [shape = 'f32[128,128]{1,0:T(8,128)}', space=vmem, size = 0x10000, scoped, tag = 'scratch operand']
  %s0 = inlined_call_operand.vmem [shape: bf16[128,128], index: 0, kind: input, shape index: {}]
  %s1 = inlined_call_operand.vmem [shape: bf16[128,128], index: 1, kind: input, shape index: {}]
  %s2 = inlined_call_operand.vmem [shape: f32[128,128], index: 2, kind: output, shape index: {}]
  %s3 = sld [smem:[#allocation0]]
  $region26: #{gcn_with_kan_forward.7} parent=0
    _
  %s5 = ssub.s32 1, %s3
  %s6 = scalar_select 0, %s5, %s3
  // Predicated region
  $region2: #{gcn_with_kan_forward.7} parent=0 // pred_check
    _
  $region3: #{gcn_with_kan_forward.7} parent=0 // pred_check_branch
    %8 = sbr.rel (0) target = $region5
  $region4: #{gcn_with_kan_forward.7} parent=0 // pred_region
    _
  $region5: #{gcn_with_kan_forward.7} parent=0 // pred_fallthru
    _
  // Predicated region
  $region6: #{gcn_with_kan_forward.7} parent=0 // pred_check
    _
  $region7: #{gcn_with_kan_forward.7} parent=0 // pred_check_branch
    %10 = sbr.rel (0) target = $region9
  $region8: #{gcn_with_kan_forward.7} parent=0 // pred_region
    _
  $region9: #{gcn_with_kan_forward.7} parent=0 // pred_fallthru
    _
  %p12 = scmp.eq.s32.totalorder 0, 0
  // Predicated region
  $region10: #{gcn_with_kan_forward.7} parent=0 // pred_check
    %p13 = pneg %p12
  $region11: #{gcn_with_kan_forward.7} parent=0 // pred_check_branch
    %15 = sbr.rel (%p13) target = $region13
  $region12: #{gcn_with_kan_forward.7} parent=0 // pred_region
    %16 = vst [vmem:[#allocation2] sm:$0xff] 0.0
    %17 = vst [vmem:[#allocation2 + $0x8] sm:$0xff] 0.0
    %18 = vst [vmem:[#allocation2 + $0x10] sm:$0xff] 0.0
    %19 = vst [vmem:[#allocation2 + $0x18] sm:$0xff] 0.0
    %20 = vst [vmem:[#allocation2 + $0x20] sm:$0xff] 0.0
    %21 = vst [vmem:[#allocation2 + $0x28] sm:$0xff] 0.0
    %22 = vst [vmem:[#allocation2 + $0x30] sm:$0xff] 0.0
    %23 = vst [vmem:[#allocation2 + $0x38] sm:$0xff] 0.0
    %24 = vst [vmem:[#allocation2 + $0x40] sm:$0xff] 0.0
    %25 = vst [vmem:[#allocation2 + $0x48] sm:$0xff] 0.0
    %26 = vst [vmem:[#allocation2 + $0x50] sm:$0xff] 0.0
    %27 = vst [vmem:[#allocation2 + $0x58] sm:$0xff] 0.0
    %28 = vst [vmem:[#allocation2 + $0x60] sm:$0xff] 0.0
    %29 = vst [vmem:[#allocation2 + $0x68] sm:$0xff] 0.0
    %30 = vst [vmem:[#allocation2 + $0x70] sm:$0xff] 0.0
    %31 = vst [vmem:[#allocation2 + $0x78] sm:$0xff] 0.0
  $region13: #{gcn_with_kan_forward.7} parent=0 // pred_fallthru
    _
  %v32 = vld [vmem:[#allocation2] sm:$0xff]
  %v33 = vld [vmem:[#allocation2 + $0x8] sm:$0xff]
  %v34 = vld [vmem:[#allocation2 + $0x10] sm:$0xff]
  %v35 = vld [vmem:[#allocation2 + $0x18] sm:$0xff]
  %v36 = vld [vmem:[#allocation2 + $0x20] sm:$0xff]
  %v37 = vld [vmem:[#allocation2 + $0x28] sm:$0xff]
  %v38 = vld [vmem:[#allocation2 + $0x30] sm:$0xff]
  %v39 = vld [vmem:[#allocation2 + $0x38] sm:$0xff]
  %v40 = vld [vmem:[#allocation2 + $0x40] sm:$0xff]
  %v41 = vld [vmem:[#allocation2 + $0x48] sm:$0xff]
  %v42 = vld [vmem:[#allocation2 + $0x50] sm:$0xff]
  %v43 = vld [vmem:[#allocation2 + $0x58] sm:$0xff]
  %v44 = vld [vmem:[#allocation2 + $0x60] sm:$0xff]
  %v45 = vld [vmem:[#allocation2 + $0x68] sm:$0xff]
  %v46 = vld [vmem:[#allocation2 + $0x70] sm:$0xff]
  %v47 = vld [vmem:[#allocation2 + $0x78] sm:$0xff]
  %v48 = vld [vmem:[%s0] sm:$0xf]
  %v49 = vld [vmem:[%s0 + $0x4] sm:$0xf]
  %v50 = vld [vmem:[%s0 + $0x8] sm:$0xf]
  %v51 = vld [vmem:[%s0 + $0xc] sm:$0xf]
  %v52 = vld [vmem:[%s0 + $0x10] sm:$0xf]
  %v53 = vld [vmem:[%s0 + $0x14] sm:$0xf]
  %v54 = vld [vmem:[%s0 + $0x18] sm:$0xf]
  %v55 = vld [vmem:[%s0 + $0x1c] sm:$0xf]
  %v56 = vld [vmem:[%s0 + $0x20] sm:$0xf]
  %v57 = vld [vmem:[%s0 + $0x24] sm:$0xf]
  %v58 = vld [vmem:[%s0 + $0x28] sm:$0xf]
  %v59 = vld [vmem:[%s0 + $0x2c] sm:$0xf]
  %v60 = vld [vmem:[%s0 + $0x30] sm:$0xf]
  %v61 = vld [vmem:[%s0 + $0x34] sm:$0xf]
  %v62 = vld [vmem:[%s0 + $0x38] sm:$0xf]
  %v63 = vld [vmem:[%s0 + $0x3c] sm:$0xf]
  %v64 = vld [vmem:[%s1] sm:$0xf]
  %v65 = vld [vmem:[%s1 + $0x4] sm:$0xf]
  %v66 = vld [vmem:[%s1 + $0x8] sm:$0xf]
  %v67 = vld [vmem:[%s1 + $0xc] sm:$0xf]
  %v68 = vld [vmem:[%s1 + $0x10] sm:$0xf]
  %v69 = vld [vmem:[%s1 + $0x14] sm:$0xf]
  %v70 = vld [vmem:[%s1 + $0x18] sm:$0xf]
  %v71 = vld [vmem:[%s1 + $0x1c] sm:$0xf]
  %v72 = vld [vmem:[%s1 + $0x20] sm:$0xf]
  %v73 = vld [vmem:[%s1 + $0x24] sm:$0xf]
  %v74 = vld [vmem:[%s1 + $0x28] sm:$0xf]
  %v75 = vld [vmem:[%s1 + $0x2c] sm:$0xf]
  %v76 = vld [vmem:[%s1 + $0x30] sm:$0xf]
  %v77 = vld [vmem:[%s1 + $0x34] sm:$0xf]
  %v78 = vld [vmem:[%s1 + $0x38] sm:$0xf]
  %v79 = vld [vmem:[%s1 + $0x3c] sm:$0xf]
  %v96 = vunpack.c.l.b16 %v48
  %v97 = vunpack.c.l.b16 %v49
  %v98 = vunpack.c.l.b16 %v50
  %v99 = vunpack.c.l.b16 %v51
  %v100 = vunpack.c.l.b16 %v52
  %v101 = vunpack.c.l.b16 %v53
  %v102 = vunpack.c.l.b16 %v54
  %v103 = vunpack.c.l.b16 %v55
  %v104 = vunpack.c.l.b16 %v56
  %v105 = vunpack.c.l.b16 %v57
  %v106 = vunpack.c.l.b16 %v58
  %v107 = vunpack.c.l.b16 %v59
  %v108 = vunpack.c.l.b16 %v60
  %v109 = vunpack.c.l.b16 %v61
  %v110 = vunpack.c.l.b16 %v62
  %v111 = vunpack.c.l.b16 %v63
  %v112 = vpack.c.b16 %v97, %v96
  %v113 = vpack.c.b16 %v99, %v98
  %v114 = vpack.c.b16 %v101, %v100
  %v115 = vpack.c.b16 %v103, %v102
  %v116 = vpack.c.b16 %v105, %v104
  %v117 = vpack.c.b16 %v107, %v106
  %v118 = vpack.c.b16 %v109, %v108
  %v119 = vpack.c.b16 %v111, %v110
  %v144 = vunpack.c.l.b16 %v64
  %v145 = vunpack.c.l.b16 %v65
  %v146 = vunpack.c.l.b16 %v66
  %v147 = vunpack.c.l.b16 %v67
  %v148 = vunpack.c.l.b16 %v68
  %v149 = vunpack.c.l.b16 %v69
  %v150 = vunpack.c.l.b16 %v70
  %v151 = vunpack.c.l.b16 %v71
  %v152 = vunpack.c.l.b16 %v72
  %v153 = vunpack.c.l.b16 %v73
  %v154 = vunpack.c.l.b16 %v74
  %v155 = vunpack.c.l.b16 %v75
  %v156 = vunpack.c.l.b16 %v76
  %v157 = vunpack.c.l.b16 %v77
  %v158 = vunpack.c.l.b16 %v78
  %v159 = vunpack.c.l.b16 %v79
  %v160 = vpack.c.b16 %v145, %v144
  %v161 = vpack.c.b16 %v147, %v146
  %v162 = vpack.c.b16 %v149, %v148
  %v163 = vpack.c.b16 %v151, %v150
  %v164 = vpack.c.b16 %v153, %v152
  %v165 = vpack.c.b16 %v155, %v154
  %v166 = vpack.c.b16 %v157, %v156
  %v167 = vpack.c.b16 %v159, %v158
  %176 = vmatprep.subr.bf16.mxu0 0
  %177 = vmatpush1.bf16.msra.mxu0 %v160
  %178 = vmatprep.subr.bf16.mxu0 0
  %179 = vmatpush1.bf16.msra.mxu0 %v161
  %180 = vmatprep.subr.bf16.mxu0 0
  %181 = vmatpush1.bf16.msra.mxu0 %v162
  %182 = vmatprep.subr.bf16.mxu0 0
  %183 = vmatpush1.bf16.msra.mxu0 %v163
  %184 = vmatprep.subr.bf16.mxu0 0
  %185 = vmatpush1.bf16.msra.mxu0 %v164
  %186 = vmatprep.subr.bf16.mxu0 0
  %187 = vmatpush1.bf16.msra.mxu0 %v165
  %188 = vmatprep.subr.bf16.mxu0 0
  %189 = vmatpush1.bf16.msra.mxu0 %v166
  %190 = vmatprep.subr.bf16.mxu0 0
  %191 = vmatpush1.bf16.msra.mxu0 %v167
  %192 = vmatprep.subr.bf16.mxu0 0
  %193 = vmatpush1.bf16.msra.mxu0 0
  %194 = vmatprep.subr.bf16.mxu0 0
  %195 = vmatpush1.bf16.msra.mxu0 0
  %196 = vmatprep.subr.bf16.mxu0 0
  %197 = vmatpush1.bf16.msra.mxu0 0
  %198 = vmatprep.subr.bf16.mxu0 0
  %199 = vmatpush1.bf16.msra.mxu0 0
  %200 = vmatprep.subr.bf16.mxu0 0
  %201 = vmatpush1.bf16.msra.mxu0 0
  %202 = vmatprep.subr.bf16.mxu0 0
  %203 = vmatpush1.bf16.msra.mxu0 0
  %204 = vmatprep.subr.bf16.mxu0 0
  %205 = vmatpush1.bf16.msra.mxu0 0
  %206 = vmatprep.subr.bf16.mxu0 0
  %207 = vmatpush1.bf16.msra.mxu0 0
  %208 = vmatprep.mubr.bf16.mxu0 0
  %209 = vmatmul.mubr.bf16.gmra.mrb[0].mxu0 %v112
  %v210 = vpop.f32.mrb[0].mxu0
  %v211 = vadd.f32 0.0, %v210
  %v212 = vpop.f32.mrb[0].mxu0
  %v213 = vpop.f32.mrb[0].mxu0
  %v214 = vadd.f32 0.0, %v213
  %v215 = vpop.f32.mrb[0].mxu0
  %216 = vmatprep.mubr.bf16.mxu0 0
  %217 = vmatmul.mubr.bf16.gmra.mrb[0].mxu0 %v113
  %v218 = vpop.f32.mrb[0].mxu0
  %v219 = vadd.f32 0.0, %v218
  %v220 = vpop.f32.mrb[0].mxu0
  %v221 = vpop.f32.mrb[0].mxu0
  %v222 = vadd.f32 0.0, %v221
  %v223 = vpop.f32.mrb[0].mxu0
  %224 = vmatprep.mubr.bf16.mxu0 0
  %225 = vmatmul.mubr.bf16.gmra.mrb[0].mxu0 %v114
  %v226 = vpop.f32.mrb[0].mxu0
  %v227 = vadd.f32 0.0, %v226
  %v228 = vpop.f32.mrb[0].mxu0
  %v229 = vpop.f32.mrb[0].mxu0
  %v230 = vadd.f32 0.0, %v229
  %v231 = vpop.f32.mrb[0].mxu0
  %232 = vmatprep.mubr.bf16.mxu0 0
  %233 = vmatmul.mubr.bf16.gmra.mrb[0].mxu0 %v115
  %v234 = vpop.f32.mrb[0].mxu0
  %v235 = vadd.f32 0.0, %v234
  %v236 = vpop.f32.mrb[0].mxu0
  %v237 = vpop.f32.mrb[0].mxu0
  %v238 = vadd.f32 0.0, %v237
  %v239 = vpop.f32.mrb[0].mxu0
  %240 = vmatprep.mubr.bf16.mxu0 0
  %241 = vmatmul.mubr.bf16.gmra.mrb[0].mxu0 %v116
  %v242 = vpop.f32.mrb[0].mxu0
  %v243 = vadd.f32 0.0, %v242
  %v244 = vpop.f32.mrb[0].mxu0
  %v245 = vpop.f32.mrb[0].mxu0
  %v246 = vadd.f32 0.0, %v245
  %v247 = vpop.f32.mrb[0].mxu0
  %248 = vmatprep.mubr.bf16.mxu0 0
  %249 = vmatmul.mubr.bf16.gmra.mrb[0].mxu0 %v117
  %v250 = vpop.f32.mrb[0].mxu0
  %v251 = vadd.f32 0.0, %v250
  %v252 = vpop.f32.mrb[0].mxu0
  %v253 = vpop.f32.mrb[0].mxu0
  %v254 = vadd.f32 0.0, %v253
  %v255 = vpop.f32.mrb[0].mxu0
  %256 = vmatprep.mubr.bf16.mxu0 0
  %257 = vmatmul.mubr.bf16.gmra.mrb[0].mxu0 %v118
  %v258 = vpop.f32.mrb[0].mxu0
  %v259 = vadd.f32 0.0, %v258
  %v260 = vpop.f32.mrb[0].mxu0
  %v261 = vpop.f32.mrb[0].mxu0
  %v262 = vadd.f32 0.0, %v261
  %v263 = vpop.f32.mrb[0].mxu0
  %264 = vmatprep.mubr.bf16.mxu0 0
  %265 = vmatmul.mubr.bf16.gmra.mrb[0].mxu0 %v119
  %v266 = vpop.f32.mrb[0].mxu0
  %v267 = vadd.f32 0.0, %v266
  %v268 = vpop.f32.mrb[0].mxu0
  %v269 = vpop.f32.mrb[0].mxu0
  %v270 = vadd.f32 0.0, %v269
  %v271 = vpop.f32.mrb[0].mxu0
  %272 = vdwg.mxu0
  %v273 = vadd.f32 %v32, %v211
  %v274 = vadd.f32 %v33, %v214
  %v275 = vadd.f32 %v34, %v219
  %v276 = vadd.f32 %v35, %v222
  %v277 = vadd.f32 %v36, %v227
  %v278 = vadd.f32 %v37, %v230
  %v279 = vadd.f32 %v38, %v235
  %v280 = vadd.f32 %v39, %v238
  %v281 = vadd.f32 %v40, %v243
  %v282 = vadd.f32 %v41, %v246
  %v283 = vadd.f32 %v42, %v251
  %v284 = vadd.f32 %v43, %v254
  %v285 = vadd.f32 %v44, %v259
  %v286 = vadd.f32 %v45, %v262
  %v287 = vadd.f32 %v46, %v267
  %v288 = vadd.f32 %v47, %v270
  %289 = vst [vmem:[#allocation2] sm:$0xff] %v273
  %290 = vst [vmem:[#allocation2 + $0x8] sm:$0xff] %v274
  %291 = vst [vmem:[#allocation2 + $0x10] sm:$0xff] %v275
  %292 = vst [vmem:[#allocation2 + $0x18] sm:$0xff] %v276
  %293 = vst [vmem:[#allocation2 + $0x20] sm:$0xff] %v277
  %294 = vst [vmem:[#allocation2 + $0x28] sm:$0xff] %v278
  %295 = vst [vmem:[#allocation2 + $0x30] sm:$0xff] %v279
  %296 = vst [vmem:[#allocation2 + $0x38] sm:$0xff] %v280
  %297 = vst [vmem:[#allocation2 + $0x40] sm:$0xff] %v281
  %298 = vst [vmem:[#allocation2 + $0x48] sm:$0xff] %v282
  %299 = vst [vmem:[#allocation2 + $0x50] sm:$0xff] %v283
  %300 = vst [vmem:[#allocation2 + $0x58] sm:$0xff] %v284
  %301 = vst [vmem:[#allocation2 + $0x60] sm:$0xff] %v285
  %302 = vst [vmem:[#allocation2 + $0x68] sm:$0xff] %v286
  %303 = vst [vmem:[#allocation2 + $0x70] sm:$0xff] %v287
  %304 = vst [vmem:[#allocation2 + $0x78] sm:$0xff] %v288
  // Predicated region
  $region14: #{gcn_with_kan_forward.7} parent=0 // pred_check
    %p305 = pneg %p12
  $region15: #{gcn_with_kan_forward.7} parent=0 // pred_check_branch
    %307 = sbr.rel (%p305) target = $region17
  $region16: #{gcn_with_kan_forward.7} parent=0 // pred_region
    %v308 = vld [vmem:[#allocation2] sm:$0xff]
    %v309 = vld [vmem:[#allocation2 + $0x8] sm:$0xff]
    %v310 = vld [vmem:[#allocation2 + $0x10] sm:$0xff]
    %v311 = vld [vmem:[#allocation2 + $0x18] sm:$0xff]
    %v312 = vld [vmem:[#allocation2 + $0x20] sm:$0xff]
    %v313 = vld [vmem:[#allocation2 + $0x28] sm:$0xff]
    %v314 = vld [vmem:[#allocation2 + $0x30] sm:$0xff]
    %v315 = vld [vmem:[#allocation2 + $0x38] sm:$0xff]
    %v316 = vld [vmem:[#allocation2 + $0x40] sm:$0xff]
    %v317 = vld [vmem:[#allocation2 + $0x48] sm:$0xff]
    %v318 = vld [vmem:[#allocation2 + $0x50] sm:$0xff]
    %v319 = vld [vmem:[#allocation2 + $0x58] sm:$0xff]
    %v320 = vld [vmem:[#allocation2 + $0x60] sm:$0xff]
    %v321 = vld [vmem:[#allocation2 + $0x68] sm:$0xff]
    %v322 = vld [vmem:[#allocation2 + $0x70] sm:$0xff]
    %v323 = vld [vmem:[#allocation2 + $0x78] sm:$0xff]
    %v324 = vlaneseq
    %v325 = vand.u32 %v324, 127
    %vm326 = vcmp.lt.s32.totalorder %v325, 8
    %v327 = vsel %vm326, %v308, -1e+30
    %v328 = vsel %vm326, %v309, -1e+30
    %v329 = vsel %vm326, %v310, -1e+30
    %v330 = vsel %vm326, %v311, -1e+30
    %v331 = vsel %vm326, %v312, -1e+30
    %v332 = vsel %vm326, %v313, -1e+30
    %v333 = vsel %vm326, %v314, -1e+30
    %v334 = vsel %vm326, %v315, -1e+30
    %v335 = vsel %vm326, %v316, -1e+30
    %v336 = vsel %vm326, %v317, -1e+30
    %v337 = vsel %vm326, %v318, -1e+30
    %v338 = vsel %vm326, %v319, -1e+30
    %v339 = vsel %vm326, %v320, -1e+30
    %v340 = vsel %vm326, %v321, -1e+30
    %v341 = vsel %vm326, %v322, -1e+30
    %v342 = vsel %vm326, %v323, -1e+30
    %343 = vmax.xlane.f32.xlu0 %v327
    %v344 = vpop.xlane.xlu0 %343
    %345 = vmax.xlane.f32.xlu0 %v328
    %v346 = vpop.xlane.xlu0 %345
    %347 = vmax.xlane.f32.xlu0 %v329
    %v348 = vpop.xlane.xlu0 %347
    %349 = vmax.xlane.f32.xlu0 %v330
    %v350 = vpop.xlane.xlu0 %349
    %351 = vmax.xlane.f32.xlu0 %v331
    %v352 = vpop.xlane.xlu0 %351
    %353 = vmax.xlane.f32.xlu0 %v332
    %v354 = vpop.xlane.xlu0 %353
    %355 = vmax.xlane.f32.xlu0 %v333
    %v356 = vpop.xlane.xlu0 %355
    %357 = vmax.xlane.f32.xlu0 %v334
    %v358 = vpop.xlane.xlu0 %357
    %359 = vmax.xlane.f32.xlu0 %v335
    %v360 = vpop.xlane.xlu0 %359
    %361 = vmax.xlane.f32.xlu0 %v336
    %v362 = vpop.xlane.xlu0 %361
    %363 = vmax.xlane.f32.xlu0 %v337
    %v364 = vpop.xlane.xlu0 %363
    %365 = vmax.xlane.f32.xlu0 %v338
    %v366 = vpop.xlane.xlu0 %365
    %367 = vmax.xlane.f32.xlu0 %v339
    %v368 = vpop.xlane.xlu0 %367
    %369 = vmax.xlane.f32.xlu0 %v340
    %v370 = vpop.xlane.xlu0 %369
    %371 = vmax.xlane.f32.xlu0 %v341
    %v372 = vpop.xlane.xlu0 %371
    %373 = vmax.xlane.f32.xlu0 %v342
    %v374 = vpop.xlane.xlu0 %373
    %v375 = vsub.f32 %v327, %v344
    %v376 = vsub.f32 %v328, %v346
    %v377 = vsub.f32 %v329, %v348
    %v378 = vsub.f32 %v330, %v350
    %v379 = vsub.f32 %v331, %v352
    %v380 = vsub.f32 %v332, %v354
    %v381 = vsub.f32 %v333, %v356
    %v382 = vsub.f32 %v334, %v358
    %v383 = vsub.f32 %v335, %v360
    %v384 = vsub.f32 %v336, %v362
    %v385 = vsub.f32 %v337, %v364
    %v386 = vsub.f32 %v338, %v366
    %v387 = vsub.f32 %v339, %v368
    %v388 = vsub.f32 %v340, %v370
    %v389 = vsub.f32 %v341, %v372
    %v390 = vsub.f32 %v342, %v374
    %v391 = vmul.f32 %v375, 1.442695
    %v392 = vpow.pop %v391
    %v393 = vmul.f32 %v376, 1.442695
    %v394 = vpow.pop %v393
    %v395 = vmul.f32 %v377, 1.442695
    %v396 = vpow.pop %v395
    %v397 = vmul.f32 %v378, 1.442695
    %v398 = vpow.pop %v397
    %v399 = vmul.f32 %v379, 1.442695
    %v400 = vpow.pop %v399
    %v401 = vmul.f32 %v380, 1.442695
    %v402 = vpow.pop %v401
    %v403 = vmul.f32 %v381, 1.442695
    %v404 = vpow.pop %v403
    %v405 = vmul.f32 %v382, 1.442695
    %v406 = vpow.pop %v405
    %v407 = vmul.f32 %v383, 1.442695
    %v408 = vpow.pop %v407
    %v409 = vmul.f32 %v384, 1.442695
    %v410 = vpow.pop %v409
    %v411 = vmul.f32 %v385, 1.442695
    %v412 = vpow.pop %v411
    %v413 = vmul.f32 %v386, 1.442695
    %v414 = vpow.pop %v413
    %v415 = vmul.f32 %v387, 1.442695
    %v416 = vpow.pop %v415
    %v417 = vmul.f32 %v388, 1.442695
    %v418 = vpow.pop %v417
    %v419 = vmul.f32 %v389, 1.442695
    %v420 = vpow.pop %v419
    %v421 = vmul.f32 %v390, 1.442695
    %v422 = vpow.pop %v421
    %423 = vadd.xlane.f32.xlu0 %v392
    %v424 = vpop.xlane.xlu0 %423
    %425 = vadd.xlane.f32.xlu0 %v394
    %v426 = vpop.xlane.xlu0 %425
    %427 = vadd.xlane.f32.xlu0 %v396
    %v428 = vpop.xlane.xlu0 %427
    %429 = vadd.xlane.f32.xlu0 %v398
    %v430 = vpop.xlane.xlu0 %429
    %431 = vadd.xlane.f32.xlu0 %v400
    %v432 = vpop.xlane.xlu0 %431
    %433 = vadd.xlane.f32.xlu0 %v402
    %v434 = vpop.xlane.xlu0 %433
    %435 = vadd.xlane.f32.xlu0 %v404
    %v436 = vpop.xlane.xlu0 %435
    %437 = vadd.xlane.f32.xlu0 %v406
    %v438 = vpop.xlane.xlu0 %437
    %439 = vadd.xlane.f32.xlu0 %v408
    %v440 = vpop.xlane.xlu0 %439
    %441 = vadd.xlane.f32.xlu0 %v410
    %v442 = vpop.xlane.xlu0 %441
    %443 = vadd.xlane.f32.xlu0 %v412
    %v444 = vpop.xlane.xlu0 %443
    %445 = vadd.xlane.f32.xlu0 %v414
    %v446 = vpop.xlane.xlu0 %445
    %447 = vadd.xlane.f32.xlu0 %v416
    %v448 = vpop.xlane.xlu0 %447
    %449 = vadd.xlane.f32.xlu0 %v418
    %v450 = vpop.xlane.xlu0 %449
    %451 = vadd.xlane.f32.xlu0 %v420
    %v452 = vpop.xlane.xlu0 %451
    %453 = vadd.xlane.f32.xlu0 %v422
    %v454 = vpop.xlane.xlu0 %453
    %v455 = vlog2.pop %v424
    %v456 = vmul.f32 %v455, 0.6931472
    %v457 = vlog2.pop %v426
    %v458 = vmul.f32 %v457, 0.6931472
    %v459 = vlog2.pop %v428
    %v460 = vmul.f32 %v459, 0.6931472
    %v461 = vlog2.pop %v430
    %v462 = vmul.f32 %v461, 0.6931472
    %v463 = vlog2.pop %v432
    %v464 = vmul.f32 %v463, 0.6931472
    %v465 = vlog2.pop %v434
    %v466 = vmul.f32 %v465, 0.6931472
    %v467 = vlog2.pop %v436
    %v468 = vmul.f32 %v467, 0.6931472
    %v469 = vlog2.pop %v438
    %v470 = vmul.f32 %v469, 0.6931472
    %v471 = vlog2.pop %v440
    %v472 = vmul.f32 %v471, 0.6931472
    %v473 = vlog2.pop %v442
    %v474 = vmul.f32 %v473, 0.6931472
    %v475 = vlog2.pop %v444
    %v476 = vmul.f32 %v475, 0.6931472
    %v477 = vlog2.pop %v446
    %v478 = vmul.f32 %v477, 0.6931472
    %v479 = vlog2.pop %v448
    %v480 = vmul.f32 %v479, 0.6931472
    %v481 = vlog2.pop %v450
    %v482 = vmul.f32 %v481, 0.6931472
    %v483 = vlog2.pop %v452
    %v484 = vmul.f32 %v483, 0.6931472
    %v485 = vlog2.pop %v454
    %v486 = vmul.f32 %v485, 0.6931472
    %v487 = vsub.f32 %v375, %v456
    %v488 = vsub.f32 %v376, %v458
    %v489 = vsub.f32 %v377, %v460
    %v490 = vsub.f32 %v378, %v462
    %v491 = vsub.f32 %v379, %v464
    %v492 = vsub.f32 %v380, %v466
    %v493 = vsub.f32 %v381, %v468
    %v494 = vsub.f32 %v382, %v470
    %v495 = vsub.f32 %v383, %v472
    %v496 = vsub.f32 %v384, %v474
    %v497 = vsub.f32 %v385, %v476
    %v498 = vsub.f32 %v386, %v478
    %v499 = vsub.f32 %v387, %v480
    %v500 = vsub.f32 %v388, %v482
    %v501 = vsub.f32 %v389, %v484
    %v502 = vsub.f32 %v390, %v486
    %503 = vst [vmem:[%s2] sm:$0xff] %v487
    %504 = vst [vmem:[%s2 + $0x8] sm:$0xff] %v488
    %505 = vst [vmem:[%s2 + $0x10] sm:$0xff] %v489
    %506 = vst [vmem:[%s2 + $0x18] sm:$0xff] %v490
    %507 = vst [vmem:[%s2 + $0x20] sm:$0xff] %v491
    %508 = vst [vmem:[%s2 + $0x28] sm:$0xff] %v492
    %509 = vst [vmem:[%s2 + $0x30] sm:$0xff] %v493
    %510 = vst [vmem:[%s2 + $0x38] sm:$0xff] %v494
    %511 = vst [vmem:[%s2 + $0x40] sm:$0xff] %v495
    %512 = vst [vmem:[%s2 + $0x48] sm:$0xff] %v496
    %513 = vst [vmem:[%s2 + $0x50] sm:$0xff] %v497
    %514 = vst [vmem:[%s2 + $0x58] sm:$0xff] %v498
    %515 = vst [vmem:[%s2 + $0x60] sm:$0xff] %v499
    %516 = vst [vmem:[%s2 + $0x68] sm:$0xff] %v500
    %517 = vst [vmem:[%s2 + $0x70] sm:$0xff] %v501
    %518 = vst [vmem:[%s2 + $0x78] sm:$0xff] %v502
  $region17: #{gcn_with_kan_forward.7} parent=0 // pred_fallthru
    _
  // Predicated region
  $region18: #{gcn_with_kan_forward.7} parent=0 // pred_check
    _
  $region19: #{gcn_with_kan_forward.7} parent=0 // pred_check_branch
    %520 = sbr.rel (0) target = $region21
  $region20: #{gcn_with_kan_forward.7} parent=0 // pred_region
    _
  $region21: #{gcn_with_kan_forward.7} parent=0 // pred_fallthru
    _
  // Predicated region
  $region22: #{gcn_with_kan_forward.7} parent=0 // pred_check
    _
  $region23: #{gcn_with_kan_forward.7} parent=0 // pred_check_branch
    %522 = sbr.rel (0) target = $region25
  $region24: #{gcn_with_kan_forward.7} parent=0 // pred_region
    _
  $region25: #{gcn_with_kan_forward.7} parent=0 // pred_fallthru
    _

// kernel: gcn_with_kan_forward.5
$region0: #{gcn_with_kan_forward.5}
  #allocation0 [shape = 'u32[]', space=smem, size = 0x4, offset = 0x4, fixed_abs, tag = 'smem constant byte address 0x4 - core index']
  #allocation1 [shape = 'u32[144,128]{1,0:T(1,128)}', space=vmem, size = 0x12000, scoped, tag = 'internal scratch']
  #allocation2 [shape = 'f32[128,128]{1,0:T(8,128)}', space=vmem, size = 0x10000, scoped, tag = 'scratch operand']
  %s0 = inlined_call_operand.vmem [shape: bf16[128,128], index: 0, kind: input, shape index: {}]
  %s1 = inlined_call_operand.vmem [shape: bf16[128,128], index: 1, kind: input, shape index: {}]
  %s2 = inlined_call_operand.vmem [shape: f32[128,128], index: 2, kind: output, shape index: {}]
  %s3 = sld [smem:[#allocation0]]
  $region26: #{gcn_with_kan_forward.5} parent=0
    _
  %s5 = ssub.s32 1, %s3
  %s6 = scalar_select 0, %s5, %s3
  // Predicated region
  $region2: #{gcn_with_kan_forward.5} parent=0 // pred_check
    _
  $region3: #{gcn_with_kan_forward.5} parent=0 // pred_check_branch
    %8 = sbr.rel (0) target = $region5
  $region4: #{gcn_with_kan_forward.5} parent=0 // pred_region
    _
  $region5: #{gcn_with_kan_forward.5} parent=0 // pred_fallthru
    _
  // Predicated region
  $region6: #{gcn_with_kan_forward.5} parent=0 // pred_check
    _
  $region7: #{gcn_with_kan_forward.5} parent=0 // pred_check_branch
    %10 = sbr.rel (0) target = $region9
  $region8: #{gcn_with_kan_forward.5} parent=0 // pred_region
    _
  $region9: #{gcn_with_kan_forward.5} parent=0 // pred_fallthru
    _
  %p12 = scmp.eq.s32.totalorder 0, 0
  // Predicated region
  $region10: #{gcn_with_kan_forward.5} parent=0 // pred_check
    %p13 = pneg %p12
  $region11: #{gcn_with_kan_forward.5} parent=0 // pred_check_branch
    %15 = sbr.rel (%p13) target = $region13
  $region12: #{gcn_with_kan_forward.5} parent=0 // pred_region
    %16 = vst [vmem:[#allocation2] sm:$0xff] 0.0
    %17 = vst [vmem:[#allocation2 + $0x8] sm:$0xff] 0.0
    %18 = vst [vmem:[#allocation2 + $0x10] sm:$0xff] 0.0
    %19 = vst [vmem:[#allocation2 + $0x18] sm:$0xff] 0.0
    %20 = vst [vmem:[#allocation2 + $0x20] sm:$0xff] 0.0
    %21 = vst [vmem:[#allocation2 + $0x28] sm:$0xff] 0.0
    %22 = vst [vmem:[#allocation2 + $0x30] sm:$0xff] 0.0
    %23 = vst [vmem:[#allocation2 + $0x38] sm:$0xff] 0.0
    %24 = vst [vmem:[#allocation2 + $0x40] sm:$0xff] 0.0
    %25 = vst [vmem:[#allocation2 + $0x48] sm:$0xff] 0.0
    %26 = vst [vmem:[#allocation2 + $0x50] sm:$0xff] 0.0
    %27 = vst [vmem:[#allocation2 + $0x58] sm:$0xff] 0.0
    %28 = vst [vmem:[#allocation2 + $0x60] sm:$0xff] 0.0
    %29 = vst [vmem:[#allocation2 + $0x68] sm:$0xff] 0.0
    %30 = vst [vmem:[#allocation2 + $0x70] sm:$0xff] 0.0
    %31 = vst [vmem:[#allocation2 + $0x78] sm:$0xff] 0.0
  $region13: #{gcn_with_kan_forward.5} parent=0 // pred_fallthru
    _
  %v32 = vld [vmem:[#allocation2] sm:$0xff]
  %v33 = vld [vmem:[#allocation2 + $0x8] sm:$0xff]
  %v34 = vld [vmem:[#allocation2 + $0x10] sm:$0xff]
  %v35 = vld [vmem:[#allocation2 + $0x18] sm:$0xff]
  %v36 = vld [vmem:[#allocation2 + $0x20] sm:$0xff]
  %v37 = vld [vmem:[#allocation2 + $0x28] sm:$0xff]
  %v38 = vld [vmem:[#allocation2 + $0x30] sm:$0xff]
  %v39 = vld [vmem:[#allocation2 + $0x38] sm:$0xff]
  %v40 = vld [vmem:[#allocation2 + $0x40] sm:$0xff]
  %v41 = vld [vmem:[#allocation2 + $0x48] sm:$0xff]
  %v42 = vld [vmem:[#allocation2 + $0x50] sm:$0xff]
  %v43 = vld [vmem:[#allocation2 + $0x58] sm:$0xff]
  %v44 = vld [vmem:[#allocation2 + $0x60] sm:$0xff]
  %v45 = vld [vmem:[#allocation2 + $0x68] sm:$0xff]
  %v46 = vld [vmem:[#allocation2 + $0x70] sm:$0xff]
  %v47 = vld [vmem:[#allocation2 + $0x78] sm:$0xff]
  %v48 = vld [vmem:[%s0] sm:$0xf]
  %v49 = vld [vmem:[%s0 + $0x4] sm:$0xf]
  %v50 = vld [vmem:[%s0 + $0x8] sm:$0xf]
  %v51 = vld [vmem:[%s0 + $0xc] sm:$0xf]
  %v52 = vld [vmem:[%s0 + $0x10] sm:$0xf]
  %v53 = vld [vmem:[%s0 + $0x14] sm:$0xf]
  %v54 = vld [vmem:[%s0 + $0x18] sm:$0xf]
  %v55 = vld [vmem:[%s0 + $0x1c] sm:$0xf]
  %v56 = vld [vmem:[%s0 + $0x20] sm:$0xf]
  %v57 = vld [vmem:[%s0 + $0x24] sm:$0xf]
  %v58 = vld [vmem:[%s0 + $0x28] sm:$0xf]
  %v59 = vld [vmem:[%s0 + $0x2c] sm:$0xf]
  %v60 = vld [vmem:[%s0 + $0x30] sm:$0xf]
  %v61 = vld [vmem:[%s0 + $0x34] sm:$0xf]
  %v62 = vld [vmem:[%s0 + $0x38] sm:$0xf]
  %v63 = vld [vmem:[%s0 + $0x3c] sm:$0xf]
  %v64 = vld [vmem:[%s1] sm:$0xf]
  %v65 = vld [vmem:[%s1 + $0x4] sm:$0xf]
  %v66 = vld [vmem:[%s1 + $0x8] sm:$0xf]
  %v67 = vld [vmem:[%s1 + $0xc] sm:$0xf]
  %v68 = vld [vmem:[%s1 + $0x10] sm:$0xf]
  %v69 = vld [vmem:[%s1 + $0x14] sm:$0xf]
  %v70 = vld [vmem:[%s1 + $0x18] sm:$0xf]
  %v71 = vld [vmem:[%s1 + $0x1c] sm:$0xf]
  %v72 = vld [vmem:[%s1 + $0x20] sm:$0xf]
  %v73 = vld [vmem:[%s1 + $0x24] sm:$0xf]
  %v74 = vld [vmem:[%s1 + $0x28] sm:$0xf]
  %v75 = vld [vmem:[%s1 + $0x2c] sm:$0xf]
  %v76 = vld [vmem:[%s1 + $0x30] sm:$0xf]
  %v77 = vld [vmem:[%s1 + $0x34] sm:$0xf]
  %v78 = vld [vmem:[%s1 + $0x38] sm:$0xf]
  %v79 = vld [vmem:[%s1 + $0x3c] sm:$0xf]
  %v96 = vunpack.c.l.b16 %v48
  %v97 = vunpack.c.l.b16 %v49
  %v98 = vunpack.c.l.b16 %v50
  %v99 = vunpack.c.l.b16 %v51
  %v100 = vunpack.c.l.b16 %v52
  %v101 = vunpack.c.l.b16 %v53
  %v102 = vunpack.c.l.b16 %v54
  %v103 = vunpack.c.l.b16 %v55
  %v104 = vunpack.c.l.b16 %v56
  %v105 = vunpack.c.l.b16 %v57
  %v106 = vunpack.c.l.b16 %v58
  %v107 = vunpack.c.l.b16 %v59
  %v108 = vunpack.c.l.b16 %v60
  %v109 = vunpack.c.l.b16 %v61
  %v110 = vunpack.c.l.b16 %v62
  %v111 = vunpack.c.l.b16 %v63
  %v112 = vpack.c.b16 %v97, %v96
  %v113 = vpack.c.b16 %v99, %v98
  %v114 = vpack.c.b16 %v101, %v100
  %v115 = vpack.c.b16 %v103, %v102
  %v116 = vpack.c.b16 %v105, %v104
  %v117 = vpack.c.b16 %v107, %v106
  %v118 = vpack.c.b16 %v109, %v108
  %v119 = vpack.c.b16 %v111, %v110
  %v144 = vunpack.c.l.b16 %v64
  %v145 = vunpack.c.l.b16 %v65
  %v146 = vunpack.c.l.b16 %v66
  %v147 = vunpack.c.l.b16 %v67
  %v148 = vunpack.c.l.b16 %v68
  %v149 = vunpack.c.l.b16 %v69
  %v150 = vunpack.c.l.b16 %v70
  %v151 = vunpack.c.l.b16 %v71
  %v152 = vunpack.c.l.b16 %v72
  %v153 = vunpack.c.l.b16 %v73
  %v154 = vunpack.c.l.b16 %v74
  %v155 = vunpack.c.l.b16 %v75
  %v156 = vunpack.c.l.b16 %v76
  %v157 = vunpack.c.l.b16 %v77
  %v158 = vunpack.c.l.b16 %v78
  %v159 = vunpack.c.l.b16 %v79
  %v160 = vpack.c.b16 %v145, %v144
  %v161 = vpack.c.b16 %v147, %v146
  %v162 = vpack.c.b16 %v149, %v148
  %v163 = vpack.c.b16 %v151, %v150
  %v164 = vpack.c.b16 %v153, %v152
  %v165 = vpack.c.b16 %v155, %v154
  %v166 = vpack.c.b16 %v157, %v156
  %v167 = vpack.c.b16 %v159, %v158
  %176 = vmatprep.subr.bf16.mxu0 0
  %177 = vmatpush1.bf16.msra.mxu0 %v160
  %178 = vmatprep.subr.bf16.mxu0 0
  %179 = vmatpush1.bf16.msra.mxu0 %v161
  %180 = vmatprep.subr.bf16.mxu0 0
  %181 = vmatpush1.bf16.msra.mxu0 %v162
  %182 = vmatprep.subr.bf16.mxu0 0
  %183 = vmatpush1.bf16.msra.mxu0 %v163
  %184 = vmatprep.subr.bf16.mxu0 0
  %185 = vmatpush1.bf16.msra.mxu0 %v164
  %186 = vmatprep.subr.bf16.mxu0 0
  %187 = vmatpush1.bf16.msra.mxu0 %v165
  %188 = vmatprep.subr.bf16.mxu0 0
  %189 = vmatpush1.bf16.msra.mxu0 %v166
  %190 = vmatprep.subr.bf16.mxu0 0
  %191 = vmatpush1.bf16.msra.mxu0 %v167
  %192 = vmatprep.subr.bf16.mxu0 0
  %193 = vmatpush1.bf16.msra.mxu0 0
  %194 = vmatprep.subr.bf16.mxu0 0
  %195 = vmatpush1.bf16.msra.mxu0 0
  %196 = vmatprep.subr.bf16.mxu0 0
  %197 = vmatpush1.bf16.msra.mxu0 0
  %198 = vmatprep.subr.bf16.mxu0 0
  %199 = vmatpush1.bf16.msra.mxu0 0
  %200 = vmatprep.subr.bf16.mxu0 0
  %201 = vmatpush1.bf16.msra.mxu0 0
  %202 = vmatprep.subr.bf16.mxu0 0
  %203 = vmatpush1.bf16.msra.mxu0 0
  %204 = vmatprep.subr.bf16.mxu0 0
  %205 = vmatpush1.bf16.msra.mxu0 0
  %206 = vmatprep.subr.bf16.mxu0 0
  %207 = vmatpush1.bf16.msra.mxu0 0
  %208 = vmatprep.mubr.bf16.mxu0 0
  %209 = vmatmul.mubr.bf16.gmra.mrb[0].mxu0 %v112
  %v210 = vpop.f32.mrb[0].mxu0
  %v211 = vadd.f32 0.0, %v210
  %v212 = vpop.f32.mrb[0].mxu0
  %v213 = vpop.f32.mrb[0].mxu0
  %v214 = vadd.f32 0.0, %v213
  %v215 = vpop.f32.mrb[0].mxu0
  %216 = vmatprep.mubr.bf16.mxu0 0
  %217 = vmatmul.mubr.bf16.gmra.mrb[0].mxu0 %v113
  %v218 = vpop.f32.mrb[0].mxu0
  %v219 = vadd.f32 0.0, %v218
  %v220 = vpop.f32.mrb[0].mxu0
  %v221 = vpop.f32.mrb[0].mxu0
  %v222 = vadd.f32 0.0, %v221
  %v223 = vpop.f32.mrb[0].mxu0
  %224 = vmatprep.mubr.bf16.mxu0 0
  %225 = vmatmul.mubr.bf16.gmra.mrb[0].mxu0 %v114
  %v226 = vpop.f32.mrb[0].mxu0
  %v227 = vadd.f32 0.0, %v226
  %v228 = vpop.f32.mrb[0].mxu0
  %v229 = vpop.f32.mrb[0].mxu0
  %v230 = vadd.f32 0.0, %v229
  %v231 = vpop.f32.mrb[0].mxu0
  %232 = vmatprep.mubr.bf16.mxu0 0
  %233 = vmatmul.mubr.bf16.gmra.mrb[0].mxu0 %v115
  %v234 = vpop.f32.mrb[0].mxu0
  %v235 = vadd.f32 0.0, %v234
  %v236 = vpop.f32.mrb[0].mxu0
  %v237 = vpop.f32.mrb[0].mxu0
  %v238 = vadd.f32 0.0, %v237
  %v239 = vpop.f32.mrb[0].mxu0
  %240 = vmatprep.mubr.bf16.mxu0 0
  %241 = vmatmul.mubr.bf16.gmra.mrb[0].mxu0 %v116
  %v242 = vpop.f32.mrb[0].mxu0
  %v243 = vadd.f32 0.0, %v242
  %v244 = vpop.f32.mrb[0].mxu0
  %v245 = vpop.f32.mrb[0].mxu0
  %v246 = vadd.f32 0.0, %v245
  %v247 = vpop.f32.mrb[0].mxu0
  %248 = vmatprep.mubr.bf16.mxu0 0
  %249 = vmatmul.mubr.bf16.gmra.mrb[0].mxu0 %v117
  %v250 = vpop.f32.mrb[0].mxu0
  %v251 = vadd.f32 0.0, %v250
  %v252 = vpop.f32.mrb[0].mxu0
  %v253 = vpop.f32.mrb[0].mxu0
  %v254 = vadd.f32 0.0, %v253
  %v255 = vpop.f32.mrb[0].mxu0
  %256 = vmatprep.mubr.bf16.mxu0 0
  %257 = vmatmul.mubr.bf16.gmra.mrb[0].mxu0 %v118
  %v258 = vpop.f32.mrb[0].mxu0
  %v259 = vadd.f32 0.0, %v258
  %v260 = vpop.f32.mrb[0].mxu0
  %v261 = vpop.f32.mrb[0].mxu0
  %v262 = vadd.f32 0.0, %v261
  %v263 = vpop.f32.mrb[0].mxu0
  %264 = vmatprep.mubr.bf16.mxu0 0
  %265 = vmatmul.mubr.bf16.gmra.mrb[0].mxu0 %v119
  %v266 = vpop.f32.mrb[0].mxu0
  %v267 = vadd.f32 0.0, %v266
  %v268 = vpop.f32.mrb[0].mxu0
  %v269 = vpop.f32.mrb[0].mxu0
  %v270 = vadd.f32 0.0, %v269
  %v271 = vpop.f32.mrb[0].mxu0
  %272 = vdwg.mxu0
  %v273 = vadd.f32 %v32, %v211
  %v274 = vadd.f32 %v33, %v214
  %v275 = vadd.f32 %v34, %v219
  %v276 = vadd.f32 %v35, %v222
  %v277 = vadd.f32 %v36, %v227
  %v278 = vadd.f32 %v37, %v230
  %v279 = vadd.f32 %v38, %v235
  %v280 = vadd.f32 %v39, %v238
  %v281 = vadd.f32 %v40, %v243
  %v282 = vadd.f32 %v41, %v246
  %v283 = vadd.f32 %v42, %v251
  %v284 = vadd.f32 %v43, %v254
  %v285 = vadd.f32 %v44, %v259
  %v286 = vadd.f32 %v45, %v262
  %v287 = vadd.f32 %v46, %v267
  %v288 = vadd.f32 %v47, %v270
  %289 = vst [vmem:[#allocation2] sm:$0xff] %v273
  %290 = vst [vmem:[#allocation2 + $0x8] sm:$0xff] %v274
  %291 = vst [vmem:[#allocation2 + $0x10] sm:$0xff] %v275
  %292 = vst [vmem:[#allocation2 + $0x18] sm:$0xff] %v276
  %293 = vst [vmem:[#allocation2 + $0x20] sm:$0xff] %v277
  %294 = vst [vmem:[#allocation2 + $0x28] sm:$0xff] %v278
  %295 = vst [vmem:[#allocation2 + $0x30] sm:$0xff] %v279
  %296 = vst [vmem:[#allocation2 + $0x38] sm:$0xff] %v280
  %297 = vst [vmem:[#allocation2 + $0x40] sm:$0xff] %v281
  %298 = vst [vmem:[#allocation2 + $0x48] sm:$0xff] %v282
  %299 = vst [vmem:[#allocation2 + $0x50] sm:$0xff] %v283
  %300 = vst [vmem:[#allocation2 + $0x58] sm:$0xff] %v284
  %301 = vst [vmem:[#allocation2 + $0x60] sm:$0xff] %v285
  %302 = vst [vmem:[#allocation2 + $0x68] sm:$0xff] %v286
  %303 = vst [vmem:[#allocation2 + $0x70] sm:$0xff] %v287
  %304 = vst [vmem:[#allocation2 + $0x78] sm:$0xff] %v288
  // Predicated region
  $region14: #{gcn_with_kan_forward.5} parent=0 // pred_check
    %p305 = pneg %p12
  $region15: #{gcn_with_kan_forward.5} parent=0 // pred_check_branch
    %307 = sbr.rel (%p305) target = $region17
  $region16: #{gcn_with_kan_forward.5} parent=0 // pred_region
    %v308 = vld [vmem:[#allocation2] sm:$0xff]
    %v309 = vld [vmem:[#allocation2 + $0x8] sm:$0xff]
    %v310 = vld [vmem:[#allocation2 + $0x10] sm:$0xff]
    %v311 = vld [vmem:[#allocation2 + $0x18] sm:$0xff]
    %v312 = vld [vmem:[#allocation2 + $0x20] sm:$0xff]
    %v313 = vld [vmem:[#allocation2 + $0x28] sm:$0xff]
    %v314 = vld [vmem:[#allocation2 + $0x30] sm:$0xff]
    %v315 = vld [vmem:[#allocation2 + $0x38] sm:$0xff]
    %v316 = vld [vmem:[#allocation2 + $0x40] sm:$0xff]
    %v317 = vld [vmem:[#allocation2 + $0x48] sm:$0xff]
    %v318 = vld [vmem:[#allocation2 + $0x50] sm:$0xff]
    %v319 = vld [vmem:[#allocation2 + $0x58] sm:$0xff]
    %v320 = vld [vmem:[#allocation2 + $0x60] sm:$0xff]
    %v321 = vld [vmem:[#allocation2 + $0x68] sm:$0xff]
    %v322 = vld [vmem:[#allocation2 + $0x70] sm:$0xff]
    %v323 = vld [vmem:[#allocation2 + $0x78] sm:$0xff]
    %v324 = vmax.f32 %v308, 0.0
    %v325 = vmax.f32 %v309, 0.0
    %v326 = vmax.f32 %v310, 0.0
    %v327 = vmax.f32 %v311, 0.0
    %v328 = vmax.f32 %v312, 0.0
    %v329 = vmax.f32 %v313, 0.0
    %v330 = vmax.f32 %v314, 0.0
    %v331 = vmax.f32 %v315, 0.0
    %v332 = vmax.f32 %v316, 0.0
    %v333 = vmax.f32 %v317, 0.0
    %v334 = vmax.f32 %v318, 0.0
    %v335 = vmax.f32 %v319, 0.0
    %v336 = vmax.f32 %v320, 0.0
    %v337 = vmax.f32 %v321, 0.0
    %v338 = vmax.f32 %v322, 0.0
    %v339 = vmax.f32 %v323, 0.0
    %340 = vst [vmem:[%s2] sm:$0xff] %v324
    %341 = vst [vmem:[%s2 + $0x8] sm:$0xff] %v325
    %342 = vst [vmem:[%s2 + $0x10] sm:$0xff] %v326
    %343 = vst [vmem:[%s2 + $0x18] sm:$0xff] %v327
    %344 = vst [vmem:[%s2 + $0x20] sm:$0xff] %v328
    %345 = vst [vmem:[%s2 + $0x28] sm:$0xff] %v329
    %346 = vst [vmem:[%s2 + $0x30] sm:$0xff] %v330
    %347 = vst [vmem:[%s2 + $0x38] sm:$0xff] %v331
    %348 = vst [vmem:[%s2 + $0x40] sm:$0xff] %v332
    %349 = vst [vmem:[%s2 + $0x48] sm:$0xff] %v333
    %350 = vst [vmem:[%s2 + $0x50] sm:$0xff] %v334
    %351 = vst [vmem:[%s2 + $0x58] sm:$0xff] %v335
    %352 = vst [vmem:[%s2 + $0x60] sm:$0xff] %v336
    %353 = vst [vmem:[%s2 + $0x68] sm:$0xff] %v337
    %354 = vst [vmem:[%s2 + $0x70] sm:$0xff] %v338
    %355 = vst [vmem:[%s2 + $0x78] sm:$0xff] %v339
  $region17: #{gcn_with_kan_forward.5} parent=0 // pred_fallthru
    _
  // Predicated region
  $region18: #{gcn_with_kan_forward.5} parent=0 // pred_check
    _
  $region19: #{gcn_with_kan_forward.5} parent=0 // pred_check_branch
    %357 = sbr.rel (0) target = $region21
  $region20: #{gcn_with_kan_forward.5} parent=0 // pred_region
    _
  $region21: #{gcn_with_kan_forward.5} parent=0 // pred_fallthru
    _
  // Predicated region
  $region22: #{gcn_with_kan_forward.5} parent=0 // pred_check
    _
  $region23: #{gcn_with_kan_forward.5} parent=0 // pred_check_branch
    %359 = sbr.rel (0) target = $region25
  $region24: #{gcn_with_kan_forward.5} parent=0 // pred_region
    _
  $region25: #{gcn_with_kan_forward.5} parent=0 // pred_fallthru
    _

// kernel: gcn_with_kan_forward.4
$region0: #{gcn_with_kan_forward.4}
  #allocation0 [shape = 'u32[]', space=smem, size = 0x4, offset = 0x4, fixed_abs, tag = 'smem constant byte address 0x4 - core index']
  #allocation1 [shape = 'u32[144,128]{1,0:T(1,128)}', space=vmem, size = 0x12000, scoped, tag = 'internal scratch']
  #allocation2 [shape = 'f32[128,128]{1,0:T(8,128)}', space=vmem, size = 0x10000, scoped, tag = 'scratch operand']
  %s0 = inlined_call_operand.vmem [shape: f32[128,32], index: 0, kind: input, shape index: {}]
  %s1 = inlined_call_operand.vmem [shape: bf16[32,128], index: 1, kind: input, shape index: {}]
  %s2 = inlined_call_operand.vmem [shape: bf16[8,32,128], index: 2, kind: input, shape index: {}]
  %s3 = inlined_call_operand.vmem [shape: bf16[128,128], index: 3, kind: output, shape index: {}]
  %s4 = sld [smem:[#allocation0]]
  $region30: #{gcn_with_kan_forward.4} parent=0
    _
  %s6 = ssub.s32 1, %s4
  %s7 = scalar_select 0, %s6, %s4
  // Predicated region
  $region2: #{gcn_with_kan_forward.4} parent=0 // pred_check
    _
  $region3: #{gcn_with_kan_forward.4} parent=0 // pred_check_branch
    %9 = sbr.rel (0) target = $region5
  $region4: #{gcn_with_kan_forward.4} parent=0 // pred_region
    _
  $region5: #{gcn_with_kan_forward.4} parent=0 // pred_fallthru
    _
  // Predicated region
  $region6: #{gcn_with_kan_forward.4} parent=0 // pred_check
    _
  $region7: #{gcn_with_kan_forward.4} parent=0 // pred_check_branch
    %11 = sbr.rel (0) target = $region9
  $region8: #{gcn_with_kan_forward.4} parent=0 // pred_region
    _
  $region9: #{gcn_with_kan_forward.4} parent=0 // pred_fallthru
    _
  // Predicated region
  $region10: #{gcn_with_kan_forward.4} parent=0 // pred_check
    _
  $region11: #{gcn_with_kan_forward.4} parent=0 // pred_check_branch
    %13 = sbr.rel (0) target = $region13
  $region12: #{gcn_with_kan_forward.4} parent=0 // pred_region
    _
  $region13: #{gcn_with_kan_forward.4} parent=0 // pred_fallthru
    _
  %p15 = scmp.eq.s32.totalorder 0, 0
  // Predicated region
  $region14: #{gcn_with_kan_forward.4} parent=0 // pred_check
    %p16 = pneg %p15
  $region15: #{gcn_with_kan_forward.4} parent=0 // pred_check_branch
    %18 = sbr.rel (%p16) target = $region17
  $region16: #{gcn_with_kan_forward.4} parent=0 // pred_region
    %19 = vst [vmem:[#allocation2] sm:$0xff] 0.0
    %20 = vst [vmem:[#allocation2 + $0x8] sm:$0xff] 0.0
    %21 = vst [vmem:[#allocation2 + $0x10] sm:$0xff] 0.0
    %22 = vst [vmem:[#allocation2 + $0x18] sm:$0xff] 0.0
    %23 = vst [vmem:[#allocation2 + $0x20] sm:$0xff] 0.0
    %24 = vst [vmem:[#allocation2 + $0x28] sm:$0xff] 0.0
    %25 = vst [vmem:[#allocation2 + $0x30] sm:$0xff] 0.0
    %26 = vst [vmem:[#allocation2 + $0x38] sm:$0xff] 0.0
    %27 = vst [vmem:[#allocation2 + $0x40] sm:$0xff] 0.0
    %28 = vst [vmem:[#allocation2 + $0x48] sm:$0xff] 0.0
    %29 = vst [vmem:[#allocation2 + $0x50] sm:$0xff] 0.0
    %30 = vst [vmem:[#allocation2 + $0x58] sm:$0xff] 0.0
    %31 = vst [vmem:[#allocation2 + $0x60] sm:$0xff] 0.0
    %32 = vst [vmem:[#allocation2 + $0x68] sm:$0xff] 0.0
    %33 = vst [vmem:[#allocation2 + $0x70] sm:$0xff] 0.0
    %34 = vst [vmem:[#allocation2 + $0x78] sm:$0xff] 0.0
  $region17: #{gcn_with_kan_forward.4} parent=0 // pred_fallthru
    _
  %v35 = vld [vmem:[%s0] sm:$0xff]
  %v36 = vld [vmem:[%s0 + $0x8] sm:$0xff]
  %v37 = vld [vmem:[%s0 + $0x10] sm:$0xff]
  %v38 = vld [vmem:[%s0 + $0x18] sm:$0xff]
  %v39 = vld [vmem:[%s0 + $0x20] sm:$0xff]
  %v40 = vld [vmem:[%s0 + $0x28] sm:$0xff]
  %v41 = vld [vmem:[%s0 + $0x30] sm:$0xff]
  %v42 = vld [vmem:[%s0 + $0x38] sm:$0xff]
  %v43 = vld [vmem:[%s0 + $0x40] sm:$0xff]
  %v44 = vld [vmem:[%s0 + $0x48] sm:$0xff]
  %v45 = vld [vmem:[%s0 + $0x50] sm:$0xff]
  %v46 = vld [vmem:[%s0 + $0x58] sm:$0xff]
  %v47 = vld [vmem:[%s0 + $0x60] sm:$0xff]
  %v48 = vld [vmem:[%s0 + $0x68] sm:$0xff]
  %v49 = vld [vmem:[%s0 + $0x70] sm:$0xff]
  %v50 = vld [vmem:[%s0 + $0x78] sm:$0xff]
  %v51 = vsub.f32 0.0, %v35
  %v52 = vsub.f32 0.0, %v36
  %v53 = vsub.f32 0.0, %v37
  %v54 = vsub.f32 0.0, %v38
  %v55 = vsub.f32 0.0, %v39
  %v56 = vsub.f32 0.0, %v40
  %v57 = vsub.f32 0.0, %v41
  %v58 = vsub.f32 0.0, %v42
  %v59 = vsub.f32 0.0, %v43
  %v60 = vsub.f32 0.0, %v44
  %v61 = vsub.f32 0.0, %v45
  %v62 = vsub.f32 0.0, %v46
  %v63 = vsub.f32 0.0, %v47
  %v64 = vsub.f32 0.0, %v48
  %v65 = vsub.f32 0.0, %v49
  %v66 = vsub.f32 0.0, %v50
  %v67 = vmul.f32 %v51, 1.442695
  %v68 = vpow.pop %v67
  %v69 = vmul.f32 %v52, 1.442695
  %v70 = vpow.pop %v69
  %v71 = vmul.f32 %v53, 1.442695
  %v72 = vpow.pop %v71
  %v73 = vmul.f32 %v54, 1.442695
  %v74 = vpow.pop %v73
  %v75 = vmul.f32 %v55, 1.442695
  %v76 = vpow.pop %v75
  %v77 = vmul.f32 %v56, 1.442695
  %v78 = vpow.pop %v77
  %v79 = vmul.f32 %v57, 1.442695
  %v80 = vpow.pop %v79
  %v81 = vmul.f32 %v58, 1.442695
  %v82 = vpow.pop %v81
  %v83 = vmul.f32 %v59, 1.442695
  %v84 = vpow.pop %v83
  %v85 = vmul.f32 %v60, 1.442695
  %v86 = vpow.pop %v85
  %v87 = vmul.f32 %v61, 1.442695
  %v88 = vpow.pop %v87
  %v89 = vmul.f32 %v62, 1.442695
  %v90 = vpow.pop %v89
  %v91 = vmul.f32 %v63, 1.442695
  %v92 = vpow.pop %v91
  %v93 = vmul.f32 %v64, 1.442695
  %v94 = vpow.pop %v93
  %v95 = vmul.f32 %v65, 1.442695
  %v96 = vpow.pop %v95
  %v97 = vmul.f32 %v66, 1.442695
  %v98 = vpow.pop %v97
  %v99 = vadd.f32 %v68, 1.0
  %v100 = vadd.f32 %v70, 1.0
  %v101 = vadd.f32 %v72, 1.0
  %v102 = vadd.f32 %v74, 1.0
  %v103 = vadd.f32 %v76, 1.0
  %v104 = vadd.f32 %v78, 1.0
  %v105 = vadd.f32 %v80, 1.0
  %v106 = vadd.f32 %v82, 1.0
  %v107 = vadd.f32 %v84, 1.0
  %v108 = vadd.f32 %v86, 1.0
  %v109 = vadd.f32 %v88, 1.0
  %v110 = vadd.f32 %v90, 1.0
  %v111 = vadd.f32 %v92, 1.0
  %v112 = vadd.f32 %v94, 1.0
  %v113 = vadd.f32 %v96, 1.0
  %v114 = vadd.f32 %v98, 1.0
  %v115 = vrcp.pop %v99
  %v116 = vrcp.pop %v100
  %v117 = vrcp.pop %v101
  %v118 = vrcp.pop %v102
  %v119 = vrcp.pop %v103
  %v120 = vrcp.pop %v104
  %v121 = vrcp.pop %v105
  %v122 = vrcp.pop %v106
  %v123 = vrcp.pop %v107
  %v124 = vrcp.pop %v108
  %v125 = vrcp.pop %v109
  %v126 = vrcp.pop %v110
  %v127 = vrcp.pop %v111
  %v128 = vrcp.pop %v112
  %v129 = vrcp.pop %v113
  %v130 = vrcp.pop %v114
  %v131 = vmul.f32 %v35, %v115
  %v132 = vmul.f32 %v36, %v116
  %v133 = vmul.f32 %v37, %v117
  %v134 = vmul.f32 %v38, %v118
  %v135 = vmul.f32 %v39, %v119
  %v136 = vmul.f32 %v40, %v120
  %v137 = vmul.f32 %v41, %v121
  %v138 = vmul.f32 %v42, %v122
  %v139 = vmul.f32 %v43, %v123
  %v140 = vmul.f32 %v44, %v124
  %v141 = vmul.f32 %v45, %v125
  %v142 = vmul.f32 %v46, %v126
  %v143 = vmul.f32 %v47, %v127
  %v144 = vmul.f32 %v48, %v128
  %v145 = vmul.f32 %v49, %v129
  %v146 = vmul.f32 %v50, %v130
  %v147 = vpack.c.bf16 %v132, %v131
  %v148 = vpack.c.bf16 %v134, %v133
  %v149 = vpack.c.bf16 %v136, %v135
  %v150 = vpack.c.bf16 %v138, %v137
  %v151 = vpack.c.bf16 %v140, %v139
  %v152 = vpack.c.bf16 %v142, %v141
  %v153 = vpack.c.bf16 %v144, %v143
  %v154 = vpack.c.bf16 %v146, %v145
  %v155 = vld [vmem:[%s1] sm:$0xf]
  %v156 = vld [vmem:[%s1 + $0x4] sm:$0xf]
  %v157 = vld [vmem:[%s1 + $0x8] sm:$0xf]
  %v158 = vld [vmem:[%s1 + $0xc] sm:$0xf]
  %vm159 = vcmp.ge.f32.partialorder %v35, -2.2
  %vm160 = vcmp.ge.f32.partialorder %v36, -2.2
  %vm161 = vcmp.ge.f32.partialorder %v37, -2.2
  %vm162 = vcmp.ge.f32.partialorder %v38, -2.2
  %vm163 = vcmp.ge.f32.partialorder %v39, -2.2
  %vm164 = vcmp.ge.f32.partialorder %v40, -2.2
  %vm165 = vcmp.ge.f32.partialorder %v41, -2.2
  %vm166 = vcmp.ge.f32.partialorder %v42, -2.2
  %vm167 = vcmp.ge.f32.partialorder %v43, -2.2
  %vm168 = vcmp.ge.f32.partialorder %v44, -2.2
  %vm169 = vcmp.ge.f32.partialorder %v45, -2.2
  %vm170 = vcmp.ge.f32.partialorder %v46, -2.2
  %vm171 = vcmp.ge.f32.partialorder %v47, -2.2
  %vm172 = vcmp.ge.f32.partialorder %v48, -2.2
  %vm173 = vcmp.ge.f32.partialorder %v49, -2.2
  %vm174 = vcmp.ge.f32.partialorder %v50, -2.2
  %vm175 = vcmp.lt.f32.partialorder %v35, -1.8
  %vm176 = vcmp.lt.f32.partialorder %v36, -1.8
  %vm177 = vcmp.lt.f32.partialorder %v37, -1.8
  %vm178 = vcmp.lt.f32.partialorder %v38, -1.8
  %vm179 = vcmp.lt.f32.partialorder %v39, -1.8
  %vm180 = vcmp.lt.f32.partialorder %v40, -1.8
  %vm181 = vcmp.lt.f32.partialorder %v41, -1.8
  %vm182 = vcmp.lt.f32.partialorder %v42, -1.8
  %vm183 = vcmp.lt.f32.partialorder %v43, -1.8
  %vm184 = vcmp.lt.f32.partialorder %v44, -1.8
  %vm185 = vcmp.lt.f32.partialorder %v45, -1.8
  %vm186 = vcmp.lt.f32.partialorder %v46, -1.8
  %vm187 = vcmp.lt.f32.partialorder %v47, -1.8
  %vm188 = vcmp.lt.f32.partialorder %v48, -1.8
  %vm189 = vcmp.lt.f32.partialorder %v49, -1.8
  %vm190 = vcmp.lt.f32.partialorder %v50, -1.8
  %vm191 = vmand %vm159, %vm175
  %vm192 = vmand %vm160, %vm176
  %vm193 = vmand %vm161, %vm177
  %vm194 = vmand %vm162, %vm178
  %vm195 = vmand %vm163, %vm179
  %vm196 = vmand %vm164, %vm180
  %vm197 = vmand %vm165, %vm181
  %vm198 = vmand %vm166, %vm182
  %vm199 = vmand %vm167, %vm183
  %vm200 = vmand %vm168, %vm184
  %vm201 = vmand %vm169, %vm185
  %vm202 = vmand %vm170, %vm186
  %vm203 = vmand %vm171, %vm187
  %vm204 = vmand %vm172, %vm188
  %vm205 = vmand %vm173, %vm189
  %vm206 = vmand %vm174, %vm190
  %v207 = vsel %vm191, 1, 0
  %v208 = vsel %vm192, 1, 0
  %v209 = vsel %vm193, 1, 0
  %v210 = vsel %vm194, 1, 0
  %v211 = vsel %vm195, 1, 0
  %v212 = vsel %vm196, 1, 0
  %v213 = vsel %vm197, 1, 0
  %v214 = vsel %vm198, 1, 0
  %v215 = vsel %vm199, 1, 0
  %v216 = vsel %vm200, 1, 0
  %v217 = vsel %vm201, 1, 0
  %v218 = vsel %vm202, 1, 0
  %v219 = vsel %vm203, 1, 0
  %v220 = vsel %vm204, 1, 0
  %v221 = vsel %vm205, 1, 0
  %v222 = vsel %vm206, 1, 0
  %v223 = vcvt.s32.f32 %v207
  %v224 = vcvt.s32.f32 %v208
  %v225 = vcvt.s32.f32 %v209
  %v226 = vcvt.s32.f32 %v210
  %v227 = vcvt.s32.f32 %v211
  %v228 = vcvt.s32.f32 %v212
  %v229 = vcvt.s32.f32 %v213
  %v230 = vcvt.s32.f32 %v214
  %v231 = vcvt.s32.f32 %v215
  %v232 = vcvt.s32.f32 %v216
  %v233 = vcvt.s32.f32 %v217
  %v234 = vcvt.s32.f32 %v218
  %v235 = vcvt.s32.f32 %v219
  %v236 = vcvt.s32.f32 %v220
  %v237 = vcvt.s32.f32 %v221
  %v238 = vcvt.s32.f32 %v222
  %vm239 = vcmp.ge.f32.partialorder %v35, -1.8
  %vm240 = vcmp.ge.f32.partialorder %v36, -1.8
  %vm241 = vcmp.ge.f32.partialorder %v37, -1.8
  %vm242 = vcmp.ge.f32.partialorder %v38, -1.8
  %vm243 = vcmp.ge.f32.partialorder %v39, -1.8
  %vm244 = vcmp.ge.f32.partialorder %v40, -1.8
  %vm245 = vcmp.ge.f32.partialorder %v41, -1.8
  %vm246 = vcmp.ge.f32.partialorder %v42, -1.8
  %vm247 = vcmp.ge.f32.partialorder %v43, -1.8
  %vm248 = vcmp.ge.f32.partialorder %v44, -1.8
  %vm249 = vcmp.ge.f32.partialorder %v45, -1.8
  %vm250 = vcmp.ge.f32.partialorder %v46, -1.8
  %vm251 = vcmp.ge.f32.partialorder %v47, -1.8
  %vm252 = vcmp.ge.f32.partialorder %v48, -1.8
  %vm253 = vcmp.ge.f32.partialorder %v49, -1.8
  %vm254 = vcmp.ge.f32.partialorder %v50, -1.8
  %vm255 = vcmp.lt.f32.partialorder %v35, -1.4
  %vm256 = vcmp.lt.f32.partialorder %v36, -1.4
  %vm257 = vcmp.lt.f32.partialorder %v37, -1.4
  %vm258 = vcmp.lt.f32.partialorder %v38, -1.4
  %vm259 = vcmp.lt.f32.partialorder %v39, -1.4
  %vm260 = vcmp.lt.f32.partialorder %v40, -1.4
  %vm261 = vcmp.lt.f32.partialorder %v41, -1.4
  %vm262 = vcmp.lt.f32.partialorder %v42, -1.4
  %vm263 = vcmp.lt.f32.partialorder %v43, -1.4
  %vm264 = vcmp.lt.f32.partialorder %v44, -1.4
  %vm265 = vcmp.lt.f32.partialorder %v45, -1.4
  %vm266 = vcmp.lt.f32.partialorder %v46, -1.4
  %vm267 = vcmp.lt.f32.partialorder %v47, -1.4
  %vm268 = vcmp.lt.f32.partialorder %v48, -1.4
  %vm269 = vcmp.lt.f32.partialorder %v49, -1.4
  %vm270 = vcmp.lt.f32.partialorder %v50, -1.4
  %vm271 = vmand %vm239, %vm255
  %vm272 = vmand %vm240, %vm256
  %vm273 = vmand %vm241, %vm257
  %vm274 = vmand %vm242, %vm258
  %vm275 = vmand %vm243, %vm259
  %vm276 = vmand %vm244, %vm260
  %vm277 = vmand %vm245, %vm261
  %vm278 = vmand %vm246, %vm262
  %vm279 = vmand %vm247, %vm263
  %vm280 = vmand %vm248, %vm264
  %vm281 = vmand %vm249, %vm265
  %vm282 = vmand %vm250, %vm266
  %vm283 = vmand %vm251, %vm267
  %vm284 = vmand %vm252, %vm268
  %vm285 = vmand %vm253, %vm269
  %vm286 = vmand %vm254, %vm270
  %v287 = vsel %vm271, 1, 0
  %v288 = vsel %vm272, 1, 0
  %v289 = vsel %vm273, 1, 0
  %v290 = vsel %vm274, 1, 0
  %v291 = vsel %vm275, 1, 0
  %v292 = vsel %vm276, 1, 0
  %v293 = vsel %vm277, 1, 0
  %v294 = vsel %vm278, 1, 0
  %v295 = vsel %vm279, 1, 0
  %v296 = vsel %vm280, 1, 0
  %v297 = vsel %vm281, 1, 0
  %v298 = vsel %vm282, 1, 0
  %v299 = vsel %vm283, 1, 0
  %v300 = vsel %vm284, 1, 0
  %v301 = vsel %vm285, 1, 0
  %v302 = vsel %vm286, 1, 0
  %v303 = vcvt.s32.f32 %v287
  %v304 = vcvt.s32.f32 %v288
  %v305 = vcvt.s32.f32 %v289
  %v306 = vcvt.s32.f32 %v290
  %v307 = vcvt.s32.f32 %v291
  %v308 = vcvt.s32.f32 %v292
  %v309 = vcvt.s32.f32 %v293
  %v310 = vcvt.s32.f32 %v294
  %v311 = vcvt.s32.f32 %v295
  %v312 = vcvt.s32.f32 %v296
  %v313 = vcvt.s32.f32 %v297
  %v314 = vcvt.s32.f32 %v298
  %v315 = vcvt.s32.f32 %v299
  %v316 = vcvt.s32.f32 %v300
  %v317 = vcvt.s32.f32 %v301
  %v318 = vcvt.s32.f32 %v302
  %vm319 = vcmp.ge.f32.partialorder %v35, -1.4
  %vm320 = vcmp.ge.f32.partialorder %v36, -1.4
  %vm321 = vcmp.ge.f32.partialorder %v37, -1.4
  %vm322 = vcmp.ge.f32.partialorder %v38, -1.4
  %vm323 = vcmp.ge.f32.partialorder %v39, -1.4
  %vm324 = vcmp.ge.f32.partialorder %v40, -1.4
  %vm325 = vcmp.ge.f32.partialorder %v41, -1.4
  %vm326 = vcmp.ge.f32.partialorder %v42, -1.4
  %vm327 = vcmp.ge.f32.partialorder %v43, -1.4
  %vm328 = vcmp.ge.f32.partialorder %v44, -1.4
  %vm329 = vcmp.ge.f32.partialorder %v45, -1.4
  %vm330 = vcmp.ge.f32.partialorder %v46, -1.4
  %vm331 = vcmp.ge.f32.partialorder %v47, -1.4
  %vm332 = vcmp.ge.f32.partialorder %v48, -1.4
  %vm333 = vcmp.ge.f32.partialorder %v49, -1.4
  %vm334 = vcmp.ge.f32.partialorder %v50, -1.4
  %vm335 = vcmp.lt.f32.partialorder %v35, -1.0
  %vm336 = vcmp.lt.f32.partialorder %v36, -1.0
  %vm337 = vcmp.lt.f32.partialorder %v37, -1.0
  %vm338 = vcmp.lt.f32.partialorder %v38, -1.0
  %vm339 = vcmp.lt.f32.partialorder %v39, -1.0
  %vm340 = vcmp.lt.f32.partialorder %v40, -1.0
  %vm341 = vcmp.lt.f32.partialorder %v41, -1.0
  %vm342 = vcmp.lt.f32.partialorder %v42, -1.0
  %vm343 = vcmp.lt.f32.partialorder %v43, -1.0
  %vm344 = vcmp.lt.f32.partialorder %v44, -1.0
  %vm345 = vcmp.lt.f32.partialorder %v45, -1.0
  %vm346 = vcmp.lt.f32.partialorder %v46, -1.0
  %vm347 = vcmp.lt.f32.partialorder %v47, -1.0
  %vm348 = vcmp.lt.f32.partialorder %v48, -1.0
  %vm349 = vcmp.lt.f32.partialorder %v49, -1.0
  %vm350 = vcmp.lt.f32.partialorder %v50, -1.0
  %vm351 = vmand %vm319, %vm335
  %vm352 = vmand %vm320, %vm336
  %vm353 = vmand %vm321, %vm337
  %vm354 = vmand %vm322, %vm338
  %vm355 = vmand %vm323, %vm339
  %vm356 = vmand %vm324, %vm340
  %vm357 = vmand %vm325, %vm341
  %vm358 = vmand %vm326, %vm342
  %vm359 = vmand %vm327, %vm343
  %vm360 = vmand %vm328, %vm344
  %vm361 = vmand %vm329, %vm345
  %vm362 = vmand %vm330, %vm346
  %vm363 = vmand %vm331, %vm347
  %vm364 = vmand %vm332, %vm348
  %vm365 = vmand %vm333, %vm349
  %vm366 = vmand %vm334, %vm350
  %v367 = vsel %vm351, 1, 0
  %v368 = vsel %vm352, 1, 0
  %v369 = vsel %vm353, 1, 0
  %v370 = vsel %vm354, 1, 0
  %v371 = vsel %vm355, 1, 0
  %v372 = vsel %vm356, 1, 0
  %v373 = vsel %vm357, 1, 0
  %v374 = vsel %vm358, 1, 0
  %v375 = vsel %vm359, 1, 0
  %v376 = vsel %vm360, 1, 0
  %v377 = vsel %vm361, 1, 0
  %v378 = vsel %vm362, 1, 0
  %v379 = vsel %vm363, 1, 0
  %v380 = vsel %vm364, 1, 0
  %v381 = vsel %vm365, 1, 0
  %v382 = vsel %vm366, 1, 0
  %v383 = vcvt.s32.f32 %v367
  %v384 = vcvt.s32.f32 %v368
  %v385 = vcvt.s32.f32 %v369
  %v386 = vcvt.s32.f32 %v370
  %v387 = vcvt.s32.f32 %v371
  %v388 = vcvt.s32.f32 %v372
  %v389 = vcvt.s32.f32 %v373
  %v390 = vcvt.s32.f32 %v374
  %v391 = vcvt.s32.f32 %v375
  %v392 = vcvt.s32.f32 %v376
  %v393 = vcvt.s32.f32 %v377
  %v394 = vcvt.s32.f32 %v378
  %v395 = vcvt.s32.f32 %v379
  %v396 = vcvt.s32.f32 %v380
  %v397 = vcvt.s32.f32 %v381
  %v398 = vcvt.s32.f32 %v382
  %vm399 = vcmp.ge.f32.partialorder %v35, -1.0
  %vm400 = vcmp.ge.f32.partialorder %v36, -1.0
  %vm401 = vcmp.ge.f32.partialorder %v37, -1.0
  %vm402 = vcmp.ge.f32.partialorder %v38, -1.0
  %vm403 = vcmp.ge.f32.partialorder %v39, -1.0
  %vm404 = vcmp.ge.f32.partialorder %v40, -1.0
  %vm405 = vcmp.ge.f32.partialorder %v41, -1.0
  %vm406 = vcmp.ge.f32.partialorder %v42, -1.0
  %vm407 = vcmp.ge.f32.partialorder %v43, -1.0
  %vm408 = vcmp.ge.f32.partialorder %v44, -1.0
  %vm409 = vcmp.ge.f32.partialorder %v45, -1.0
  %vm410 = vcmp.ge.f32.partialorder %v46, -1.0
  %vm411 = vcmp.ge.f32.partialorder %v47, -1.0
  %vm412 = vcmp.ge.f32.partialorder %v48, -1.0
  %vm413 = vcmp.ge.f32.partialorder %v49, -1.0
  %vm414 = vcmp.ge.f32.partialorder %v50, -1.0
  %vm415 = vcmp.lt.f32.partialorder %v35, -0.6
  %vm416 = vcmp.lt.f32.partialorder %v36, -0.6
  %vm417 = vcmp.lt.f32.partialorder %v37, -0.6
  %vm418 = vcmp.lt.f32.partialorder %v38, -0.6
  %vm419 = vcmp.lt.f32.partialorder %v39, -0.6
  %vm420 = vcmp.lt.f32.partialorder %v40, -0.6
  %vm421 = vcmp.lt.f32.partialorder %v41, -0.6
  %vm422 = vcmp.lt.f32.partialorder %v42, -0.6
  %vm423 = vcmp.lt.f32.partialorder %v43, -0.6
  %vm424 = vcmp.lt.f32.partialorder %v44, -0.6
  %vm425 = vcmp.lt.f32.partialorder %v45, -0.6
  %vm426 = vcmp.lt.f32.partialorder %v46, -0.6
  %vm427 = vcmp.lt.f32.partialorder %v47, -0.6
  %vm428 = vcmp.lt.f32.partialorder %v48, -0.6
  %vm429 = vcmp.lt.f32.partialorder %v49, -0.6
  %vm430 = vcmp.lt.f32.partialorder %v50, -0.6
  %vm431 = vmand %vm399, %vm415
  %vm432 = vmand %vm400, %vm416
  %vm433 = vmand %vm401, %vm417
  %vm434 = vmand %vm402, %vm418
  %vm435 = vmand %vm403, %vm419
  %vm436 = vmand %vm404, %vm420
  %vm437 = vmand %vm405, %vm421
  %vm438 = vmand %vm406, %vm422
  %vm439 = vmand %vm407, %vm423
  %vm440 = vmand %vm408, %vm424
  %vm441 = vmand %vm409, %vm425
  %vm442 = vmand %vm410, %vm426
  %vm443 = vmand %vm411, %vm427
  %vm444 = vmand %vm412, %vm428
  %vm445 = vmand %vm413, %vm429
  %vm446 = vmand %vm414, %vm430
  %v447 = vsel %vm431, 1, 0
  %v448 = vsel %vm432, 1, 0
  %v449 = vsel %vm433, 1, 0
  %v450 = vsel %vm434, 1, 0
  %v451 = vsel %vm435, 1, 0
  %v452 = vsel %vm436, 1, 0
  %v453 = vsel %vm437, 1, 0
  %v454 = vsel %vm438, 1, 0
  %v455 = vsel %vm439, 1, 0
  %v456 = vsel %vm440, 1, 0
  %v457 = vsel %vm441, 1, 0
  %v458 = vsel %vm442, 1, 0
  %v459 = vsel %vm443, 1, 0
  %v460 = vsel %vm444, 1, 0
  %v461 = vsel %vm445, 1, 0
  %v462 = vsel %vm446, 1, 0
  %v463 = vcvt.s32.f32 %v447
  %v464 = vcvt.s32.f32 %v448
  %v465 = vcvt.s32.f32 %v449
  %v466 = vcvt.s32.f32 %v450
  %v467 = vcvt.s32.f32 %v451
  %v468 = vcvt.s32.f32 %v452
  %v469 = vcvt.s32.f32 %v453
  %v470 = vcvt.s32.f32 %v454
  %v471 = vcvt.s32.f32 %v455
  %v472 = vcvt.s32.f32 %v456
  %v473 = vcvt.s32.f32 %v457
  %v474 = vcvt.s32.f32 %v458
  %v475 = vcvt.s32.f32 %v459
  %v476 = vcvt.s32.f32 %v460
  %v477 = vcvt.s32.f32 %v461
  %v478 = vcvt.s32.f32 %v462
  %vm479 = vcmp.ge.f32.partialorder %v35, -0.6
  %vm480 = vcmp.ge.f32.partialorder %v36, -0.6
  %vm481 = vcmp.ge.f32.partialorder %v37, -0.6
  %vm482 = vcmp.ge.f32.partialorder %v38, -0.6
  %vm483 = vcmp.ge.f32.partialorder %v39, -0.6
  %vm484 = vcmp.ge.f32.partialorder %v40, -0.6
  %vm485 = vcmp.ge.f32.partialorder %v41, -0.6
  %vm486 = vcmp.ge.f32.partialorder %v42, -0.6
  %vm487 = vcmp.ge.f32.partialorder %v43, -0.6
  %vm488 = vcmp.ge.f32.partialorder %v44, -0.6
  %vm489 = vcmp.ge.f32.partialorder %v45, -0.6
  %vm490 = vcmp.ge.f32.partialorder %v46, -0.6
  %vm491 = vcmp.ge.f32.partialorder %v47, -0.6
  %vm492 = vcmp.ge.f32.partialorder %v48, -0.6
  %vm493 = vcmp.ge.f32.partialorder %v49, -0.6
  %vm494 = vcmp.ge.f32.partialorder %v50, -0.6
  %vm495 = vcmp.lt.f32.partialorder %v35, -0.2
  %vm496 = vcmp.lt.f32.partialorder %v36, -0.2
  %vm497 = vcmp.lt.f32.partialorder %v37, -0.2
  %vm498 = vcmp.lt.f32.partialorder %v38, -0.2
  %vm499 = vcmp.lt.f32.partialorder %v39, -0.2
  %vm500 = vcmp.lt.f32.partialorder %v40, -0.2
  %vm501 = vcmp.lt.f32.partialorder %v41, -0.2
  %vm502 = vcmp.lt.f32.partialorder %v42, -0.2
  %vm503 = vcmp.lt.f32.partialorder %v43, -0.2
  %vm504 = vcmp.lt.f32.partialorder %v44, -0.2
  %vm505 = vcmp.lt.f32.partialorder %v45, -0.2
  %vm506 = vcmp.lt.f32.partialorder %v46, -0.2
  %vm507 = vcmp.lt.f32.partialorder %v47, -0.2
  %vm508 = vcmp.lt.f32.partialorder %v48, -0.2
  %vm509 = vcmp.lt.f32.partialorder %v49, -0.2
  %vm510 = vcmp.lt.f32.partialorder %v50, -0.2
  %vm511 = vmand %vm479, %vm495
  %vm512 = vmand %vm480, %vm496
  %vm513 = vmand %vm481, %vm497
  %vm514 = vmand %vm482, %vm498
  %vm515 = vmand %vm483, %vm499
  %vm516 = vmand %vm484, %vm500
  %vm517 = vmand %vm485, %vm501
  %vm518 = vmand %vm486, %vm502
  %vm519 = vmand %vm487, %vm503
  %vm520 = vmand %vm488, %vm504
  %vm521 = vmand %vm489, %vm505
  %vm522 = vmand %vm490, %vm506
  %vm523 = vmand %vm491, %vm507
  %vm524 = vmand %vm492, %vm508
  %vm525 = vmand %vm493, %vm509
  %vm526 = vmand %vm494, %vm510
  %v527 = vsel %vm511, 1, 0
  %v528 = vsel %vm512, 1, 0
  %v529 = vsel %vm513, 1, 0
  %v530 = vsel %vm514, 1, 0
  %v531 = vsel %vm515, 1, 0
  %v532 = vsel %vm516, 1, 0
  %v533 = vsel %vm517, 1, 0
  %v534 = vsel %vm518, 1, 0
  %v535 = vsel %vm519, 1, 0
  %v536 = vsel %vm520, 1, 0
  %v537 = vsel %vm521, 1, 0
  %v538 = vsel %vm522, 1, 0
  %v539 = vsel %vm523, 1, 0
  %v540 = vsel %vm524, 1, 0
  %v541 = vsel %vm525, 1, 0
  %v542 = vsel %vm526, 1, 0
  %v543 = vcvt.s32.f32 %v527
  %v544 = vcvt.s32.f32 %v528
  %v545 = vcvt.s32.f32 %v529
  %v546 = vcvt.s32.f32 %v530
  %v547 = vcvt.s32.f32 %v531
  %v548 = vcvt.s32.f32 %v532
  %v549 = vcvt.s32.f32 %v533
  %v550 = vcvt.s32.f32 %v534
  %v551 = vcvt.s32.f32 %v535
  %v552 = vcvt.s32.f32 %v536
  %v553 = vcvt.s32.f32 %v537
  %v554 = vcvt.s32.f32 %v538
  %v555 = vcvt.s32.f32 %v539
  %v556 = vcvt.s32.f32 %v540
  %v557 = vcvt.s32.f32 %v541
  %v558 = vcvt.s32.f32 %v542
  %vm559 = vcmp.ge.f32.partialorder %v35, -0.2
  %vm560 = vcmp.ge.f32.partialorder %v36, -0.2
  %vm561 = vcmp.ge.f32.partialorder %v37, -0.2
  %vm562 = vcmp.ge.f32.partialorder %v38, -0.2
  %vm563 = vcmp.ge.f32.partialorder %v39, -0.2
  %vm564 = vcmp.ge.f32.partialorder %v40, -0.2
  %vm565 = vcmp.ge.f32.partialorder %v41, -0.2
  %vm566 = vcmp.ge.f32.partialorder %v42, -0.2
  %vm567 = vcmp.ge.f32.partialorder %v43, -0.2
  %vm568 = vcmp.ge.f32.partialorder %v44, -0.2
  %vm569 = vcmp.ge.f32.partialorder %v45, -0.2
  %vm570 = vcmp.ge.f32.partialorder %v46, -0.2
  %vm571 = vcmp.ge.f32.partialorder %v47, -0.2
  %vm572 = vcmp.ge.f32.partialorder %v48, -0.2
  %vm573 = vcmp.ge.f32.partialorder %v49, -0.2
  %vm574 = vcmp.ge.f32.partialorder %v50, -0.2
  %vm575 = vcmp.lt.f32.partialorder %v35, 0.2
  %vm576 = vcmp.lt.f32.partialorder %v36, 0.2
  %vm577 = vcmp.lt.f32.partialorder %v37, 0.2
  %vm578 = vcmp.lt.f32.partialorder %v38, 0.2
  %vm579 = vcmp.lt.f32.partialorder %v39, 0.2
  %vm580 = vcmp.lt.f32.partialorder %v40, 0.2
  %vm581 = vcmp.lt.f32.partialorder %v41, 0.2
  %vm582 = vcmp.lt.f32.partialorder %v42, 0.2
  %vm583 = vcmp.lt.f32.partialorder %v43, 0.2
  %vm584 = vcmp.lt.f32.partialorder %v44, 0.2
  %vm585 = vcmp.lt.f32.partialorder %v45, 0.2
  %vm586 = vcmp.lt.f32.partialorder %v46, 0.2
  %vm587 = vcmp.lt.f32.partialorder %v47, 0.2
  %vm588 = vcmp.lt.f32.partialorder %v48, 0.2
  %vm589 = vcmp.lt.f32.partialorder %v49, 0.2
  %vm590 = vcmp.lt.f32.partialorder %v50, 0.2
  %vm591 = vmand %vm559, %vm575
  %vm592 = vmand %vm560, %vm576
  %vm593 = vmand %vm561, %vm577
  %vm594 = vmand %vm562, %vm578
  %vm595 = vmand %vm563, %vm579
  %vm596 = vmand %vm564, %vm580
  %vm597 = vmand %vm565, %vm581
  %vm598 = vmand %vm566, %vm582
  %vm599 = vmand %vm567, %vm583
  %vm600 = vmand %vm568, %vm584
  %vm601 = vmand %vm569, %vm585
  %vm602 = vmand %vm570, %vm586
  %vm603 = vmand %vm571, %vm587
  %vm604 = vmand %vm572, %vm588
  %vm605 = vmand %vm573, %vm589
  %vm606 = vmand %vm574, %vm590
  %v607 = vsel %vm591, 1, 0
  %v608 = vsel %vm592, 1, 0
  %v609 = vsel %vm593, 1, 0
  %v610 = vsel %vm594, 1, 0
  %v611 = vsel %vm595, 1, 0
  %v612 = vsel %vm596, 1, 0
  %v613 = vsel %vm597, 1, 0
  %v614 = vsel %vm598, 1, 0
  %v615 = vsel %vm599, 1, 0
  %v616 = vsel %vm600, 1, 0
  %v617 = vsel %vm601, 1, 0
  %v618 = vsel %vm602, 1, 0
  %v619 = vsel %vm603, 1, 0
  %v620 = vsel %vm604, 1, 0
  %v621 = vsel %vm605, 1, 0
  %v622 = vsel %vm606, 1, 0
  %v623 = vcvt.s32.f32 %v607
  %v624 = vcvt.s32.f32 %v608
  %v625 = vcvt.s32.f32 %v609
  %v626 = vcvt.s32.f32 %v610
  %v627 = vcvt.s32.f32 %v611
  %v628 = vcvt.s32.f32 %v612
  %v629 = vcvt.s32.f32 %v613
  %v630 = vcvt.s32.f32 %v614
  %v631 = vcvt.s32.f32 %v615
  %v632 = vcvt.s32.f32 %v616
  %v633 = vcvt.s32.f32 %v617
  %v634 = vcvt.s32.f32 %v618
  %v635 = vcvt.s32.f32 %v619
  %v636 = vcvt.s32.f32 %v620
  %v637 = vcvt.s32.f32 %v621
  %v638 = vcvt.s32.f32 %v622
  %vm639 = vcmp.ge.f32.partialorder %v35, 0.2
  %vm640 = vcmp.ge.f32.partialorder %v36, 0.2
  %vm641 = vcmp.ge.f32.partialorder %v37, 0.2
  %vm642 = vcmp.ge.f32.partialorder %v38, 0.2
  %vm643 = vcmp.ge.f32.partialorder %v39, 0.2
  %vm644 = vcmp.ge.f32.partialorder %v40, 0.2
  %vm645 = vcmp.ge.f32.partialorder %v41, 0.2
  %vm646 = vcmp.ge.f32.partialorder %v42, 0.2
  %vm647 = vcmp.ge.f32.partialorder %v43, 0.2
  %vm648 = vcmp.ge.f32.partialorder %v44, 0.2
  %vm649 = vcmp.ge.f32.partialorder %v45, 0.2
  %vm650 = vcmp.ge.f32.partialorder %v46, 0.2
  %vm651 = vcmp.ge.f32.partialorder %v47, 0.2
  %vm652 = vcmp.ge.f32.partialorder %v48, 0.2
  %vm653 = vcmp.ge.f32.partialorder %v49, 0.2
  %vm654 = vcmp.ge.f32.partialorder %v50, 0.2
  %vm655 = vcmp.lt.f32.partialorder %v35, 0.6
  %vm656 = vcmp.lt.f32.partialorder %v36, 0.6
  %vm657 = vcmp.lt.f32.partialorder %v37, 0.6
  %vm658 = vcmp.lt.f32.partialorder %v38, 0.6
  %vm659 = vcmp.lt.f32.partialorder %v39, 0.6
  %vm660 = vcmp.lt.f32.partialorder %v40, 0.6
  %vm661 = vcmp.lt.f32.partialorder %v41, 0.6
  %vm662 = vcmp.lt.f32.partialorder %v42, 0.6
  %vm663 = vcmp.lt.f32.partialorder %v43, 0.6
  %vm664 = vcmp.lt.f32.partialorder %v44, 0.6
  %vm665 = vcmp.lt.f32.partialorder %v45, 0.6
  %vm666 = vcmp.lt.f32.partialorder %v46, 0.6
  %vm667 = vcmp.lt.f32.partialorder %v47, 0.6
  %vm668 = vcmp.lt.f32.partialorder %v48, 0.6
  %vm669 = vcmp.lt.f32.partialorder %v49, 0.6
  %vm670 = vcmp.lt.f32.partialorder %v50, 0.6
  %vm671 = vmand %vm639, %vm655
  %vm672 = vmand %vm640, %vm656
  %vm673 = vmand %vm641, %vm657
  %vm674 = vmand %vm642, %vm658
  %vm675 = vmand %vm643, %vm659
  %vm676 = vmand %vm644, %vm660
  %vm677 = vmand %vm645, %vm661
  %vm678 = vmand %vm646, %vm662
  %vm679 = vmand %vm647, %vm663
  %vm680 = vmand %vm648, %vm664
  %vm681 = vmand %vm649, %vm665
  %vm682 = vmand %vm650, %vm666
  %vm683 = vmand %vm651, %vm667
  %vm684 = vmand %vm652, %vm668
  %vm685 = vmand %vm653, %vm669
  %vm686 = vmand %vm654, %vm670
  %v687 = vsel %vm671, 1, 0
  %v688 = vsel %vm672, 1, 0
  %v689 = vsel %vm673, 1, 0
  %v690 = vsel %vm674, 1, 0
  %v691 = vsel %vm675, 1, 0
  %v692 = vsel %vm676, 1, 0
  %v693 = vsel %vm677, 1, 0
  %v694 = vsel %vm678, 1, 0
  %v695 = vsel %vm679, 1, 0
  %v696 = vsel %vm680, 1, 0
  %v697 = vsel %vm681, 1, 0
  %v698 = vsel %vm682, 1, 0
  %v699 = vsel %vm683, 1, 0
  %v700 = vsel %vm684, 1, 0
  %v701 = vsel %vm685, 1, 0
  %v702 = vsel %vm686, 1, 0
  %v703 = vcvt.s32.f32 %v687
  %v704 = vcvt.s32.f32 %v688
  %v705 = vcvt.s32.f32 %v689
  %v706 = vcvt.s32.f32 %v690
  %v707 = vcvt.s32.f32 %v691
  %v708 = vcvt.s32.f32 %v692
  %v709 = vcvt.s32.f32 %v693
  %v710 = vcvt.s32.f32 %v694
  %v711 = vcvt.s32.f32 %v695
  %v712 = vcvt.s32.f32 %v696
  %v713 = vcvt.s32.f32 %v697
  %v714 = vcvt.s32.f32 %v698
  %v715 = vcvt.s32.f32 %v699
  %v716 = vcvt.s32.f32 %v700
  %v717 = vcvt.s32.f32 %v701
  %v718 = vcvt.s32.f32 %v702
  %vm719 = vcmp.ge.f32.partialorder %v35, 0.6
  %vm720 = vcmp.ge.f32.partialorder %v36, 0.6
  %vm721 = vcmp.ge.f32.partialorder %v37, 0.6
  %vm722 = vcmp.ge.f32.partialorder %v38, 0.6
  %vm723 = vcmp.ge.f32.partialorder %v39, 0.6
  %vm724 = vcmp.ge.f32.partialorder %v40, 0.6
  %vm725 = vcmp.ge.f32.partialorder %v41, 0.6
  %vm726 = vcmp.ge.f32.partialorder %v42, 0.6
  %vm727 = vcmp.ge.f32.partialorder %v43, 0.6
  %vm728 = vcmp.ge.f32.partialorder %v44, 0.6
  %vm729 = vcmp.ge.f32.partialorder %v45, 0.6
  %vm730 = vcmp.ge.f32.partialorder %v46, 0.6
  %vm731 = vcmp.ge.f32.partialorder %v47, 0.6
  %vm732 = vcmp.ge.f32.partialorder %v48, 0.6
  %vm733 = vcmp.ge.f32.partialorder %v49, 0.6
  %vm734 = vcmp.ge.f32.partialorder %v50, 0.6
  %vm735 = vcmp.lt.f32.partialorder %v35, 1.0
  %vm736 = vcmp.lt.f32.partialorder %v36, 1.0
  %vm737 = vcmp.lt.f32.partialorder %v37, 1.0
  %vm738 = vcmp.lt.f32.partialorder %v38, 1.0
  %vm739 = vcmp.lt.f32.partialorder %v39, 1.0
  %vm740 = vcmp.lt.f32.partialorder %v40, 1.0
  %vm741 = vcmp.lt.f32.partialorder %v41, 1.0
  %vm742 = vcmp.lt.f32.partialorder %v42, 1.0
  %vm743 = vcmp.lt.f32.partialorder %v43, 1.0
  %vm744 = vcmp.lt.f32.partialorder %v44, 1.0
  %vm745 = vcmp.lt.f32.partialorder %v45, 1.0
  %vm746 = vcmp.lt.f32.partialorder %v46, 1.0
  %vm747 = vcmp.lt.f32.partialorder %v47, 1.0
  %vm748 = vcmp.lt.f32.partialorder %v48, 1.0
  %vm749 = vcmp.lt.f32.partialorder %v49, 1.0
  %vm750 = vcmp.lt.f32.partialorder %v50, 1.0
  %vm751 = vmand %vm719, %vm735
  %vm752 = vmand %vm720, %vm736
  %vm753 = vmand %vm721, %vm737
  %vm754 = vmand %vm722, %vm738
  %vm755 = vmand %vm723, %vm739
  %vm756 = vmand %vm724, %vm740
  %vm757 = vmand %vm725, %vm741
  %vm758 = vmand %vm726, %vm742
  %vm759 = vmand %vm727, %vm743
  %vm760 = vmand %vm728, %vm744
  %vm761 = vmand %vm729, %vm745
  %vm762 = vmand %vm730, %vm746
  %vm763 = vmand %vm731, %vm747
  %vm764 = vmand %vm732, %vm748
  %vm765 = vmand %vm733, %vm749
  %vm766 = vmand %vm734, %vm750
  %v767 = vsel %vm751, 1, 0
  %v768 = vsel %vm752, 1, 0
  %v769 = vsel %vm753, 1, 0
  %v770 = vsel %vm754, 1, 0
  %v771 = vsel %vm755, 1, 0
  %v772 = vsel %vm756, 1, 0
  %v773 = vsel %vm757, 1, 0
  %v774 = vsel %vm758, 1, 0
  %v775 = vsel %vm759, 1, 0
  %v776 = vsel %vm760, 1, 0
  %v777 = vsel %vm761, 1, 0
  %v778 = vsel %vm762, 1, 0
  %v779 = vsel %vm763, 1, 0
  %v780 = vsel %vm764, 1, 0
  %v781 = vsel %vm765, 1, 0
  %v782 = vsel %vm766, 1, 0
  %v783 = vcvt.s32.f32 %v767
  %v784 = vcvt.s32.f32 %v768
  %v785 = vcvt.s32.f32 %v769
  %v786 = vcvt.s32.f32 %v770
  %v787 = vcvt.s32.f32 %v771
  %v788 = vcvt.s32.f32 %v772
  %v789 = vcvt.s32.f32 %v773
  %v790 = vcvt.s32.f32 %v774
  %v791 = vcvt.s32.f32 %v775
  %v792 = vcvt.s32.f32 %v776
  %v793 = vcvt.s32.f32 %v777
  %v794 = vcvt.s32.f32 %v778
  %v795 = vcvt.s32.f32 %v779
  %v796 = vcvt.s32.f32 %v780
  %v797 = vcvt.s32.f32 %v781
  %v798 = vcvt.s32.f32 %v782
  %vm799 = vcmp.ge.f32.partialorder %v35, 1.0
  %vm800 = vcmp.ge.f32.partialorder %v36, 1.0
  %vm801 = vcmp.ge.f32.partialorder %v37, 1.0
  %vm802 = vcmp.ge.f32.partialorder %v38, 1.0
  %vm803 = vcmp.ge.f32.partialorder %v39, 1.0
  %vm804 = vcmp.ge.f32.partialorder %v40, 1.0
  %vm805 = vcmp.ge.f32.partialorder %v41, 1.0
  %vm806 = vcmp.ge.f32.partialorder %v42, 1.0
  %vm807 = vcmp.ge.f32.partialorder %v43, 1.0
  %vm808 = vcmp.ge.f32.partialorder %v44, 1.0
  %vm809 = vcmp.ge.f32.partialorder %v45, 1.0
  %vm810 = vcmp.ge.f32.partialorder %v46, 1.0
  %vm811 = vcmp.ge.f32.partialorder %v47, 1.0
  %vm812 = vcmp.ge.f32.partialorder %v48, 1.0
  %vm813 = vcmp.ge.f32.partialorder %v49, 1.0
  %vm814 = vcmp.ge.f32.partialorder %v50, 1.0
  %vm815 = vcmp.lt.f32.partialorder %v35, 1.4
  %vm816 = vcmp.lt.f32.partialorder %v36, 1.4
  %vm817 = vcmp.lt.f32.partialorder %v37, 1.4
  %vm818 = vcmp.lt.f32.partialorder %v38, 1.4
  %vm819 = vcmp.lt.f32.partialorder %v39, 1.4
  %vm820 = vcmp.lt.f32.partialorder %v40, 1.4
  %vm821 = vcmp.lt.f32.partialorder %v41, 1.4
  %vm822 = vcmp.lt.f32.partialorder %v42, 1.4
  %vm823 = vcmp.lt.f32.partialorder %v43, 1.4
  %vm824 = vcmp.lt.f32.partialorder %v44, 1.4
  %vm825 = vcmp.lt.f32.partialorder %v45, 1.4
  %vm826 = vcmp.lt.f32.partialorder %v46, 1.4
  %vm827 = vcmp.lt.f32.partialorder %v47, 1.4
  %vm828 = vcmp.lt.f32.partialorder %v48, 1.4
  %vm829 = vcmp.lt.f32.partialorder %v49, 1.4
  %vm830 = vcmp.lt.f32.partialorder %v50, 1.4
  %vm831 = vmand %vm799, %vm815
  %vm832 = vmand %vm800, %vm816
  %vm833 = vmand %vm801, %vm817
  %vm834 = vmand %vm802, %vm818
  %vm835 = vmand %vm803, %vm819
  %vm836 = vmand %vm804, %vm820
  %vm837 = vmand %vm805, %vm821
  %vm838 = vmand %vm806, %vm822
  %vm839 = vmand %vm807, %vm823
  %vm840 = vmand %vm808, %vm824
  %vm841 = vmand %vm809, %vm825
  %vm842 = vmand %vm810, %vm826
  %vm843 = vmand %vm811, %vm827
  %vm844 = vmand %vm812, %vm828
  %vm845 = vmand %vm813, %vm829
  %vm846 = vmand %vm814, %vm830
  %v847 = vsel %vm831, 1, 0
  %v848 = vsel %vm832, 1, 0
  %v849 = vsel %vm833, 1, 0
  %v850 = vsel %vm834, 1, 0
  %v851 = vsel %vm835, 1, 0
  %v852 = vsel %vm836, 1, 0
  %v853 = vsel %vm837, 1, 0
  %v854 = vsel %vm838, 1, 0
  %v855 = vsel %vm839, 1, 0
  %v856 = vsel %vm840, 1, 0
  %v857 = vsel %vm841, 1, 0
  %v858 = vsel %vm842, 1, 0
  %v859 = vsel %vm843, 1, 0
  %v860 = vsel %vm844, 1, 0
  %v861 = vsel %vm845, 1, 0
  %v862 = vsel %vm846, 1, 0
  %v863 = vcvt.s32.f32 %v847
  %v864 = vcvt.s32.f32 %v848
  %v865 = vcvt.s32.f32 %v849
  %v866 = vcvt.s32.f32 %v850
  %v867 = vcvt.s32.f32 %v851
  %v868 = vcvt.s32.f32 %v852
  %v869 = vcvt.s32.f32 %v853
  %v870 = vcvt.s32.f32 %v854
  %v871 = vcvt.s32.f32 %v855
  %v872 = vcvt.s32.f32 %v856
  %v873 = vcvt.s32.f32 %v857
  %v874 = vcvt.s32.f32 %v858
  %v875 = vcvt.s32.f32 %v859
  %v876 = vcvt.s32.f32 %v860
  %v877 = vcvt.s32.f32 %v861
  %v878 = vcvt.s32.f32 %v862
  %vm879 = vcmp.ge.f32.partialorder %v35, 1.4
  %vm880 = vcmp.ge.f32.partialorder %v36, 1.4
  %vm881 = vcmp.ge.f32.partialorder %v37, 1.4
  %vm882 = vcmp.ge.f32.partialorder %v38, 1.4
  %vm883 = vcmp.ge.f32.partialorder %v39, 1.4
  %vm884 = vcmp.ge.f32.partialorder %v40, 1.4
  %vm885 = vcmp.ge.f32.partialorder %v41, 1.4
  %vm886 = vcmp.ge.f32.partialorder %v42, 1.4
  %vm887 = vcmp.ge.f32.partialorder %v43, 1.4
  %vm888 = vcmp.ge.f32.partialorder %v44, 1.4
  %vm889 = vcmp.ge.f32.partialorder %v45, 1.4
  %vm890 = vcmp.ge.f32.partialorder %v46, 1.4
  %vm891 = vcmp.ge.f32.partialorder %v47, 1.4
  %vm892 = vcmp.ge.f32.partialorder %v48, 1.4
  %vm893 = vcmp.ge.f32.partialorder %v49, 1.4
  %vm894 = vcmp.ge.f32.partialorder %v50, 1.4
  %vm895 = vcmp.lt.f32.partialorder %v35, 1.8
  %vm896 = vcmp.lt.f32.partialorder %v36, 1.8
  %vm897 = vcmp.lt.f32.partialorder %v37, 1.8
  %vm898 = vcmp.lt.f32.partialorder %v38, 1.8
  %vm899 = vcmp.lt.f32.partialorder %v39, 1.8
  %vm900 = vcmp.lt.f32.partialorder %v40, 1.8
  %vm901 = vcmp.lt.f32.partialorder %v41, 1.8
  %vm902 = vcmp.lt.f32.partialorder %v42, 1.8
  %vm903 = vcmp.lt.f32.partialorder %v43, 1.8
  %vm904 = vcmp.lt.f32.partialorder %v44, 1.8
  %vm905 = vcmp.lt.f32.partialorder %v45, 1.8
  %vm906 = vcmp.lt.f32.partialorder %v46, 1.8
  %vm907 = vcmp.lt.f32.partialorder %v47, 1.8
  %vm908 = vcmp.lt.f32.partialorder %v48, 1.8
  %vm909 = vcmp.lt.f32.partialorder %v49, 1.8
  %vm910 = vcmp.lt.f32.partialorder %v50, 1.8
  %vm911 = vmand %vm879, %vm895
  %vm912 = vmand %vm880, %vm896
  %vm913 = vmand %vm881, %vm897
  %vm914 = vmand %vm882, %vm898
  %vm915 = vmand %vm883, %vm899
  %vm916 = vmand %vm884, %vm900
  %vm917 = vmand %vm885, %vm901
  %vm918 = vmand %vm886, %vm902
  %vm919 = vmand %vm887, %vm903
  %vm920 = vmand %vm888, %vm904
  %vm921 = vmand %vm889, %vm905
  %vm922 = vmand %vm890, %vm906
  %vm923 = vmand %vm891, %vm907
  %vm924 = vmand %vm892, %vm908
  %vm925 = vmand %vm893, %vm909
  %vm926 = vmand %vm894, %vm910
  %v927 = vsel %vm911, 1, 0
  %v928 = vsel %vm912, 1, 0
  %v929 = vsel %vm913, 1, 0
  %v930 = vsel %vm914, 1, 0
  %v931 = vsel %vm915, 1, 0
  %v932 = vsel %vm916, 1, 0
  %v933 = vsel %vm917, 1, 0
  %v934 = vsel %vm918, 1, 0
  %v935 = vsel %vm919, 1, 0
  %v936 = vsel %vm920, 1, 0
  %v937 = vsel %vm921, 1, 0
  %v938 = vsel %vm922, 1, 0
  %v939 = vsel %vm923, 1, 0
  %v940 = vsel %vm924, 1, 0
  %v941 = vsel %vm925, 1, 0
  %v942 = vsel %vm926, 1, 0
  %v943 = vcvt.s32.f32 %v927
  %v944 = vcvt.s32.f32 %v928
  %v945 = vcvt.s32.f32 %v929
  %v946 = vcvt.s32.f32 %v930
  %v947 = vcvt.s32.f32 %v931
  %v948 = vcvt.s32.f32 %v932
  %v949 = vcvt.s32.f32 %v933
  %v950 = vcvt.s32.f32 %v934
  %v951 = vcvt.s32.f32 %v935
  %v952 = vcvt.s32.f32 %v936
  %v953 = vcvt.s32.f32 %v937
  %v954 = vcvt.s32.f32 %v938
  %v955 = vcvt.s32.f32 %v939
  %v956 = vcvt.s32.f32 %v940
  %v957 = vcvt.s32.f32 %v941
  %v958 = vcvt.s32.f32 %v942
  %vm959 = vcmp.ge.f32.partialorder %v35, 1.8
  %vm960 = vcmp.ge.f32.partialorder %v36, 1.8
  %vm961 = vcmp.ge.f32.partialorder %v37, 1.8
  %vm962 = vcmp.ge.f32.partialorder %v38, 1.8
  %vm963 = vcmp.ge.f32.partialorder %v39, 1.8
  %vm964 = vcmp.ge.f32.partialorder %v40, 1.8
  %vm965 = vcmp.ge.f32.partialorder %v41, 1.8
  %vm966 = vcmp.ge.f32.partialorder %v42, 1.8
  %vm967 = vcmp.ge.f32.partialorder %v43, 1.8
  %vm968 = vcmp.ge.f32.partialorder %v44, 1.8
  %vm969 = vcmp.ge.f32.partialorder %v45, 1.8
  %vm970 = vcmp.ge.f32.partialorder %v46, 1.8
  %vm971 = vcmp.ge.f32.partialorder %v47, 1.8
  %vm972 = vcmp.ge.f32.partialorder %v48, 1.8
  %vm973 = vcmp.ge.f32.partialorder %v49, 1.8
  %vm974 = vcmp.ge.f32.partialorder %v50, 1.8
  %vm975 = vcmp.lt.f32.partialorder %v35, 2.2
  %vm976 = vcmp.lt.f32.partialorder %v36, 2.2
  %vm977 = vcmp.lt.f32.partialorder %v37, 2.2
  %vm978 = vcmp.lt.f32.partialorder %v38, 2.2
  %vm979 = vcmp.lt.f32.partialorder %v39, 2.2
  %vm980 = vcmp.lt.f32.partialorder %v40, 2.2
  %vm981 = vcmp.lt.f32.partialorder %v41, 2.2
  %vm982 = vcmp.lt.f32.partialorder %v42, 2.2
  %vm983 = vcmp.lt.f32.partialorder %v43, 2.2
  %vm984 = vcmp.lt.f32.partialorder %v44, 2.2
  %vm985 = vcmp.lt.f32.partialorder %v45, 2.2
  %vm986 = vcmp.lt.f32.partialorder %v46, 2.2
  %vm987 = vcmp.lt.f32.partialorder %v47, 2.2
  %vm988 = vcmp.lt.f32.partialorder %v48, 2.2
  %vm989 = vcmp.lt.f32.partialorder %v49, 2.2
  %vm990 = vcmp.lt.f32.partialorder %v50, 2.2
  %vm991 = vmand %vm959, %vm975
  %vm992 = vmand %vm960, %vm976
  %vm993 = vmand %vm961, %vm977
  %vm994 = vmand %vm962, %vm978
  %vm995 = vmand %vm963, %vm979
  %vm996 = vmand %vm964, %vm980
  %vm997 = vmand %vm965, %vm981
  %vm998 = vmand %vm966, %vm982
  %vm999 = vmand %vm967, %vm983
  %vm1000 = vmand %vm968, %vm984
  %vm1001 = vmand %vm969, %vm985
  %vm1002 = vmand %vm970, %vm986
  %vm1003 = vmand %vm971, %vm987
  %vm1004 = vmand %vm972, %vm988
  %vm1005 = vmand %vm973, %vm989
  %vm1006 = vmand %vm974, %vm990
  %v1007 = vsel %vm991, 1, 0
  %v1008 = vsel %vm992, 1, 0
  %v1009 = vsel %vm993, 1, 0
  %v1010 = vsel %vm994, 1, 0
  %v1011 = vsel %vm995, 1, 0
  %v1012 = vsel %vm996, 1, 0
  %v1013 = vsel %vm997, 1, 0
  %v1014 = vsel %vm998, 1, 0
  %v1015 = vsel %vm999, 1, 0
  %v1016 = vsel %vm1000, 1, 0
  %v1017 = vsel %vm1001, 1, 0
  %v1018 = vsel %vm1002, 1, 0
  %v1019 = vsel %vm1003, 1, 0
  %v1020 = vsel %vm1004, 1, 0
  %v1021 = vsel %vm1005, 1, 0
  %v1022 = vsel %vm1006, 1, 0
  %v1023 = vcvt.s32.f32 %v1007
  %v1024 = vcvt.s32.f32 %v1008
  %v1025 = vcvt.s32.f32 %v1009
  %v1026 = vcvt.s32.f32 %v1010
  %v1027 = vcvt.s32.f32 %v1011
  %v1028 = vcvt.s32.f32 %v1012
  %v1029 = vcvt.s32.f32 %v1013
  %v1030 = vcvt.s32.f32 %v1014
  %v1031 = vcvt.s32.f32 %v1015
  %v1032 = vcvt.s32.f32 %v1016
  %v1033 = vcvt.s32.f32 %v1017
  %v1034 = vcvt.s32.f32 %v1018
  %v1035 = vcvt.s32.f32 %v1019
  %v1036 = vcvt.s32.f32 %v1020
  %v1037 = vcvt.s32.f32 %v1021
  %v1038 = vcvt.s32.f32 %v1022
  %v1039 = vsub.f32 %v35, -2.2
  %v1040 = vsub.f32 %v36, -2.2
  %v1041 = vsub.f32 %v37, -2.2
  %v1042 = vsub.f32 %v38, -2.2
  %v1043 = vsub.f32 %v39, -2.2
  %v1044 = vsub.f32 %v40, -2.2
  %v1045 = vsub.f32 %v41, -2.2
  %v1046 = vsub.f32 %v42, -2.2
  %v1047 = vsub.f32 %v43, -2.2
  %v1048 = vsub.f32 %v44, -2.2
  %v1049 = vsub.f32 %v45, -2.2
  %v1050 = vsub.f32 %v46, -2.2
  %v1051 = vsub.f32 %v47, -2.2
  %v1052 = vsub.f32 %v48, -2.2
  %v1053 = vsub.f32 %v49, -2.2
  %v1054 = vsub.f32 %v50, -2.2
  %v1055 = vmul.f32 %v1039, 2.5
  %v1056 = vmul.f32 %v1040, 2.5
  %v1057 = vmul.f32 %v1041, 2.5
  %v1058 = vmul.f32 %v1042, 2.5
  %v1059 = vmul.f32 %v1043, 2.5
  %v1060 = vmul.f32 %v1044, 2.5
  %v1061 = vmul.f32 %v1045, 2.5
  %v1062 = vmul.f32 %v1046, 2.5
  %v1063 = vmul.f32 %v1047, 2.5
  %v1064 = vmul.f32 %v1048, 2.5
  %v1065 = vmul.f32 %v1049, 2.5
  %v1066 = vmul.f32 %v1050, 2.5
  %v1067 = vmul.f32 %v1051, 2.5
  %v1068 = vmul.f32 %v1052, 2.5
  %v1069 = vmul.f32 %v1053, 2.5
  %v1070 = vmul.f32 %v1054, 2.5
  %v1071 = vmul.f32 %v1055, %v223
  %v1072 = vmul.f32 %v1056, %v224
  %v1073 = vmul.f32 %v1057, %v225
  %v1074 = vmul.f32 %v1058, %v226
  %v1075 = vmul.f32 %v1059, %v227
  %v1076 = vmul.f32 %v1060, %v228
  %v1077 = vmul.f32 %v1061, %v229
  %v1078 = vmul.f32 %v1062, %v230
  %v1079 = vmul.f32 %v1063, %v231
  %v1080 = vmul.f32 %v1064, %v232
  %v1081 = vmul.f32 %v1065, %v233
  %v1082 = vmul.f32 %v1066, %v234
  %v1083 = vmul.f32 %v1067, %v235
  %v1084 = vmul.f32 %v1068, %v236
  %v1085 = vmul.f32 %v1069, %v237
  %v1086 = vmul.f32 %v1070, %v238
  %v1087 = vsub.f32 -1.4, %v35
  %v1088 = vsub.f32 -1.4, %v36
  %v1089 = vsub.f32 -1.4, %v37
  %v1090 = vsub.f32 -1.4, %v38
  %v1091 = vsub.f32 -1.4, %v39
  %v1092 = vsub.f32 -1.4, %v40
  %v1093 = vsub.f32 -1.4, %v41
  %v1094 = vsub.f32 -1.4, %v42
  %v1095 = vsub.f32 -1.4, %v43
  %v1096 = vsub.f32 -1.4, %v44
  %v1097 = vsub.f32 -1.4, %v45
  %v1098 = vsub.f32 -1.4, %v46
  %v1099 = vsub.f32 -1.4, %v47
  %v1100 = vsub.f32 -1.4, %v48
  %v1101 = vsub.f32 -1.4, %v49
  %v1102 = vsub.f32 -1.4, %v50
  %v1103 = vmul.f32 %v1087, 2.5
  %v1104 = vmul.f32 %v1088, 2.5
  %v1105 = vmul.f32 %v1089, 2.5
  %v1106 = vmul.f32 %v1090, 2.5
  %v1107 = vmul.f32 %v1091, 2.5
  %v1108 = vmul.f32 %v1092, 2.5
  %v1109 = vmul.f32 %v1093, 2.5
  %v1110 = vmul.f32 %v1094, 2.5
  %v1111 = vmul.f32 %v1095, 2.5
  %v1112 = vmul.f32 %v1096, 2.5
  %v1113 = vmul.f32 %v1097, 2.5
  %v1114 = vmul.f32 %v1098, 2.5
  %v1115 = vmul.f32 %v1099, 2.5
  %v1116 = vmul.f32 %v1100, 2.5
  %v1117 = vmul.f32 %v1101, 2.5
  %v1118 = vmul.f32 %v1102, 2.5
  %v1119 = vmul.f32 %v1103, %v303
  %v1120 = vmul.f32 %v1104, %v304
  %v1121 = vmul.f32 %v1105, %v305
  %v1122 = vmul.f32 %v1106, %v306
  %v1123 = vmul.f32 %v1107, %v307
  %v1124 = vmul.f32 %v1108, %v308
  %v1125 = vmul.f32 %v1109, %v309
  %v1126 = vmul.f32 %v1110, %v310
  %v1127 = vmul.f32 %v1111, %v311
  %v1128 = vmul.f32 %v1112, %v312
  %v1129 = vmul.f32 %v1113, %v313
  %v1130 = vmul.f32 %v1114, %v314
  %v1131 = vmul.f32 %v1115, %v315
  %v1132 = vmul.f32 %v1116, %v316
  %v1133 = vmul.f32 %v1117, %v317
  %v1134 = vmul.f32 %v1118, %v318
  %v1135 = vadd.f32 %v1071, %v1119
  %v1136 = vadd.f32 %v1072, %v1120
  %v1137 = vadd.f32 %v1073, %v1121
  %v1138 = vadd.f32 %v1074, %v1122
  %v1139 = vadd.f32 %v1075, %v1123
  %v1140 = vadd.f32 %v1076, %v1124
  %v1141 = vadd.f32 %v1077, %v1125
  %v1142 = vadd.f32 %v1078, %v1126
  %v1143 = vadd.f32 %v1079, %v1127
  %v1144 = vadd.f32 %v1080, %v1128
  %v1145 = vadd.f32 %v1081, %v1129
  %v1146 = vadd.f32 %v1082, %v1130
  %v1147 = vadd.f32 %v1083, %v1131
  %v1148 = vadd.f32 %v1084, %v1132
  %v1149 = vadd.f32 %v1085, %v1133
  %v1150 = vadd.f32 %v1086, %v1134
  %v1151 = vsub.f32 %v35, -1.8
  %v1152 = vsub.f32 %v36, -1.8
  %v1153 = vsub.f32 %v37, -1.8
  %v1154 = vsub.f32 %v38, -1.8
  %v1155 = vsub.f32 %v39, -1.8
  %v1156 = vsub.f32 %v40, -1.8
  %v1157 = vsub.f32 %v41, -1.8
  %v1158 = vsub.f32 %v42, -1.8
  %v1159 = vsub.f32 %v43, -1.8
  %v1160 = vsub.f32 %v44, -1.8
  %v1161 = vsub.f32 %v45, -1.8
  %v1162 = vsub.f32 %v46, -1.8
  %v1163 = vsub.f32 %v47, -1.8
  %v1164 = vsub.f32 %v48, -1.8
  %v1165 = vsub.f32 %v49, -1.8
  %v1166 = vsub.f32 %v50, -1.8
  %v1167 = vmul.f32 %v1151, 2.5
  %v1168 = vmul.f32 %v1152, 2.5
  %v1169 = vmul.f32 %v1153, 2.5
  %v1170 = vmul.f32 %v1154, 2.5
  %v1171 = vmul.f32 %v1155, 2.5
  %v1172 = vmul.f32 %v1156, 2.5
  %v1173 = vmul.f32 %v1157, 2.5
  %v1174 = vmul.f32 %v1158, 2.5
  %v1175 = vmul.f32 %v1159, 2.5
  %v1176 = vmul.f32 %v1160, 2.5
  %v1177 = vmul.f32 %v1161, 2.5
  %v1178 = vmul.f32 %v1162, 2.5
  %v1179 = vmul.f32 %v1163, 2.5
  %v1180 = vmul.f32 %v1164, 2.5
  %v1181 = vmul.f32 %v1165, 2.5
  %v1182 = vmul.f32 %v1166, 2.5
  %v1183 = vmul.f32 %v1167, %v303
  %v1184 = vmul.f32 %v1168, %v304
  %v1185 = vmul.f32 %v1169, %v305
  %v1186 = vmul.f32 %v1170, %v306
  %v1187 = vmul.f32 %v1171, %v307
  %v1188 = vmul.f32 %v1172, %v308
  %v1189 = vmul.f32 %v1173, %v309
  %v1190 = vmul.f32 %v1174, %v310
  %v1191 = vmul.f32 %v1175, %v311
  %v1192 = vmul.f32 %v1176, %v312
  %v1193 = vmul.f32 %v1177, %v313
  %v1194 = vmul.f32 %v1178, %v314
  %v1195 = vmul.f32 %v1179, %v315
  %v1196 = vmul.f32 %v1180, %v316
  %v1197 = vmul.f32 %v1181, %v317
  %v1198 = vmul.f32 %v1182, %v318
  %v1199 = vsub.f32 -1.0, %v35
  %v1200 = vsub.f32 -1.0, %v36
  %v1201 = vsub.f32 -1.0, %v37
  %v1202 = vsub.f32 -1.0, %v38
  %v1203 = vsub.f32 -1.0, %v39
  %v1204 = vsub.f32 -1.0, %v40
  %v1205 = vsub.f32 -1.0, %v41
  %v1206 = vsub.f32 -1.0, %v42
  %v1207 = vsub.f32 -1.0, %v43
  %v1208 = vsub.f32 -1.0, %v44
  %v1209 = vsub.f32 -1.0, %v45
  %v1210 = vsub.f32 -1.0, %v46
  %v1211 = vsub.f32 -1.0, %v47
  %v1212 = vsub.f32 -1.0, %v48
  %v1213 = vsub.f32 -1.0, %v49
  %v1214 = vsub.f32 -1.0, %v50
  %v1215 = vmul.f32 %v1199, 2.5
  %v1216 = vmul.f32 %v1200, 2.5
  %v1217 = vmul.f32 %v1201, 2.5
  %v1218 = vmul.f32 %v1202, 2.5
  %v1219 = vmul.f32 %v1203, 2.5
  %v1220 = vmul.f32 %v1204, 2.5
  %v1221 = vmul.f32 %v1205, 2.5
  %v1222 = vmul.f32 %v1206, 2.5
  %v1223 = vmul.f32 %v1207, 2.5
  %v1224 = vmul.f32 %v1208, 2.5
  %v1225 = vmul.f32 %v1209, 2.5
  %v1226 = vmul.f32 %v1210, 2.5
  %v1227 = vmul.f32 %v1211, 2.5
  %v1228 = vmul.f32 %v1212, 2.5
  %v1229 = vmul.f32 %v1213, 2.5
  %v1230 = vmul.f32 %v1214, 2.5
  %v1231 = vmul.f32 %v1215, %v383
  %v1232 = vmul.f32 %v1216, %v384
  %v1233 = vmul.f32 %v1217, %v385
  %v1234 = vmul.f32 %v1218, %v386
  %v1235 = vmul.f32 %v1219, %v387
  %v1236 = vmul.f32 %v1220, %v388
  %v1237 = vmul.f32 %v1221, %v389
  %v1238 = vmul.f32 %v1222, %v390
  %v1239 = vmul.f32 %v1223, %v391
  %v1240 = vmul.f32 %v1224, %v392
  %v1241 = vmul.f32 %v1225, %v393
  %v1242 = vmul.f32 %v1226, %v394
  %v1243 = vmul.f32 %v1227, %v395
  %v1244 = vmul.f32 %v1228, %v396
  %v1245 = vmul.f32 %v1229, %v397
  %v1246 = vmul.f32 %v1230, %v398
  %v1247 = vadd.f32 %v1183, %v1231
  %v1248 = vadd.f32 %v1184, %v1232
  %v1249 = vadd.f32 %v1185, %v1233
  %v1250 = vadd.f32 %v1186, %v1234
  %v1251 = vadd.f32 %v1187, %v1235
  %v1252 = vadd.f32 %v1188, %v1236
  %v1253 = vadd.f32 %v1189, %v1237
  %v1254 = vadd.f32 %v1190, %v1238
  %v1255 = vadd.f32 %v1191, %v1239
  %v1256 = vadd.f32 %v1192, %v1240
  %v1257 = vadd.f32 %v1193, %v1241
  %v1258 = vadd.f32 %v1194, %v1242
  %v1259 = vadd.f32 %v1195, %v1243
  %v1260 = vadd.f32 %v1196, %v1244
  %v1261 = vadd.f32 %v1197, %v1245
  %v1262 = vadd.f32 %v1198, %v1246
  %v1263 = vsub.f32 %v35, -1.4
  %v1264 = vsub.f32 %v36, -1.4
  %v1265 = vsub.f32 %v37, -1.4
  %v1266 = vsub.f32 %v38, -1.4
  %v1267 = vsub.f32 %v39, -1.4
  %v1268 = vsub.f32 %v40, -1.4
  %v1269 = vsub.f32 %v41, -1.4
  %v1270 = vsub.f32 %v42, -1.4
  %v1271 = vsub.f32 %v43, -1.4
  %v1272 = vsub.f32 %v44, -1.4
  %v1273 = vsub.f32 %v45, -1.4
  %v1274 = vsub.f32 %v46, -1.4
  %v1275 = vsub.f32 %v47, -1.4
  %v1276 = vsub.f32 %v48, -1.4
  %v1277 = vsub.f32 %v49, -1.4
  %v1278 = vsub.f32 %v50, -1.4
  %v1279 = vmul.f32 %v1263, 2.5
  %v1280 = vmul.f32 %v1264, 2.5
  %v1281 = vmul.f32 %v1265, 2.5
  %v1282 = vmul.f32 %v1266, 2.5
  %v1283 = vmul.f32 %v1267, 2.5
  %v1284 = vmul.f32 %v1268, 2.5
  %v1285 = vmul.f32 %v1269, 2.5
  %v1286 = vmul.f32 %v1270, 2.5
  %v1287 = vmul.f32 %v1271, 2.5
  %v1288 = vmul.f32 %v1272, 2.5
  %v1289 = vmul.f32 %v1273, 2.5
  %v1290 = vmul.f32 %v1274, 2.5
  %v1291 = vmul.f32 %v1275, 2.5
  %v1292 = vmul.f32 %v1276, 2.5
  %v1293 = vmul.f32 %v1277, 2.5
  %v1294 = vmul.f32 %v1278, 2.5
  %v1295 = vmul.f32 %v1279, %v383
  %v1296 = vmul.f32 %v1280, %v384
  %v1297 = vmul.f32 %v1281, %v385
  %v1298 = vmul.f32 %v1282, %v386
  %v1299 = vmul.f32 %v1283, %v387
  %v1300 = vmul.f32 %v1284, %v388
  %v1301 = vmul.f32 %v1285, %v389
  %v1302 = vmul.f32 %v1286, %v390
  %v1303 = vmul.f32 %v1287, %v391
  %v1304 = vmul.f32 %v1288, %v392
  %v1305 = vmul.f32 %v1289, %v393
  %v1306 = vmul.f32 %v1290, %v394
  %v1307 = vmul.f32 %v1291, %v395
  %v1308 = vmul.f32 %v1292, %v396
  %v1309 = vmul.f32 %v1293, %v397
  %v1310 = vmul.f32 %v1294, %v398
  %v1311 = vsub.f32 -0.6, %v35
  %v1312 = vsub.f32 -0.6, %v36
  %v1313 = vsub.f32 -0.6, %v37
  %v1314 = vsub.f32 -0.6, %v38
  %v1315 = vsub.f32 -0.6, %v39
  %v1316 = vsub.f32 -0.6, %v40
  %v1317 = vsub.f32 -0.6, %v41
  %v1318 = vsub.f32 -0.6, %v42
  %v1319 = vsub.f32 -0.6, %v43
  %v1320 = vsub.f32 -0.6, %v44
  %v1321 = vsub.f32 -0.6, %v45
  %v1322 = vsub.f32 -0.6, %v46
  %v1323 = vsub.f32 -0.6, %v47
  %v1324 = vsub.f32 -0.6, %v48
  %v1325 = vsub.f32 -0.6, %v49
  %v1326 = vsub.f32 -0.6, %v50
  %v1327 = vmul.f32 %v1311, 2.5
  %v1328 = vmul.f32 %v1312, 2.5
  %v1329 = vmul.f32 %v1313, 2.5
  %v1330 = vmul.f32 %v1314, 2.5
  %v1331 = vmul.f32 %v1315, 2.5
  %v1332 = vmul.f32 %v1316, 2.5
  %v1333 = vmul.f32 %v1317, 2.5
  %v1334 = vmul.f32 %v1318, 2.5
  %v1335 = vmul.f32 %v1319, 2.5
  %v1336 = vmul.f32 %v1320, 2.5
  %v1337 = vmul.f32 %v1321, 2.5
  %v1338 = vmul.f32 %v1322, 2.5
  %v1339 = vmul.f32 %v1323, 2.5
  %v1340 = vmul.f32 %v1324, 2.5
  %v1341 = vmul.f32 %v1325, 2.5
  %v1342 = vmul.f32 %v1326, 2.5
  %v1343 = vmul.f32 %v1327, %v463
  %v1344 = vmul.f32 %v1328, %v464
  %v1345 = vmul.f32 %v1329, %v465
  %v1346 = vmul.f32 %v1330, %v466
  %v1347 = vmul.f32 %v1331, %v467
  %v1348 = vmul.f32 %v1332, %v468
  %v1349 = vmul.f32 %v1333, %v469
  %v1350 = vmul.f32 %v1334, %v470
  %v1351 = vmul.f32 %v1335, %v471
  %v1352 = vmul.f32 %v1336, %v472
  %v1353 = vmul.f32 %v1337, %v473
  %v1354 = vmul.f32 %v1338, %v474
  %v1355 = vmul.f32 %v1339, %v475
  %v1356 = vmul.f32 %v1340, %v476
  %v1357 = vmul.f32 %v1341, %v477
  %v1358 = vmul.f32 %v1342, %v478
  %v1359 = vadd.f32 %v1295, %v1343
  %v1360 = vadd.f32 %v1296, %v1344
  %v1361 = vadd.f32 %v1297, %v1345
  %v1362 = vadd.f32 %v1298, %v1346
  %v1363 = vadd.f32 %v1299, %v1347
  %v1364 = vadd.f32 %v1300, %v1348
  %v1365 = vadd.f32 %v1301, %v1349
  %v1366 = vadd.f32 %v1302, %v1350
  %v1367 = vadd.f32 %v1303, %v1351
  %v1368 = vadd.f32 %v1304, %v1352
  %v1369 = vadd.f32 %v1305, %v1353
  %v1370 = vadd.f32 %v1306, %v1354
  %v1371 = vadd.f32 %v1307, %v1355
  %v1372 = vadd.f32 %v1308, %v1356
  %v1373 = vadd.f32 %v1309, %v1357
  %v1374 = vadd.f32 %v1310, %v1358
  %v1375 = vsub.f32 %v35, -1.0
  %v1376 = vsub.f32 %v36, -1.0
  %v1377 = vsub.f32 %v37, -1.0
  %v1378 = vsub.f32 %v38, -1.0
  %v1379 = vsub.f32 %v39, -1.0
  %v1380 = vsub.f32 %v40, -1.0
  %v1381 = vsub.f32 %v41, -1.0
  %v1382 = vsub.f32 %v42, -1.0
  %v1383 = vsub.f32 %v43, -1.0
  %v1384 = vsub.f32 %v44, -1.0
  %v1385 = vsub.f32 %v45, -1.0
  %v1386 = vsub.f32 %v46, -1.0
  %v1387 = vsub.f32 %v47, -1.0
  %v1388 = vsub.f32 %v48, -1.0
  %v1389 = vsub.f32 %v49, -1.0
  %v1390 = vsub.f32 %v50, -1.0
  %v1391 = vmul.f32 %v1375, 2.5
  %v1392 = vmul.f32 %v1376, 2.5
  %v1393 = vmul.f32 %v1377, 2.5
  %v1394 = vmul.f32 %v1378, 2.5
  %v1395 = vmul.f32 %v1379, 2.5
  %v1396 = vmul.f32 %v1380, 2.5
  %v1397 = vmul.f32 %v1381, 2.5
  %v1398 = vmul.f32 %v1382, 2.5
  %v1399 = vmul.f32 %v1383, 2.5
  %v1400 = vmul.f32 %v1384, 2.5
  %v1401 = vmul.f32 %v1385, 2.5
  %v1402 = vmul.f32 %v1386, 2.5
  %v1403 = vmul.f32 %v1387, 2.5
  %v1404 = vmul.f32 %v1388, 2.5
  %v1405 = vmul.f32 %v1389, 2.5
  %v1406 = vmul.f32 %v1390, 2.5
  %v1407 = vmul.f32 %v1391, %v463
  %v1408 = vmul.f32 %v1392, %v464
  %v1409 = vmul.f32 %v1393, %v465
  %v1410 = vmul.f32 %v1394, %v466
  %v1411 = vmul.f32 %v1395, %v467
  %v1412 = vmul.f32 %v1396, %v468
  %v1413 = vmul.f32 %v1397, %v469
  %v1414 = vmul.f32 %v1398, %v470
  %v1415 = vmul.f32 %v1399, %v471
  %v1416 = vmul.f32 %v1400, %v472
  %v1417 = vmul.f32 %v1401, %v473
  %v1418 = vmul.f32 %v1402, %v474
  %v1419 = vmul.f32 %v1403, %v475
  %v1420 = vmul.f32 %v1404, %v476
  %v1421 = vmul.f32 %v1405, %v477
  %v1422 = vmul.f32 %v1406, %v478
  %v1423 = vsub.f32 -0.2, %v35
  %v1424 = vsub.f32 -0.2, %v36
  %v1425 = vsub.f32 -0.2, %v37
  %v1426 = vsub.f32 -0.2, %v38
  %v1427 = vsub.f32 -0.2, %v39
  %v1428 = vsub.f32 -0.2, %v40
  %v1429 = vsub.f32 -0.2, %v41
  %v1430 = vsub.f32 -0.2, %v42
  %v1431 = vsub.f32 -0.2, %v43
  %v1432 = vsub.f32 -0.2, %v44
  %v1433 = vsub.f32 -0.2, %v45
  %v1434 = vsub.f32 -0.2, %v46
  %v1435 = vsub.f32 -0.2, %v47
  %v1436 = vsub.f32 -0.2, %v48
  %v1437 = vsub.f32 -0.2, %v49
  %v1438 = vsub.f32 -0.2, %v50
  %v1439 = vmul.f32 %v1423, 2.5
  %v1440 = vmul.f32 %v1424, 2.5
  %v1441 = vmul.f32 %v1425, 2.5
  %v1442 = vmul.f32 %v1426, 2.5
  %v1443 = vmul.f32 %v1427, 2.5
  %v1444 = vmul.f32 %v1428, 2.5
  %v1445 = vmul.f32 %v1429, 2.5
  %v1446 = vmul.f32 %v1430, 2.5
  %v1447 = vmul.f32 %v1431, 2.5
  %v1448 = vmul.f32 %v1432, 2.5
  %v1449 = vmul.f32 %v1433, 2.5
  %v1450 = vmul.f32 %v1434, 2.5
  %v1451 = vmul.f32 %v1435, 2.5
  %v1452 = vmul.f32 %v1436, 2.5
  %v1453 = vmul.f32 %v1437, 2.5
  %v1454 = vmul.f32 %v1438, 2.5
  %v1455 = vmul.f32 %v1439, %v543
  %v1456 = vmul.f32 %v1440, %v544
  %v1457 = vmul.f32 %v1441, %v545
  %v1458 = vmul.f32 %v1442, %v546
  %v1459 = vmul.f32 %v1443, %v547
  %v1460 = vmul.f32 %v1444, %v548
  %v1461 = vmul.f32 %v1445, %v549
  %v1462 = vmul.f32 %v1446, %v550
  %v1463 = vmul.f32 %v1447, %v551
  %v1464 = vmul.f32 %v1448, %v552
  %v1465 = vmul.f32 %v1449, %v553
  %v1466 = vmul.f32 %v1450, %v554
  %v1467 = vmul.f32 %v1451, %v555
  %v1468 = vmul.f32 %v1452, %v556
  %v1469 = vmul.f32 %v1453, %v557
  %v1470 = vmul.f32 %v1454, %v558
  %v1471 = vadd.f32 %v1407, %v1455
  %v1472 = vadd.f32 %v1408, %v1456
  %v1473 = vadd.f32 %v1409, %v1457
  %v1474 = vadd.f32 %v1410, %v1458
  %v1475 = vadd.f32 %v1411, %v1459
  %v1476 = vadd.f32 %v1412, %v1460
  %v1477 = vadd.f32 %v1413, %v1461
  %v1478 = vadd.f32 %v1414, %v1462
  %v1479 = vadd.f32 %v1415, %v1463
  %v1480 = vadd.f32 %v1416, %v1464
  %v1481 = vadd.f32 %v1417, %v1465
  %v1482 = vadd.f32 %v1418, %v1466
  %v1483 = vadd.f32 %v1419, %v1467
  %v1484 = vadd.f32 %v1420, %v1468
  %v1485 = vadd.f32 %v1421, %v1469
  %v1486 = vadd.f32 %v1422, %v1470
  %v1487 = vsub.f32 %v35, -0.6
  %v1488 = vsub.f32 %v36, -0.6
  %v1489 = vsub.f32 %v37, -0.6
  %v1490 = vsub.f32 %v38, -0.6
  %v1491 = vsub.f32 %v39, -0.6
  %v1492 = vsub.f32 %v40, -0.6
  %v1493 = vsub.f32 %v41, -0.6
  %v1494 = vsub.f32 %v42, -0.6
  %v1495 = vsub.f32 %v43, -0.6
  %v1496 = vsub.f32 %v44, -0.6
  %v1497 = vsub.f32 %v45, -0.6
  %v1498 = vsub.f32 %v46, -0.6
  %v1499 = vsub.f32 %v47, -0.6
  %v1500 = vsub.f32 %v48, -0.6
  %v1501 = vsub.f32 %v49, -0.6
  %v1502 = vsub.f32 %v50, -0.6
  %v1503 = vmul.f32 %v1487, 2.5
  %v1504 = vmul.f32 %v1488, 2.5
  %v1505 = vmul.f32 %v1489, 2.5
  %v1506 = vmul.f32 %v1490, 2.5
  %v1507 = vmul.f32 %v1491, 2.5
  %v1508 = vmul.f32 %v1492, 2.5
  %v1509 = vmul.f32 %v1493, 2.5
  %v1510 = vmul.f32 %v1494, 2.5
  %v1511 = vmul.f32 %v1495, 2.5
  %v1512 = vmul.f32 %v1496, 2.5
  %v1513 = vmul.f32 %v1497, 2.5
  %v1514 = vmul.f32 %v1498, 2.5
  %v1515 = vmul.f32 %v1499, 2.5
  %v1516 = vmul.f32 %v1500, 2.5
  %v1517 = vmul.f32 %v1501, 2.5
  %v1518 = vmul.f32 %v1502, 2.5
  %v1519 = vmul.f32 %v1503, %v543
  %v1520 = vmul.f32 %v1504, %v544
  %v1521 = vmul.f32 %v1505, %v545
  %v1522 = vmul.f32 %v1506, %v546
  %v1523 = vmul.f32 %v1507, %v547
  %v1524 = vmul.f32 %v1508, %v548
  %v1525 = vmul.f32 %v1509, %v549
  %v1526 = vmul.f32 %v1510, %v550
  %v1527 = vmul.f32 %v1511, %v551
  %v1528 = vmul.f32 %v1512, %v552
  %v1529 = vmul.f32 %v1513, %v553
  %v1530 = vmul.f32 %v1514, %v554
  %v1531 = vmul.f32 %v1515, %v555
  %v1532 = vmul.f32 %v1516, %v556
  %v1533 = vmul.f32 %v1517, %v557
  %v1534 = vmul.f32 %v1518, %v558
  %v1535 = vsub.f32 0.2, %v35
  %v1536 = vsub.f32 0.2, %v36
  %v1537 = vsub.f32 0.2, %v37
  %v1538 = vsub.f32 0.2, %v38
  %v1539 = vsub.f32 0.2, %v39
  %v1540 = vsub.f32 0.2, %v40
  %v1541 = vsub.f32 0.2, %v41
  %v1542 = vsub.f32 0.2, %v42
  %v1543 = vsub.f32 0.2, %v43
  %v1544 = vsub.f32 0.2, %v44
  %v1545 = vsub.f32 0.2, %v45
  %v1546 = vsub.f32 0.2, %v46
  %v1547 = vsub.f32 0.2, %v47
  %v1548 = vsub.f32 0.2, %v48
  %v1549 = vsub.f32 0.2, %v49
  %v1550 = vsub.f32 0.2, %v50
  %v1551 = vmul.f32 %v1535, 2.5
  %v1552 = vmul.f32 %v1536, 2.5
  %v1553 = vmul.f32 %v1537, 2.5
  %v1554 = vmul.f32 %v1538, 2.5
  %v1555 = vmul.f32 %v1539, 2.5
  %v1556 = vmul.f32 %v1540, 2.5
  %v1557 = vmul.f32 %v1541, 2.5
  %v1558 = vmul.f32 %v1542, 2.5
  %v1559 = vmul.f32 %v1543, 2.5
  %v1560 = vmul.f32 %v1544, 2.5
  %v1561 = vmul.f32 %v1545, 2.5
  %v1562 = vmul.f32 %v1546, 2.5
  %v1563 = vmul.f32 %v1547, 2.5
  %v1564 = vmul.f32 %v1548, 2.5
  %v1565 = vmul.f32 %v1549, 2.5
  %v1566 = vmul.f32 %v1550, 2.5
  %v1567 = vmul.f32 %v1551, %v623
  %v1568 = vmul.f32 %v1552, %v624
  %v1569 = vmul.f32 %v1553, %v625
  %v1570 = vmul.f32 %v1554, %v626
  %v1571 = vmul.f32 %v1555, %v627
  %v1572 = vmul.f32 %v1556, %v628
  %v1573 = vmul.f32 %v1557, %v629
  %v1574 = vmul.f32 %v1558, %v630
  %v1575 = vmul.f32 %v1559, %v631
  %v1576 = vmul.f32 %v1560, %v632
  %v1577 = vmul.f32 %v1561, %v633
  %v1578 = vmul.f32 %v1562, %v634
  %v1579 = vmul.f32 %v1563, %v635
  %v1580 = vmul.f32 %v1564, %v636
  %v1581 = vmul.f32 %v1565, %v637
  %v1582 = vmul.f32 %v1566, %v638
  %v1583 = vadd.f32 %v1519, %v1567
  %v1584 = vadd.f32 %v1520, %v1568
  %v1585 = vadd.f32 %v1521, %v1569
  %v1586 = vadd.f32 %v1522, %v1570
  %v1587 = vadd.f32 %v1523, %v1571
  %v1588 = vadd.f32 %v1524, %v1572
  %v1589 = vadd.f32 %v1525, %v1573
  %v1590 = vadd.f32 %v1526, %v1574
  %v1591 = vadd.f32 %v1527, %v1575
  %v1592 = vadd.f32 %v1528, %v1576
  %v1593 = vadd.f32 %v1529, %v1577
  %v1594 = vadd.f32 %v1530, %v1578
  %v1595 = vadd.f32 %v1531, %v1579
  %v1596 = vadd.f32 %v1532, %v1580
  %v1597 = vadd.f32 %v1533, %v1581
  %v1598 = vadd.f32 %v1534, %v1582
  %v1599 = vsub.f32 %v35, -0.2
  %v1600 = vsub.f32 %v36, -0.2
  %v1601 = vsub.f32 %v37, -0.2
  %v1602 = vsub.f32 %v38, -0.2
  %v1603 = vsub.f32 %v39, -0.2
  %v1604 = vsub.f32 %v40, -0.2
  %v1605 = vsub.f32 %v41, -0.2
  %v1606 = vsub.f32 %v42, -0.2
  %v1607 = vsub.f32 %v43, -0.2
  %v1608 = vsub.f32 %v44, -0.2
  %v1609 = vsub.f32 %v45, -0.2
  %v1610 = vsub.f32 %v46, -0.2
  %v1611 = vsub.f32 %v47, -0.2
  %v1612 = vsub.f32 %v48, -0.2
  %v1613 = vsub.f32 %v49, -0.2
  %v1614 = vsub.f32 %v50, -0.2
  %v1615 = vmul.f32 %v1599, 2.5
  %v1616 = vmul.f32 %v1600, 2.5
  %v1617 = vmul.f32 %v1601, 2.5
  %v1618 = vmul.f32 %v1602, 2.5
  %v1619 = vmul.f32 %v1603, 2.5
  %v1620 = vmul.f32 %v1604, 2.5
  %v1621 = vmul.f32 %v1605, 2.5
  %v1622 = vmul.f32 %v1606, 2.5
  %v1623 = vmul.f32 %v1607, 2.5
  %v1624 = vmul.f32 %v1608, 2.5
  %v1625 = vmul.f32 %v1609, 2.5
  %v1626 = vmul.f32 %v1610, 2.5
  %v1627 = vmul.f32 %v1611, 2.5
  %v1628 = vmul.f32 %v1612, 2.5
  %v1629 = vmul.f32 %v1613, 2.5
  %v1630 = vmul.f32 %v1614, 2.5
  %v1631 = vmul.f32 %v1615, %v623
  %v1632 = vmul.f32 %v1616, %v624
  %v1633 = vmul.f32 %v1617, %v625
  %v1634 = vmul.f32 %v1618, %v626
  %v1635 = vmul.f32 %v1619, %v627
  %v1636 = vmul.f32 %v1620, %v628
  %v1637 = vmul.f32 %v1621, %v629
  %v1638 = vmul.f32 %v1622, %v630
  %v1639 = vmul.f32 %v1623, %v631
  %v1640 = vmul.f32 %v1624, %v632
  %v1641 = vmul.f32 %v1625, %v633
  %v1642 = vmul.f32 %v1626, %v634
  %v1643 = vmul.f32 %v1627, %v635
  %v1644 = vmul.f32 %v1628, %v636
  %v1645 = vmul.f32 %v1629, %v637
  %v1646 = vmul.f32 %v1630, %v638
  %v1647 = vsub.f32 0.6, %v35
  %v1648 = vsub.f32 0.6, %v36
  %v1649 = vsub.f32 0.6, %v37
  %v1650 = vsub.f32 0.6, %v38
  %v1651 = vsub.f32 0.6, %v39
  %v1652 = vsub.f32 0.6, %v40
  %v1653 = vsub.f32 0.6, %v41
  %v1654 = vsub.f32 0.6, %v42
  %v1655 = vsub.f32 0.6, %v43
  %v1656 = vsub.f32 0.6, %v44
  %v1657 = vsub.f32 0.6, %v45
  %v1658 = vsub.f32 0.6, %v46
  %v1659 = vsub.f32 0.6, %v47
  %v1660 = vsub.f32 0.6, %v48
  %v1661 = vsub.f32 0.6, %v49
  %v1662 = vsub.f32 0.6, %v50
  %v1663 = vmul.f32 %v1647, 2.5
  %v1664 = vmul.f32 %v1648, 2.5
  %v1665 = vmul.f32 %v1649, 2.5
  %v1666 = vmul.f32 %v1650, 2.5
  %v1667 = vmul.f32 %v1651, 2.5
  %v1668 = vmul.f32 %v1652, 2.5
  %v1669 = vmul.f32 %v1653, 2.5
  %v1670 = vmul.f32 %v1654, 2.5
  %v1671 = vmul.f32 %v1655, 2.5
  %v1672 = vmul.f32 %v1656, 2.5
  %v1673 = vmul.f32 %v1657, 2.5
  %v1674 = vmul.f32 %v1658, 2.5
  %v1675 = vmul.f32 %v1659, 2.5
  %v1676 = vmul.f32 %v1660, 2.5
  %v1677 = vmul.f32 %v1661, 2.5
  %v1678 = vmul.f32 %v1662, 2.5
  %v1679 = vmul.f32 %v1663, %v703
  %v1680 = vmul.f32 %v1664, %v704
  %v1681 = vmul.f32 %v1665, %v705
  %v1682 = vmul.f32 %v1666, %v706
  %v1683 = vmul.f32 %v1667, %v707
  %v1684 = vmul.f32 %v1668, %v708
  %v1685 = vmul.f32 %v1669, %v709
  %v1686 = vmul.f32 %v1670, %v710
  %v1687 = vmul.f32 %v1671, %v711
  %v1688 = vmul.f32 %v1672, %v712
  %v1689 = vmul.f32 %v1673, %v713
  %v1690 = vmul.f32 %v1674, %v714
  %v1691 = vmul.f32 %v1675, %v715
  %v1692 = vmul.f32 %v1676, %v716
  %v1693 = vmul.f32 %v1677, %v717
  %v1694 = vmul.f32 %v1678, %v718
  %v1695 = vadd.f32 %v1631, %v1679
  %v1696 = vadd.f32 %v1632, %v1680
  %v1697 = vadd.f32 %v1633, %v1681
  %v1698 = vadd.f32 %v1634, %v1682
  %v1699 = vadd.f32 %v1635, %v1683
  %v1700 = vadd.f32 %v1636, %v1684
  %v1701 = vadd.f32 %v1637, %v1685
  %v1702 = vadd.f32 %v1638, %v1686
  %v1703 = vadd.f32 %v1639, %v1687
  %v1704 = vadd.f32 %v1640, %v1688
  %v1705 = vadd.f32 %v1641, %v1689
  %v1706 = vadd.f32 %v1642, %v1690
  %v1707 = vadd.f32 %v1643, %v1691
  %v1708 = vadd.f32 %v1644, %v1692
  %v1709 = vadd.f32 %v1645, %v1693
  %v1710 = vadd.f32 %v1646, %v1694
  %v1711 = vsub.f32 %v35, 0.2
  %v1712 = vsub.f32 %v36, 0.2
  %v1713 = vsub.f32 %v37, 0.2
  %v1714 = vsub.f32 %v38, 0.2
  %v1715 = vsub.f32 %v39, 0.2
  %v1716 = vsub.f32 %v40, 0.2
  %v1717 = vsub.f32 %v41, 0.2
  %v1718 = vsub.f32 %v42, 0.2
  %v1719 = vsub.f32 %v43, 0.2
  %v1720 = vsub.f32 %v44, 0.2
  %v1721 = vsub.f32 %v45, 0.2
  %v1722 = vsub.f32 %v46, 0.2
  %v1723 = vsub.f32 %v47, 0.2
  %v1724 = vsub.f32 %v48, 0.2
  %v1725 = vsub.f32 %v49, 0.2
  %v1726 = vsub.f32 %v50, 0.2
  %v1727 = vmul.f32 %v1711, 2.5
  %v1728 = vmul.f32 %v1712, 2.5
  %v1729 = vmul.f32 %v1713, 2.5
  %v1730 = vmul.f32 %v1714, 2.5
  %v1731 = vmul.f32 %v1715, 2.5
  %v1732 = vmul.f32 %v1716, 2.5
  %v1733 = vmul.f32 %v1717, 2.5
  %v1734 = vmul.f32 %v1718, 2.5
  %v1735 = vmul.f32 %v1719, 2.5
  %v1736 = vmul.f32 %v1720, 2.5
  %v1737 = vmul.f32 %v1721, 2.5
  %v1738 = vmul.f32 %v1722, 2.5
  %v1739 = vmul.f32 %v1723, 2.5
  %v1740 = vmul.f32 %v1724, 2.5
  %v1741 = vmul.f32 %v1725, 2.5
  %v1742 = vmul.f32 %v1726, 2.5
  %v1743 = vmul.f32 %v1727, %v703
  %v1744 = vmul.f32 %v1728, %v704
  %v1745 = vmul.f32 %v1729, %v705
  %v1746 = vmul.f32 %v1730, %v706
  %v1747 = vmul.f32 %v1731, %v707
  %v1748 = vmul.f32 %v1732, %v708
  %v1749 = vmul.f32 %v1733, %v709
  %v1750 = vmul.f32 %v1734, %v710
  %v1751 = vmul.f32 %v1735, %v711
  %v1752 = vmul.f32 %v1736, %v712
  %v1753 = vmul.f32 %v1737, %v713
  %v1754 = vmul.f32 %v1738, %v714
  %v1755 = vmul.f32 %v1739, %v715
  %v1756 = vmul.f32 %v1740, %v716
  %v1757 = vmul.f32 %v1741, %v717
  %v1758 = vmul.f32 %v1742, %v718
  %v1759 = vsub.f32 1.0, %v35
  %v1760 = vsub.f32 1.0, %v36
  %v1761 = vsub.f32 1.0, %v37
  %v1762 = vsub.f32 1.0, %v38
  %v1763 = vsub.f32 1.0, %v39
  %v1764 = vsub.f32 1.0, %v40
  %v1765 = vsub.f32 1.0, %v41
  %v1766 = vsub.f32 1.0, %v42
  %v1767 = vsub.f32 1.0, %v43
  %v1768 = vsub.f32 1.0, %v44
  %v1769 = vsub.f32 1.0, %v45
  %v1770 = vsub.f32 1.0, %v46
  %v1771 = vsub.f32 1.0, %v47
  %v1772 = vsub.f32 1.0, %v48
  %v1773 = vsub.f32 1.0, %v49
  %v1774 = vsub.f32 1.0, %v50
  %v1775 = vmul.f32 %v1759, 2.5
  %v1776 = vmul.f32 %v1760, 2.5
  %v1777 = vmul.f32 %v1761, 2.5
  %v1778 = vmul.f32 %v1762, 2.5
  %v1779 = vmul.f32 %v1763, 2.5
  %v1780 = vmul.f32 %v1764, 2.5
  %v1781 = vmul.f32 %v1765, 2.5
  %v1782 = vmul.f32 %v1766, 2.5
  %v1783 = vmul.f32 %v1767, 2.5
  %v1784 = vmul.f32 %v1768, 2.5
  %v1785 = vmul.f32 %v1769, 2.5
  %v1786 = vmul.f32 %v1770, 2.5
  %v1787 = vmul.f32 %v1771, 2.5
  %v1788 = vmul.f32 %v1772, 2.5
  %v1789 = vmul.f32 %v1773, 2.5
  %v1790 = vmul.f32 %v1774, 2.5
  %v1791 = vmul.f32 %v1775, %v783
  %v1792 = vmul.f32 %v1776, %v784
  %v1793 = vmul.f32 %v1777, %v785
  %v1794 = vmul.f32 %v1778, %v786
  %v1795 = vmul.f32 %v1779, %v787
  %v1796 = vmul.f32 %v1780, %v788
  %v1797 = vmul.f32 %v1781, %v789
  %v1798 = vmul.f32 %v1782, %v790
  %v1799 = vmul.f32 %v1783, %v791
  %v1800 = vmul.f32 %v1784, %v792
  %v1801 = vmul.f32 %v1785, %v793
  %v1802 = vmul.f32 %v1786, %v794
  %v1803 = vmul.f32 %v1787, %v795
  %v1804 = vmul.f32 %v1788, %v796
  %v1805 = vmul.f32 %v1789, %v797
  %v1806 = vmul.f32 %v1790, %v798
  %v1807 = vadd.f32 %v1743, %v1791
  %v1808 = vadd.f32 %v1744, %v1792
  %v1809 = vadd.f32 %v1745, %v1793
  %v1810 = vadd.f32 %v1746, %v1794
  %v1811 = vadd.f32 %v1747, %v1795
  %v1812 = vadd.f32 %v1748, %v1796
  %v1813 = vadd.f32 %v1749, %v1797
  %v1814 = vadd.f32 %v1750, %v1798
  %v1815 = vadd.f32 %v1751, %v1799
  %v1816 = vadd.f32 %v1752, %v1800
  %v1817 = vadd.f32 %v1753, %v1801
  %v1818 = vadd.f32 %v1754, %v1802
  %v1819 = vadd.f32 %v1755, %v1803
  %v1820 = vadd.f32 %v1756, %v1804
  %v1821 = vadd.f32 %v1757, %v1805
  %v1822 = vadd.f32 %v1758, %v1806
  %v1823 = vsub.f32 %v35, 0.6
  %v1824 = vsub.f32 %v36, 0.6
  %v1825 = vsub.f32 %v37, 0.6
  %v1826 = vsub.f32 %v38, 0.6
  %v1827 = vsub.f32 %v39, 0.6
  %v1828 = vsub.f32 %v40, 0.6
  %v1829 = vsub.f32 %v41, 0.6
  %v1830 = vsub.f32 %v42, 0.6
  %v1831 = vsub.f32 %v43, 0.6
  %v1832 = vsub.f32 %v44, 0.6
  %v1833 = vsub.f32 %v45, 0.6
  %v1834 = vsub.f32 %v46, 0.6
  %v1835 = vsub.f32 %v47, 0.6
  %v1836 = vsub.f32 %v48, 0.6
  %v1837 = vsub.f32 %v49, 0.6
  %v1838 = vsub.f32 %v50, 0.6
  %v1839 = vmul.f32 %v1823, 2.5
  %v1840 = vmul.f32 %v1824, 2.5
  %v1841 = vmul.f32 %v1825, 2.5
  %v1842 = vmul.f32 %v1826, 2.5
  %v1843 = vmul.f32 %v1827, 2.5
  %v1844 = vmul.f32 %v1828, 2.5
  %v1845 = vmul.f32 %v1829, 2.5
  %v1846 = vmul.f32 %v1830, 2.5
  %v1847 = vmul.f32 %v1831, 2.5
  %v1848 = vmul.f32 %v1832, 2.5
  %v1849 = vmul.f32 %v1833, 2.5
  %v1850 = vmul.f32 %v1834, 2.5
  %v1851 = vmul.f32 %v1835, 2.5
  %v1852 = vmul.f32 %v1836, 2.5
  %v1853 = vmul.f32 %v1837, 2.5
  %v1854 = vmul.f32 %v1838, 2.5
  %v1855 = vmul.f32 %v1839, %v783
  %v1856 = vmul.f32 %v1840, %v784
  %v1857 = vmul.f32 %v1841, %v785
  %v1858 = vmul.f32 %v1842, %v786
  %v1859 = vmul.f32 %v1843, %v787
  %v1860 = vmul.f32 %v1844, %v788
  %v1861 = vmul.f32 %v1845, %v789
  %v1862 = vmul.f32 %v1846, %v790
  %v1863 = vmul.f32 %v1847, %v791
  %v1864 = vmul.f32 %v1848, %v792
  %v1865 = vmul.f32 %v1849, %v793
  %v1866 = vmul.f32 %v1850, %v794
  %v1867 = vmul.f32 %v1851, %v795
  %v1868 = vmul.f32 %v1852, %v796
  %v1869 = vmul.f32 %v1853, %v797
  %v1870 = vmul.f32 %v1854, %v798
  %v1871 = vsub.f32 1.4, %v35
  %v1872 = vsub.f32 1.4, %v36
  %v1873 = vsub.f32 1.4, %v37
  %v1874 = vsub.f32 1.4, %v38
  %v1875 = vsub.f32 1.4, %v39
  %v1876 = vsub.f32 1.4, %v40
  %v1877 = vsub.f32 1.4, %v41
  %v1878 = vsub.f32 1.4, %v42
  %v1879 = vsub.f32 1.4, %v43
  %v1880 = vsub.f32 1.4, %v44
  %v1881 = vsub.f32 1.4, %v45
  %v1882 = vsub.f32 1.4, %v46
  %v1883 = vsub.f32 1.4, %v47
  %v1884 = vsub.f32 1.4, %v48
  %v1885 = vsub.f32 1.4, %v49
  %v1886 = vsub.f32 1.4, %v50
  %v1887 = vmul.f32 %v1871, 2.5
  %v1888 = vmul.f32 %v1872, 2.5
  %v1889 = vmul.f32 %v1873, 2.5
  %v1890 = vmul.f32 %v1874, 2.5
  %v1891 = vmul.f32 %v1875, 2.5
  %v1892 = vmul.f32 %v1876, 2.5
  %v1893 = vmul.f32 %v1877, 2.5
  %v1894 = vmul.f32 %v1878, 2.5
  %v1895 = vmul.f32 %v1879, 2.5
  %v1896 = vmul.f32 %v1880, 2.5
  %v1897 = vmul.f32 %v1881, 2.5
  %v1898 = vmul.f32 %v1882, 2.5
  %v1899 = vmul.f32 %v1883, 2.5
  %v1900 = vmul.f32 %v1884, 2.5
  %v1901 = vmul.f32 %v1885, 2.5
  %v1902 = vmul.f32 %v1886, 2.5
  %v1903 = vmul.f32 %v1887, %v863
  %v1904 = vmul.f32 %v1888, %v864
  %v1905 = vmul.f32 %v1889, %v865
  %v1906 = vmul.f32 %v1890, %v866
  %v1907 = vmul.f32 %v1891, %v867
  %v1908 = vmul.f32 %v1892, %v868
  %v1909 = vmul.f32 %v1893, %v869
  %v1910 = vmul.f32 %v1894, %v870
  %v1911 = vmul.f32 %v1895, %v871
  %v1912 = vmul.f32 %v1896, %v872
  %v1913 = vmul.f32 %v1897, %v873
  %v1914 = vmul.f32 %v1898, %v874
  %v1915 = vmul.f32 %v1899, %v875
  %v1916 = vmul.f32 %v1900, %v876
  %v1917 = vmul.f32 %v1901, %v877
  %v1918 = vmul.f32 %v1902, %v878
  %v1919 = vadd.f32 %v1855, %v1903
  %v1920 = vadd.f32 %v1856, %v1904
  %v1921 = vadd.f32 %v1857, %v1905
  %v1922 = vadd.f32 %v1858, %v1906
  %v1923 = vadd.f32 %v1859, %v1907
  %v1924 = vadd.f32 %v1860, %v1908
  %v1925 = vadd.f32 %v1861, %v1909
  %v1926 = vadd.f32 %v1862, %v1910
  %v1927 = vadd.f32 %v1863, %v1911
  %v1928 = vadd.f32 %v1864, %v1912
  %v1929 = vadd.f32 %v1865, %v1913
  %v1930 = vadd.f32 %v1866, %v1914
  %v1931 = vadd.f32 %v1867, %v1915
  %v1932 = vadd.f32 %v1868, %v1916
  %v1933 = vadd.f32 %v1869, %v1917
  %v1934 = vadd.f32 %v1870, %v1918
  %v1935 = vsub.f32 %v35, 1.0
  %v1936 = vsub.f32 %v36, 1.0
  %v1937 = vsub.f32 %v37, 1.0
  %v1938 = vsub.f32 %v38, 1.0
  %v1939 = vsub.f32 %v39, 1.0
  %v1940 = vsub.f32 %v40, 1.0
  %v1941 = vsub.f32 %v41, 1.0
  %v1942 = vsub.f32 %v42, 1.0
  %v1943 = vsub.f32 %v43, 1.0
  %v1944 = vsub.f32 %v44, 1.0
  %v1945 = vsub.f32 %v45, 1.0
  %v1946 = vsub.f32 %v46, 1.0
  %v1947 = vsub.f32 %v47, 1.0
  %v1948 = vsub.f32 %v48, 1.0
  %v1949 = vsub.f32 %v49, 1.0
  %v1950 = vsub.f32 %v50, 1.0
  %v1951 = vmul.f32 %v1935, 2.5
  %v1952 = vmul.f32 %v1936, 2.5
  %v1953 = vmul.f32 %v1937, 2.5
  %v1954 = vmul.f32 %v1938, 2.5
  %v1955 = vmul.f32 %v1939, 2.5
  %v1956 = vmul.f32 %v1940, 2.5
  %v1957 = vmul.f32 %v1941, 2.5
  %v1958 = vmul.f32 %v1942, 2.5
  %v1959 = vmul.f32 %v1943, 2.5
  %v1960 = vmul.f32 %v1944, 2.5
  %v1961 = vmul.f32 %v1945, 2.5
  %v1962 = vmul.f32 %v1946, 2.5
  %v1963 = vmul.f32 %v1947, 2.5
  %v1964 = vmul.f32 %v1948, 2.5
  %v1965 = vmul.f32 %v1949, 2.5
  %v1966 = vmul.f32 %v1950, 2.5
  %v1967 = vmul.f32 %v1951, %v863
  %v1968 = vmul.f32 %v1952, %v864
  %v1969 = vmul.f32 %v1953, %v865
  %v1970 = vmul.f32 %v1954, %v866
  %v1971 = vmul.f32 %v1955, %v867
  %v1972 = vmul.f32 %v1956, %v868
  %v1973 = vmul.f32 %v1957, %v869
  %v1974 = vmul.f32 %v1958, %v870
  %v1975 = vmul.f32 %v1959, %v871
  %v1976 = vmul.f32 %v1960, %v872
  %v1977 = vmul.f32 %v1961, %v873
  %v1978 = vmul.f32 %v1962, %v874
  %v1979 = vmul.f32 %v1963, %v875
  %v1980 = vmul.f32 %v1964, %v876
  %v1981 = vmul.f32 %v1965, %v877
  %v1982 = vmul.f32 %v1966, %v878
  %v1983 = vsub.f32 1.8, %v35
  %v1984 = vsub.f32 1.8, %v36
  %v1985 = vsub.f32 1.8, %v37
  %v1986 = vsub.f32 1.8, %v38
  %v1987 = vsub.f32 1.8, %v39
  %v1988 = vsub.f32 1.8, %v40
  %v1989 = vsub.f32 1.8, %v41
  %v1990 = vsub.f32 1.8, %v42
  %v1991 = vsub.f32 1.8, %v43
  %v1992 = vsub.f32 1.8, %v44
  %v1993 = vsub.f32 1.8, %v45
  %v1994 = vsub.f32 1.8, %v46
  %v1995 = vsub.f32 1.8, %v47
  %v1996 = vsub.f32 1.8, %v48
  %v1997 = vsub.f32 1.8, %v49
  %v1998 = vsub.f32 1.8, %v50
  %v1999 = vmul.f32 %v1983, 2.5
  %v2000 = vmul.f32 %v1984, 2.5
  %v2001 = vmul.f32 %v1985, 2.5
  %v2002 = vmul.f32 %v1986, 2.5
  %v2003 = vmul.f32 %v1987, 2.5
  %v2004 = vmul.f32 %v1988, 2.5
  %v2005 = vmul.f32 %v1989, 2.5
  %v2006 = vmul.f32 %v1990, 2.5
  %v2007 = vmul.f32 %v1991, 2.5
  %v2008 = vmul.f32 %v1992, 2.5
  %v2009 = vmul.f32 %v1993, 2.5
  %v2010 = vmul.f32 %v1994, 2.5
  %v2011 = vmul.f32 %v1995, 2.5
  %v2012 = vmul.f32 %v1996, 2.5
  %v2013 = vmul.f32 %v1997, 2.5
  %v2014 = vmul.f32 %v1998, 2.5
  %v2015 = vmul.f32 %v1999, %v943
  %v2016 = vmul.f32 %v2000, %v944
  %v2017 = vmul.f32 %v2001, %v945
  %v2018 = vmul.f32 %v2002, %v946
  %v2019 = vmul.f32 %v2003, %v947
  %v2020 = vmul.f32 %v2004, %v948
  %v2021 = vmul.f32 %v2005, %v949
  %v2022 = vmul.f32 %v2006, %v950
  %v2023 = vmul.f32 %v2007, %v951
  %v2024 = vmul.f32 %v2008, %v952
  %v2025 = vmul.f32 %v2009, %v953
  %v2026 = vmul.f32 %v2010, %v954
  %v2027 = vmul.f32 %v2011, %v955
  %v2028 = vmul.f32 %v2012, %v956
  %v2029 = vmul.f32 %v2013, %v957
  %v2030 = vmul.f32 %v2014, %v958
  %v2031 = vadd.f32 %v1967, %v2015
  %v2032 = vadd.f32 %v1968, %v2016
  %v2033 = vadd.f32 %v1969, %v2017
  %v2034 = vadd.f32 %v1970, %v2018
  %v2035 = vadd.f32 %v1971, %v2019
  %v2036 = vadd.f32 %v1972, %v2020
  %v2037 = vadd.f32 %v1973, %v2021
  %v2038 = vadd.f32 %v1974, %v2022
  %v2039 = vadd.f32 %v1975, %v2023
  %v2040 = vadd.f32 %v1976, %v2024
  %v2041 = vadd.f32 %v1977, %v2025
  %v2042 = vadd.f32 %v1978, %v2026
  %v2043 = vadd.f32 %v1979, %v2027
  %v2044 = vadd.f32 %v1980, %v2028
  %v2045 = vadd.f32 %v1981, %v2029
  %v2046 = vadd.f32 %v1982, %v2030
  %v2047 = vsub.f32 %v35, 1.4
  %v2048 = vsub.f32 %v36, 1.4
  %v2049 = vsub.f32 %v37, 1.4
  %v2050 = vsub.f32 %v38, 1.4
  %v2051 = vsub.f32 %v39, 1.4
  %v2052 = vsub.f32 %v40, 1.4
  %v2053 = vsub.f32 %v41, 1.4
  %v2054 = vsub.f32 %v42, 1.4
  %v2055 = vsub.f32 %v43, 1.4
  %v2056 = vsub.f32 %v44, 1.4
  %v2057 = vsub.f32 %v45, 1.4
  %v2058 = vsub.f32 %v46, 1.4
  %v2059 = vsub.f32 %v47, 1.4
  %v2060 = vsub.f32 %v48, 1.4
  %v2061 = vsub.f32 %v49, 1.4
  %v2062 = vsub.f32 %v50, 1.4
  %v2063 = vmul.f32 %v2047, 2.5
  %v2064 = vmul.f32 %v2048, 2.5
  %v2065 = vmul.f32 %v2049, 2.5
  %v2066 = vmul.f32 %v2050, 2.5
  %v2067 = vmul.f32 %v2051, 2.5
  %v2068 = vmul.f32 %v2052, 2.5
  %v2069 = vmul.f32 %v2053, 2.5
  %v2070 = vmul.f32 %v2054, 2.5
  %v2071 = vmul.f32 %v2055, 2.5
  %v2072 = vmul.f32 %v2056, 2.5
  %v2073 = vmul.f32 %v2057, 2.5
  %v2074 = vmul.f32 %v2058, 2.5
  %v2075 = vmul.f32 %v2059, 2.5
  %v2076 = vmul.f32 %v2060, 2.5
  %v2077 = vmul.f32 %v2061, 2.5
  %v2078 = vmul.f32 %v2062, 2.5
  %v2079 = vmul.f32 %v2063, %v943
  %v2080 = vmul.f32 %v2064, %v944
  %v2081 = vmul.f32 %v2065, %v945
  %v2082 = vmul.f32 %v2066, %v946
  %v2083 = vmul.f32 %v2067, %v947
  %v2084 = vmul.f32 %v2068, %v948
  %v2085 = vmul.f32 %v2069, %v949
  %v2086 = vmul.f32 %v2070, %v950
  %v2087 = vmul.f32 %v2071, %v951
  %v2088 = vmul.f32 %v2072, %v952
  %v2089 = vmul.f32 %v2073, %v953
  %v2090 = vmul.f32 %v2074, %v954
  %v2091 = vmul.f32 %v2075, %v955
  %v2092 = vmul.f32 %v2076, %v956
  %v2093 = vmul.f32 %v2077, %v957
  %v2094 = vmul.f32 %v2078, %v958
  %v2095 = vsub.f32 2.2, %v35
  %v2096 = vsub.f32 2.2, %v36
  %v2097 = vsub.f32 2.2, %v37
  %v2098 = vsub.f32 2.2, %v38
  %v2099 = vsub.f32 2.2, %v39
  %v2100 = vsub.f32 2.2, %v40
  %v2101 = vsub.f32 2.2, %v41
  %v2102 = vsub.f32 2.2, %v42
  %v2103 = vsub.f32 2.2, %v43
  %v2104 = vsub.f32 2.2, %v44
  %v2105 = vsub.f32 2.2, %v45
  %v2106 = vsub.f32 2.2, %v46
  %v2107 = vsub.f32 2.2, %v47
  %v2108 = vsub.f32 2.2, %v48
  %v2109 = vsub.f32 2.2, %v49
  %v2110 = vsub.f32 2.2, %v50
  %v2111 = vmul.f32 %v2095, 2.5
  %v2112 = vmul.f32 %v2096, 2.5
  %v2113 = vmul.f32 %v2097, 2.5
  %v2114 = vmul.f32 %v2098, 2.5
  %v2115 = vmul.f32 %v2099, 2.5
  %v2116 = vmul.f32 %v2100, 2.5
  %v2117 = vmul.f32 %v2101, 2.5
  %v2118 = vmul.f32 %v2102, 2.5
  %v2119 = vmul.f32 %v2103, 2.5
  %v2120 = vmul.f32 %v2104, 2.5
  %v2121 = vmul.f32 %v2105, 2.5
  %v2122 = vmul.f32 %v2106, 2.5
  %v2123 = vmul.f32 %v2107, 2.5
  %v2124 = vmul.f32 %v2108, 2.5
  %v2125 = vmul.f32 %v2109, 2.5
  %v2126 = vmul.f32 %v2110, 2.5
  %v2127 = vmul.f32 %v2111, %v1023
  %v2128 = vmul.f32 %v2112, %v1024
  %v2129 = vmul.f32 %v2113, %v1025
  %v2130 = vmul.f32 %v2114, %v1026
  %v2131 = vmul.f32 %v2115, %v1027
  %v2132 = vmul.f32 %v2116, %v1028
  %v2133 = vmul.f32 %v2117, %v1029
  %v2134 = vmul.f32 %v2118, %v1030
  %v2135 = vmul.f32 %v2119, %v1031
  %v2136 = vmul.f32 %v2120, %v1032
  %v2137 = vmul.f32 %v2121, %v1033
  %v2138 = vmul.f32 %v2122, %v1034
  %v2139 = vmul.f32 %v2123, %v1035
  %v2140 = vmul.f32 %v2124, %v1036
  %v2141 = vmul.f32 %v2125, %v1037
  %v2142 = vmul.f32 %v2126, %v1038
  %v2143 = vadd.f32 %v2079, %v2127
  %v2144 = vadd.f32 %v2080, %v2128
  %v2145 = vadd.f32 %v2081, %v2129
  %v2146 = vadd.f32 %v2082, %v2130
  %v2147 = vadd.f32 %v2083, %v2131
  %v2148 = vadd.f32 %v2084, %v2132
  %v2149 = vadd.f32 %v2085, %v2133
  %v2150 = vadd.f32 %v2086, %v2134
  %v2151 = vadd.f32 %v2087, %v2135
  %v2152 = vadd.f32 %v2088, %v2136
  %v2153 = vadd.f32 %v2089, %v2137
  %v2154 = vadd.f32 %v2090, %v2138
  %v2155 = vadd.f32 %v2091, %v2139
  %v2156 = vadd.f32 %v2092, %v2140
  %v2157 = vadd.f32 %v2093, %v2141
  %v2158 = vadd.f32 %v2094, %v2142
  %v2159 = vmul.f32 %v1039, 1.25
  %v2160 = vmul.f32 %v1040, 1.25
  %v2161 = vmul.f32 %v1041, 1.25
  %v2162 = vmul.f32 %v1042, 1.25
  %v2163 = vmul.f32 %v1043, 1.25
  %v2164 = vmul.f32 %v1044, 1.25
  %v2165 = vmul.f32 %v1045, 1.25
  %v2166 = vmul.f32 %v1046, 1.25
  %v2167 = vmul.f32 %v1047, 1.25
  %v2168 = vmul.f32 %v1048, 1.25
  %v2169 = vmul.f32 %v1049, 1.25
  %v2170 = vmul.f32 %v1050, 1.25
  %v2171 = vmul.f32 %v1051, 1.25
  %v2172 = vmul.f32 %v1052, 1.25
  %v2173 = vmul.f32 %v1053, 1.25
  %v2174 = vmul.f32 %v1054, 1.25
  %v2175 = vmul.f32 %v2159, %v1135
  %v2176 = vmul.f32 %v2160, %v1136
  %v2177 = vmul.f32 %v2161, %v1137
  %v2178 = vmul.f32 %v2162, %v1138
  %v2179 = vmul.f32 %v2163, %v1139
  %v2180 = vmul.f32 %v2164, %v1140
  %v2181 = vmul.f32 %v2165, %v1141
  %v2182 = vmul.f32 %v2166, %v1142
  %v2183 = vmul.f32 %v2167, %v1143
  %v2184 = vmul.f32 %v2168, %v1144
  %v2185 = vmul.f32 %v2169, %v1145
  %v2186 = vmul.f32 %v2170, %v1146
  %v2187 = vmul.f32 %v2171, %v1147
  %v2188 = vmul.f32 %v2172, %v1148
  %v2189 = vmul.f32 %v2173, %v1149
  %v2190 = vmul.f32 %v2174, %v1150
  %v2191 = vmul.f32 %v1199, 1.25
  %v2192 = vmul.f32 %v1200, 1.25
  %v2193 = vmul.f32 %v1201, 1.25
  %v2194 = vmul.f32 %v1202, 1.25
  %v2195 = vmul.f32 %v1203, 1.25
  %v2196 = vmul.f32 %v1204, 1.25
  %v2197 = vmul.f32 %v1205, 1.25
  %v2198 = vmul.f32 %v1206, 1.25
  %v2199 = vmul.f32 %v1207, 1.25
  %v2200 = vmul.f32 %v1208, 1.25
  %v2201 = vmul.f32 %v1209, 1.25
  %v2202 = vmul.f32 %v1210, 1.25
  %v2203 = vmul.f32 %v1211, 1.25
  %v2204 = vmul.f32 %v1212, 1.25
  %v2205 = vmul.f32 %v1213, 1.25
  %v2206 = vmul.f32 %v1214, 1.25
  %v2207 = vmul.f32 %v2191, %v1247
  %v2208 = vmul.f32 %v2192, %v1248
  %v2209 = vmul.f32 %v2193, %v1249
  %v2210 = vmul.f32 %v2194, %v1250
  %v2211 = vmul.f32 %v2195, %v1251
  %v2212 = vmul.f32 %v2196, %v1252
  %v2213 = vmul.f32 %v2197, %v1253
  %v2214 = vmul.f32 %v2198, %v1254
  %v2215 = vmul.f32 %v2199, %v1255
  %v2216 = vmul.f32 %v2200, %v1256
  %v2217 = vmul.f32 %v2201, %v1257
  %v2218 = vmul.f32 %v2202, %v1258
  %v2219 = vmul.f32 %v2203, %v1259
  %v2220 = vmul.f32 %v2204, %v1260
  %v2221 = vmul.f32 %v2205, %v1261
  %v2222 = vmul.f32 %v2206, %v1262
  %v2223 = vadd.f32 %v2175, %v2207
  %v2224 = vadd.f32 %v2176, %v2208
  %v2225 = vadd.f32 %v2177, %v2209
  %v2226 = vadd.f32 %v2178, %v2210
  %v2227 = vadd.f32 %v2179, %v2211
  %v2228 = vadd.f32 %v2180, %v2212
  %v2229 = vadd.f32 %v2181, %v2213
  %v2230 = vadd.f32 %v2182, %v2214
  %v2231 = vadd.f32 %v2183, %v2215
  %v2232 = vadd.f32 %v2184, %v2216
  %v2233 = vadd.f32 %v2185, %v2217
  %v2234 = vadd.f32 %v2186, %v2218
  %v2235 = vadd.f32 %v2187, %v2219
  %v2236 = vadd.f32 %v2188, %v2220
  %v2237 = vadd.f32 %v2189, %v2221
  %v2238 = vadd.f32 %v2190, %v2222
  %v2239 = vmul.f32 %v1151, 1.25
  %v2240 = vmul.f32 %v1152, 1.25
  %v2241 = vmul.f32 %v1153, 1.25
  %v2242 = vmul.f32 %v1154, 1.25
  %v2243 = vmul.f32 %v1155, 1.25
  %v2244 = vmul.f32 %v1156, 1.25
  %v2245 = vmul.f32 %v1157, 1.25
  %v2246 = vmul.f32 %v1158, 1.25
  %v2247 = vmul.f32 %v1159, 1.25
  %v2248 = vmul.f32 %v1160, 1.25
  %v2249 = vmul.f32 %v1161, 1.25
  %v2250 = vmul.f32 %v1162, 1.25
  %v2251 = vmul.f32 %v1163, 1.25
  %v2252 = vmul.f32 %v1164, 1.25
  %v2253 = vmul.f32 %v1165, 1.25
  %v2254 = vmul.f32 %v1166, 1.25
  %v2255 = vmul.f32 %v2239, %v1247
  %v2256 = vmul.f32 %v2240, %v1248
  %v2257 = vmul.f32 %v2241, %v1249
  %v2258 = vmul.f32 %v2242, %v1250
  %v2259 = vmul.f32 %v2243, %v1251
  %v2260 = vmul.f32 %v2244, %v1252
  %v2261 = vmul.f32 %v2245, %v1253
  %v2262 = vmul.f32 %v2246, %v1254
  %v2263 = vmul.f32 %v2247, %v1255
  %v2264 = vmul.f32 %v2248, %v1256
  %v2265 = vmul.f32 %v2249, %v1257
  %v2266 = vmul.f32 %v2250, %v1258
  %v2267 = vmul.f32 %v2251, %v1259
  %v2268 = vmul.f32 %v2252, %v1260
  %v2269 = vmul.f32 %v2253, %v1261
  %v2270 = vmul.f32 %v2254, %v1262
  %v2271 = vmul.f32 %v1311, 1.25
  %v2272 = vmul.f32 %v1312, 1.25
  %v2273 = vmul.f32 %v1313, 1.25
  %v2274 = vmul.f32 %v1314, 1.25
  %v2275 = vmul.f32 %v1315, 1.25
  %v2276 = vmul.f32 %v1316, 1.25
  %v2277 = vmul.f32 %v1317, 1.25
  %v2278 = vmul.f32 %v1318, 1.25
  %v2279 = vmul.f32 %v1319, 1.25
  %v2280 = vmul.f32 %v1320, 1.25
  %v2281 = vmul.f32 %v1321, 1.25
  %v2282 = vmul.f32 %v1322, 1.25
  %v2283 = vmul.f32 %v1323, 1.25
  %v2284 = vmul.f32 %v1324, 1.25
  %v2285 = vmul.f32 %v1325, 1.25
  %v2286 = vmul.f32 %v1326, 1.25
  %v2287 = vmul.f32 %v2271, %v1359
  %v2288 = vmul.f32 %v2272, %v1360
  %v2289 = vmul.f32 %v2273, %v1361
  %v2290 = vmul.f32 %v2274, %v1362
  %v2291 = vmul.f32 %v2275, %v1363
  %v2292 = vmul.f32 %v2276, %v1364
  %v2293 = vmul.f32 %v2277, %v1365
  %v2294 = vmul.f32 %v2278, %v1366
  %v2295 = vmul.f32 %v2279, %v1367
  %v2296 = vmul.f32 %v2280, %v1368
  %v2297 = vmul.f32 %v2281, %v1369
  %v2298 = vmul.f32 %v2282, %v1370
  %v2299 = vmul.f32 %v2283, %v1371
  %v2300 = vmul.f32 %v2284, %v1372
  %v2301 = vmul.f32 %v2285, %v1373
  %v2302 = vmul.f32 %v2286, %v1374
  %v2303 = vadd.f32 %v2255, %v2287
  %v2304 = vadd.f32 %v2256, %v2288
  %v2305 = vadd.f32 %v2257, %v2289
  %v2306 = vadd.f32 %v2258, %v2290
  %v2307 = vadd.f32 %v2259, %v2291
  %v2308 = vadd.f32 %v2260, %v2292
  %v2309 = vadd.f32 %v2261, %v2293
  %v2310 = vadd.f32 %v2262, %v2294
  %v2311 = vadd.f32 %v2263, %v2295
  %v2312 = vadd.f32 %v2264, %v2296
  %v2313 = vadd.f32 %v2265, %v2297
  %v2314 = vadd.f32 %v2266, %v2298
  %v2315 = vadd.f32 %v2267, %v2299
  %v2316 = vadd.f32 %v2268, %v2300
  %v2317 = vadd.f32 %v2269, %v2301
  %v2318 = vadd.f32 %v2270, %v2302
  %v2319 = vmul.f32 %v1263, 1.25
  %v2320 = vmul.f32 %v1264, 1.25
  %v2321 = vmul.f32 %v1265, 1.25
  %v2322 = vmul.f32 %v1266, 1.25
  %v2323 = vmul.f32 %v1267, 1.25
  %v2324 = vmul.f32 %v1268, 1.25
  %v2325 = vmul.f32 %v1269, 1.25
  %v2326 = vmul.f32 %v1270, 1.25
  %v2327 = vmul.f32 %v1271, 1.25
  %v2328 = vmul.f32 %v1272, 1.25
  %v2329 = vmul.f32 %v1273, 1.25
  %v2330 = vmul.f32 %v1274, 1.25
  %v2331 = vmul.f32 %v1275, 1.25
  %v2332 = vmul.f32 %v1276, 1.25
  %v2333 = vmul.f32 %v1277, 1.25
  %v2334 = vmul.f32 %v1278, 1.25
  %v2335 = vmul.f32 %v2319, %v1359
  %v2336 = vmul.f32 %v2320, %v1360
  %v2337 = vmul.f32 %v2321, %v1361
  %v2338 = vmul.f32 %v2322, %v1362
  %v2339 = vmul.f32 %v2323, %v1363
  %v2340 = vmul.f32 %v2324, %v1364
  %v2341 = vmul.f32 %v2325, %v1365
  %v2342 = vmul.f32 %v2326, %v1366
  %v2343 = vmul.f32 %v2327, %v1367
  %v2344 = vmul.f32 %v2328, %v1368
  %v2345 = vmul.f32 %v2329, %v1369
  %v2346 = vmul.f32 %v2330, %v1370
  %v2347 = vmul.f32 %v2331, %v1371
  %v2348 = vmul.f32 %v2332, %v1372
  %v2349 = vmul.f32 %v2333, %v1373
  %v2350 = vmul.f32 %v2334, %v1374
  %v2351 = vmul.f32 %v1423, 1.25
  %v2352 = vmul.f32 %v1424, 1.25
  %v2353 = vmul.f32 %v1425, 1.25
  %v2354 = vmul.f32 %v1426, 1.25
  %v2355 = vmul.f32 %v1427, 1.25
  %v2356 = vmul.f32 %v1428, 1.25
  %v2357 = vmul.f32 %v1429, 1.25
  %v2358 = vmul.f32 %v1430, 1.25
  %v2359 = vmul.f32 %v1431, 1.25
  %v2360 = vmul.f32 %v1432, 1.25
  %v2361 = vmul.f32 %v1433, 1.25
  %v2362 = vmul.f32 %v1434, 1.25
  %v2363 = vmul.f32 %v1435, 1.25
  %v2364 = vmul.f32 %v1436, 1.25
  %v2365 = vmul.f32 %v1437, 1.25
  %v2366 = vmul.f32 %v1438, 1.25
  %v2367 = vmul.f32 %v2351, %v1471
  %v2368 = vmul.f32 %v2352, %v1472
  %v2369 = vmul.f32 %v2353, %v1473
  %v2370 = vmul.f32 %v2354, %v1474
  %v2371 = vmul.f32 %v2355, %v1475
  %v2372 = vmul.f32 %v2356, %v1476
  %v2373 = vmul.f32 %v2357, %v1477
  %v2374 = vmul.f32 %v2358, %v1478
  %v2375 = vmul.f32 %v2359, %v1479
  %v2376 = vmul.f32 %v2360, %v1480
  %v2377 = vmul.f32 %v2361, %v1481
  %v2378 = vmul.f32 %v2362, %v1482
  %v2379 = vmul.f32 %v2363, %v1483
  %v2380 = vmul.f32 %v2364, %v1484
  %v2381 = vmul.f32 %v2365, %v1485
  %v2382 = vmul.f32 %v2366, %v1486
  %v2383 = vadd.f32 %v2335, %v2367
  %v2384 = vadd.f32 %v2336, %v2368
  %v2385 = vadd.f32 %v2337, %v2369
  %v2386 = vadd.f32 %v2338, %v2370
  %v2387 = vadd.f32 %v2339, %v2371
  %v2388 = vadd.f32 %v2340, %v2372
  %v2389 = vadd.f32 %v2341, %v2373
  %v2390 = vadd.f32 %v2342, %v2374
  %v2391 = vadd.f32 %v2343, %v2375
  %v2392 = vadd.f32 %v2344, %v2376
  %v2393 = vadd.f32 %v2345, %v2377
  %v2394 = vadd.f32 %v2346, %v2378
  %v2395 = vadd.f32 %v2347, %v2379
  %v2396 = vadd.f32 %v2348, %v2380
  %v2397 = vadd.f32 %v2349, %v2381
  %v2398 = vadd.f32 %v2350, %v2382
  %v2399 = vmul.f32 %v1375, 1.25
  %v2400 = vmul.f32 %v1376, 1.25
  %v2401 = vmul.f32 %v1377, 1.25
  %v2402 = vmul.f32 %v1378, 1.25
  %v2403 = vmul.f32 %v1379, 1.25
  %v2404 = vmul.f32 %v1380, 1.25
  %v2405 = vmul.f32 %v1381, 1.25
  %v2406 = vmul.f32 %v1382, 1.25
  %v2407 = vmul.f32 %v1383, 1.25
  %v2408 = vmul.f32 %v1384, 1.25
  %v2409 = vmul.f32 %v1385, 1.25
  %v2410 = vmul.f32 %v1386, 1.25
  %v2411 = vmul.f32 %v1387, 1.25
  %v2412 = vmul.f32 %v1388, 1.25
  %v2413 = vmul.f32 %v1389, 1.25
  %v2414 = vmul.f32 %v1390, 1.25
  %v2415 = vmul.f32 %v2399, %v1471
  %v2416 = vmul.f32 %v2400, %v1472
  %v2417 = vmul.f32 %v2401, %v1473
  %v2418 = vmul.f32 %v2402, %v1474
  %v2419 = vmul.f32 %v2403, %v1475
  %v2420 = vmul.f32 %v2404, %v1476
  %v2421 = vmul.f32 %v2405, %v1477
  %v2422 = vmul.f32 %v2406, %v1478
  %v2423 = vmul.f32 %v2407, %v1479
  %v2424 = vmul.f32 %v2408, %v1480
  %v2425 = vmul.f32 %v2409, %v1481
  %v2426 = vmul.f32 %v2410, %v1482
  %v2427 = vmul.f32 %v2411, %v1483
  %v2428 = vmul.f32 %v2412, %v1484
  %v2429 = vmul.f32 %v2413, %v1485
  %v2430 = vmul.f32 %v2414, %v1486
  %v2431 = vmul.f32 %v1535, 1.25
  %v2432 = vmul.f32 %v1536, 1.25
  %v2433 = vmul.f32 %v1537, 1.25
  %v2434 = vmul.f32 %v1538, 1.25
  %v2435 = vmul.f32 %v1539, 1.25
  %v2436 = vmul.f32 %v1540, 1.25
  %v2437 = vmul.f32 %v1541, 1.25
  %v2438 = vmul.f32 %v1542, 1.25
  %v2439 = vmul.f32 %v1543, 1.25
  %v2440 = vmul.f32 %v1544, 1.25
  %v2441 = vmul.f32 %v1545, 1.25
  %v2442 = vmul.f32 %v1546, 1.25
  %v2443 = vmul.f32 %v1547, 1.25
  %v2444 = vmul.f32 %v1548, 1.25
  %v2445 = vmul.f32 %v1549, 1.25
  %v2446 = vmul.f32 %v1550, 1.25
  %v2447 = vmul.f32 %v2431, %v1583
  %v2448 = vmul.f32 %v2432, %v1584
  %v2449 = vmul.f32 %v2433, %v1585
  %v2450 = vmul.f32 %v2434, %v1586
  %v2451 = vmul.f32 %v2435, %v1587
  %v2452 = vmul.f32 %v2436, %v1588
  %v2453 = vmul.f32 %v2437, %v1589
  %v2454 = vmul.f32 %v2438, %v1590
  %v2455 = vmul.f32 %v2439, %v1591
  %v2456 = vmul.f32 %v2440, %v1592
  %v2457 = vmul.f32 %v2441, %v1593
  %v2458 = vmul.f32 %v2442, %v1594
  %v2459 = vmul.f32 %v2443, %v1595
  %v2460 = vmul.f32 %v2444, %v1596
  %v2461 = vmul.f32 %v2445, %v1597
  %v2462 = vmul.f32 %v2446, %v1598
  %v2463 = vadd.f32 %v2415, %v2447
  %v2464 = vadd.f32 %v2416, %v2448
  %v2465 = vadd.f32 %v2417, %v2449
  %v2466 = vadd.f32 %v2418, %v2450
  %v2467 = vadd.f32 %v2419, %v2451
  %v2468 = vadd.f32 %v2420, %v2452
  %v2469 = vadd.f32 %v2421, %v2453
  %v2470 = vadd.f32 %v2422, %v2454
  %v2471 = vadd.f32 %v2423, %v2455
  %v2472 = vadd.f32 %v2424, %v2456
  %v2473 = vadd.f32 %v2425, %v2457
  %v2474 = vadd.f32 %v2426, %v2458
  %v2475 = vadd.f32 %v2427, %v2459
  %v2476 = vadd.f32 %v2428, %v2460
  %v2477 = vadd.f32 %v2429, %v2461
  %v2478 = vadd.f32 %v2430, %v2462
  %v2479 = vmul.f32 %v1487, 1.25
  %v2480 = vmul.f32 %v1488, 1.25
  %v2481 = vmul.f32 %v1489, 1.25
  %v2482 = vmul.f32 %v1490, 1.25
  %v2483 = vmul.f32 %v1491, 1.25
  %v2484 = vmul.f32 %v1492, 1.25
  %v2485 = vmul.f32 %v1493, 1.25
  %v2486 = vmul.f32 %v1494, 1.25
  %v2487 = vmul.f32 %v1495, 1.25
  %v2488 = vmul.f32 %v1496, 1.25
  %v2489 = vmul.f32 %v1497, 1.25
  %v2490 = vmul.f32 %v1498, 1.25
  %v2491 = vmul.f32 %v1499, 1.25
  %v2492 = vmul.f32 %v1500, 1.25
  %v2493 = vmul.f32 %v1501, 1.25
  %v2494 = vmul.f32 %v1502, 1.25
  %v2495 = vmul.f32 %v2479, %v1583
  %v2496 = vmul.f32 %v2480, %v1584
  %v2497 = vmul.f32 %v2481, %v1585
  %v2498 = vmul.f32 %v2482, %v1586
  %v2499 = vmul.f32 %v2483, %v1587
  %v2500 = vmul.f32 %v2484, %v1588
  %v2501 = vmul.f32 %v2485, %v1589
  %v2502 = vmul.f32 %v2486, %v1590
  %v2503 = vmul.f32 %v2487, %v1591
  %v2504 = vmul.f32 %v2488, %v1592
  %v2505 = vmul.f32 %v2489, %v1593
  %v2506 = vmul.f32 %v2490, %v1594
  %v2507 = vmul.f32 %v2491, %v1595
  %v2508 = vmul.f32 %v2492, %v1596
  %v2509 = vmul.f32 %v2493, %v1597
  %v2510 = vmul.f32 %v2494, %v1598
  %v2511 = vmul.f32 %v1647, 1.25
  %v2512 = vmul.f32 %v1648, 1.25
  %v2513 = vmul.f32 %v1649, 1.25
  %v2514 = vmul.f32 %v1650, 1.25
  %v2515 = vmul.f32 %v1651, 1.25
  %v2516 = vmul.f32 %v1652, 1.25
  %v2517 = vmul.f32 %v1653, 1.25
  %v2518 = vmul.f32 %v1654, 1.25
  %v2519 = vmul.f32 %v1655, 1.25
  %v2520 = vmul.f32 %v1656, 1.25
  %v2521 = vmul.f32 %v1657, 1.25
  %v2522 = vmul.f32 %v1658, 1.25
  %v2523 = vmul.f32 %v1659, 1.25
  %v2524 = vmul.f32 %v1660, 1.25
  %v2525 = vmul.f32 %v1661, 1.25
  %v2526 = vmul.f32 %v1662, 1.25
  %v2527 = vmul.f32 %v2511, %v1695
  %v2528 = vmul.f32 %v2512, %v1696
  %v2529 = vmul.f32 %v2513, %v1697
  %v2530 = vmul.f32 %v2514, %v1698
  %v2531 = vmul.f32 %v2515, %v1699
  %v2532 = vmul.f32 %v2516, %v1700
  %v2533 = vmul.f32 %v2517, %v1701
  %v2534 = vmul.f32 %v2518, %v1702
  %v2535 = vmul.f32 %v2519, %v1703
  %v2536 = vmul.f32 %v2520, %v1704
  %v2537 = vmul.f32 %v2521, %v1705
  %v2538 = vmul.f32 %v2522, %v1706
  %v2539 = vmul.f32 %v2523, %v1707
  %v2540 = vmul.f32 %v2524, %v1708
  %v2541 = vmul.f32 %v2525, %v1709
  %v2542 = vmul.f32 %v2526, %v1710
  %v2543 = vadd.f32 %v2495, %v2527
  %v2544 = vadd.f32 %v2496, %v2528
  %v2545 = vadd.f32 %v2497, %v2529
  %v2546 = vadd.f32 %v2498, %v2530
  %v2547 = vadd.f32 %v2499, %v2531
  %v2548 = vadd.f32 %v2500, %v2532
  %v2549 = vadd.f32 %v2501, %v2533
  %v2550 = vadd.f32 %v2502, %v2534
  %v2551 = vadd.f32 %v2503, %v2535
  %v2552 = vadd.f32 %v2504, %v2536
  %v2553 = vadd.f32 %v2505, %v2537
  %v2554 = vadd.f32 %v2506, %v2538
  %v2555 = vadd.f32 %v2507, %v2539
  %v2556 = vadd.f32 %v2508, %v2540
  %v2557 = vadd.f32 %v2509, %v2541
  %v2558 = vadd.f32 %v2510, %v2542
  %v2559 = vmul.f32 %v1599, 1.25
  %v2560 = vmul.f32 %v1600, 1.25
  %v2561 = vmul.f32 %v1601, 1.25
  %v2562 = vmul.f32 %v1602, 1.25
  %v2563 = vmul.f32 %v1603, 1.25
  %v2564 = vmul.f32 %v1604, 1.25
  %v2565 = vmul.f32 %v1605, 1.25
  %v2566 = vmul.f32 %v1606, 1.25
  %v2567 = vmul.f32 %v1607, 1.25
  %v2568 = vmul.f32 %v1608, 1.25
  %v2569 = vmul.f32 %v1609, 1.25
  %v2570 = vmul.f32 %v1610, 1.25
  %v2571 = vmul.f32 %v1611, 1.25
  %v2572 = vmul.f32 %v1612, 1.25
  %v2573 = vmul.f32 %v1613, 1.25
  %v2574 = vmul.f32 %v1614, 1.25
  %v2575 = vmul.f32 %v2559, %v1695
  %v2576 = vmul.f32 %v2560, %v1696
  %v2577 = vmul.f32 %v2561, %v1697
  %v2578 = vmul.f32 %v2562, %v1698
  %v2579 = vmul.f32 %v2563, %v1699
  %v2580 = vmul.f32 %v2564, %v1700
  %v2581 = vmul.f32 %v2565, %v1701
  %v2582 = vmul.f32 %v2566, %v1702
  %v2583 = vmul.f32 %v2567, %v1703
  %v2584 = vmul.f32 %v2568, %v1704
  %v2585 = vmul.f32 %v2569, %v1705
  %v2586 = vmul.f32 %v2570, %v1706
  %v2587 = vmul.f32 %v2571, %v1707
  %v2588 = vmul.f32 %v2572, %v1708
  %v2589 = vmul.f32 %v2573, %v1709
  %v2590 = vmul.f32 %v2574, %v1710
  %v2591 = vmul.f32 %v1759, 1.25
  %v2592 = vmul.f32 %v1760, 1.25
  %v2593 = vmul.f32 %v1761, 1.25
  %v2594 = vmul.f32 %v1762, 1.25
  %v2595 = vmul.f32 %v1763, 1.25
  %v2596 = vmul.f32 %v1764, 1.25
  %v2597 = vmul.f32 %v1765, 1.25
  %v2598 = vmul.f32 %v1766, 1.25
  %v2599 = vmul.f32 %v1767, 1.25
  %v2600 = vmul.f32 %v1768, 1.25
  %v2601 = vmul.f32 %v1769, 1.25
  %v2602 = vmul.f32 %v1770, 1.25
  %v2603 = vmul.f32 %v1771, 1.25
  %v2604 = vmul.f32 %v1772, 1.25
  %v2605 = vmul.f32 %v1773, 1.25
  %v2606 = vmul.f32 %v1774, 1.25
  %v2607 = vmul.f32 %v2591, %v1807
  %v2608 = vmul.f32 %v2592, %v1808
  %v2609 = vmul.f32 %v2593, %v1809
  %v2610 = vmul.f32 %v2594, %v1810
  %v2611 = vmul.f32 %v2595, %v1811
  %v2612 = vmul.f32 %v2596, %v1812
  %v2613 = vmul.f32 %v2597, %v1813
  %v2614 = vmul.f32 %v2598, %v1814
  %v2615 = vmul.f32 %v2599, %v1815
  %v2616 = vmul.f32 %v2600, %v1816
  %v2617 = vmul.f32 %v2601, %v1817
  %v2618 = vmul.f32 %v2602, %v1818
  %v2619 = vmul.f32 %v2603, %v1819
  %v2620 = vmul.f32 %v2604, %v1820
  %v2621 = vmul.f32 %v2605, %v1821
  %v2622 = vmul.f32 %v2606, %v1822
  %v2623 = vadd.f32 %v2575, %v2607
  %v2624 = vadd.f32 %v2576, %v2608
  %v2625 = vadd.f32 %v2577, %v2609
  %v2626 = vadd.f32 %v2578, %v2610
  %v2627 = vadd.f32 %v2579, %v2611
  %v2628 = vadd.f32 %v2580, %v2612
  %v2629 = vadd.f32 %v2581, %v2613
  %v2630 = vadd.f32 %v2582, %v2614
  %v2631 = vadd.f32 %v2583, %v2615
  %v2632 = vadd.f32 %v2584, %v2616
  %v2633 = vadd.f32 %v2585, %v2617
  %v2634 = vadd.f32 %v2586, %v2618
  %v2635 = vadd.f32 %v2587, %v2619
  %v2636 = vadd.f32 %v2588, %v2620
  %v2637 = vadd.f32 %v2589, %v2621
  %v2638 = vadd.f32 %v2590, %v2622
  %v2639 = vmul.f32 %v1711, 1.25
  %v2640 = vmul.f32 %v1712, 1.25
  %v2641 = vmul.f32 %v1713, 1.25
  %v2642 = vmul.f32 %v1714, 1.25
  %v2643 = vmul.f32 %v1715, 1.25
  %v2644 = vmul.f32 %v1716, 1.25
  %v2645 = vmul.f32 %v1717, 1.25
  %v2646 = vmul.f32 %v1718, 1.25
  %v2647 = vmul.f32 %v1719, 1.25
  %v2648 = vmul.f32 %v1720, 1.25
  %v2649 = vmul.f32 %v1721, 1.25
  %v2650 = vmul.f32 %v1722, 1.25
  %v2651 = vmul.f32 %v1723, 1.25
  %v2652 = vmul.f32 %v1724, 1.25
  %v2653 = vmul.f32 %v1725, 1.25
  %v2654 = vmul.f32 %v1726, 1.25
  %v2655 = vmul.f32 %v2639, %v1807
  %v2656 = vmul.f32 %v2640, %v1808
  %v2657 = vmul.f32 %v2641, %v1809
  %v2658 = vmul.f32 %v2642, %v1810
  %v2659 = vmul.f32 %v2643, %v1811
  %v2660 = vmul.f32 %v2644, %v1812
  %v2661 = vmul.f32 %v2645, %v1813
  %v2662 = vmul.f32 %v2646, %v1814
  %v2663 = vmul.f32 %v2647, %v1815
  %v2664 = vmul.f32 %v2648, %v1816
  %v2665 = vmul.f32 %v2649, %v1817
  %v2666 = vmul.f32 %v2650, %v1818
  %v2667 = vmul.f32 %v2651, %v1819
  %v2668 = vmul.f32 %v2652, %v1820
  %v2669 = vmul.f32 %v2653, %v1821
  %v2670 = vmul.f32 %v2654, %v1822
  %v2671 = vmul.f32 %v1871, 1.25
  %v2672 = vmul.f32 %v1872, 1.25
  %v2673 = vmul.f32 %v1873, 1.25
  %v2674 = vmul.f32 %v1874, 1.25
  %v2675 = vmul.f32 %v1875, 1.25
  %v2676 = vmul.f32 %v1876, 1.25
  %v2677 = vmul.f32 %v1877, 1.25
  %v2678 = vmul.f32 %v1878, 1.25
  %v2679 = vmul.f32 %v1879, 1.25
  %v2680 = vmul.f32 %v1880, 1.25
  %v2681 = vmul.f32 %v1881, 1.25
  %v2682 = vmul.f32 %v1882, 1.25
  %v2683 = vmul.f32 %v1883, 1.25
  %v2684 = vmul.f32 %v1884, 1.25
  %v2685 = vmul.f32 %v1885, 1.25
  %v2686 = vmul.f32 %v1886, 1.25
  %v2687 = vmul.f32 %v2671, %v1919
  %v2688 = vmul.f32 %v2672, %v1920
  %v2689 = vmul.f32 %v2673, %v1921
  %v2690 = vmul.f32 %v2674, %v1922
  %v2691 = vmul.f32 %v2675, %v1923
  %v2692 = vmul.f32 %v2676, %v1924
  %v2693 = vmul.f32 %v2677, %v1925
  %v2694 = vmul.f32 %v2678, %v1926
  %v2695 = vmul.f32 %v2679, %v1927
  %v2696 = vmul.f32 %v2680, %v1928
  %v2697 = vmul.f32 %v2681, %v1929
  %v2698 = vmul.f32 %v2682, %v1930
  %v2699 = vmul.f32 %v2683, %v1931
  %v2700 = vmul.f32 %v2684, %v1932
  %v2701 = vmul.f32 %v2685, %v1933
  %v2702 = vmul.f32 %v2686, %v1934
  %v2703 = vadd.f32 %v2655, %v2687
  %v2704 = vadd.f32 %v2656, %v2688
  %v2705 = vadd.f32 %v2657, %v2689
  %v2706 = vadd.f32 %v2658, %v2690
  %v2707 = vadd.f32 %v2659, %v2691
  %v2708 = vadd.f32 %v2660, %v2692
  %v2709 = vadd.f32 %v2661, %v2693
  %v2710 = vadd.f32 %v2662, %v2694
  %v2711 = vadd.f32 %v2663, %v2695
  %v2712 = vadd.f32 %v2664, %v2696
  %v2713 = vadd.f32 %v2665, %v2697
  %v2714 = vadd.f32 %v2666, %v2698
  %v2715 = vadd.f32 %v2667, %v2699
  %v2716 = vadd.f32 %v2668, %v2700
  %v2717 = vadd.f32 %v2669, %v2701
  %v2718 = vadd.f32 %v2670, %v2702
  %v2719 = vmul.f32 %v1823, 1.25
  %v2720 = vmul.f32 %v1824, 1.25
  %v2721 = vmul.f32 %v1825, 1.25
  %v2722 = vmul.f32 %v1826, 1.25
  %v2723 = vmul.f32 %v1827, 1.25
  %v2724 = vmul.f32 %v1828, 1.25
  %v2725 = vmul.f32 %v1829, 1.25
  %v2726 = vmul.f32 %v1830, 1.25
  %v2727 = vmul.f32 %v1831, 1.25
  %v2728 = vmul.f32 %v1832, 1.25
  %v2729 = vmul.f32 %v1833, 1.25
  %v2730 = vmul.f32 %v1834, 1.25
  %v2731 = vmul.f32 %v1835, 1.25
  %v2732 = vmul.f32 %v1836, 1.25
  %v2733 = vmul.f32 %v1837, 1.25
  %v2734 = vmul.f32 %v1838, 1.25
  %v2735 = vmul.f32 %v2719, %v1919
  %v2736 = vmul.f32 %v2720, %v1920
  %v2737 = vmul.f32 %v2721, %v1921
  %v2738 = vmul.f32 %v2722, %v1922
  %v2739 = vmul.f32 %v2723, %v1923
  %v2740 = vmul.f32 %v2724, %v1924
  %v2741 = vmul.f32 %v2725, %v1925
  %v2742 = vmul.f32 %v2726, %v1926
  %v2743 = vmul.f32 %v2727, %v1927
  %v2744 = vmul.f32 %v2728, %v1928
  %v2745 = vmul.f32 %v2729, %v1929
  %v2746 = vmul.f32 %v2730, %v1930
  %v2747 = vmul.f32 %v2731, %v1931
  %v2748 = vmul.f32 %v2732, %v1932
  %v2749 = vmul.f32 %v2733, %v1933
  %v2750 = vmul.f32 %v2734, %v1934
  %v2751 = vmul.f32 %v1983, 1.25
  %v2752 = vmul.f32 %v1984, 1.25
  %v2753 = vmul.f32 %v1985, 1.25
  %v2754 = vmul.f32 %v1986, 1.25
  %v2755 = vmul.f32 %v1987, 1.25
  %v2756 = vmul.f32 %v1988, 1.25
  %v2757 = vmul.f32 %v1989, 1.25
  %v2758 = vmul.f32 %v1990, 1.25
  %v2759 = vmul.f32 %v1991, 1.25
  %v2760 = vmul.f32 %v1992, 1.25
  %v2761 = vmul.f32 %v1993, 1.25
  %v2762 = vmul.f32 %v1994, 1.25
  %v2763 = vmul.f32 %v1995, 1.25
  %v2764 = vmul.f32 %v1996, 1.25
  %v2765 = vmul.f32 %v1997, 1.25
  %v2766 = vmul.f32 %v1998, 1.25
  %v2767 = vmul.f32 %v2751, %v2031
  %v2768 = vmul.f32 %v2752, %v2032
  %v2769 = vmul.f32 %v2753, %v2033
  %v2770 = vmul.f32 %v2754, %v2034
  %v2771 = vmul.f32 %v2755, %v2035
  %v2772 = vmul.f32 %v2756, %v2036
  %v2773 = vmul.f32 %v2757, %v2037
  %v2774 = vmul.f32 %v2758, %v2038
  %v2775 = vmul.f32 %v2759, %v2039
  %v2776 = vmul.f32 %v2760, %v2040
  %v2777 = vmul.f32 %v2761, %v2041
  %v2778 = vmul.f32 %v2762, %v2042
  %v2779 = vmul.f32 %v2763, %v2043
  %v2780 = vmul.f32 %v2764, %v2044
  %v2781 = vmul.f32 %v2765, %v2045
  %v2782 = vmul.f32 %v2766, %v2046
  %v2783 = vadd.f32 %v2735, %v2767
  %v2784 = vadd.f32 %v2736, %v2768
  %v2785 = vadd.f32 %v2737, %v2769
  %v2786 = vadd.f32 %v2738, %v2770
  %v2787 = vadd.f32 %v2739, %v2771
  %v2788 = vadd.f32 %v2740, %v2772
  %v2789 = vadd.f32 %v2741, %v2773
  %v2790 = vadd.f32 %v2742, %v2774
  %v2791 = vadd.f32 %v2743, %v2775
  %v2792 = vadd.f32 %v2744, %v2776
  %v2793 = vadd.f32 %v2745, %v2777
  %v2794 = vadd.f32 %v2746, %v2778
  %v2795 = vadd.f32 %v2747, %v2779
  %v2796 = vadd.f32 %v2748, %v2780
  %v2797 = vadd.f32 %v2749, %v2781
  %v2798 = vadd.f32 %v2750, %v2782
  %v2799 = vmul.f32 %v1935, 1.25
  %v2800 = vmul.f32 %v1936, 1.25
  %v2801 = vmul.f32 %v1937, 1.25
  %v2802 = vmul.f32 %v1938, 1.25
  %v2803 = vmul.f32 %v1939, 1.25
  %v2804 = vmul.f32 %v1940, 1.25
  %v2805 = vmul.f32 %v1941, 1.25
  %v2806 = vmul.f32 %v1942, 1.25
  %v2807 = vmul.f32 %v1943, 1.25
  %v2808 = vmul.f32 %v1944, 1.25
  %v2809 = vmul.f32 %v1945, 1.25
  %v2810 = vmul.f32 %v1946, 1.25
  %v2811 = vmul.f32 %v1947, 1.25
  %v2812 = vmul.f32 %v1948, 1.25
  %v2813 = vmul.f32 %v1949, 1.25
  %v2814 = vmul.f32 %v1950, 1.25
  %v2815 = vmul.f32 %v2799, %v2031
  %v2816 = vmul.f32 %v2800, %v2032
  %v2817 = vmul.f32 %v2801, %v2033
  %v2818 = vmul.f32 %v2802, %v2034
  %v2819 = vmul.f32 %v2803, %v2035
  %v2820 = vmul.f32 %v2804, %v2036
  %v2821 = vmul.f32 %v2805, %v2037
  %v2822 = vmul.f32 %v2806, %v2038
  %v2823 = vmul.f32 %v2807, %v2039
  %v2824 = vmul.f32 %v2808, %v2040
  %v2825 = vmul.f32 %v2809, %v2041
  %v2826 = vmul.f32 %v2810, %v2042
  %v2827 = vmul.f32 %v2811, %v2043
  %v2828 = vmul.f32 %v2812, %v2044
  %v2829 = vmul.f32 %v2813, %v2045
  %v2830 = vmul.f32 %v2814, %v2046
  %v2831 = vmul.f32 %v2095, 1.25
  %v2832 = vmul.f32 %v2096, 1.25
  %v2833 = vmul.f32 %v2097, 1.25
  %v2834 = vmul.f32 %v2098, 1.25
  %v2835 = vmul.f32 %v2099, 1.25
  %v2836 = vmul.f32 %v2100, 1.25
  %v2837 = vmul.f32 %v2101, 1.25
  %v2838 = vmul.f32 %v2102, 1.25
  %v2839 = vmul.f32 %v2103, 1.25
  %v2840 = vmul.f32 %v2104, 1.25
  %v2841 = vmul.f32 %v2105, 1.25
  %v2842 = vmul.f32 %v2106, 1.25
  %v2843 = vmul.f32 %v2107, 1.25
  %v2844 = vmul.f32 %v2108, 1.25
  %v2845 = vmul.f32 %v2109, 1.25
  %v2846 = vmul.f32 %v2110, 1.25
  %v2847 = vmul.f32 %v2831, %v2143
  %v2848 = vmul.f32 %v2832, %v2144
  %v2849 = vmul.f32 %v2833, %v2145
  %v2850 = vmul.f32 %v2834, %v2146
  %v2851 = vmul.f32 %v2835, %v2147
  %v2852 = vmul.f32 %v2836, %v2148
  %v2853 = vmul.f32 %v2837, %v2149
  %v2854 = vmul.f32 %v2838, %v2150
  %v2855 = vmul.f32 %v2839, %v2151
  %v2856 = vmul.f32 %v2840, %v2152
  %v2857 = vmul.f32 %v2841, %v2153
  %v2858 = vmul.f32 %v2842, %v2154
  %v2859 = vmul.f32 %v2843, %v2155
  %v2860 = vmul.f32 %v2844, %v2156
  %v2861 = vmul.f32 %v2845, %v2157
  %v2862 = vmul.f32 %v2846, %v2158
  %v2863 = vadd.f32 %v2815, %v2847
  %v2864 = vadd.f32 %v2816, %v2848
  %v2865 = vadd.f32 %v2817, %v2849
  %v2866 = vadd.f32 %v2818, %v2850
  %v2867 = vadd.f32 %v2819, %v2851
  %v2868 = vadd.f32 %v2820, %v2852
  %v2869 = vadd.f32 %v2821, %v2853
  %v2870 = vadd.f32 %v2822, %v2854
  %v2871 = vadd.f32 %v2823, %v2855
  %v2872 = vadd.f32 %v2824, %v2856
  %v2873 = vadd.f32 %v2825, %v2857
  %v2874 = vadd.f32 %v2826, %v2858
  %v2875 = vadd.f32 %v2827, %v2859
  %v2876 = vadd.f32 %v2828, %v2860
  %v2877 = vadd.f32 %v2829, %v2861
  %v2878 = vadd.f32 %v2830, %v2862
  %v2879 = vmul.f32 %v1039, 0.8333333
  %v2880 = vmul.f32 %v1040, 0.8333333
  %v2881 = vmul.f32 %v1041, 0.8333333
  %v2882 = vmul.f32 %v1042, 0.8333333
  %v2883 = vmul.f32 %v1043, 0.8333333
  %v2884 = vmul.f32 %v1044, 0.8333333
  %v2885 = vmul.f32 %v1045, 0.8333333
  %v2886 = vmul.f32 %v1046, 0.8333333
  %v2887 = vmul.f32 %v1047, 0.8333333
  %v2888 = vmul.f32 %v1048, 0.8333333
  %v2889 = vmul.f32 %v1049, 0.8333333
  %v2890 = vmul.f32 %v1050, 0.8333333
  %v2891 = vmul.f32 %v1051, 0.8333333
  %v2892 = vmul.f32 %v1052, 0.8333333
  %v2893 = vmul.f32 %v1053, 0.8333333
  %v2894 = vmul.f32 %v1054, 0.8333333
  %v2895 = vmul.f32 %v2879, %v2223
  %v2896 = vmul.f32 %v2880, %v2224
  %v2897 = vmul.f32 %v2881, %v2225
  %v2898 = vmul.f32 %v2882, %v2226
  %v2899 = vmul.f32 %v2883, %v2227
  %v2900 = vmul.f32 %v2884, %v2228
  %v2901 = vmul.f32 %v2885, %v2229
  %v2902 = vmul.f32 %v2886, %v2230
  %v2903 = vmul.f32 %v2887, %v2231
  %v2904 = vmul.f32 %v2888, %v2232
  %v2905 = vmul.f32 %v2889, %v2233
  %v2906 = vmul.f32 %v2890, %v2234
  %v2907 = vmul.f32 %v2891, %v2235
  %v2908 = vmul.f32 %v2892, %v2236
  %v2909 = vmul.f32 %v2893, %v2237
  %v2910 = vmul.f32 %v2894, %v2238
  %v2911 = vmul.f32 %v1311, 0.8333333
  %v2912 = vmul.f32 %v1312, 0.8333333
  %v2913 = vmul.f32 %v1313, 0.8333333
  %v2914 = vmul.f32 %v1314, 0.8333333
  %v2915 = vmul.f32 %v1315, 0.8333333
  %v2916 = vmul.f32 %v1316, 0.8333333
  %v2917 = vmul.f32 %v1317, 0.8333333
  %v2918 = vmul.f32 %v1318, 0.8333333
  %v2919 = vmul.f32 %v1319, 0.8333333
  %v2920 = vmul.f32 %v1320, 0.8333333
  %v2921 = vmul.f32 %v1321, 0.8333333
  %v2922 = vmul.f32 %v1322, 0.8333333
  %v2923 = vmul.f32 %v1323, 0.8333333
  %v2924 = vmul.f32 %v1324, 0.8333333
  %v2925 = vmul.f32 %v1325, 0.8333333
  %v2926 = vmul.f32 %v1326, 0.8333333
  %v2927 = vmul.f32 %v2911, %v2303
  %v2928 = vmul.f32 %v2912, %v2304
  %v2929 = vmul.f32 %v2913, %v2305
  %v2930 = vmul.f32 %v2914, %v2306
  %v2931 = vmul.f32 %v2915, %v2307
  %v2932 = vmul.f32 %v2916, %v2308
  %v2933 = vmul.f32 %v2917, %v2309
  %v2934 = vmul.f32 %v2918, %v2310
  %v2935 = vmul.f32 %v2919, %v2311
  %v2936 = vmul.f32 %v2920, %v2312
  %v2937 = vmul.f32 %v2921, %v2313
  %v2938 = vmul.f32 %v2922, %v2314
  %v2939 = vmul.f32 %v2923, %v2315
  %v2940 = vmul.f32 %v2924, %v2316
  %v2941 = vmul.f32 %v2925, %v2317
  %v2942 = vmul.f32 %v2926, %v2318
  %v2943 = vadd.f32 %v2895, %v2927
  %v2944 = vadd.f32 %v2896, %v2928
  %v2945 = vadd.f32 %v2897, %v2929
  %v2946 = vadd.f32 %v2898, %v2930
  %v2947 = vadd.f32 %v2899, %v2931
  %v2948 = vadd.f32 %v2900, %v2932
  %v2949 = vadd.f32 %v2901, %v2933
  %v2950 = vadd.f32 %v2902, %v2934
  %v2951 = vadd.f32 %v2903, %v2935
  %v2952 = vadd.f32 %v2904, %v2936
  %v2953 = vadd.f32 %v2905, %v2937
  %v2954 = vadd.f32 %v2906, %v2938
  %v2955 = vadd.f32 %v2907, %v2939
  %v2956 = vadd.f32 %v2908, %v2940
  %v2957 = vadd.f32 %v2909, %v2941
  %v2958 = vadd.f32 %v2910, %v2942
  %v2959 = vmul.f32 %v1151, 0.8333333
  %v2960 = vmul.f32 %v1152, 0.8333333
  %v2961 = vmul.f32 %v1153, 0.8333333
  %v2962 = vmul.f32 %v1154, 0.8333333
  %v2963 = vmul.f32 %v1155, 0.8333333
  %v2964 = vmul.f32 %v1156, 0.8333333
  %v2965 = vmul.f32 %v1157, 0.8333333
  %v2966 = vmul.f32 %v1158, 0.8333333
  %v2967 = vmul.f32 %v1159, 0.8333333
  %v2968 = vmul.f32 %v1160, 0.8333333
  %v2969 = vmul.f32 %v1161, 0.8333333
  %v2970 = vmul.f32 %v1162, 0.8333333
  %v2971 = vmul.f32 %v1163, 0.8333333
  %v2972 = vmul.f32 %v1164, 0.8333333
  %v2973 = vmul.f32 %v1165, 0.8333333
  %v2974 = vmul.f32 %v1166, 0.8333333
  %v2975 = vmul.f32 %v2959, %v2303
  %v2976 = vmul.f32 %v2960, %v2304
  %v2977 = vmul.f32 %v2961, %v2305
  %v2978 = vmul.f32 %v2962, %v2306
  %v2979 = vmul.f32 %v2963, %v2307
  %v2980 = vmul.f32 %v2964, %v2308
  %v2981 = vmul.f32 %v2965, %v2309
  %v2982 = vmul.f32 %v2966, %v2310
  %v2983 = vmul.f32 %v2967, %v2311
  %v2984 = vmul.f32 %v2968, %v2312
  %v2985 = vmul.f32 %v2969, %v2313
  %v2986 = vmul.f32 %v2970, %v2314
  %v2987 = vmul.f32 %v2971, %v2315
  %v2988 = vmul.f32 %v2972, %v2316
  %v2989 = vmul.f32 %v2973, %v2317
  %v2990 = vmul.f32 %v2974, %v2318
  %v2991 = vmul.f32 %v1423, 0.8333333
  %v2992 = vmul.f32 %v1424, 0.8333333
  %v2993 = vmul.f32 %v1425, 0.8333333
  %v2994 = vmul.f32 %v1426, 0.8333333
  %v2995 = vmul.f32 %v1427, 0.8333333
  %v2996 = vmul.f32 %v1428, 0.8333333
  %v2997 = vmul.f32 %v1429, 0.8333333
  %v2998 = vmul.f32 %v1430, 0.8333333
  %v2999 = vmul.f32 %v1431, 0.8333333
  %v3000 = vmul.f32 %v1432, 0.8333333
  %v3001 = vmul.f32 %v1433, 0.8333333
  %v3002 = vmul.f32 %v1434, 0.8333333
  %v3003 = vmul.f32 %v1435, 0.8333333
  %v3004 = vmul.f32 %v1436, 0.8333333
  %v3005 = vmul.f32 %v1437, 0.8333333
  %v3006 = vmul.f32 %v1438, 0.8333333
  %v3007 = vmul.f32 %v2991, %v2383
  %v3008 = vmul.f32 %v2992, %v2384
  %v3009 = vmul.f32 %v2993, %v2385
  %v3010 = vmul.f32 %v2994, %v2386
  %v3011 = vmul.f32 %v2995, %v2387
  %v3012 = vmul.f32 %v2996, %v2388
  %v3013 = vmul.f32 %v2997, %v2389
  %v3014 = vmul.f32 %v2998, %v2390
  %v3015 = vmul.f32 %v2999, %v2391
  %v3016 = vmul.f32 %v3000, %v2392
  %v3017 = vmul.f32 %v3001, %v2393
  %v3018 = vmul.f32 %v3002, %v2394
  %v3019 = vmul.f32 %v3003, %v2395
  %v3020 = vmul.f32 %v3004, %v2396
  %v3021 = vmul.f32 %v3005, %v2397
  %v3022 = vmul.f32 %v3006, %v2398
  %v3023 = vadd.f32 %v2975, %v3007
  %v3024 = vadd.f32 %v2976, %v3008
  %v3025 = vadd.f32 %v2977, %v3009
  %v3026 = vadd.f32 %v2978, %v3010
  %v3027 = vadd.f32 %v2979, %v3011
  %v3028 = vadd.f32 %v2980, %v3012
  %v3029 = vadd.f32 %v2981, %v3013
  %v3030 = vadd.f32 %v2982, %v3014
  %v3031 = vadd.f32 %v2983, %v3015
  %v3032 = vadd.f32 %v2984, %v3016
  %v3033 = vadd.f32 %v2985, %v3017
  %v3034 = vadd.f32 %v2986, %v3018
  %v3035 = vadd.f32 %v2987, %v3019
  %v3036 = vadd.f32 %v2988, %v3020
  %v3037 = vadd.f32 %v2989, %v3021
  %v3038 = vadd.f32 %v2990, %v3022
  %v3039 = vmul.f32 %v1263, 0.8333333
  %v3040 = vmul.f32 %v1264, 0.8333333
  %v3041 = vmul.f32 %v1265, 0.8333333
  %v3042 = vmul.f32 %v1266, 0.8333333
  %v3043 = vmul.f32 %v1267, 0.8333333
  %v3044 = vmul.f32 %v1268, 0.8333333
  %v3045 = vmul.f32 %v1269, 0.8333333
  %v3046 = vmul.f32 %v1270, 0.8333333
  %v3047 = vmul.f32 %v1271, 0.8333333
  %v3048 = vmul.f32 %v1272, 0.8333333
  %v3049 = vmul.f32 %v1273, 0.8333333
  %v3050 = vmul.f32 %v1274, 0.8333333
  %v3051 = vmul.f32 %v1275, 0.8333333
  %v3052 = vmul.f32 %v1276, 0.8333333
  %v3053 = vmul.f32 %v1277, 0.8333333
  %v3054 = vmul.f32 %v1278, 0.8333333
  %v3055 = vmul.f32 %v3039, %v2383
  %v3056 = vmul.f32 %v3040, %v2384
  %v3057 = vmul.f32 %v3041, %v2385
  %v3058 = vmul.f32 %v3042, %v2386
  %v3059 = vmul.f32 %v3043, %v2387
  %v3060 = vmul.f32 %v3044, %v2388
  %v3061 = vmul.f32 %v3045, %v2389
  %v3062 = vmul.f32 %v3046, %v2390
  %v3063 = vmul.f32 %v3047, %v2391
  %v3064 = vmul.f32 %v3048, %v2392
  %v3065 = vmul.f32 %v3049, %v2393
  %v3066 = vmul.f32 %v3050, %v2394
  %v3067 = vmul.f32 %v3051, %v2395
  %v3068 = vmul.f32 %v3052, %v2396
  %v3069 = vmul.f32 %v3053, %v2397
  %v3070 = vmul.f32 %v3054, %v2398
  %v3071 = vmul.f32 %v1535, 0.8333333
  %v3072 = vmul.f32 %v1536, 0.8333333
  %v3073 = vmul.f32 %v1537, 0.8333333
  %v3074 = vmul.f32 %v1538, 0.8333333
  %v3075 = vmul.f32 %v1539, 0.8333333
  %v3076 = vmul.f32 %v1540, 0.8333333
  %v3077 = vmul.f32 %v1541, 0.8333333
  %v3078 = vmul.f32 %v1542, 0.8333333
  %v3079 = vmul.f32 %v1543, 0.8333333
  %v3080 = vmul.f32 %v1544, 0.8333333
  %v3081 = vmul.f32 %v1545, 0.8333333
  %v3082 = vmul.f32 %v1546, 0.8333333
  %v3083 = vmul.f32 %v1547, 0.8333333
  %v3084 = vmul.f32 %v1548, 0.8333333
  %v3085 = vmul.f32 %v1549, 0.8333333
  %v3086 = vmul.f32 %v1550, 0.8333333
  %v3087 = vmul.f32 %v3071, %v2463
  %v3088 = vmul.f32 %v3072, %v2464
  %v3089 = vmul.f32 %v3073, %v2465
  %v3090 = vmul.f32 %v3074, %v2466
  %v3091 = vmul.f32 %v3075, %v2467
  %v3092 = vmul.f32 %v3076, %v2468
  %v3093 = vmul.f32 %v3077, %v2469
  %v3094 = vmul.f32 %v3078, %v2470
  %v3095 = vmul.f32 %v3079, %v2471
  %v3096 = vmul.f32 %v3080, %v2472
  %v3097 = vmul.f32 %v3081, %v2473
  %v3098 = vmul.f32 %v3082, %v2474
  %v3099 = vmul.f32 %v3083, %v2475
  %v3100 = vmul.f32 %v3084, %v2476
  %v3101 = vmul.f32 %v3085, %v2477
  %v3102 = vmul.f32 %v3086, %v2478
  %v3103 = vadd.f32 %v3055, %v3087
  %v3104 = vadd.f32 %v3056, %v3088
  %v3105 = vadd.f32 %v3057, %v3089
  %v3106 = vadd.f32 %v3058, %v3090
  %v3107 = vadd.f32 %v3059, %v3091
  %v3108 = vadd.f32 %v3060, %v3092
  %v3109 = vadd.f32 %v3061, %v3093
  %v3110 = vadd.f32 %v3062, %v3094
  %v3111 = vadd.f32 %v3063, %v3095
  %v3112 = vadd.f32 %v3064, %v3096
  %v3113 = vadd.f32 %v3065, %v3097
  %v3114 = vadd.f32 %v3066, %v3098
  %v3115 = vadd.f32 %v3067, %v3099
  %v3116 = vadd.f32 %v3068, %v3100
  %v3117 = vadd.f32 %v3069, %v3101
  %v3118 = vadd.f32 %v3070, %v3102
  %v3119 = vmul.f32 %v1375, 0.8333333
  %v3120 = vmul.f32 %v1376, 0.8333333
  %v3121 = vmul.f32 %v1377, 0.8333333
  %v3122 = vmul.f32 %v1378, 0.8333333
  %v3123 = vmul.f32 %v1379, 0.8333333
  %v3124 = vmul.f32 %v1380, 0.8333333
  %v3125 = vmul.f32 %v1381, 0.8333333
  %v3126 = vmul.f32 %v1382, 0.8333333
  %v3127 = vmul.f32 %v1383, 0.8333333
  %v3128 = vmul.f32 %v1384, 0.8333333
  %v3129 = vmul.f32 %v1385, 0.8333333
  %v3130 = vmul.f32 %v1386, 0.8333333
  %v3131 = vmul.f32 %v1387, 0.8333333
  %v3132 = vmul.f32 %v1388, 0.8333333
  %v3133 = vmul.f32 %v1389, 0.8333333
  %v3134 = vmul.f32 %v1390, 0.8333333
  %v3135 = vmul.f32 %v3119, %v2463
  %v3136 = vmul.f32 %v3120, %v2464
  %v3137 = vmul.f32 %v3121, %v2465
  %v3138 = vmul.f32 %v3122, %v2466
  %v3139 = vmul.f32 %v3123, %v2467
  %v3140 = vmul.f32 %v3124, %v2468
  %v3141 = vmul.f32 %v3125, %v2469
  %v3142 = vmul.f32 %v3126, %v2470
  %v3143 = vmul.f32 %v3127, %v2471
  %v3144 = vmul.f32 %v3128, %v2472
  %v3145 = vmul.f32 %v3129, %v2473
  %v3146 = vmul.f32 %v3130, %v2474
  %v3147 = vmul.f32 %v3131, %v2475
  %v3148 = vmul.f32 %v3132, %v2476
  %v3149 = vmul.f32 %v3133, %v2477
  %v3150 = vmul.f32 %v3134, %v2478
  %v3151 = vmul.f32 %v1647, 0.8333333
  %v3152 = vmul.f32 %v1648, 0.8333333
  %v3153 = vmul.f32 %v1649, 0.8333333
  %v3154 = vmul.f32 %v1650, 0.8333333
  %v3155 = vmul.f32 %v1651, 0.8333333
  %v3156 = vmul.f32 %v1652, 0.8333333
  %v3157 = vmul.f32 %v1653, 0.8333333
  %v3158 = vmul.f32 %v1654, 0.8333333
  %v3159 = vmul.f32 %v1655, 0.8333333
  %v3160 = vmul.f32 %v1656, 0.8333333
  %v3161 = vmul.f32 %v1657, 0.8333333
  %v3162 = vmul.f32 %v1658, 0.8333333
  %v3163 = vmul.f32 %v1659, 0.8333333
  %v3164 = vmul.f32 %v1660, 0.8333333
  %v3165 = vmul.f32 %v1661, 0.8333333
  %v3166 = vmul.f32 %v1662, 0.8333333
  %v3167 = vmul.f32 %v3151, %v2543
  %v3168 = vmul.f32 %v3152, %v2544
  %v3169 = vmul.f32 %v3153, %v2545
  %v3170 = vmul.f32 %v3154, %v2546
  %v3171 = vmul.f32 %v3155, %v2547
  %v3172 = vmul.f32 %v3156, %v2548
  %v3173 = vmul.f32 %v3157, %v2549
  %v3174 = vmul.f32 %v3158, %v2550
  %v3175 = vmul.f32 %v3159, %v2551
  %v3176 = vmul.f32 %v3160, %v2552
  %v3177 = vmul.f32 %v3161, %v2553
  %v3178 = vmul.f32 %v3162, %v2554
  %v3179 = vmul.f32 %v3163, %v2555
  %v3180 = vmul.f32 %v3164, %v2556
  %v3181 = vmul.f32 %v3165, %v2557
  %v3182 = vmul.f32 %v3166, %v2558
  %v3183 = vadd.f32 %v3135, %v3167
  %v3184 = vadd.f32 %v3136, %v3168
  %v3185 = vadd.f32 %v3137, %v3169
  %v3186 = vadd.f32 %v3138, %v3170
  %v3187 = vadd.f32 %v3139, %v3171
  %v3188 = vadd.f32 %v3140, %v3172
  %v3189 = vadd.f32 %v3141, %v3173
  %v3190 = vadd.f32 %v3142, %v3174
  %v3191 = vadd.f32 %v3143, %v3175
  %v3192 = vadd.f32 %v3144, %v3176
  %v3193 = vadd.f32 %v3145, %v3177
  %v3194 = vadd.f32 %v3146, %v3178
  %v3195 = vadd.f32 %v3147, %v3179
  %v3196 = vadd.f32 %v3148, %v3180
  %v3197 = vadd.f32 %v3149, %v3181
  %v3198 = vadd.f32 %v3150, %v3182
  %v3199 = vmul.f32 %v1487, 0.8333333
  %v3200 = vmul.f32 %v1488, 0.8333333
  %v3201 = vmul.f32 %v1489, 0.8333333
  %v3202 = vmul.f32 %v1490, 0.8333333
  %v3203 = vmul.f32 %v1491, 0.8333333
  %v3204 = vmul.f32 %v1492, 0.8333333
  %v3205 = vmul.f32 %v1493, 0.8333333
  %v3206 = vmul.f32 %v1494, 0.8333333
  %v3207 = vmul.f32 %v1495, 0.8333333
  %v3208 = vmul.f32 %v1496, 0.8333333
  %v3209 = vmul.f32 %v1497, 0.8333333
  %v3210 = vmul.f32 %v1498, 0.8333333
  %v3211 = vmul.f32 %v1499, 0.8333333
  %v3212 = vmul.f32 %v1500, 0.8333333
  %v3213 = vmul.f32 %v1501, 0.8333333
  %v3214 = vmul.f32 %v1502, 0.8333333
  %v3215 = vmul.f32 %v3199, %v2543
  %v3216 = vmul.f32 %v3200, %v2544
  %v3217 = vmul.f32 %v3201, %v2545
  %v3218 = vmul.f32 %v3202, %v2546
  %v3219 = vmul.f32 %v3203, %v2547
  %v3220 = vmul.f32 %v3204, %v2548
  %v3221 = vmul.f32 %v3205, %v2549
  %v3222 = vmul.f32 %v3206, %v2550
  %v3223 = vmul.f32 %v3207, %v2551
  %v3224 = vmul.f32 %v3208, %v2552
  %v3225 = vmul.f32 %v3209, %v2553
  %v3226 = vmul.f32 %v3210, %v2554
  %v3227 = vmul.f32 %v3211, %v2555
  %v3228 = vmul.f32 %v3212, %v2556
  %v3229 = vmul.f32 %v3213, %v2557
  %v3230 = vmul.f32 %v3214, %v2558
  %v3231 = vmul.f32 %v1759, 0.8333333
  %v3232 = vmul.f32 %v1760, 0.8333333
  %v3233 = vmul.f32 %v1761, 0.8333333
  %v3234 = vmul.f32 %v1762, 0.8333333
  %v3235 = vmul.f32 %v1763, 0.8333333
  %v3236 = vmul.f32 %v1764, 0.8333333
  %v3237 = vmul.f32 %v1765, 0.8333333
  %v3238 = vmul.f32 %v1766, 0.8333333
  %v3239 = vmul.f32 %v1767, 0.8333333
  %v3240 = vmul.f32 %v1768, 0.8333333
  %v3241 = vmul.f32 %v1769, 0.8333333
  %v3242 = vmul.f32 %v1770, 0.8333333
  %v3243 = vmul.f32 %v1771, 0.8333333
  %v3244 = vmul.f32 %v1772, 0.8333333
  %v3245 = vmul.f32 %v1773, 0.8333333
  %v3246 = vmul.f32 %v1774, 0.8333333
  %v3247 = vmul.f32 %v3231, %v2623
  %v3248 = vmul.f32 %v3232, %v2624
  %v3249 = vmul.f32 %v3233, %v2625
  %v3250 = vmul.f32 %v3234, %v2626
  %v3251 = vmul.f32 %v3235, %v2627
  %v3252 = vmul.f32 %v3236, %v2628
  %v3253 = vmul.f32 %v3237, %v2629
  %v3254 = vmul.f32 %v3238, %v2630
  %v3255 = vmul.f32 %v3239, %v2631
  %v3256 = vmul.f32 %v3240, %v2632
  %v3257 = vmul.f32 %v3241, %v2633
  %v3258 = vmul.f32 %v3242, %v2634
  %v3259 = vmul.f32 %v3243, %v2635
  %v3260 = vmul.f32 %v3244, %v2636
  %v3261 = vmul.f32 %v3245, %v2637
  %v3262 = vmul.f32 %v3246, %v2638
  %v3263 = vadd.f32 %v3215, %v3247
  %v3264 = vadd.f32 %v3216, %v3248
  %v3265 = vadd.f32 %v3217, %v3249
  %v3266 = vadd.f32 %v3218, %v3250
  %v3267 = vadd.f32 %v3219, %v3251
  %v3268 = vadd.f32 %v3220, %v3252
  %v3269 = vadd.f32 %v3221, %v3253
  %v3270 = vadd.f32 %v3222, %v3254
  %v3271 = vadd.f32 %v3223, %v3255
  %v3272 = vadd.f32 %v3224, %v3256
  %v3273 = vadd.f32 %v3225, %v3257
  %v3274 = vadd.f32 %v3226, %v3258
  %v3275 = vadd.f32 %v3227, %v3259
  %v3276 = vadd.f32 %v3228, %v3260
  %v3277 = vadd.f32 %v3229, %v3261
  %v3278 = vadd.f32 %v3230, %v3262
  %v3279 = vmul.f32 %v1599, 0.8333333
  %v3280 = vmul.f32 %v1600, 0.8333333
  %v3281 = vmul.f32 %v1601, 0.8333333
  %v3282 = vmul.f32 %v1602, 0.8333333
  %v3283 = vmul.f32 %v1603, 0.8333333
  %v3284 = vmul.f32 %v1604, 0.8333333
  %v3285 = vmul.f32 %v1605, 0.8333333
  %v3286 = vmul.f32 %v1606, 0.8333333
  %v3287 = vmul.f32 %v1607, 0.8333333
  %v3288 = vmul.f32 %v1608, 0.8333333
  %v3289 = vmul.f32 %v1609, 0.8333333
  %v3290 = vmul.f32 %v1610, 0.8333333
  %v3291 = vmul.f32 %v1611, 0.8333333
  %v3292 = vmul.f32 %v1612, 0.8333333
  %v3293 = vmul.f32 %v1613, 0.8333333
  %v3294 = vmul.f32 %v1614, 0.8333333
  %v3295 = vmul.f32 %v3279, %v2623
  %v3296 = vmul.f32 %v3280, %v2624
  %v3297 = vmul.f32 %v3281, %v2625
  %v3298 = vmul.f32 %v3282, %v2626
  %v3299 = vmul.f32 %v3283, %v2627
  %v3300 = vmul.f32 %v3284, %v2628
  %v3301 = vmul.f32 %v3285, %v2629
  %v3302 = vmul.f32 %v3286, %v2630
  %v3303 = vmul.f32 %v3287, %v2631
  %v3304 = vmul.f32 %v3288, %v2632
  %v3305 = vmul.f32 %v3289, %v2633
  %v3306 = vmul.f32 %v3290, %v2634
  %v3307 = vmul.f32 %v3291, %v2635
  %v3308 = vmul.f32 %v3292, %v2636
  %v3309 = vmul.f32 %v3293, %v2637
  %v3310 = vmul.f32 %v3294, %v2638
  %v3311 = vmul.f32 %v1871, 0.8333333
  %v3312 = vmul.f32 %v1872, 0.8333333
  %v3313 = vmul.f32 %v1873, 0.8333333
  %v3314 = vmul.f32 %v1874, 0.8333333
  %v3315 = vmul.f32 %v1875, 0.8333333
  %v3316 = vmul.f32 %v1876, 0.8333333
  %v3317 = vmul.f32 %v1877, 0.8333333
  %v3318 = vmul.f32 %v1878, 0.8333333
  %v3319 = vmul.f32 %v1879, 0.8333333
  %v3320 = vmul.f32 %v1880, 0.8333333
  %v3321 = vmul.f32 %v1881, 0.8333333
  %v3322 = vmul.f32 %v1882, 0.8333333
  %v3323 = vmul.f32 %v1883, 0.8333333
  %v3324 = vmul.f32 %v1884, 0.8333333
  %v3325 = vmul.f32 %v1885, 0.8333333
  %v3326 = vmul.f32 %v1886, 0.8333333
  %v3327 = vmul.f32 %v3311, %v2703
  %v3328 = vmul.f32 %v3312, %v2704
  %v3329 = vmul.f32 %v3313, %v2705
  %v3330 = vmul.f32 %v3314, %v2706
  %v3331 = vmul.f32 %v3315, %v2707
  %v3332 = vmul.f32 %v3316, %v2708
  %v3333 = vmul.f32 %v3317, %v2709
  %v3334 = vmul.f32 %v3318, %v2710
  %v3335 = vmul.f32 %v3319, %v2711
  %v3336 = vmul.f32 %v3320, %v2712
  %v3337 = vmul.f32 %v3321, %v2713
  %v3338 = vmul.f32 %v3322, %v2714
  %v3339 = vmul.f32 %v3323, %v2715
  %v3340 = vmul.f32 %v3324, %v2716
  %v3341 = vmul.f32 %v3325, %v2717
  %v3342 = vmul.f32 %v3326, %v2718
  %v3343 = vadd.f32 %v3295, %v3327
  %v3344 = vadd.f32 %v3296, %v3328
  %v3345 = vadd.f32 %v3297, %v3329
  %v3346 = vadd.f32 %v3298, %v3330
  %v3347 = vadd.f32 %v3299, %v3331
  %v3348 = vadd.f32 %v3300, %v3332
  %v3349 = vadd.f32 %v3301, %v3333
  %v3350 = vadd.f32 %v3302, %v3334
  %v3351 = vadd.f32 %v3303, %v3335
  %v3352 = vadd.f32 %v3304, %v3336
  %v3353 = vadd.f32 %v3305, %v3337
  %v3354 = vadd.f32 %v3306, %v3338
  %v3355 = vadd.f32 %v3307, %v3339
  %v3356 = vadd.f32 %v3308, %v3340
  %v3357 = vadd.f32 %v3309, %v3341
  %v3358 = vadd.f32 %v3310, %v3342
  %v3359 = vmul.f32 %v1711, 0.8333333
  %v3360 = vmul.f32 %v1712, 0.8333333
  %v3361 = vmul.f32 %v1713, 0.8333333
  %v3362 = vmul.f32 %v1714, 0.8333333
  %v3363 = vmul.f32 %v1715, 0.8333333
  %v3364 = vmul.f32 %v1716, 0.8333333
  %v3365 = vmul.f32 %v1717, 0.8333333
  %v3366 = vmul.f32 %v1718, 0.8333333
  %v3367 = vmul.f32 %v1719, 0.8333333
  %v3368 = vmul.f32 %v1720, 0.8333333
  %v3369 = vmul.f32 %v1721, 0.8333333
  %v3370 = vmul.f32 %v1722, 0.8333333
  %v3371 = vmul.f32 %v1723, 0.8333333
  %v3372 = vmul.f32 %v1724, 0.8333333
  %v3373 = vmul.f32 %v1725, 0.8333333
  %v3374 = vmul.f32 %v1726, 0.8333333
  %v3375 = vmul.f32 %v3359, %v2703
  %v3376 = vmul.f32 %v3360, %v2704
  %v3377 = vmul.f32 %v3361, %v2705
  %v3378 = vmul.f32 %v3362, %v2706
  %v3379 = vmul.f32 %v3363, %v2707
  %v3380 = vmul.f32 %v3364, %v2708
  %v3381 = vmul.f32 %v3365, %v2709
  %v3382 = vmul.f32 %v3366, %v2710
  %v3383 = vmul.f32 %v3367, %v2711
  %v3384 = vmul.f32 %v3368, %v2712
  %v3385 = vmul.f32 %v3369, %v2713
  %v3386 = vmul.f32 %v3370, %v2714
  %v3387 = vmul.f32 %v3371, %v2715
  %v3388 = vmul.f32 %v3372, %v2716
  %v3389 = vmul.f32 %v3373, %v2717
  %v3390 = vmul.f32 %v3374, %v2718
  %v3391 = vmul.f32 %v1983, 0.8333333
  %v3392 = vmul.f32 %v1984, 0.8333333
  %v3393 = vmul.f32 %v1985, 0.8333333
  %v3394 = vmul.f32 %v1986, 0.8333333
  %v3395 = vmul.f32 %v1987, 0.8333333
  %v3396 = vmul.f32 %v1988, 0.8333333
  %v3397 = vmul.f32 %v1989, 0.8333333
  %v3398 = vmul.f32 %v1990, 0.8333333
  %v3399 = vmul.f32 %v1991, 0.8333333
  %v3400 = vmul.f32 %v1992, 0.8333333
  %v3401 = vmul.f32 %v1993, 0.8333333
  %v3402 = vmul.f32 %v1994, 0.8333333
  %v3403 = vmul.f32 %v1995, 0.8333333
  %v3404 = vmul.f32 %v1996, 0.8333333
  %v3405 = vmul.f32 %v1997, 0.8333333
  %v3406 = vmul.f32 %v1998, 0.8333333
  %v3407 = vmul.f32 %v3391, %v2783
  %v3408 = vmul.f32 %v3392, %v2784
  %v3409 = vmul.f32 %v3393, %v2785
  %v3410 = vmul.f32 %v3394, %v2786
  %v3411 = vmul.f32 %v3395, %v2787
  %v3412 = vmul.f32 %v3396, %v2788
  %v3413 = vmul.f32 %v3397, %v2789
  %v3414 = vmul.f32 %v3398, %v2790
  %v3415 = vmul.f32 %v3399, %v2791
  %v3416 = vmul.f32 %v3400, %v2792
  %v3417 = vmul.f32 %v3401, %v2793
  %v3418 = vmul.f32 %v3402, %v2794
  %v3419 = vmul.f32 %v3403, %v2795
  %v3420 = vmul.f32 %v3404, %v2796
  %v3421 = vmul.f32 %v3405, %v2797
  %v3422 = vmul.f32 %v3406, %v2798
  %v3423 = vadd.f32 %v3375, %v3407
  %v3424 = vadd.f32 %v3376, %v3408
  %v3425 = vadd.f32 %v3377, %v3409
  %v3426 = vadd.f32 %v3378, %v3410
  %v3427 = vadd.f32 %v3379, %v3411
  %v3428 = vadd.f32 %v3380, %v3412
  %v3429 = vadd.f32 %v3381, %v3413
  %v3430 = vadd.f32 %v3382, %v3414
  %v3431 = vadd.f32 %v3383, %v3415
  %v3432 = vadd.f32 %v3384, %v3416
  %v3433 = vadd.f32 %v3385, %v3417
  %v3434 = vadd.f32 %v3386, %v3418
  %v3435 = vadd.f32 %v3387, %v3419
  %v3436 = vadd.f32 %v3388, %v3420
  %v3437 = vadd.f32 %v3389, %v3421
  %v3438 = vadd.f32 %v3390, %v3422
  %v3439 = vmul.f32 %v1823, 0.8333333
  %v3440 = vmul.f32 %v1824, 0.8333333
  %v3441 = vmul.f32 %v1825, 0.8333333
  %v3442 = vmul.f32 %v1826, 0.8333333
  %v3443 = vmul.f32 %v1827, 0.8333333
  %v3444 = vmul.f32 %v1828, 0.8333333
  %v3445 = vmul.f32 %v1829, 0.8333333
  %v3446 = vmul.f32 %v1830, 0.8333333
  %v3447 = vmul.f32 %v1831, 0.8333333
  %v3448 = vmul.f32 %v1832, 0.8333333
  %v3449 = vmul.f32 %v1833, 0.8333333
  %v3450 = vmul.f32 %v1834, 0.8333333
  %v3451 = vmul.f32 %v1835, 0.8333333
  %v3452 = vmul.f32 %v1836, 0.8333333
  %v3453 = vmul.f32 %v1837, 0.8333333
  %v3454 = vmul.f32 %v1838, 0.8333333
  %v3455 = vmul.f32 %v3439, %v2783
  %v3456 = vmul.f32 %v3440, %v2784
  %v3457 = vmul.f32 %v3441, %v2785
  %v3458 = vmul.f32 %v3442, %v2786
  %v3459 = vmul.f32 %v3443, %v2787
  %v3460 = vmul.f32 %v3444, %v2788
  %v3461 = vmul.f32 %v3445, %v2789
  %v3462 = vmul.f32 %v3446, %v2790
  %v3463 = vmul.f32 %v3447, %v2791
  %v3464 = vmul.f32 %v3448, %v2792
  %v3465 = vmul.f32 %v3449, %v2793
  %v3466 = vmul.f32 %v3450, %v2794
  %v3467 = vmul.f32 %v3451, %v2795
  %v3468 = vmul.f32 %v3452, %v2796
  %v3469 = vmul.f32 %v3453, %v2797
  %v3470 = vmul.f32 %v3454, %v2798
  %v3471 = vmul.f32 %v2095, 0.8333333
  %v3472 = vmul.f32 %v2096, 0.8333333
  %v3473 = vmul.f32 %v2097, 0.8333333
  %v3474 = vmul.f32 %v2098, 0.8333333
  %v3475 = vmul.f32 %v2099, 0.8333333
  %v3476 = vmul.f32 %v2100, 0.8333333
  %v3477 = vmul.f32 %v2101, 0.8333333
  %v3478 = vmul.f32 %v2102, 0.8333333
  %v3479 = vmul.f32 %v2103, 0.8333333
  %v3480 = vmul.f32 %v2104, 0.8333333
  %v3481 = vmul.f32 %v2105, 0.8333333
  %v3482 = vmul.f32 %v2106, 0.8333333
  %v3483 = vmul.f32 %v2107, 0.8333333
  %v3484 = vmul.f32 %v2108, 0.8333333
  %v3485 = vmul.f32 %v2109, 0.8333333
  %v3486 = vmul.f32 %v2110, 0.8333333
  %v3487 = vmul.f32 %v3471, %v2863
  %v3488 = vmul.f32 %v3472, %v2864
  %v3489 = vmul.f32 %v3473, %v2865
  %v3490 = vmul.f32 %v3474, %v2866
  %v3491 = vmul.f32 %v3475, %v2867
  %v3492 = vmul.f32 %v3476, %v2868
  %v3493 = vmul.f32 %v3477, %v2869
  %v3494 = vmul.f32 %v3478, %v2870
  %v3495 = vmul.f32 %v3479, %v2871
  %v3496 = vmul.f32 %v3480, %v2872
  %v3497 = vmul.f32 %v3481, %v2873
  %v3498 = vmul.f32 %v3482, %v2874
  %v3499 = vmul.f32 %v3483, %v2875
  %v3500 = vmul.f32 %v3484, %v2876
  %v3501 = vmul.f32 %v3485, %v2877
  %v3502 = vmul.f32 %v3486, %v2878
  %v3503 = vadd.f32 %v3455, %v3487
  %v3504 = vadd.f32 %v3456, %v3488
  %v3505 = vadd.f32 %v3457, %v3489
  %v3506 = vadd.f32 %v3458, %v3490
  %v3507 = vadd.f32 %v3459, %v3491
  %v3508 = vadd.f32 %v3460, %v3492
  %v3509 = vadd.f32 %v3461, %v3493
  %v3510 = vadd.f32 %v3462, %v3494
  %v3511 = vadd.f32 %v3463, %v3495
  %v3512 = vadd.f32 %v3464, %v3496
  %v3513 = vadd.f32 %v3465, %v3497
  %v3514 = vadd.f32 %v3466, %v3498
  %v3515 = vadd.f32 %v3467, %v3499
  %v3516 = vadd.f32 %v3468, %v3500
  %v3517 = vadd.f32 %v3469, %v3501
  %v3518 = vadd.f32 %v3470, %v3502
  %v3519 = vpack.c.bf16 %v2944, %v2943
  %v3520 = vpack.c.bf16 %v2946, %v2945
  %v3521 = vpack.c.bf16 %v2948, %v2947
  %v3522 = vpack.c.bf16 %v2950, %v2949
  %v3523 = vpack.c.bf16 %v2952, %v2951
  %v3524 = vpack.c.bf16 %v2954, %v2953
  %v3525 = vpack.c.bf16 %v2956, %v2955
  %v3526 = vpack.c.bf16 %v2958, %v2957
  %v3527 = vld [vmem:[%s2] sm:$0xf]
  %v3528 = vld [vmem:[%s2 + $0x4] sm:$0xf]
  %v3529 = vld [vmem:[%s2 + $0x8] sm:$0xf]
  %v3530 = vld [vmem:[%s2 + $0xc] sm:$0xf]
  %v3535 = vunpack.c.l.b16 %v3527
  %v3536 = vunpack.c.l.b16 %v3528
  %v3537 = vunpack.c.l.b16 %v3529
  %v3538 = vunpack.c.l.b16 %v3530
  %v3539 = vpack.c.b16 %v3536, %v3535
  %v3540 = vpack.c.b16 %v3538, %v3537
  %vm3543 = vcmask 261120
  %v3545 = vsel %vm3543, %v3519, 0
  %v3548 = vsel %vm3543, %v3520, 0
  %v3551 = vsel %vm3543, %v3521, 0
  %v3554 = vsel %vm3543, %v3522, 0
  %v3557 = vsel %vm3543, %v3523, 0
  %v3560 = vsel %vm3543, %v3524, 0
  %v3563 = vsel %vm3543, %v3525, 0
  %v3566 = vsel %vm3543, %v3526, 0
  %3568 = vmatprep.subr.bf16.mxu0 0
  %3569 = vmatpush1.bf16.msra.mxu0 %v3539
  %3570 = vmatprep.subr.bf16.mxu0 0
  %3571 = vmatpush1.bf16.msra.mxu0 %v3540
  %3572 = vmatprep.subr.bf16.mxu0 0
  %3573 = vmatpush1.bf16.msra.mxu0 0
  %3574 = vmatprep.subr.bf16.mxu0 0
  %3575 = vmatpush1.bf16.msra.mxu0 0
  %3576 = vmatprep.subr.bf16.mxu0 0
  %3577 = vmatpush1.bf16.msra.mxu0 0
  %3578 = vmatprep.subr.bf16.mxu0 0
  %3579 = vmatpush1.bf16.msra.mxu0 0
  %3580 = vmatprep.subr.bf16.mxu0 0
  %3581 = vmatpush1.bf16.msra.mxu0 0
  %3582 = vmatprep.subr.bf16.mxu0 0
  %3583 = vmatpush1.bf16.msra.mxu0 0
  %3584 = vmatprep.subr.bf16.mxu0 0
  %3585 = vmatpush1.bf16.msra.mxu0 0
  %3586 = vmatprep.subr.bf16.mxu0 0
  %3587 = vmatpush1.bf16.msra.mxu0 0
  %3588 = vmatprep.subr.bf16.mxu0 0
  %3589 = vmatpush1.bf16.msra.mxu0 0
  %3590 = vmatprep.subr.bf16.mxu0 0
  %3591 = vmatpush1.bf16.msra.mxu0 0
  %3592 = vmatprep.subr.bf16.mxu0 0
  %3593 = vmatpush1.bf16.msra.mxu0 0
  %3594 = vmatprep.subr.bf16.mxu0 0
  %3595 = vmatpush1.bf16.msra.mxu0 0
  %3596 = vmatprep.subr.bf16.mxu0 0
  %3597 = vmatpush1.bf16.msra.mxu0 0
  %3598 = vmatprep.subr.bf16.mxu0 0
  %3599 = vmatpush1.bf16.msra.mxu0 0
  %3600 = vmatprep.mubr.bf16.mxu0 0
  %3601 = vmatmul.mubr.bf16.gmra.mrb[0].mxu0 %v3545
  %v3602 = vpop.f32.mrb[0].mxu0
  %v3603 = vadd.f32 0.0, %v3602
  %v3604 = vpop.f32.mrb[0].mxu0
  %v3605 = vpop.f32.mrb[0].mxu0
  %v3606 = vadd.f32 0.0, %v3605
  %v3607 = vpop.f32.mrb[0].mxu0
  %3608 = vmatprep.mubr.bf16.mxu0 0
  %3609 = vmatmul.mubr.bf16.gmra.mrb[0].mxu0 %v3548
  %v3610 = vpop.f32.mrb[0].mxu0
  %v3611 = vadd.f32 0.0, %v3610
  %v3612 = vpop.f32.mrb[0].mxu0
  %v3613 = vpop.f32.mrb[0].mxu0
  %v3614 = vadd.f32 0.0, %v3613
  %v3615 = vpop.f32.mrb[0].mxu0
  %3616 = vmatprep.mubr.bf16.mxu0 0
  %3617 = vmatmul.mubr.bf16.gmra.mrb[0].mxu0 %v3551
  %v3618 = vpop.f32.mrb[0].mxu0
  %v3619 = vadd.f32 0.0, %v3618
  %v3620 = vpop.f32.mrb[0].mxu0
  %v3621 = vpop.f32.mrb[0].mxu0
  %v3622 = vadd.f32 0.0, %v3621
  %v3623 = vpop.f32.mrb[0].mxu0
  %3624 = vmatprep.mubr.bf16.mxu0 0
  %3625 = vmatmul.mubr.bf16.gmra.mrb[0].mxu0 %v3554
  %v3626 = vpop.f32.mrb[0].mxu0
  %v3627 = vadd.f32 0.0, %v3626
  %v3628 = vpop.f32.mrb[0].mxu0
  %v3629 = vpop.f32.mrb[0].mxu0
  %v3630 = vadd.f32 0.0, %v3629
  %v3631 = vpop.f32.mrb[0].mxu0
  %3632 = vmatprep.mubr.bf16.mxu0 0
  %3633 = vmatmul.mubr.bf16.gmra.mrb[0].mxu0 %v3557
  %v3634 = vpop.f32.mrb[0].mxu0
  %v3635 = vadd.f32 0.0, %v3634
  %v3636 = vpop.f32.mrb[0].mxu0
  %v3637 = vpop.f32.mrb[0].mxu0
  %v3638 = vadd.f32 0.0, %v3637
  %v3639 = vpop.f32.mrb[0].mxu0
  %3640 = vmatprep.mubr.bf16.mxu0 0
  %3641 = vmatmul.mubr.bf16.gmra.mrb[0].mxu0 %v3560
  %v3642 = vpop.f32.mrb[0].mxu0
  %v3643 = vadd.f32 0.0, %v3642
  %v3644 = vpop.f32.mrb[0].mxu0
  %v3645 = vpop.f32.mrb[0].mxu0
  %v3646 = vadd.f32 0.0, %v3645
  %v3647 = vpop.f32.mrb[0].mxu0
  %3648 = vmatprep.mubr.bf16.mxu0 0
  %3649 = vmatmul.mubr.bf16.gmra.mrb[0].mxu0 %v3563
  %v3650 = vpop.f32.mrb[0].mxu0
  %v3651 = vadd.f32 0.0, %v3650
  %v3652 = vpop.f32.mrb[0].mxu0
  %v3653 = vpop.f32.mrb[0].mxu0
  %v3654 = vadd.f32 0.0, %v3653
  %v3655 = vpop.f32.mrb[0].mxu0
  %3656 = vmatprep.mubr.bf16.mxu0 0
  %3657 = vmatmul.mubr.bf16.gmra.mrb[0].mxu0 %v3566
  %v3658 = vpop.f32.mrb[0].mxu0
  %v3659 = vadd.f32 0.0, %v3658
  %v3660 = vpop.f32.mrb[0].mxu0
  %v3661 = vpop.f32.mrb[0].mxu0
  %v3662 = vadd.f32 0.0, %v3661
  %v3663 = vpop.f32.mrb[0].mxu0
  %3664 = vdwg.mxu0
  %v3669 = vunpack.c.l.b16 %v155
  %v3670 = vunpack.c.l.b16 %v156
  %v3671 = vunpack.c.l.b16 %v157
  %v3672 = vunpack.c.l.b16 %v158
  %v3673 = vpack.c.b16 %v3670, %v3669
  %v3674 = vpack.c.b16 %v3672, %v3671
  %v3678 = vsel %vm3543, %v147, 0
  %v3681 = vsel %vm3543, %v148, 0
  %v3684 = vsel %vm3543, %v149, 0
  %v3687 = vsel %vm3543, %v150, 0
  %v3690 = vsel %vm3543, %v151, 0
  %v3693 = vsel %vm3543, %v152, 0
  %v3696 = vsel %vm3543, %v153, 0
  %v3699 = vsel %vm3543, %v154, 0
  %3701 = vmatprep.subr.bf16.mxu0 0
  %3702 = vmatpush1.bf16.msra.mxu0 %v3673
  %3703 = vmatprep.subr.bf16.mxu0 0
  %3704 = vmatpush1.bf16.msra.mxu0 %v3674
  %3705 = vmatprep.subr.bf16.mxu0 0
  %3706 = vmatpush1.bf16.msra.mxu0 0
  %3707 = vmatprep.subr.bf16.mxu0 0
  %3708 = vmatpush1.bf16.msra.mxu0 0
  %3709 = vmatprep.subr.bf16.mxu0 0
  %3710 = vmatpush1.bf16.msra.mxu0 0
  %3711 = vmatprep.subr.bf16.mxu0 0
  %3712 = vmatpush1.bf16.msra.mxu0 0
  %3713 = vmatprep.subr.bf16.mxu0 0
  %3714 = vmatpush1.bf16.msra.mxu0 0
  %3715 = vmatprep.subr.bf16.mxu0 0
  %3716 = vmatpush1.bf16.msra.mxu0 0
  %3717 = vmatprep.subr.bf16.mxu0 0
  %3718 = vmatpush1.bf16.msra.mxu0 0
  %3719 = vmatprep.subr.bf16.mxu0 0
  %3720 = vmatpush1.bf16.msra.mxu0 0
  %3721 = vmatprep.subr.bf16.mxu0 0
  %3722 = vmatpush1.bf16.msra.mxu0 0
  %3723 = vmatprep.subr.bf16.mxu0 0
  %3724 = vmatpush1.bf16.msra.mxu0 0
  %3725 = vmatprep.subr.bf16.mxu0 0
  %3726 = vmatpush1.bf16.msra.mxu0 0
  %3727 = vmatprep.subr.bf16.mxu0 0
  %3728 = vmatpush1.bf16.msra.mxu0 0
  %3729 = vmatprep.subr.bf16.mxu0 0
  %3730 = vmatpush1.bf16.msra.mxu0 0
  %3731 = vmatprep.subr.bf16.mxu0 0
  %3732 = vmatpush1.bf16.msra.mxu0 0
  %3733 = vmatprep.mubr.bf16.mxu0 0
  %3734 = vmatmul.mubr.bf16.gmra.mrb[0].mxu0 %v3678
  %v3735 = vpop.f32.mrb[0].mxu0
  %v3736 = vadd.f32 %v3603, %v3735
  %v3737 = vpop.f32.mrb[0].mxu0
  %v3738 = vpop.f32.mrb[0].mxu0
  %v3739 = vadd.f32 %v3606, %v3738
  %v3740 = vpop.f32.mrb[0].mxu0
  %3741 = vmatprep.mubr.bf16.mxu0 0
  %3742 = vmatmul.mubr.bf16.gmra.mrb[0].mxu0 %v3681
  %v3743 = vpop.f32.mrb[0].mxu0
  %v3744 = vadd.f32 %v3611, %v3743
  %v3745 = vpop.f32.mrb[0].mxu0
  %v3746 = vpop.f32.mrb[0].mxu0
  %v3747 = vadd.f32 %v3614, %v3746
  %v3748 = vpop.f32.mrb[0].mxu0
  %3749 = vmatprep.mubr.bf16.mxu0 0
  %3750 = vmatmul.mubr.bf16.gmra.mrb[0].mxu0 %v3684
  %v3751 = vpop.f32.mrb[0].mxu0
  %v3752 = vadd.f32 %v3619, %v3751
  %v3753 = vpop.f32.mrb[0].mxu0
  %v3754 = vpop.f32.mrb[0].mxu0
  %v3755 = vadd.f32 %v3622, %v3754
  %v3756 = vpop.f32.mrb[0].mxu0
  %3757 = vmatprep.mubr.bf16.mxu0 0
  %3758 = vmatmul.mubr.bf16.gmra.mrb[0].mxu0 %v3687
  %v3759 = vpop.f32.mrb[0].mxu0
  %v3760 = vadd.f32 %v3627, %v3759
  %v3761 = vpop.f32.mrb[0].mxu0
  %v3762 = vpop.f32.mrb[0].mxu0
  %v3763 = vadd.f32 %v3630, %v3762
  %v3764 = vpop.f32.mrb[0].mxu0
  %3765 = vmatprep.mubr.bf16.mxu0 0
  %3766 = vmatmul.mubr.bf16.gmra.mrb[0].mxu0 %v3690
  %v3767 = vpop.f32.mrb[0].mxu0
  %v3768 = vadd.f32 %v3635, %v3767
  %v3769 = vpop.f32.mrb[0].mxu0
  %v3770 = vpop.f32.mrb[0].mxu0
  %v3771 = vadd.f32 %v3638, %v3770
  %v3772 = vpop.f32.mrb[0].mxu0
  %3773 = vmatprep.mubr.bf16.mxu0 0
  %3774 = vmatmul.mubr.bf16.gmra.mrb[0].mxu0 %v3693
  %v3775 = vpop.f32.mrb[0].mxu0
  %v3776 = vadd.f32 %v3643, %v3775
  %v3777 = vpop.f32.mrb[0].mxu0
  %v3778 = vpop.f32.mrb[0].mxu0
  %v3779 = vadd.f32 %v3646, %v3778
  %v3780 = vpop.f32.mrb[0].mxu0
  %3781 = vmatprep.mubr.bf16.mxu0 0
  %3782 = vmatmul.mubr.bf16.gmra.mrb[0].mxu0 %v3696
  %v3783 = vpop.f32.mrb[0].mxu0
  %v3784 = vadd.f32 %v3651, %v3783
  %v3785 = vpop.f32.mrb[0].mxu0
  %v3786 = vpop.f32.mrb[0].mxu0
  %v3787 = vadd.f32 %v3654, %v3786
  %v3788 = vpop.f32.mrb[0].mxu0
  %3789 = vmatprep.mubr.bf16.mxu0 0
  %3790 = vmatmul.mubr.bf16.gmra.mrb[0].mxu0 %v3699
  %v3791 = vpop.f32.mrb[0].mxu0
  %v3792 = vadd.f32 %v3659, %v3791
  %v3793 = vpop.f32.mrb[0].mxu0
  %v3794 = vpop.f32.mrb[0].mxu0
  %v3795 = vadd.f32 %v3662, %v3794
  %v3796 = vpop.f32.mrb[0].mxu0
  %3797 = vdwg.mxu0
  %v3798 = vpack.c.bf16 %v3024, %v3023
  %v3799 = vpack.c.bf16 %v3026, %v3025
  %v3800 = vpack.c.bf16 %v3028, %v3027
  %v3801 = vpack.c.bf16 %v3030, %v3029
  %v3802 = vpack.c.bf16 %v3032, %v3031
  %v3803 = vpack.c.bf16 %v3034, %v3033
  %v3804 = vpack.c.bf16 %v3036, %v3035
  %v3805 = vpack.c.bf16 %v3038, %v3037
  %s3806 = scalar_lea.vmem %s2, 16
  %v3807 = vld [vmem:[%s3806] sm:$0xf]
  %v3808 = vld [vmem:[%s3806 + $0x4] sm:$0xf]
  %v3809 = vld [vmem:[%s3806 + $0x8] sm:$0xf]
  %v3810 = vld [vmem:[%s3806 + $0xc] sm:$0xf]
  %v3815 = vunpack.c.l.b16 %v3807
  %v3816 = vunpack.c.l.b16 %v3808
  %v3817 = vunpack.c.l.b16 %v3809
  %v3818 = vunpack.c.l.b16 %v3810
  %v3819 = vpack.c.b16 %v3816, %v3815
  %v3820 = vpack.c.b16 %v3818, %v3817
  %v3824 = vsel %vm3543, %v3798, 0
  %v3827 = vsel %vm3543, %v3799, 0
  %v3830 = vsel %vm3543, %v3800, 0
  %v3833 = vsel %vm3543, %v3801, 0
  %v3836 = vsel %vm3543, %v3802, 0
  %v3839 = vsel %vm3543, %v3803, 0
  %v3842 = vsel %vm3543, %v3804, 0
  %v3845 = vsel %vm3543, %v3805, 0
  %3847 = vmatprep.subr.bf16.mxu0 0
  %3848 = vmatpush1.bf16.msra.mxu0 %v3819
  %3849 = vmatprep.subr.bf16.mxu0 0
  %3850 = vmatpush1.bf16.msra.mxu0 %v3820
  %3851 = vmatprep.subr.bf16.mxu0 0
  %3852 = vmatpush1.bf16.msra.mxu0 0
  %3853 = vmatprep.subr.bf16.mxu0 0
  %3854 = vmatpush1.bf16.msra.mxu0 0
  %3855 = vmatprep.subr.bf16.mxu0 0
  %3856 = vmatpush1.bf16.msra.mxu0 0
  %3857 = vmatprep.subr.bf16.mxu0 0
  %3858 = vmatpush1.bf16.msra.mxu0 0
  %3859 = vmatprep.subr.bf16.mxu0 0
  %3860 = vmatpush1.bf16.msra.mxu0 0
  %3861 = vmatprep.subr.bf16.mxu0 0
  %3862 = vmatpush1.bf16.msra.mxu0 0
  %3863 = vmatprep.subr.bf16.mxu0 0
  %3864 = vmatpush1.bf16.msra.mxu0 0
  %3865 = vmatprep.subr.bf16.mxu0 0
  %3866 = vmatpush1.bf16.msra.mxu0 0
  %3867 = vmatprep.subr.bf16.mxu0 0
  %3868 = vmatpush1.bf16.msra.mxu0 0
  %3869 = vmatprep.subr.bf16.mxu0 0
  %3870 = vmatpush1.bf16.msra.mxu0 0
  %3871 = vmatprep.subr.bf16.mxu0 0
  %3872 = vmatpush1.bf16.msra.mxu0 0
  %3873 = vmatprep.subr.bf16.mxu0 0
  %3874 = vmatpush1.bf16.msra.mxu0 0
  %3875 = vmatprep.subr.bf16.mxu0 0
  %3876 = vmatpush1.bf16.msra.mxu0 0
  %3877 = vmatprep.subr.bf16.mxu0 0
  %3878 = vmatpush1.bf16.msra.mxu0 0
  %3879 = vmatprep.mubr.bf16.mxu0 0
  %3880 = vmatmul.mubr.bf16.gmra.mrb[0].mxu0 %v3824
  %v3881 = vpop.f32.mrb[0].mxu0
  %v3882 = vadd.f32 0.0, %v3881
  %v3883 = vpop.f32.mrb[0].mxu0
  %v3884 = vpop.f32.mrb[0].mxu0
  %v3885 = vadd.f32 0.0, %v3884
  %v3886 = vpop.f32.mrb[0].mxu0
  %3887 = vmatprep.mubr.bf16.mxu0 0
  %3888 = vmatmul.mubr.bf16.gmra.mrb[0].mxu0 %v3827
  %v3889 = vpop.f32.mrb[0].mxu0
  %v3890 = vadd.f32 0.0, %v3889
  %v3891 = vpop.f32.mrb[0].mxu0
  %v3892 = vpop.f32.mrb[0].mxu0
  %v3893 = vadd.f32 0.0, %v3892
  %v3894 = vpop.f32.mrb[0].mxu0
  %3895 = vmatprep.mubr.bf16.mxu0 0
  %3896 = vmatmul.mubr.bf16.gmra.mrb[0].mxu0 %v3830
  %v3897 = vpop.f32.mrb[0].mxu0
  %v3898 = vadd.f32 0.0, %v3897
  %v3899 = vpop.f32.mrb[0].mxu0
  %v3900 = vpop.f32.mrb[0].mxu0
  %v3901 = vadd.f32 0.0, %v3900
  %v3902 = vpop.f32.mrb[0].mxu0
  %3903 = vmatprep.mubr.bf16.mxu0 0
  %3904 = vmatmul.mubr.bf16.gmra.mrb[0].mxu0 %v3833
  %v3905 = vpop.f32.mrb[0].mxu0
  %v3906 = vadd.f32 0.0, %v3905
  %v3907 = vpop.f32.mrb[0].mxu0
  %v3908 = vpop.f32.mrb[0].mxu0
  %v3909 = vadd.f32 0.0, %v3908
  %v3910 = vpop.f32.mrb[0].mxu0
  %3911 = vmatprep.mubr.bf16.mxu0 0
  %3912 = vmatmul.mubr.bf16.gmra.mrb[0].mxu0 %v3836
  %v3913 = vpop.f32.mrb[0].mxu0
  %v3914 = vadd.f32 0.0, %v3913
  %v3915 = vpop.f32.mrb[0].mxu0
  %v3916 = vpop.f32.mrb[0].mxu0
  %v3917 = vadd.f32 0.0, %v3916
  %v3918 = vpop.f32.mrb[0].mxu0
  %3919 = vmatprep.mubr.bf16.mxu0 0
  %3920 = vmatmul.mubr.bf16.gmra.mrb[0].mxu0 %v3839
  %v3921 = vpop.f32.mrb[0].mxu0
  %v3922 = vadd.f32 0.0, %v3921
  %v3923 = vpop.f32.mrb[0].mxu0
  %v3924 = vpop.f32.mrb[0].mxu0
  %v3925 = vadd.f32 0.0, %v3924
  %v3926 = vpop.f32.mrb[0].mxu0
  %3927 = vmatprep.mubr.bf16.mxu0 0
  %3928 = vmatmul.mubr.bf16.gmra.mrb[0].mxu0 %v3842
  %v3929 = vpop.f32.mrb[0].mxu0
  %v3930 = vadd.f32 0.0, %v3929
  %v3931 = vpop.f32.mrb[0].mxu0
  %v3932 = vpop.f32.mrb[0].mxu0
  %v3933 = vadd.f32 0.0, %v3932
  %v3934 = vpop.f32.mrb[0].mxu0
  %3935 = vmatprep.mubr.bf16.mxu0 0
  %3936 = vmatmul.mubr.bf16.gmra.mrb[0].mxu0 %v3845
  %v3937 = vpop.f32.mrb[0].mxu0
  %v3938 = vadd.f32 0.0, %v3937
  %v3939 = vpop.f32.mrb[0].mxu0
  %v3940 = vpop.f32.mrb[0].mxu0
  %v3941 = vadd.f32 0.0, %v3940
  %v3942 = vpop.f32.mrb[0].mxu0
  %3943 = vdwg.mxu0
  %v3944 = vadd.f32 %v3736, %v3882
  %v3945 = vadd.f32 %v3739, %v3885
  %v3946 = vadd.f32 %v3744, %v3890
  %v3947 = vadd.f32 %v3747, %v3893
  %v3948 = vadd.f32 %v3752, %v3898
  %v3949 = vadd.f32 %v3755, %v3901
  %v3950 = vadd.f32 %v3760, %v3906
  %v3951 = vadd.f32 %v3763, %v3909
  %v3952 = vadd.f32 %v3768, %v3914
  %v3953 = vadd.f32 %v3771, %v3917
  %v3954 = vadd.f32 %v3776, %v3922
  %v3955 = vadd.f32 %v3779, %v3925
  %v3956 = vadd.f32 %v3784, %v3930
  %v3957 = vadd.f32 %v3787, %v3933
  %v3958 = vadd.f32 %v3792, %v3938
  %v3959 = vadd.f32 %v3795, %v3941
  %v3960 = vpack.c.bf16 %v3104, %v3103
  %v3961 = vpack.c.bf16 %v3106, %v3105
  %v3962 = vpack.c.bf16 %v3108, %v3107
  %v3963 = vpack.c.bf16 %v3110, %v3109
  %v3964 = vpack.c.bf16 %v3112, %v3111
  %v3965 = vpack.c.bf16 %v3114, %v3113
  %v3966 = vpack.c.bf16 %v3116, %v3115
  %v3967 = vpack.c.bf16 %v3118, %v3117
  %s3968 = scalar_lea.vmem %s2, 32
  %v3969 = vld [vmem:[%s3968] sm:$0xf]
  %v3970 = vld [vmem:[%s3968 + $0x4] sm:$0xf]
  %v3971 = vld [vmem:[%s3968 + $0x8] sm:$0xf]
  %v3972 = vld [vmem:[%s3968 + $0xc] sm:$0xf]
  %v3977 = vunpack.c.l.b16 %v3969
  %v3978 = vunpack.c.l.b16 %v3970
  %v3979 = vunpack.c.l.b16 %v3971
  %v3980 = vunpack.c.l.b16 %v3972
  %v3981 = vpack.c.b16 %v3978, %v3977
  %v3982 = vpack.c.b16 %v3980, %v3979
  %v3986 = vsel %vm3543, %v3960, 0
  %v3989 = vsel %vm3543, %v3961, 0
  %v3992 = vsel %vm3543, %v3962, 0
  %v3995 = vsel %vm3543, %v3963, 0
  %v3998 = vsel %vm3543, %v3964, 0
  %v4001 = vsel %vm3543, %v3965, 0
  %v4004 = vsel %vm3543, %v3966, 0
  %v4007 = vsel %vm3543, %v3967, 0
  %4009 = vmatprep.subr.bf16.mxu0 0
  %4010 = vmatpush1.bf16.msra.mxu0 %v3981
  %4011 = vmatprep.subr.bf16.mxu0 0
  %4012 = vmatpush1.bf16.msra.mxu0 %v3982
  %4013 = vmatprep.subr.bf16.mxu0 0
  %4014 = vmatpush1.bf16.msra.mxu0 0
  %4015 = vmatprep.subr.bf16.mxu0 0
  %4016 = vmatpush1.bf16.msra.mxu0 0
  %4017 = vmatprep.subr.bf16.mxu0 0
  %4018 = vmatpush1.bf16.msra.mxu0 0
  %4019 = vmatprep.subr.bf16.mxu0 0
  %4020 = vmatpush1.bf16.msra.mxu0 0
  %4021 = vmatprep.subr.bf16.mxu0 0
  %4022 = vmatpush1.bf16.msra.mxu0 0
  %4023 = vmatprep.subr.bf16.mxu0 0
  %4024 = vmatpush1.bf16.msra.mxu0 0
  %4025 = vmatprep.subr.bf16.mxu0 0
  %4026 = vmatpush1.bf16.msra.mxu0 0
  %4027 = vmatprep.subr.bf16.mxu0 0
  %4028 = vmatpush1.bf16.msra.mxu0 0
  %4029 = vmatprep.subr.bf16.mxu0 0
  %4030 = vmatpush1.bf16.msra.mxu0 0
  %4031 = vmatprep.subr.bf16.mxu0 0
  %4032 = vmatpush1.bf16.msra.mxu0 0
  %4033 = vmatprep.subr.bf16.mxu0 0
  %4034 = vmatpush1.bf16.msra.mxu0 0
  %4035 = vmatprep.subr.bf16.mxu0 0
  %4036 = vmatpush1.bf16.msra.mxu0 0
  %4037 = vmatprep.subr.bf16.mxu0 0
  %4038 = vmatpush1.bf16.msra.mxu0 0
  %4039 = vmatprep.subr.bf16.mxu0 0
  %4040 = vmatpush1.bf16.msra.mxu0 0
  %4041 = vmatprep.mubr.bf16.mxu0 0
  %4042 = vmatmul.mubr.bf16.gmra.mrb[0].mxu0 %v3986
  %v4043 = vpop.f32.mrb[0].mxu0
  %v4044 = vadd.f32 0.0, %v4043
  %v4045 = vpop.f32.mrb[0].mxu0
  %v4046 = vpop.f32.mrb[0].mxu0
  %v4047 = vadd.f32 0.0, %v4046
  %v4048 = vpop.f32.mrb[0].mxu0
  %4049 = vmatprep.mubr.bf16.mxu0 0
  %4050 = vmatmul.mubr.bf16.gmra.mrb[0].mxu0 %v3989
  %v4051 = vpop.f32.mrb[0].mxu0
  %v4052 = vadd.f32 0.0, %v4051
  %v4053 = vpop.f32.mrb[0].mxu0
  %v4054 = vpop.f32.mrb[0].mxu0
  %v4055 = vadd.f32 0.0, %v4054
  %v4056 = vpop.f32.mrb[0].mxu0
  %4057 = vmatprep.mubr.bf16.mxu0 0
  %4058 = vmatmul.mubr.bf16.gmra.mrb[0].mxu0 %v3992
  %v4059 = vpop.f32.mrb[0].mxu0
  %v4060 = vadd.f32 0.0, %v4059
  %v4061 = vpop.f32.mrb[0].mxu0
  %v4062 = vpop.f32.mrb[0].mxu0
  %v4063 = vadd.f32 0.0, %v4062
  %v4064 = vpop.f32.mrb[0].mxu0
  %4065 = vmatprep.mubr.bf16.mxu0 0
  %4066 = vmatmul.mubr.bf16.gmra.mrb[0].mxu0 %v3995
  %v4067 = vpop.f32.mrb[0].mxu0
  %v4068 = vadd.f32 0.0, %v4067
  %v4069 = vpop.f32.mrb[0].mxu0
  %v4070 = vpop.f32.mrb[0].mxu0
  %v4071 = vadd.f32 0.0, %v4070
  %v4072 = vpop.f32.mrb[0].mxu0
  %4073 = vmatprep.mubr.bf16.mxu0 0
  %4074 = vmatmul.mubr.bf16.gmra.mrb[0].mxu0 %v3998
  %v4075 = vpop.f32.mrb[0].mxu0
  %v4076 = vadd.f32 0.0, %v4075
  %v4077 = vpop.f32.mrb[0].mxu0
  %v4078 = vpop.f32.mrb[0].mxu0
  %v4079 = vadd.f32 0.0, %v4078
  %v4080 = vpop.f32.mrb[0].mxu0
  %4081 = vmatprep.mubr.bf16.mxu0 0
  %4082 = vmatmul.mubr.bf16.gmra.mrb[0].mxu0 %v4001
  %v4083 = vpop.f32.mrb[0].mxu0
  %v4084 = vadd.f32 0.0, %v4083
  %v4085 = vpop.f32.mrb[0].mxu0
  %v4086 = vpop.f32.mrb[0].mxu0
  %v4087 = vadd.f32 0.0, %v4086
  %v4088 = vpop.f32.mrb[0].mxu0
  %4089 = vmatprep.mubr.bf16.mxu0 0
  %4090 = vmatmul.mubr.bf16.gmra.mrb[0].mxu0 %v4004
  %v4091 = vpop.f32.mrb[0].mxu0
  %v4092 = vadd.f32 0.0, %v4091
  %v4093 = vpop.f32.mrb[0].mxu0
  %v4094 = vpop.f32.mrb[0].mxu0
  %v4095 = vadd.f32 0.0, %v4094
  %v4096 = vpop.f32.mrb[0].mxu0
  %4097 = vmatprep.mubr.bf16.mxu0 0
  %4098 = vmatmul.mubr.bf16.gmra.mrb[0].mxu0 %v4007
  %v4099 = vpop.f32.mrb[0].mxu0
  %v4100 = vadd.f32 0.0, %v4099
  %v4101 = vpop.f32.mrb[0].mxu0
  %v4102 = vpop.f32.mrb[0].mxu0
  %v4103 = vadd.f32 0.0, %v4102
  %v4104 = vpop.f32.mrb[0].mxu0
  %4105 = vdwg.mxu0
  %v4106 = vadd.f32 %v3944, %v4044
  %v4107 = vadd.f32 %v3945, %v4047
  %v4108 = vadd.f32 %v3946, %v4052
  %v4109 = vadd.f32 %v3947, %v4055
  %v4110 = vadd.f32 %v3948, %v4060
  %v4111 = vadd.f32 %v3949, %v4063
  %v4112 = vadd.f32 %v3950, %v4068
  %v4113 = vadd.f32 %v3951, %v4071
  %v4114 = vadd.f32 %v3952, %v4076
  %v4115 = vadd.f32 %v3953, %v4079
  %v4116 = vadd.f32 %v3954, %v4084
  %v4117 = vadd.f32 %v3955, %v4087
  %v4118 = vadd.f32 %v3956, %v4092
  %v4119 = vadd.f32 %v3957, %v4095
  %v4120 = vadd.f32 %v3958, %v4100
  %v4121 = vadd.f32 %v3959, %v4103
  %v4122 = vpack.c.bf16 %v3184, %v3183
  %v4123 = vpack.c.bf16 %v3186, %v3185
  %v4124 = vpack.c.bf16 %v3188, %v3187
  %v4125 = vpack.c.bf16 %v3190, %v3189
  %v4126 = vpack.c.bf16 %v3192, %v3191
  %v4127 = vpack.c.bf16 %v3194, %v3193
  %v4128 = vpack.c.bf16 %v3196, %v3195
  %v4129 = vpack.c.bf16 %v3198, %v3197
  %s4130 = scalar_lea.vmem %s2, 48
  %v4131 = vld [vmem:[%s4130] sm:$0xf]
  %v4132 = vld [vmem:[%s4130 + $0x4] sm:$0xf]
  %v4133 = vld [vmem:[%s4130 + $0x8] sm:$0xf]
  %v4134 = vld [vmem:[%s4130 + $0xc] sm:$0xf]
  %v4139 = vunpack.c.l.b16 %v4131
  %v4140 = vunpack.c.l.b16 %v4132
  %v4141 = vunpack.c.l.b16 %v4133
  %v4142 = vunpack.c.l.b16 %v4134
  %v4143 = vpack.c.b16 %v4140, %v4139
  %v4144 = vpack.c.b16 %v4142, %v4141
  %v4148 = vsel %vm3543, %v4122, 0
  %v4151 = vsel %vm3543, %v4123, 0
  %v4154 = vsel %vm3543, %v4124, 0
  %v4157 = vsel %vm3543, %v4125, 0
  %v4160 = vsel %vm3543, %v4126, 0
  %v4163 = vsel %vm3543, %v4127, 0
  %v4166 = vsel %vm3543, %v4128, 0
  %v4169 = vsel %vm3543, %v4129, 0
  %4171 = vmatprep.subr.bf16.mxu0 0
  %4172 = vmatpush1.bf16.msra.mxu0 %v4143
  %4173 = vmatprep.subr.bf16.mxu0 0
  %4174 = vmatpush1.bf16.msra.mxu0 %v4144
  %4175 = vmatprep.subr.bf16.mxu0 0
  %4176 = vmatpush1.bf16.msra.mxu0 0
  %4177 = vmatprep.subr.bf16.mxu0 0
  %4178 = vmatpush1.bf16.msra.mxu0 0
  %4179 = vmatprep.subr.bf16.mxu0 0
  %4180 = vmatpush1.bf16.msra.mxu0 0
  %4181 = vmatprep.subr.bf16.mxu0 0
  %4182 = vmatpush1.bf16.msra.mxu0 0
  %4183 = vmatprep.subr.bf16.mxu0 0
  %4184 = vmatpush1.bf16.msra.mxu0 0
  %4185 = vmatprep.subr.bf16.mxu0 0
  %4186 = vmatpush1.bf16.msra.mxu0 0
  %4187 = vmatprep.subr.bf16.mxu0 0
  %4188 = vmatpush1.bf16.msra.mxu0 0
  %4189 = vmatprep.subr.bf16.mxu0 0
  %4190 = vmatpush1.bf16.msra.mxu0 0
  %4191 = vmatprep.subr.bf16.mxu0 0
  %4192 = vmatpush1.bf16.msra.mxu0 0
  %4193 = vmatprep.subr.bf16.mxu0 0
  %4194 = vmatpush1.bf16.msra.mxu0 0
  %4195 = vmatprep.subr.bf16.mxu0 0
  %4196 = vmatpush1.bf16.msra.mxu0 0
  %4197 = vmatprep.subr.bf16.mxu0 0
  %4198 = vmatpush1.bf16.msra.mxu0 0
  %4199 = vmatprep.subr.bf16.mxu0 0
  %4200 = vmatpush1.bf16.msra.mxu0 0
  %4201 = vmatprep.subr.bf16.mxu0 0
  %4202 = vmatpush1.bf16.msra.mxu0 0
  %4203 = vmatprep.mubr.bf16.mxu0 0
  %4204 = vmatmul.mubr.bf16.gmra.mrb[0].mxu0 %v4148
  %v4205 = vpop.f32.mrb[0].mxu0
  %v4206 = vadd.f32 0.0, %v4205
  %v4207 = vpop.f32.mrb[0].mxu0
  %v4208 = vpop.f32.mrb[0].mxu0
  %v4209 = vadd.f32 0.0, %v4208
  %v4210 = vpop.f32.mrb[0].mxu0
  %4211 = vmatprep.mubr.bf16.mxu0 0
  %4212 = vmatmul.mubr.bf16.gmra.mrb[0].mxu0 %v4151
  %v4213 = vpop.f32.mrb[0].mxu0
  %v4214 = vadd.f32 0.0, %v4213
  %v4215 = vpop.f32.mrb[0].mxu0
  %v4216 = vpop.f32.mrb[0].mxu0
  %v4217 = vadd.f32 0.0, %v4216
  %v4218 = vpop.f32.mrb[0].mxu0
  %4219 = vmatprep.mubr.bf16.mxu0 0
  %4220 = vmatmul.mubr.bf16.gmra.mrb[0].mxu0 %v4154
  %v4221 = vpop.f32.mrb[0].mxu0
  %v4222 = vadd.f32 0.0, %v4221
  %v4223 = vpop.f32.mrb[0].mxu0
  %v4224 = vpop.f32.mrb[0].mxu0
  %v4225 = vadd.f32 0.0, %v4224
  %v4226 = vpop.f32.mrb[0].mxu0
  %4227 = vmatprep.mubr.bf16.mxu0 0
  %4228 = vmatmul.mubr.bf16.gmra.mrb[0].mxu0 %v4157
  %v4229 = vpop.f32.mrb[0].mxu0
  %v4230 = vadd.f32 0.0, %v4229
  %v4231 = vpop.f32.mrb[0].mxu0
  %v4232 = vpop.f32.mrb[0].mxu0
  %v4233 = vadd.f32 0.0, %v4232
  %v4234 = vpop.f32.mrb[0].mxu0
  %4235 = vmatprep.mubr.bf16.mxu0 0
  %4236 = vmatmul.mubr.bf16.gmra.mrb[0].mxu0 %v4160
  %v4237 = vpop.f32.mrb[0].mxu0
  %v4238 = vadd.f32 0.0, %v4237
  %v4239 = vpop.f32.mrb[0].mxu0
  %v4240 = vpop.f32.mrb[0].mxu0
  %v4241 = vadd.f32 0.0, %v4240
  %v4242 = vpop.f32.mrb[0].mxu0
  %4243 = vmatprep.mubr.bf16.mxu0 0
  %4244 = vmatmul.mubr.bf16.gmra.mrb[0].mxu0 %v4163
  %v4245 = vpop.f32.mrb[0].mxu0
  %v4246 = vadd.f32 0.0, %v4245
  %v4247 = vpop.f32.mrb[0].mxu0
  %v4248 = vpop.f32.mrb[0].mxu0
  %v4249 = vadd.f32 0.0, %v4248
  %v4250 = vpop.f32.mrb[0].mxu0
  %4251 = vmatprep.mubr.bf16.mxu0 0
  %4252 = vmatmul.mubr.bf16.gmra.mrb[0].mxu0 %v4166
  %v4253 = vpop.f32.mrb[0].mxu0
  %v4254 = vadd.f32 0.0, %v4253
  %v4255 = vpop.f32.mrb[0].mxu0
  %v4256 = vpop.f32.mrb[0].mxu0
  %v4257 = vadd.f32 0.0, %v4256
  %v4258 = vpop.f32.mrb[0].mxu0
  %4259 = vmatprep.mubr.bf16.mxu0 0
  %4260 = vmatmul.mubr.bf16.gmra.mrb[0].mxu0 %v4169
  %v4261 = vpop.f32.mrb[0].mxu0
  %v4262 = vadd.f32 0.0, %v4261
  %v4263 = vpop.f32.mrb[0].mxu0
  %v4264 = vpop.f32.mrb[0].mxu0
  %v4265 = vadd.f32 0.0, %v4264
  %v4266 = vpop.f32.mrb[0].mxu0
  %4267 = vdwg.mxu0
  %v4268 = vadd.f32 %v4106, %v4206
  %v4269 = vadd.f32 %v4107, %v4209
  %v4270 = vadd.f32 %v4108, %v4214
  %v4271 = vadd.f32 %v4109, %v4217
  %v4272 = vadd.f32 %v4110, %v4222
  %v4273 = vadd.f32 %v4111, %v4225
  %v4274 = vadd.f32 %v4112, %v4230
  %v4275 = vadd.f32 %v4113, %v4233
  %v4276 = vadd.f32 %v4114, %v4238
  %v4277 = vadd.f32 %v4115, %v4241
  %v4278 = vadd.f32 %v4116, %v4246
  %v4279 = vadd.f32 %v4117, %v4249
  %v4280 = vadd.f32 %v4118, %v4254
  %v4281 = vadd.f32 %v4119, %v4257
  %v4282 = vadd.f32 %v4120, %v4262
  %v4283 = vadd.f32 %v4121, %v4265
  %v4284 = vpack.c.bf16 %v3264, %v3263
  %v4285 = vpack.c.bf16 %v3266, %v3265
  %v4286 = vpack.c.bf16 %v3268, %v3267
  %v4287 = vpack.c.bf16 %v3270, %v3269
  %v4288 = vpack.c.bf16 %v3272, %v3271
  %v4289 = vpack.c.bf16 %v3274, %v3273
  %v4290 = vpack.c.bf16 %v3276, %v3275
  %v4291 = vpack.c.bf16 %v3278, %v3277
  %s4292 = scalar_lea.vmem %s2, 64
  %v4293 = vld [vmem:[%s4292] sm:$0xf]
  %v4294 = vld [vmem:[%s4292 + $0x4] sm:$0xf]
  %v4295 = vld [vmem:[%s4292 + $0x8] sm:$0xf]
  %v4296 = vld [vmem:[%s4292 + $0xc] sm:$0xf]
  %v4301 = vunpack.c.l.b16 %v4293
  %v4302 = vunpack.c.l.b16 %v4294
  %v4303 = vunpack.c.l.b16 %v4295
  %v4304 = vunpack.c.l.b16 %v4296
  %v4305 = vpack.c.b16 %v4302, %v4301
  %v4306 = vpack.c.b16 %v4304, %v4303
  %v4310 = vsel %vm3543, %v4284, 0
  %v4313 = vsel %vm3543, %v4285, 0
  %v4316 = vsel %vm3543, %v4286, 0
  %v4319 = vsel %vm3543, %v4287, 0
  %v4322 = vsel %vm3543, %v4288, 0
  %v4325 = vsel %vm3543, %v4289, 0
  %v4328 = vsel %vm3543, %v4290, 0
  %v4331 = vsel %vm3543, %v4291, 0
  %4333 = vmatprep.subr.bf16.mxu0 0
  %4334 = vmatpush1.bf16.msra.mxu0 %v4305
  %4335 = vmatprep.subr.bf16.mxu0 0
  %4336 = vmatpush1.bf16.msra.mxu0 %v4306
  %4337 = vmatprep.subr.bf16.mxu0 0
  %4338 = vmatpush1.bf16.msra.mxu0 0
  %4339 = vmatprep.subr.bf16.mxu0 0
  %4340 = vmatpush1.bf16.msra.mxu0 0
  %4341 = vmatprep.subr.bf16.mxu0 0
  %4342 = vmatpush1.bf16.msra.mxu0 0
  %4343 = vmatprep.subr.bf16.mxu0 0
  %4344 = vmatpush1.bf16.msra.mxu0 0
  %4345 = vmatprep.subr.bf16.mxu0 0
  %4346 = vmatpush1.bf16.msra.mxu0 0
  %4347 = vmatprep.subr.bf16.mxu0 0
  %4348 = vmatpush1.bf16.msra.mxu0 0
  %4349 = vmatprep.subr.bf16.mxu0 0
  %4350 = vmatpush1.bf16.msra.mxu0 0
  %4351 = vmatprep.subr.bf16.mxu0 0
  %4352 = vmatpush1.bf16.msra.mxu0 0
  %4353 = vmatprep.subr.bf16.mxu0 0
  %4354 = vmatpush1.bf16.msra.mxu0 0
  %4355 = vmatprep.subr.bf16.mxu0 0
  %4356 = vmatpush1.bf16.msra.mxu0 0
  %4357 = vmatprep.subr.bf16.mxu0 0
  %4358 = vmatpush1.bf16.msra.mxu0 0
  %4359 = vmatprep.subr.bf16.mxu0 0
  %4360 = vmatpush1.bf16.msra.mxu0 0
  %4361 = vmatprep.subr.bf16.mxu0 0
  %4362 = vmatpush1.bf16.msra.mxu0 0
  %4363 = vmatprep.subr.bf16.mxu0 0
  %4364 = vmatpush1.bf16.msra.mxu0 0
  %4365 = vmatprep.mubr.bf16.mxu0 0
  %4366 = vmatmul.mubr.bf16.gmra.mrb[0].mxu0 %v4310
  %v4367 = vpop.f32.mrb[0].mxu0
  %v4368 = vadd.f32 0.0, %v4367
  %v4369 = vpop.f32.mrb[0].mxu0
  %v4370 = vpop.f32.mrb[0].mxu0
  %v4371 = vadd.f32 0.0, %v4370
  %v4372 = vpop.f32.mrb[0].mxu0
  %4373 = vmatprep.mubr.bf16.mxu0 0
  %4374 = vmatmul.mubr.bf16.gmra.mrb[0].mxu0 %v4313
  %v4375 = vpop.f32.mrb[0].mxu0
  %v4376 = vadd.f32 0.0, %v4375
  %v4377 = vpop.f32.mrb[0].mxu0
  %v4378 = vpop.f32.mrb[0].mxu0
  %v4379 = vadd.f32 0.0, %v4378
  %v4380 = vpop.f32.mrb[0].mxu0
  %4381 = vmatprep.mubr.bf16.mxu0 0
  %4382 = vmatmul.mubr.bf16.gmra.mrb[0].mxu0 %v4316
  %v4383 = vpop.f32.mrb[0].mxu0
  %v4384 = vadd.f32 0.0, %v4383
  %v4385 = vpop.f32.mrb[0].mxu0
  %v4386 = vpop.f32.mrb[0].mxu0
  %v4387 = vadd.f32 0.0, %v4386
  %v4388 = vpop.f32.mrb[0].mxu0
  %4389 = vmatprep.mubr.bf16.mxu0 0
  %4390 = vmatmul.mubr.bf16.gmra.mrb[0].mxu0 %v4319
  %v4391 = vpop.f32.mrb[0].mxu0
  %v4392 = vadd.f32 0.0, %v4391
  %v4393 = vpop.f32.mrb[0].mxu0
  %v4394 = vpop.f32.mrb[0].mxu0
  %v4395 = vadd.f32 0.0, %v4394
  %v4396 = vpop.f32.mrb[0].mxu0
  %4397 = vmatprep.mubr.bf16.mxu0 0
  %4398 = vmatmul.mubr.bf16.gmra.mrb[0].mxu0 %v4322
  %v4399 = vpop.f32.mrb[0].mxu0
  %v4400 = vadd.f32 0.0, %v4399
  %v4401 = vpop.f32.mrb[0].mxu0
  %v4402 = vpop.f32.mrb[0].mxu0
  %v4403 = vadd.f32 0.0, %v4402
  %v4404 = vpop.f32.mrb[0].mxu0
  %4405 = vmatprep.mubr.bf16.mxu0 0
  %4406 = vmatmul.mubr.bf16.gmra.mrb[0].mxu0 %v4325
  %v4407 = vpop.f32.mrb[0].mxu0
  %v4408 = vadd.f32 0.0, %v4407
  %v4409 = vpop.f32.mrb[0].mxu0
  %v4410 = vpop.f32.mrb[0].mxu0
  %v4411 = vadd.f32 0.0, %v4410
  %v4412 = vpop.f32.mrb[0].mxu0
  %4413 = vmatprep.mubr.bf16.mxu0 0
  %4414 = vmatmul.mubr.bf16.gmra.mrb[0].mxu0 %v4328
  %v4415 = vpop.f32.mrb[0].mxu0
  %v4416 = vadd.f32 0.0, %v4415
  %v4417 = vpop.f32.mrb[0].mxu0
  %v4418 = vpop.f32.mrb[0].mxu0
  %v4419 = vadd.f32 0.0, %v4418
  %v4420 = vpop.f32.mrb[0].mxu0
  %4421 = vmatprep.mubr.bf16.mxu0 0
  %4422 = vmatmul.mubr.bf16.gmra.mrb[0].mxu0 %v4331
  %v4423 = vpop.f32.mrb[0].mxu0
  %v4424 = vadd.f32 0.0, %v4423
  %v4425 = vpop.f32.mrb[0].mxu0
  %v4426 = vpop.f32.mrb[0].mxu0
  %v4427 = vadd.f32 0.0, %v4426
  %v4428 = vpop.f32.mrb[0].mxu0
  %4429 = vdwg.mxu0
  %v4430 = vadd.f32 %v4268, %v4368
  %v4431 = vadd.f32 %v4269, %v4371
  %v4432 = vadd.f32 %v4270, %v4376
  %v4433 = vadd.f32 %v4271, %v4379
  %v4434 = vadd.f32 %v4272, %v4384
  %v4435 = vadd.f32 %v4273, %v4387
  %v4436 = vadd.f32 %v4274, %v4392
  %v4437 = vadd.f32 %v4275, %v4395
  %v4438 = vadd.f32 %v4276, %v4400
  %v4439 = vadd.f32 %v4277, %v4403
  %v4440 = vadd.f32 %v4278, %v4408
  %v4441 = vadd.f32 %v4279, %v4411
  %v4442 = vadd.f32 %v4280, %v4416
  %v4443 = vadd.f32 %v4281, %v4419
  %v4444 = vadd.f32 %v4282, %v4424
  %v4445 = vadd.f32 %v4283, %v4427
  %v4446 = vpack.c.bf16 %v3344, %v3343
  %v4447 = vpack.c.bf16 %v3346, %v3345
  %v4448 = vpack.c.bf16 %v3348, %v3347
  %v4449 = vpack.c.bf16 %v3350, %v3349
  %v4450 = vpack.c.bf16 %v3352, %v3351
  %v4451 = vpack.c.bf16 %v3354, %v3353
  %v4452 = vpack.c.bf16 %v3356, %v3355
  %v4453 = vpack.c.bf16 %v3358, %v3357
  %s4454 = scalar_lea.vmem %s2, 80
  %v4455 = vld [vmem:[%s4454] sm:$0xf]
  %v4456 = vld [vmem:[%s4454 + $0x4] sm:$0xf]
  %v4457 = vld [vmem:[%s4454 + $0x8] sm:$0xf]
  %v4458 = vld [vmem:[%s4454 + $0xc] sm:$0xf]
  %v4463 = vunpack.c.l.b16 %v4455
  %v4464 = vunpack.c.l.b16 %v4456
  %v4465 = vunpack.c.l.b16 %v4457
  %v4466 = vunpack.c.l.b16 %v4458
  %v4467 = vpack.c.b16 %v4464, %v4463
  %v4468 = vpack.c.b16 %v4466, %v4465
  %v4472 = vsel %vm3543, %v4446, 0
  %v4475 = vsel %vm3543, %v4447, 0
  %v4478 = vsel %vm3543, %v4448, 0
  %v4481 = vsel %vm3543, %v4449, 0
  %v4484 = vsel %vm3543, %v4450, 0
  %v4487 = vsel %vm3543, %v4451, 0
  %v4490 = vsel %vm3543, %v4452, 0
  %v4493 = vsel %vm3543, %v4453, 0
  %4495 = vmatprep.subr.bf16.mxu0 0
  %4496 = vmatpush1.bf16.msra.mxu0 %v4467
  %4497 = vmatprep.subr.bf16.mxu0 0
  %4498 = vmatpush1.bf16.msra.mxu0 %v4468
  %4499 = vmatprep.subr.bf16.mxu0 0
  %4500 = vmatpush1.bf16.msra.mxu0 0
  %4501 = vmatprep.subr.bf16.mxu0 0
  %4502 = vmatpush1.bf16.msra.mxu0 0
  %4503 = vmatprep.subr.bf16.mxu0 0
  %4504 = vmatpush1.bf16.msra.mxu0 0
  %4505 = vmatprep.subr.bf16.mxu0 0
  %4506 = vmatpush1.bf16.msra.mxu0 0
  %4507 = vmatprep.subr.bf16.mxu0 0
  %4508 = vmatpush1.bf16.msra.mxu0 0
  %4509 = vmatprep.subr.bf16.mxu0 0
  %4510 = vmatpush1.bf16.msra.mxu0 0
  %4511 = vmatprep.subr.bf16.mxu0 0
  %4512 = vmatpush1.bf16.msra.mxu0 0
  %4513 = vmatprep.subr.bf16.mxu0 0
  %4514 = vmatpush1.bf16.msra.mxu0 0
  %4515 = vmatprep.subr.bf16.mxu0 0
  %4516 = vmatpush1.bf16.msra.mxu0 0
  %4517 = vmatprep.subr.bf16.mxu0 0
  %4518 = vmatpush1.bf16.msra.mxu0 0
  %4519 = vmatprep.subr.bf16.mxu0 0
  %4520 = vmatpush1.bf16.msra.mxu0 0
  %4521 = vmatprep.subr.bf16.mxu0 0
  %4522 = vmatpush1.bf16.msra.mxu0 0
  %4523 = vmatprep.subr.bf16.mxu0 0
  %4524 = vmatpush1.bf16.msra.mxu0 0
  %4525 = vmatprep.subr.bf16.mxu0 0
  %4526 = vmatpush1.bf16.msra.mxu0 0
  %4527 = vmatprep.mubr.bf16.mxu0 0
  %4528 = vmatmul.mubr.bf16.gmra.mrb[0].mxu0 %v4472
  %v4529 = vpop.f32.mrb[0].mxu0
  %v4530 = vadd.f32 0.0, %v4529
  %v4531 = vpop.f32.mrb[0].mxu0
  %v4532 = vpop.f32.mrb[0].mxu0
  %v4533 = vadd.f32 0.0, %v4532
  %v4534 = vpop.f32.mrb[0].mxu0
  %4535 = vmatprep.mubr.bf16.mxu0 0
  %4536 = vmatmul.mubr.bf16.gmra.mrb[0].mxu0 %v4475
  %v4537 = vpop.f32.mrb[0].mxu0
  %v4538 = vadd.f32 0.0, %v4537
  %v4539 = vpop.f32.mrb[0].mxu0
  %v4540 = vpop.f32.mrb[0].mxu0
  %v4541 = vadd.f32 0.0, %v4540
  %v4542 = vpop.f32.mrb[0].mxu0
  %4543 = vmatprep.mubr.bf16.mxu0 0
  %4544 = vmatmul.mubr.bf16.gmra.mrb[0].mxu0 %v4478
  %v4545 = vpop.f32.mrb[0].mxu0
  %v4546 = vadd.f32 0.0, %v4545
  %v4547 = vpop.f32.mrb[0].mxu0
  %v4548 = vpop.f32.mrb[0].mxu0
  %v4549 = vadd.f32 0.0, %v4548
  %v4550 = vpop.f32.mrb[0].mxu0
  %4551 = vmatprep.mubr.bf16.mxu0 0
  %4552 = vmatmul.mubr.bf16.gmra.mrb[0].mxu0 %v4481
  %v4553 = vpop.f32.mrb[0].mxu0
  %v4554 = vadd.f32 0.0, %v4553
  %v4555 = vpop.f32.mrb[0].mxu0
  %v4556 = vpop.f32.mrb[0].mxu0
  %v4557 = vadd.f32 0.0, %v4556
  %v4558 = vpop.f32.mrb[0].mxu0
  %4559 = vmatprep.mubr.bf16.mxu0 0
  %4560 = vmatmul.mubr.bf16.gmra.mrb[0].mxu0 %v4484
  %v4561 = vpop.f32.mrb[0].mxu0
  %v4562 = vadd.f32 0.0, %v4561
  %v4563 = vpop.f32.mrb[0].mxu0
  %v4564 = vpop.f32.mrb[0].mxu0
  %v4565 = vadd.f32 0.0, %v4564
  %v4566 = vpop.f32.mrb[0].mxu0
  %4567 = vmatprep.mubr.bf16.mxu0 0
  %4568 = vmatmul.mubr.bf16.gmra.mrb[0].mxu0 %v4487
  %v4569 = vpop.f32.mrb[0].mxu0
  %v4570 = vadd.f32 0.0, %v4569
  %v4571 = vpop.f32.mrb[0].mxu0
  %v4572 = vpop.f32.mrb[0].mxu0
  %v4573 = vadd.f32 0.0, %v4572
  %v4574 = vpop.f32.mrb[0].mxu0
  %4575 = vmatprep.mubr.bf16.mxu0 0
  %4576 = vmatmul.mubr.bf16.gmra.mrb[0].mxu0 %v4490
  %v4577 = vpop.f32.mrb[0].mxu0
  %v4578 = vadd.f32 0.0, %v4577
  %v4579 = vpop.f32.mrb[0].mxu0
  %v4580 = vpop.f32.mrb[0].mxu0
  %v4581 = vadd.f32 0.0, %v4580
  %v4582 = vpop.f32.mrb[0].mxu0
  %4583 = vmatprep.mubr.bf16.mxu0 0
  %4584 = vmatmul.mubr.bf16.gmra.mrb[0].mxu0 %v4493
  %v4585 = vpop.f32.mrb[0].mxu0
  %v4586 = vadd.f32 0.0, %v4585
  %v4587 = vpop.f32.mrb[0].mxu0
  %v4588 = vpop.f32.mrb[0].mxu0
  %v4589 = vadd.f32 0.0, %v4588
  %v4590 = vpop.f32.mrb[0].mxu0
  %4591 = vdwg.mxu0
  %v4592 = vadd.f32 %v4430, %v4530
  %v4593 = vadd.f32 %v4431, %v4533
  %v4594 = vadd.f32 %v4432, %v4538
  %v4595 = vadd.f32 %v4433, %v4541
  %v4596 = vadd.f32 %v4434, %v4546
  %v4597 = vadd.f32 %v4435, %v4549
  %v4598 = vadd.f32 %v4436, %v4554
  %v4599 = vadd.f32 %v4437, %v4557
  %v4600 = vadd.f32 %v4438, %v4562
  %v4601 = vadd.f32 %v4439, %v4565
  %v4602 = vadd.f32 %v4440, %v4570
  %v4603 = vadd.f32 %v4441, %v4573
  %v4604 = vadd.f32 %v4442, %v4578
  %v4605 = vadd.f32 %v4443, %v4581
  %v4606 = vadd.f32 %v4444, %v4586
  %v4607 = vadd.f32 %v4445, %v4589
  %v4608 = vpack.c.bf16 %v3424, %v3423
  %v4609 = vpack.c.bf16 %v3426, %v3425
  %v4610 = vpack.c.bf16 %v3428, %v3427
  %v4611 = vpack.c.bf16 %v3430, %v3429
  %v4612 = vpack.c.bf16 %v3432, %v3431
  %v4613 = vpack.c.bf16 %v3434, %v3433
  %v4614 = vpack.c.bf16 %v3436, %v3435
  %v4615 = vpack.c.bf16 %v3438, %v3437
  %s4616 = scalar_lea.vmem %s2, 96
  %v4617 = vld [vmem:[%s4616] sm:$0xf]
  %v4618 = vld [vmem:[%s4616 + $0x4] sm:$0xf]
  %v4619 = vld [vmem:[%s4616 + $0x8] sm:$0xf]
  %v4620 = vld [vmem:[%s4616 + $0xc] sm:$0xf]
  %v4625 = vunpack.c.l.b16 %v4617
  %v4626 = vunpack.c.l.b16 %v4618
  %v4627 = vunpack.c.l.b16 %v4619
  %v4628 = vunpack.c.l.b16 %v4620
  %v4629 = vpack.c.b16 %v4626, %v4625
  %v4630 = vpack.c.b16 %v4628, %v4627
  %v4634 = vsel %vm3543, %v4608, 0
  %v4637 = vsel %vm3543, %v4609, 0
  %v4640 = vsel %vm3543, %v4610, 0
  %v4643 = vsel %vm3543, %v4611, 0
  %v4646 = vsel %vm3543, %v4612, 0
  %v4649 = vsel %vm3543, %v4613, 0
  %v4652 = vsel %vm3543, %v4614, 0
  %v4655 = vsel %vm3543, %v4615, 0
  %4657 = vmatprep.subr.bf16.mxu0 0
  %4658 = vmatpush1.bf16.msra.mxu0 %v4629
  %4659 = vmatprep.subr.bf16.mxu0 0
  %4660 = vmatpush1.bf16.msra.mxu0 %v4630
  %4661 = vmatprep.subr.bf16.mxu0 0
  %4662 = vmatpush1.bf16.msra.mxu0 0
  %4663 = vmatprep.subr.bf16.mxu0 0
  %4664 = vmatpush1.bf16.msra.mxu0 0
  %4665 = vmatprep.subr.bf16.mxu0 0
  %4666 = vmatpush1.bf16.msra.mxu0 0
  %4667 = vmatprep.subr.bf16.mxu0 0
  %4668 = vmatpush1.bf16.msra.mxu0 0
  %4669 = vmatprep.subr.bf16.mxu0 0
  %4670 = vmatpush1.bf16.msra.mxu0 0
  %4671 = vmatprep.subr.bf16.mxu0 0
  %4672 = vmatpush1.bf16.msra.mxu0 0
  %4673 = vmatprep.subr.bf16.mxu0 0
  %4674 = vmatpush1.bf16.msra.mxu0 0
  %4675 = vmatprep.subr.bf16.mxu0 0
  %4676 = vmatpush1.bf16.msra.mxu0 0
  %4677 = vmatprep.subr.bf16.mxu0 0
  %4678 = vmatpush1.bf16.msra.mxu0 0
  %4679 = vmatprep.subr.bf16.mxu0 0
  %4680 = vmatpush1.bf16.msra.mxu0 0
  %4681 = vmatprep.subr.bf16.mxu0 0
  %4682 = vmatpush1.bf16.msra.mxu0 0
  %4683 = vmatprep.subr.bf16.mxu0 0
  %4684 = vmatpush1.bf16.msra.mxu0 0
  %4685 = vmatprep.subr.bf16.mxu0 0
  %4686 = vmatpush1.bf16.msra.mxu0 0
  %4687 = vmatprep.subr.bf16.mxu0 0
  %4688 = vmatpush1.bf16.msra.mxu0 0
  %4689 = vmatprep.mubr.bf16.mxu0 0
  %4690 = vmatmul.mubr.bf16.gmra.mrb[0].mxu0 %v4634
  %v4691 = vpop.f32.mrb[0].mxu0
  %v4692 = vadd.f32 0.0, %v4691
  %v4693 = vpop.f32.mrb[0].mxu0
  %v4694 = vpop.f32.mrb[0].mxu0
  %v4695 = vadd.f32 0.0, %v4694
  %v4696 = vpop.f32.mrb[0].mxu0
  %4697 = vmatprep.mubr.bf16.mxu0 0
  %4698 = vmatmul.mubr.bf16.gmra.mrb[0].mxu0 %v4637
  %v4699 = vpop.f32.mrb[0].mxu0
  %v4700 = vadd.f32 0.0, %v4699
  %v4701 = vpop.f32.mrb[0].mxu0
  %v4702 = vpop.f32.mrb[0].mxu0
  %v4703 = vadd.f32 0.0, %v4702
  %v4704 = vpop.f32.mrb[0].mxu0
  %4705 = vmatprep.mubr.bf16.mxu0 0
  %4706 = vmatmul.mubr.bf16.gmra.mrb[0].mxu0 %v4640
  %v4707 = vpop.f32.mrb[0].mxu0
  %v4708 = vadd.f32 0.0, %v4707
  %v4709 = vpop.f32.mrb[0].mxu0
  %v4710 = vpop.f32.mrb[0].mxu0
  %v4711 = vadd.f32 0.0, %v4710
  %v4712 = vpop.f32.mrb[0].mxu0
  %4713 = vmatprep.mubr.bf16.mxu0 0
  %4714 = vmatmul.mubr.bf16.gmra.mrb[0].mxu0 %v4643
  %v4715 = vpop.f32.mrb[0].mxu0
  %v4716 = vadd.f32 0.0, %v4715
  %v4717 = vpop.f32.mrb[0].mxu0
  %v4718 = vpop.f32.mrb[0].mxu0
  %v4719 = vadd.f32 0.0, %v4718
  %v4720 = vpop.f32.mrb[0].mxu0
  %4721 = vmatprep.mubr.bf16.mxu0 0
  %4722 = vmatmul.mubr.bf16.gmra.mrb[0].mxu0 %v4646
  %v4723 = vpop.f32.mrb[0].mxu0
  %v4724 = vadd.f32 0.0, %v4723
  %v4725 = vpop.f32.mrb[0].mxu0
  %v4726 = vpop.f32.mrb[0].mxu0
  %v4727 = vadd.f32 0.0, %v4726
  %v4728 = vpop.f32.mrb[0].mxu0
  %4729 = vmatprep.mubr.bf16.mxu0 0
  %4730 = vmatmul.mubr.bf16.gmra.mrb[0].mxu0 %v4649
  %v4731 = vpop.f32.mrb[0].mxu0
  %v4732 = vadd.f32 0.0, %v4731
  %v4733 = vpop.f32.mrb[0].mxu0
  %v4734 = vpop.f32.mrb[0].mxu0
  %v4735 = vadd.f32 0.0, %v4734
  %v4736 = vpop.f32.mrb[0].mxu0
  %4737 = vmatprep.mubr.bf16.mxu0 0
  %4738 = vmatmul.mubr.bf16.gmra.mrb[0].mxu0 %v4652
  %v4739 = vpop.f32.mrb[0].mxu0
  %v4740 = vadd.f32 0.0, %v4739
  %v4741 = vpop.f32.mrb[0].mxu0
  %v4742 = vpop.f32.mrb[0].mxu0
  %v4743 = vadd.f32 0.0, %v4742
  %v4744 = vpop.f32.mrb[0].mxu0
  %4745 = vmatprep.mubr.bf16.mxu0 0
  %4746 = vmatmul.mubr.bf16.gmra.mrb[0].mxu0 %v4655
  %v4747 = vpop.f32.mrb[0].mxu0
  %v4748 = vadd.f32 0.0, %v4747
  %v4749 = vpop.f32.mrb[0].mxu0
  %v4750 = vpop.f32.mrb[0].mxu0
  %v4751 = vadd.f32 0.0, %v4750
  %v4752 = vpop.f32.mrb[0].mxu0
  %4753 = vdwg.mxu0
  %v4754 = vadd.f32 %v4592, %v4692
  %v4755 = vadd.f32 %v4593, %v4695
  %v4756 = vadd.f32 %v4594, %v4700
  %v4757 = vadd.f32 %v4595, %v4703
  %v4758 = vadd.f32 %v4596, %v4708
  %v4759 = vadd.f32 %v4597, %v4711
  %v4760 = vadd.f32 %v4598, %v4716
  %v4761 = vadd.f32 %v4599, %v4719
  %v4762 = vadd.f32 %v4600, %v4724
  %v4763 = vadd.f32 %v4601, %v4727
  %v4764 = vadd.f32 %v4602, %v4732
  %v4765 = vadd.f32 %v4603, %v4735
  %v4766 = vadd.f32 %v4604, %v4740
  %v4767 = vadd.f32 %v4605, %v4743
  %v4768 = vadd.f32 %v4606, %v4748
  %v4769 = vadd.f32 %v4607, %v4751
  %v4770 = vpack.c.bf16 %v3504, %v3503
  %v4771 = vpack.c.bf16 %v3506, %v3505
  %v4772 = vpack.c.bf16 %v3508, %v3507
  %v4773 = vpack.c.bf16 %v3510, %v3509
  %v4774 = vpack.c.bf16 %v3512, %v3511
  %v4775 = vpack.c.bf16 %v3514, %v3513
  %v4776 = vpack.c.bf16 %v3516, %v3515
  %v4777 = vpack.c.bf16 %v3518, %v3517
  %s4778 = scalar_lea.vmem %s2, 112
  %v4779 = vld [vmem:[%s4778] sm:$0xf]
  %v4780 = vld [vmem:[%s4778 + $0x4] sm:$0xf]
  %v4781 = vld [vmem:[%s4778 + $0x8] sm:$0xf]
  %v4782 = vld [vmem:[%s4778 + $0xc] sm:$0xf]
  %v4787 = vunpack.c.l.b16 %v4779
  %v4788 = vunpack.c.l.b16 %v4780
  %v4789 = vunpack.c.l.b16 %v4781
  %v4790 = vunpack.c.l.b16 %v4782
  %v4791 = vpack.c.b16 %v4788, %v4787
  %v4792 = vpack.c.b16 %v4790, %v4789
  %v4796 = vsel %vm3543, %v4770, 0
  %v4799 = vsel %vm3543, %v4771, 0
  %v4802 = vsel %vm3543, %v4772, 0
  %v4805 = vsel %vm3543, %v4773, 0
  %v4808 = vsel %vm3543, %v4774, 0
  %v4811 = vsel %vm3543, %v4775, 0
  %v4814 = vsel %vm3543, %v4776, 0
  %v4817 = vsel %vm3543, %v4777, 0
  %4819 = vmatprep.subr.bf16.mxu0 0
  %4820 = vmatpush1.bf16.msra.mxu0 %v4791
  %4821 = vmatprep.subr.bf16.mxu0 0
  %4822 = vmatpush1.bf16.msra.mxu0 %v4792
  %4823 = vmatprep.subr.bf16.mxu0 0
  %4824 = vmatpush1.bf16.msra.mxu0 0
  %4825 = vmatprep.subr.bf16.mxu0 0
  %4826 = vmatpush1.bf16.msra.mxu0 0
  %4827 = vmatprep.subr.bf16.mxu0 0
  %4828 = vmatpush1.bf16.msra.mxu0 0
  %4829 = vmatprep.subr.bf16.mxu0 0
  %4830 = vmatpush1.bf16.msra.mxu0 0
  %4831 = vmatprep.subr.bf16.mxu0 0
  %4832 = vmatpush1.bf16.msra.mxu0 0
  %4833 = vmatprep.subr.bf16.mxu0 0
  %4834 = vmatpush1.bf16.msra.mxu0 0
  %4835 = vmatprep.subr.bf16.mxu0 0
  %4836 = vmatpush1.bf16.msra.mxu0 0
  %4837 = vmatprep.subr.bf16.mxu0 0
  %4838 = vmatpush1.bf16.msra.mxu0 0
  %4839 = vmatprep.subr.bf16.mxu0 0
  %4840 = vmatpush1.bf16.msra.mxu0 0
  %4841 = vmatprep.subr.bf16.mxu0 0
  %4842 = vmatpush1.bf16.msra.mxu0 0
  %4843 = vmatprep.subr.bf16.mxu0 0
  %4844 = vmatpush1.bf16.msra.mxu0 0
  %4845 = vmatprep.subr.bf16.mxu0 0
  %4846 = vmatpush1.bf16.msra.mxu0 0
  %4847 = vmatprep.subr.bf16.mxu0 0
  %4848 = vmatpush1.bf16.msra.mxu0 0
  %4849 = vmatprep.subr.bf16.mxu0 0
  %4850 = vmatpush1.bf16.msra.mxu0 0
  %4851 = vmatprep.mubr.bf16.mxu0 0
  %4852 = vmatmul.mubr.bf16.gmra.mrb[0].mxu0 %v4796
  %v4853 = vpop.f32.mrb[0].mxu0
  %v4854 = vadd.f32 0.0, %v4853
  %v4855 = vpop.f32.mrb[0].mxu0
  %v4856 = vpop.f32.mrb[0].mxu0
  %v4857 = vadd.f32 0.0, %v4856
  %v4858 = vpop.f32.mrb[0].mxu0
  %4859 = vmatprep.mubr.bf16.mxu0 0
  %4860 = vmatmul.mubr.bf16.gmra.mrb[0].mxu0 %v4799
  %v4861 = vpop.f32.mrb[0].mxu0
  %v4862 = vadd.f32 0.0, %v4861
  %v4863 = vpop.f32.mrb[0].mxu0
  %v4864 = vpop.f32.mrb[0].mxu0
  %v4865 = vadd.f32 0.0, %v4864
  %v4866 = vpop.f32.mrb[0].mxu0
  %4867 = vmatprep.mubr.bf16.mxu0 0
  %4868 = vmatmul.mubr.bf16.gmra.mrb[0].mxu0 %v4802
  %v4869 = vpop.f32.mrb[0].mxu0
  %v4870 = vadd.f32 0.0, %v4869
  %v4871 = vpop.f32.mrb[0].mxu0
  %v4872 = vpop.f32.mrb[0].mxu0
  %v4873 = vadd.f32 0.0, %v4872
  %v4874 = vpop.f32.mrb[0].mxu0
  %4875 = vmatprep.mubr.bf16.mxu0 0
  %4876 = vmatmul.mubr.bf16.gmra.mrb[0].mxu0 %v4805
  %v4877 = vpop.f32.mrb[0].mxu0
  %v4878 = vadd.f32 0.0, %v4877
  %v4879 = vpop.f32.mrb[0].mxu0
  %v4880 = vpop.f32.mrb[0].mxu0
  %v4881 = vadd.f32 0.0, %v4880
  %v4882 = vpop.f32.mrb[0].mxu0
  %4883 = vmatprep.mubr.bf16.mxu0 0
  %4884 = vmatmul.mubr.bf16.gmra.mrb[0].mxu0 %v4808
  %v4885 = vpop.f32.mrb[0].mxu0
  %v4886 = vadd.f32 0.0, %v4885
  %v4887 = vpop.f32.mrb[0].mxu0
  %v4888 = vpop.f32.mrb[0].mxu0
  %v4889 = vadd.f32 0.0, %v4888
  %v4890 = vpop.f32.mrb[0].mxu0
  %4891 = vmatprep.mubr.bf16.mxu0 0
  %4892 = vmatmul.mubr.bf16.gmra.mrb[0].mxu0 %v4811
  %v4893 = vpop.f32.mrb[0].mxu0
  %v4894 = vadd.f32 0.0, %v4893
  %v4895 = vpop.f32.mrb[0].mxu0
  %v4896 = vpop.f32.mrb[0].mxu0
  %v4897 = vadd.f32 0.0, %v4896
  %v4898 = vpop.f32.mrb[0].mxu0
  %4899 = vmatprep.mubr.bf16.mxu0 0
  %4900 = vmatmul.mubr.bf16.gmra.mrb[0].mxu0 %v4814
  %v4901 = vpop.f32.mrb[0].mxu0
  %v4902 = vadd.f32 0.0, %v4901
  %v4903 = vpop.f32.mrb[0].mxu0
  %v4904 = vpop.f32.mrb[0].mxu0
  %v4905 = vadd.f32 0.0, %v4904
  %v4906 = vpop.f32.mrb[0].mxu0
  %4907 = vmatprep.mubr.bf16.mxu0 0
  %4908 = vmatmul.mubr.bf16.gmra.mrb[0].mxu0 %v4817
  %v4909 = vpop.f32.mrb[0].mxu0
  %v4910 = vadd.f32 0.0, %v4909
  %v4911 = vpop.f32.mrb[0].mxu0
  %v4912 = vpop.f32.mrb[0].mxu0
  %v4913 = vadd.f32 0.0, %v4912
  %v4914 = vpop.f32.mrb[0].mxu0
  %4915 = vdwg.mxu0
  %v4916 = vadd.f32 %v4754, %v4854
  %v4917 = vadd.f32 %v4755, %v4857
  %v4918 = vadd.f32 %v4756, %v4862
  %v4919 = vadd.f32 %v4757, %v4865
  %v4920 = vadd.f32 %v4758, %v4870
  %v4921 = vadd.f32 %v4759, %v4873
  %v4922 = vadd.f32 %v4760, %v4878
  %v4923 = vadd.f32 %v4761, %v4881
  %v4924 = vadd.f32 %v4762, %v4886
  %v4925 = vadd.f32 %v4763, %v4889
  %v4926 = vadd.f32 %v4764, %v4894
  %v4927 = vadd.f32 %v4765, %v4897
  %v4928 = vadd.f32 %v4766, %v4902
  %v4929 = vadd.f32 %v4767, %v4905
  %v4930 = vadd.f32 %v4768, %v4910
  %v4931 = vadd.f32 %v4769, %v4913
  %v4932 = vld [vmem:[#allocation2] sm:$0xff]
  %v4933 = vld [vmem:[#allocation2 + $0x8] sm:$0xff]
  %v4934 = vld [vmem:[#allocation2 + $0x10] sm:$0xff]
  %v4935 = vld [vmem:[#allocation2 + $0x18] sm:$0xff]
  %v4936 = vld [vmem:[#allocation2 + $0x20] sm:$0xff]
  %v4937 = vld [vmem:[#allocation2 + $0x28] sm:$0xff]
  %v4938 = vld [vmem:[#allocation2 + $0x30] sm:$0xff]
  %v4939 = vld [vmem:[#allocation2 + $0x38] sm:$0xff]
  %v4940 = vld [vmem:[#allocation2 + $0x40] sm:$0xff]
  %v4941 = vld [vmem:[#allocation2 + $0x48] sm:$0xff]
  %v4942 = vld [vmem:[#allocation2 + $0x50] sm:$0xff]
  %v4943 = vld [vmem:[#allocation2 + $0x58] sm:$0xff]
  %v4944 = vld [vmem:[#allocation2 + $0x60] sm:$0xff]
  %v4945 = vld [vmem:[#allocation2 + $0x68] sm:$0xff]
  %v4946 = vld [vmem:[#allocation2 + $0x70] sm:$0xff]
  %v4947 = vld [vmem:[#allocation2 + $0x78] sm:$0xff]
  %v4948 = vadd.f32 %v4932, %v4916
  %v4949 = vadd.f32 %v4933, %v4917
  %v4950 = vadd.f32 %v4934, %v4918
  %v4951 = vadd.f32 %v4935, %v4919
  %v4952 = vadd.f32 %v4936, %v4920
  %v4953 = vadd.f32 %v4937, %v4921
  %v4954 = vadd.f32 %v4938, %v4922
  %v4955 = vadd.f32 %v4939, %v4923
  %v4956 = vadd.f32 %v4940, %v4924
  %v4957 = vadd.f32 %v4941, %v4925
  %v4958 = vadd.f32 %v4942, %v4926
  %v4959 = vadd.f32 %v4943, %v4927
  %v4960 = vadd.f32 %v4944, %v4928
  %v4961 = vadd.f32 %v4945, %v4929
  %v4962 = vadd.f32 %v4946, %v4930
  %v4963 = vadd.f32 %v4947, %v4931
  %4964 = vst [vmem:[#allocation2] sm:$0xff] %v4948
  %4965 = vst [vmem:[#allocation2 + $0x8] sm:$0xff] %v4949
  %4966 = vst [vmem:[#allocation2 + $0x10] sm:$0xff] %v4950
  %4967 = vst [vmem:[#allocation2 + $0x18] sm:$0xff] %v4951
  %4968 = vst [vmem:[#allocation2 + $0x20] sm:$0xff] %v4952
  %4969 = vst [vmem:[#allocation2 + $0x28] sm:$0xff] %v4953
  %4970 = vst [vmem:[#allocation2 + $0x30] sm:$0xff] %v4954
  %4971 = vst [vmem:[#allocation2 + $0x38] sm:$0xff] %v4955
  %4972 = vst [vmem:[#allocation2 + $0x40] sm:$0xff] %v4956
  %4973 = vst [vmem:[#allocation2 + $0x48] sm:$0xff] %v4957
  %4974 = vst [vmem:[#allocation2 + $0x50] sm:$0xff] %v4958
  %4975 = vst [vmem:[#allocation2 + $0x58] sm:$0xff] %v4959
  %4976 = vst [vmem:[#allocation2 + $0x60] sm:$0xff] %v4960
  %4977 = vst [vmem:[#allocation2 + $0x68] sm:$0xff] %v4961
  %4978 = vst [vmem:[#allocation2 + $0x70] sm:$0xff] %v4962
  %4979 = vst [vmem:[#allocation2 + $0x78] sm:$0xff] %v4963
  // Predicated region
  $region18: #{gcn_with_kan_forward.4} parent=0 // pred_check
    %p4980 = pneg %p15
  $region19: #{gcn_with_kan_forward.4} parent=0 // pred_check_branch
    %4982 = sbr.rel (%p4980) target = $region21
  $region20: #{gcn_with_kan_forward.4} parent=0 // pred_region
    %v4983 = vld [vmem:[#allocation2] sm:$0xff]
    %v4984 = vld [vmem:[#allocation2 + $0x8] sm:$0xff]
    %v4985 = vld [vmem:[#allocation2 + $0x10] sm:$0xff]
    %v4986 = vld [vmem:[#allocation2 + $0x18] sm:$0xff]
    %v4987 = vld [vmem:[#allocation2 + $0x20] sm:$0xff]
    %v4988 = vld [vmem:[#allocation2 + $0x28] sm:$0xff]
    %v4989 = vld [vmem:[#allocation2 + $0x30] sm:$0xff]
    %v4990 = vld [vmem:[#allocation2 + $0x38] sm:$0xff]
    %v4991 = vld [vmem:[#allocation2 + $0x40] sm:$0xff]
    %v4992 = vld [vmem:[#allocation2 + $0x48] sm:$0xff]
    %v4993 = vld [vmem:[#allocation2 + $0x50] sm:$0xff]
    %v4994 = vld [vmem:[#allocation2 + $0x58] sm:$0xff]
    %v4995 = vld [vmem:[#allocation2 + $0x60] sm:$0xff]
    %v4996 = vld [vmem:[#allocation2 + $0x68] sm:$0xff]
    %v4997 = vld [vmem:[#allocation2 + $0x70] sm:$0xff]
    %v4998 = vld [vmem:[#allocation2 + $0x78] sm:$0xff]
    %v4999 = vpack.c.bf16 %v4984, %v4983
    %v5000 = vpack.c.bf16 %v4986, %v4985
    %v5001 = vpack.c.bf16 %v4988, %v4987
    %v5002 = vpack.c.bf16 %v4990, %v4989
    %v5003 = vpack.c.bf16 %v4992, %v4991
    %v5004 = vpack.c.bf16 %v4994, %v4993
    %v5005 = vpack.c.bf16 %v4996, %v4995
    %v5006 = vpack.c.bf16 %v4998, %v4997
    %v5015 = vunpack.c.l.b16 %v4999
    %v5016 = vunpack.c.h.b16 %v4999
    %v5017 = vunpack.c.l.b16 %v5000
    %v5018 = vunpack.c.h.b16 %v5000
    %v5019 = vunpack.c.l.b16 %v5001
    %v5020 = vunpack.c.h.b16 %v5001
    %v5021 = vunpack.c.l.b16 %v5002
    %v5022 = vunpack.c.h.b16 %v5002
    %v5023 = vunpack.c.l.b16 %v5003
    %v5024 = vunpack.c.h.b16 %v5003
    %v5025 = vunpack.c.l.b16 %v5004
    %v5026 = vunpack.c.h.b16 %v5004
    %v5027 = vunpack.c.l.b16 %v5005
    %v5028 = vunpack.c.h.b16 %v5005
    %v5029 = vunpack.c.l.b16 %v5006
    %v5030 = vunpack.c.h.b16 %v5006
    %v5031 = vpack.c.b16 %v5015, %v5015
    %v5032 = vpack.c.b16 %v5016, %v5016
    %v5033 = vpack.c.b16 %v5017, %v5017
    %v5034 = vpack.c.b16 %v5018, %v5018
    %v5035 = vpack.c.b16 %v5019, %v5019
    %v5036 = vpack.c.b16 %v5020, %v5020
    %v5037 = vpack.c.b16 %v5021, %v5021
    %v5038 = vpack.c.b16 %v5022, %v5022
    %v5039 = vpack.c.b16 %v5023, %v5023
    %v5040 = vpack.c.b16 %v5024, %v5024
    %v5041 = vpack.c.b16 %v5025, %v5025
    %v5042 = vpack.c.b16 %v5026, %v5026
    %v5043 = vpack.c.b16 %v5027, %v5027
    %v5044 = vpack.c.b16 %v5028, %v5028
    %v5045 = vpack.c.b16 %v5029, %v5029
    %v5046 = vpack.c.b16 %v5030, %v5030
    %5063 = vst [vmem:[%s3] sm:$0xf] %v5031
    %5064 = vst [vmem:[%s3 + $0x4] sm:$0xf] %v5032
    %5065 = vst [vmem:[%s3 + $0x8] sm:$0xf] %v5033
    %5066 = vst [vmem:[%s3 + $0xc] sm:$0xf] %v5034
    %5067 = vst [vmem:[%s3 + $0x10] sm:$0xf] %v5035
    %5068 = vst [vmem:[%s3 + $0x14] sm:$0xf] %v5036
    %5069 = vst [vmem:[%s3 + $0x18] sm:$0xf] %v5037
    %5070 = vst [vmem:[%s3 + $0x1c] sm:$0xf] %v5038
    %5071 = vst [vmem:[%s3 + $0x20] sm:$0xf] %v5039
    %5072 = vst [vmem:[%s3 + $0x24] sm:$0xf] %v5040
    %5073 = vst [vmem:[%s3 + $0x28] sm:$0xf] %v5041
    %5074 = vst [vmem:[%s3 + $0x2c] sm:$0xf] %v5042
    %5075 = vst [vmem:[%s3 + $0x30] sm:$0xf] %v5043
    %5076 = vst [vmem:[%s3 + $0x34] sm:$0xf] %v5044
    %5077 = vst [vmem:[%s3 + $0x38] sm:$0xf] %v5045
    %5078 = vst [vmem:[%s3 + $0x3c] sm:$0xf] %v5046
  $region21: #{gcn_with_kan_forward.4} parent=0 // pred_fallthru
    _
  // Predicated region
  $region22: #{gcn_with_kan_forward.4} parent=0 // pred_check
    _
  $region23: #{gcn_with_kan_forward.4} parent=0 // pred_check_branch
    %5080 = sbr.rel (0) target = $region25
  $region24: #{gcn_with_kan_forward.4} parent=0 // pred_region
    _
  $region25: #{gcn_with_kan_forward.4} parent=0 // pred_fallthru
    _
  // Predicated region
  $region26: #{gcn_with_kan_forward.4} parent=0 // pred_check
    _
  $region27: #{gcn_with_kan_forward.4} parent=0 // pred_check_branch
    %5082 = sbr.rel (0) target = $region29
  $region28: #{gcn_with_kan_forward.4} parent=0 // pred_region
    _
  $region29: #{gcn_with_kan_forward.4} parent=0 // pred_fallthru
    _

// kernel: gcn_with_kan_forward.6
$region0: #{gcn_with_kan_forward.6}
  #allocation0 [shape = 'u32[]', space=smem, size = 0x4, offset = 0x4, fixed_abs, tag = 'smem constant byte address 0x4 - core index']
  #allocation1 [shape = 'u32[144,128]{1,0:T(1,128)}', space=vmem, size = 0x12000, scoped, tag = 'internal scratch']
  #allocation2 [shape = 'f32[128,128]{1,0:T(8,128)}', space=vmem, size = 0x10000, scoped, tag = 'scratch operand']
  %s0 = inlined_call_operand.vmem [shape: f32[128,128], index: 0, kind: input, shape index: {}]
  %s1 = inlined_call_operand.vmem [shape: bf16[128,128], index: 1, kind: input, shape index: {}]
  %s2 = inlined_call_operand.vmem [shape: bf16[8,128,128], index: 2, kind: input, shape index: {}]
  %s3 = inlined_call_operand.vmem [shape: bf16[128,128], index: 3, kind: output, shape index: {}]
  %s4 = sld [smem:[#allocation0]]
  $region30: #{gcn_with_kan_forward.6} parent=0
    _
  %s6 = ssub.s32 1, %s4
  %s7 = scalar_select 0, %s6, %s4
  // Predicated region
  $region2: #{gcn_with_kan_forward.6} parent=0 // pred_check
    _
  $region3: #{gcn_with_kan_forward.6} parent=0 // pred_check_branch
    %9 = sbr.rel (0) target = $region5
  $region4: #{gcn_with_kan_forward.6} parent=0 // pred_region
    _
  $region5: #{gcn_with_kan_forward.6} parent=0 // pred_fallthru
    _
  // Predicated region
  $region6: #{gcn_with_kan_forward.6} parent=0 // pred_check
    _
  $region7: #{gcn_with_kan_forward.6} parent=0 // pred_check_branch
    %11 = sbr.rel (0) target = $region9
  $region8: #{gcn_with_kan_forward.6} parent=0 // pred_region
    _
  $region9: #{gcn_with_kan_forward.6} parent=0 // pred_fallthru
    _
  // Predicated region
  $region10: #{gcn_with_kan_forward.6} parent=0 // pred_check
    _
  $region11: #{gcn_with_kan_forward.6} parent=0 // pred_check_branch
    %13 = sbr.rel (0) target = $region13
  $region12: #{gcn_with_kan_forward.6} parent=0 // pred_region
    _
  $region13: #{gcn_with_kan_forward.6} parent=0 // pred_fallthru
    _
  %p15 = scmp.eq.s32.totalorder 0, 0
  // Predicated region
  $region14: #{gcn_with_kan_forward.6} parent=0 // pred_check
    %p16 = pneg %p15
  $region15: #{gcn_with_kan_forward.6} parent=0 // pred_check_branch
    %18 = sbr.rel (%p16) target = $region17
  $region16: #{gcn_with_kan_forward.6} parent=0 // pred_region
    %19 = vst [vmem:[#allocation2] sm:$0xff] 0.0
    %20 = vst [vmem:[#allocation2 + $0x8] sm:$0xff] 0.0
    %21 = vst [vmem:[#allocation2 + $0x10] sm:$0xff] 0.0
    %22 = vst [vmem:[#allocation2 + $0x18] sm:$0xff] 0.0
    %23 = vst [vmem:[#allocation2 + $0x20] sm:$0xff] 0.0
    %24 = vst [vmem:[#allocation2 + $0x28] sm:$0xff] 0.0
    %25 = vst [vmem:[#allocation2 + $0x30] sm:$0xff] 0.0
    %26 = vst [vmem:[#allocation2 + $0x38] sm:$0xff] 0.0
    %27 = vst [vmem:[#allocation2 + $0x40] sm:$0xff] 0.0
    %28 = vst [vmem:[#allocation2 + $0x48] sm:$0xff] 0.0
    %29 = vst [vmem:[#allocation2 + $0x50] sm:$0xff] 0.0
    %30 = vst [vmem:[#allocation2 + $0x58] sm:$0xff] 0.0
    %31 = vst [vmem:[#allocation2 + $0x60] sm:$0xff] 0.0
    %32 = vst [vmem:[#allocation2 + $0x68] sm:$0xff] 0.0
    %33 = vst [vmem:[#allocation2 + $0x70] sm:$0xff] 0.0
    %34 = vst [vmem:[#allocation2 + $0x78] sm:$0xff] 0.0
  $region17: #{gcn_with_kan_forward.6} parent=0 // pred_fallthru
    _
  %v35 = vld [vmem:[%s0] sm:$0xff]
  %v36 = vld [vmem:[%s0 + $0x8] sm:$0xff]
  %v37 = vld [vmem:[%s0 + $0x10] sm:$0xff]
  %v38 = vld [vmem:[%s0 + $0x18] sm:$0xff]
  %v39 = vld [vmem:[%s0 + $0x20] sm:$0xff]
  %v40 = vld [vmem:[%s0 + $0x28] sm:$0xff]
  %v41 = vld [vmem:[%s0 + $0x30] sm:$0xff]
  %v42 = vld [vmem:[%s0 + $0x38] sm:$0xff]
  %v43 = vld [vmem:[%s0 + $0x40] sm:$0xff]
  %v44 = vld [vmem:[%s0 + $0x48] sm:$0xff]
  %v45 = vld [vmem:[%s0 + $0x50] sm:$0xff]
  %v46 = vld [vmem:[%s0 + $0x58] sm:$0xff]
  %v47 = vld [vmem:[%s0 + $0x60] sm:$0xff]
  %v48 = vld [vmem:[%s0 + $0x68] sm:$0xff]
  %v49 = vld [vmem:[%s0 + $0x70] sm:$0xff]
  %v50 = vld [vmem:[%s0 + $0x78] sm:$0xff]
  %v51 = vsub.f32 0.0, %v35
  %v52 = vsub.f32 0.0, %v36
  %v53 = vsub.f32 0.0, %v37
  %v54 = vsub.f32 0.0, %v38
  %v55 = vsub.f32 0.0, %v39
  %v56 = vsub.f32 0.0, %v40
  %v57 = vsub.f32 0.0, %v41
  %v58 = vsub.f32 0.0, %v42
  %v59 = vsub.f32 0.0, %v43
  %v60 = vsub.f32 0.0, %v44
  %v61 = vsub.f32 0.0, %v45
  %v62 = vsub.f32 0.0, %v46
  %v63 = vsub.f32 0.0, %v47
  %v64 = vsub.f32 0.0, %v48
  %v65 = vsub.f32 0.0, %v49
  %v66 = vsub.f32 0.0, %v50
  %v67 = vmul.f32 %v51, 1.442695
  %v68 = vpow.pop %v67
  %v69 = vmul.f32 %v52, 1.442695
  %v70 = vpow.pop %v69
  %v71 = vmul.f32 %v53, 1.442695
  %v72 = vpow.pop %v71
  %v73 = vmul.f32 %v54, 1.442695
  %v74 = vpow.pop %v73
  %v75 = vmul.f32 %v55, 1.442695
  %v76 = vpow.pop %v75
  %v77 = vmul.f32 %v56, 1.442695
  %v78 = vpow.pop %v77
  %v79 = vmul.f32 %v57, 1.442695
  %v80 = vpow.pop %v79
  %v81 = vmul.f32 %v58, 1.442695
  %v82 = vpow.pop %v81
  %v83 = vmul.f32 %v59, 1.442695
  %v84 = vpow.pop %v83
  %v85 = vmul.f32 %v60, 1.442695
  %v86 = vpow.pop %v85
  %v87 = vmul.f32 %v61, 1.442695
  %v88 = vpow.pop %v87
  %v89 = vmul.f32 %v62, 1.442695
  %v90 = vpow.pop %v89
  %v91 = vmul.f32 %v63, 1.442695
  %v92 = vpow.pop %v91
  %v93 = vmul.f32 %v64, 1.442695
  %v94 = vpow.pop %v93
  %v95 = vmul.f32 %v65, 1.442695
  %v96 = vpow.pop %v95
  %v97 = vmul.f32 %v66, 1.442695
  %v98 = vpow.pop %v97
  %v99 = vadd.f32 %v68, 1.0
  %v100 = vadd.f32 %v70, 1.0
  %v101 = vadd.f32 %v72, 1.0
  %v102 = vadd.f32 %v74, 1.0
  %v103 = vadd.f32 %v76, 1.0
  %v104 = vadd.f32 %v78, 1.0
  %v105 = vadd.f32 %v80, 1.0
  %v106 = vadd.f32 %v82, 1.0
  %v107 = vadd.f32 %v84, 1.0
  %v108 = vadd.f32 %v86, 1.0
  %v109 = vadd.f32 %v88, 1.0
  %v110 = vadd.f32 %v90, 1.0
  %v111 = vadd.f32 %v92, 1.0
  %v112 = vadd.f32 %v94, 1.0
  %v113 = vadd.f32 %v96, 1.0
  %v114 = vadd.f32 %v98, 1.0
  %v115 = vrcp.pop %v99
  %v116 = vrcp.pop %v100
  %v117 = vrcp.pop %v101
  %v118 = vrcp.pop %v102
  %v119 = vrcp.pop %v103
  %v120 = vrcp.pop %v104
  %v121 = vrcp.pop %v105
  %v122 = vrcp.pop %v106
  %v123 = vrcp.pop %v107
  %v124 = vrcp.pop %v108
  %v125 = vrcp.pop %v109
  %v126 = vrcp.pop %v110
  %v127 = vrcp.pop %v111
  %v128 = vrcp.pop %v112
  %v129 = vrcp.pop %v113
  %v130 = vrcp.pop %v114
  %v131 = vmul.f32 %v35, %v115
  %v132 = vmul.f32 %v36, %v116
  %v133 = vmul.f32 %v37, %v117
  %v134 = vmul.f32 %v38, %v118
  %v135 = vmul.f32 %v39, %v119
  %v136 = vmul.f32 %v40, %v120
  %v137 = vmul.f32 %v41, %v121
  %v138 = vmul.f32 %v42, %v122
  %v139 = vmul.f32 %v43, %v123
  %v140 = vmul.f32 %v44, %v124
  %v141 = vmul.f32 %v45, %v125
  %v142 = vmul.f32 %v46, %v126
  %v143 = vmul.f32 %v47, %v127
  %v144 = vmul.f32 %v48, %v128
  %v145 = vmul.f32 %v49, %v129
  %v146 = vmul.f32 %v50, %v130
  %v147 = vpack.c.bf16 %v132, %v131
  %v148 = vpack.c.bf16 %v134, %v133
  %v149 = vpack.c.bf16 %v136, %v135
  %v150 = vpack.c.bf16 %v138, %v137
  %v151 = vpack.c.bf16 %v140, %v139
  %v152 = vpack.c.bf16 %v142, %v141
  %v153 = vpack.c.bf16 %v144, %v143
  %v154 = vpack.c.bf16 %v146, %v145
  %v155 = vld [vmem:[%s1] sm:$0xf]
  %v156 = vld [vmem:[%s1 + $0x4] sm:$0xf]
  %v157 = vld [vmem:[%s1 + $0x8] sm:$0xf]
  %v158 = vld [vmem:[%s1 + $0xc] sm:$0xf]
  %v159 = vld [vmem:[%s1 + $0x10] sm:$0xf]
  %v160 = vld [vmem:[%s1 + $0x14] sm:$0xf]
  %v161 = vld [vmem:[%s1 + $0x18] sm:$0xf]
  %v162 = vld [vmem:[%s1 + $0x1c] sm:$0xf]
  %v163 = vld [vmem:[%s1 + $0x20] sm:$0xf]
  %v164 = vld [vmem:[%s1 + $0x24] sm:$0xf]
  %v165 = vld [vmem:[%s1 + $0x28] sm:$0xf]
  %v166 = vld [vmem:[%s1 + $0x2c] sm:$0xf]
  %v167 = vld [vmem:[%s1 + $0x30] sm:$0xf]
  %v168 = vld [vmem:[%s1 + $0x34] sm:$0xf]
  %v169 = vld [vmem:[%s1 + $0x38] sm:$0xf]
  %v170 = vld [vmem:[%s1 + $0x3c] sm:$0xf]
  %vm171 = vcmp.ge.f32.partialorder %v35, -2.2
  %vm172 = vcmp.ge.f32.partialorder %v36, -2.2
  %vm173 = vcmp.ge.f32.partialorder %v37, -2.2
  %vm174 = vcmp.ge.f32.partialorder %v38, -2.2
  %vm175 = vcmp.ge.f32.partialorder %v39, -2.2
  %vm176 = vcmp.ge.f32.partialorder %v40, -2.2
  %vm177 = vcmp.ge.f32.partialorder %v41, -2.2
  %vm178 = vcmp.ge.f32.partialorder %v42, -2.2
  %vm179 = vcmp.ge.f32.partialorder %v43, -2.2
  %vm180 = vcmp.ge.f32.partialorder %v44, -2.2
  %vm181 = vcmp.ge.f32.partialorder %v45, -2.2
  %vm182 = vcmp.ge.f32.partialorder %v46, -2.2
  %vm183 = vcmp.ge.f32.partialorder %v47, -2.2
  %vm184 = vcmp.ge.f32.partialorder %v48, -2.2
  %vm185 = vcmp.ge.f32.partialorder %v49, -2.2
  %vm186 = vcmp.ge.f32.partialorder %v50, -2.2
  %vm187 = vcmp.lt.f32.partialorder %v35, -1.8
  %vm188 = vcmp.lt.f32.partialorder %v36, -1.8
  %vm189 = vcmp.lt.f32.partialorder %v37, -1.8
  %vm190 = vcmp.lt.f32.partialorder %v38, -1.8
  %vm191 = vcmp.lt.f32.partialorder %v39, -1.8
  %vm192 = vcmp.lt.f32.partialorder %v40, -1.8
  %vm193 = vcmp.lt.f32.partialorder %v41, -1.8
  %vm194 = vcmp.lt.f32.partialorder %v42, -1.8
  %vm195 = vcmp.lt.f32.partialorder %v43, -1.8
  %vm196 = vcmp.lt.f32.partialorder %v44, -1.8
  %vm197 = vcmp.lt.f32.partialorder %v45, -1.8
  %vm198 = vcmp.lt.f32.partialorder %v46, -1.8
  %vm199 = vcmp.lt.f32.partialorder %v47, -1.8
  %vm200 = vcmp.lt.f32.partialorder %v48, -1.8
  %vm201 = vcmp.lt.f32.partialorder %v49, -1.8
  %vm202 = vcmp.lt.f32.partialorder %v50, -1.8
  %vm203 = vmand %vm171, %vm187
  %vm204 = vmand %vm172, %vm188
  %vm205 = vmand %vm173, %vm189
  %vm206 = vmand %vm174, %vm190
  %vm207 = vmand %vm175, %vm191
  %vm208 = vmand %vm176, %vm192
  %vm209 = vmand %vm177, %vm193
  %vm210 = vmand %vm178, %vm194
  %vm211 = vmand %vm179, %vm195
  %vm212 = vmand %vm180, %vm196
  %vm213 = vmand %vm181, %vm197
  %vm214 = vmand %vm182, %vm198
  %vm215 = vmand %vm183, %vm199
  %vm216 = vmand %vm184, %vm200
  %vm217 = vmand %vm185, %vm201
  %vm218 = vmand %vm186, %vm202
  %v219 = vsel %vm203, 1, 0
  %v220 = vsel %vm204, 1, 0
  %v221 = vsel %vm205, 1, 0
  %v222 = vsel %vm206, 1, 0
  %v223 = vsel %vm207, 1, 0
  %v224 = vsel %vm208, 1, 0
  %v225 = vsel %vm209, 1, 0
  %v226 = vsel %vm210, 1, 0
  %v227 = vsel %vm211, 1, 0
  %v228 = vsel %vm212, 1, 0
  %v229 = vsel %vm213, 1, 0
  %v230 = vsel %vm214, 1, 0
  %v231 = vsel %vm215, 1, 0
  %v232 = vsel %vm216, 1, 0
  %v233 = vsel %vm217, 1, 0
  %v234 = vsel %vm218, 1, 0
  %v235 = vcvt.s32.f32 %v219
  %v236 = vcvt.s32.f32 %v220
  %v237 = vcvt.s32.f32 %v221
  %v238 = vcvt.s32.f32 %v222
  %v239 = vcvt.s32.f32 %v223
  %v240 = vcvt.s32.f32 %v224
  %v241 = vcvt.s32.f32 %v225
  %v242 = vcvt.s32.f32 %v226
  %v243 = vcvt.s32.f32 %v227
  %v244 = vcvt.s32.f32 %v228
  %v245 = vcvt.s32.f32 %v229
  %v246 = vcvt.s32.f32 %v230
  %v247 = vcvt.s32.f32 %v231
  %v248 = vcvt.s32.f32 %v232
  %v249 = vcvt.s32.f32 %v233
  %v250 = vcvt.s32.f32 %v234
  %vm251 = vcmp.ge.f32.partialorder %v35, -1.8
  %vm252 = vcmp.ge.f32.partialorder %v36, -1.8
  %vm253 = vcmp.ge.f32.partialorder %v37, -1.8
  %vm254 = vcmp.ge.f32.partialorder %v38, -1.8
  %vm255 = vcmp.ge.f32.partialorder %v39, -1.8
  %vm256 = vcmp.ge.f32.partialorder %v40, -1.8
  %vm257 = vcmp.ge.f32.partialorder %v41, -1.8
  %vm258 = vcmp.ge.f32.partialorder %v42, -1.8
  %vm259 = vcmp.ge.f32.partialorder %v43, -1.8
  %vm260 = vcmp.ge.f32.partialorder %v44, -1.8
  %vm261 = vcmp.ge.f32.partialorder %v45, -1.8
  %vm262 = vcmp.ge.f32.partialorder %v46, -1.8
  %vm263 = vcmp.ge.f32.partialorder %v47, -1.8
  %vm264 = vcmp.ge.f32.partialorder %v48, -1.8
  %vm265 = vcmp.ge.f32.partialorder %v49, -1.8
  %vm266 = vcmp.ge.f32.partialorder %v50, -1.8
  %vm267 = vcmp.lt.f32.partialorder %v35, -1.4
  %vm268 = vcmp.lt.f32.partialorder %v36, -1.4
  %vm269 = vcmp.lt.f32.partialorder %v37, -1.4
  %vm270 = vcmp.lt.f32.partialorder %v38, -1.4
  %vm271 = vcmp.lt.f32.partialorder %v39, -1.4
  %vm272 = vcmp.lt.f32.partialorder %v40, -1.4
  %vm273 = vcmp.lt.f32.partialorder %v41, -1.4
  %vm274 = vcmp.lt.f32.partialorder %v42, -1.4
  %vm275 = vcmp.lt.f32.partialorder %v43, -1.4
  %vm276 = vcmp.lt.f32.partialorder %v44, -1.4
  %vm277 = vcmp.lt.f32.partialorder %v45, -1.4
  %vm278 = vcmp.lt.f32.partialorder %v46, -1.4
  %vm279 = vcmp.lt.f32.partialorder %v47, -1.4
  %vm280 = vcmp.lt.f32.partialorder %v48, -1.4
  %vm281 = vcmp.lt.f32.partialorder %v49, -1.4
  %vm282 = vcmp.lt.f32.partialorder %v50, -1.4
  %vm283 = vmand %vm251, %vm267
  %vm284 = vmand %vm252, %vm268
  %vm285 = vmand %vm253, %vm269
  %vm286 = vmand %vm254, %vm270
  %vm287 = vmand %vm255, %vm271
  %vm288 = vmand %vm256, %vm272
  %vm289 = vmand %vm257, %vm273
  %vm290 = vmand %vm258, %vm274
  %vm291 = vmand %vm259, %vm275
  %vm292 = vmand %vm260, %vm276
  %vm293 = vmand %vm261, %vm277
  %vm294 = vmand %vm262, %vm278
  %vm295 = vmand %vm263, %vm279
  %vm296 = vmand %vm264, %vm280
  %vm297 = vmand %vm265, %vm281
  %vm298 = vmand %vm266, %vm282
  %v299 = vsel %vm283, 1, 0
  %v300 = vsel %vm284, 1, 0
  %v301 = vsel %vm285, 1, 0
  %v302 = vsel %vm286, 1, 0
  %v303 = vsel %vm287, 1, 0
  %v304 = vsel %vm288, 1, 0
  %v305 = vsel %vm289, 1, 0
  %v306 = vsel %vm290, 1, 0
  %v307 = vsel %vm291, 1, 0
  %v308 = vsel %vm292, 1, 0
  %v309 = vsel %vm293, 1, 0
  %v310 = vsel %vm294, 1, 0
  %v311 = vsel %vm295, 1, 0
  %v312 = vsel %vm296, 1, 0
  %v313 = vsel %vm297, 1, 0
  %v314 = vsel %vm298, 1, 0
  %v315 = vcvt.s32.f32 %v299
  %v316 = vcvt.s32.f32 %v300
  %v317 = vcvt.s32.f32 %v301
  %v318 = vcvt.s32.f32 %v302
  %v319 = vcvt.s32.f32 %v303
  %v320 = vcvt.s32.f32 %v304
  %v321 = vcvt.s32.f32 %v305
  %v322 = vcvt.s32.f32 %v306
  %v323 = vcvt.s32.f32 %v307
  %v324 = vcvt.s32.f32 %v308
  %v325 = vcvt.s32.f32 %v309
  %v326 = vcvt.s32.f32 %v310
  %v327 = vcvt.s32.f32 %v311
  %v328 = vcvt.s32.f32 %v312
  %v329 = vcvt.s32.f32 %v313
  %v330 = vcvt.s32.f32 %v314
  %vm331 = vcmp.ge.f32.partialorder %v35, -1.4
  %vm332 = vcmp.ge.f32.partialorder %v36, -1.4
  %vm333 = vcmp.ge.f32.partialorder %v37, -1.4
  %vm334 = vcmp.ge.f32.partialorder %v38, -1.4
  %vm335 = vcmp.ge.f32.partialorder %v39, -1.4
  %vm336 = vcmp.ge.f32.partialorder %v40, -1.4
  %vm337 = vcmp.ge.f32.partialorder %v41, -1.4
  %vm338 = vcmp.ge.f32.partialorder %v42, -1.4
  %vm339 = vcmp.ge.f32.partialorder %v43, -1.4
  %vm340 = vcmp.ge.f32.partialorder %v44, -1.4
  %vm341 = vcmp.ge.f32.partialorder %v45, -1.4
  %vm342 = vcmp.ge.f32.partialorder %v46, -1.4
  %vm343 = vcmp.ge.f32.partialorder %v47, -1.4
  %vm344 = vcmp.ge.f32.partialorder %v48, -1.4
  %vm345 = vcmp.ge.f32.partialorder %v49, -1.4
  %vm346 = vcmp.ge.f32.partialorder %v50, -1.4
  %vm347 = vcmp.lt.f32.partialorder %v35, -1.0
  %vm348 = vcmp.lt.f32.partialorder %v36, -1.0
  %vm349 = vcmp.lt.f32.partialorder %v37, -1.0
  %vm350 = vcmp.lt.f32.partialorder %v38, -1.0
  %vm351 = vcmp.lt.f32.partialorder %v39, -1.0
  %vm352 = vcmp.lt.f32.partialorder %v40, -1.0
  %vm353 = vcmp.lt.f32.partialorder %v41, -1.0
  %vm354 = vcmp.lt.f32.partialorder %v42, -1.0
  %vm355 = vcmp.lt.f32.partialorder %v43, -1.0
  %vm356 = vcmp.lt.f32.partialorder %v44, -1.0
  %vm357 = vcmp.lt.f32.partialorder %v45, -1.0
  %vm358 = vcmp.lt.f32.partialorder %v46, -1.0
  %vm359 = vcmp.lt.f32.partialorder %v47, -1.0
  %vm360 = vcmp.lt.f32.partialorder %v48, -1.0
  %vm361 = vcmp.lt.f32.partialorder %v49, -1.0
  %vm362 = vcmp.lt.f32.partialorder %v50, -1.0
  %vm363 = vmand %vm331, %vm347
  %vm364 = vmand %vm332, %vm348
  %vm365 = vmand %vm333, %vm349
  %vm366 = vmand %vm334, %vm350
  %vm367 = vmand %vm335, %vm351
  %vm368 = vmand %vm336, %vm352
  %vm369 = vmand %vm337, %vm353
  %vm370 = vmand %vm338, %vm354
  %vm371 = vmand %vm339, %vm355
  %vm372 = vmand %vm340, %vm356
  %vm373 = vmand %vm341, %vm357
  %vm374 = vmand %vm342, %vm358
  %vm375 = vmand %vm343, %vm359
  %vm376 = vmand %vm344, %vm360
  %vm377 = vmand %vm345, %vm361
  %vm378 = vmand %vm346, %vm362
  %v379 = vsel %vm363, 1, 0
  %v380 = vsel %vm364, 1, 0
  %v381 = vsel %vm365, 1, 0
  %v382 = vsel %vm366, 1, 0
  %v383 = vsel %vm367, 1, 0
  %v384 = vsel %vm368, 1, 0
  %v385 = vsel %vm369, 1, 0
  %v386 = vsel %vm370, 1, 0
  %v387 = vsel %vm371, 1, 0
  %v388 = vsel %vm372, 1, 0
  %v389 = vsel %vm373, 1, 0
  %v390 = vsel %vm374, 1, 0
  %v391 = vsel %vm375, 1, 0
  %v392 = vsel %vm376, 1, 0
  %v393 = vsel %vm377, 1, 0
  %v394 = vsel %vm378, 1, 0
  %v395 = vcvt.s32.f32 %v379
  %v396 = vcvt.s32.f32 %v380
  %v397 = vcvt.s32.f32 %v381
  %v398 = vcvt.s32.f32 %v382
  %v399 = vcvt.s32.f32 %v383
  %v400 = vcvt.s32.f32 %v384
  %v401 = vcvt.s32.f32 %v385
  %v402 = vcvt.s32.f32 %v386
  %v403 = vcvt.s32.f32 %v387
  %v404 = vcvt.s32.f32 %v388
  %v405 = vcvt.s32.f32 %v389
  %v406 = vcvt.s32.f32 %v390
  %v407 = vcvt.s32.f32 %v391
  %v408 = vcvt.s32.f32 %v392
  %v409 = vcvt.s32.f32 %v393
  %v410 = vcvt.s32.f32 %v394
  %vm411 = vcmp.ge.f32.partialorder %v35, -1.0
  %vm412 = vcmp.ge.f32.partialorder %v36, -1.0
  %vm413 = vcmp.ge.f32.partialorder %v37, -1.0
  %vm414 = vcmp.ge.f32.partialorder %v38, -1.0
  %vm415 = vcmp.ge.f32.partialorder %v39, -1.0
  %vm416 = vcmp.ge.f32.partialorder %v40, -1.0
  %vm417 = vcmp.ge.f32.partialorder %v41, -1.0
  %vm418 = vcmp.ge.f32.partialorder %v42, -1.0
  %vm419 = vcmp.ge.f32.partialorder %v43, -1.0
  %vm420 = vcmp.ge.f32.partialorder %v44, -1.0
  %vm421 = vcmp.ge.f32.partialorder %v45, -1.0
  %vm422 = vcmp.ge.f32.partialorder %v46, -1.0
  %vm423 = vcmp.ge.f32.partialorder %v47, -1.0
  %vm424 = vcmp.ge.f32.partialorder %v48, -1.0
  %vm425 = vcmp.ge.f32.partialorder %v49, -1.0
  %vm426 = vcmp.ge.f32.partialorder %v50, -1.0
  %vm427 = vcmp.lt.f32.partialorder %v35, -0.6
  %vm428 = vcmp.lt.f32.partialorder %v36, -0.6
  %vm429 = vcmp.lt.f32.partialorder %v37, -0.6
  %vm430 = vcmp.lt.f32.partialorder %v38, -0.6
  %vm431 = vcmp.lt.f32.partialorder %v39, -0.6
  %vm432 = vcmp.lt.f32.partialorder %v40, -0.6
  %vm433 = vcmp.lt.f32.partialorder %v41, -0.6
  %vm434 = vcmp.lt.f32.partialorder %v42, -0.6
  %vm435 = vcmp.lt.f32.partialorder %v43, -0.6
  %vm436 = vcmp.lt.f32.partialorder %v44, -0.6
  %vm437 = vcmp.lt.f32.partialorder %v45, -0.6
  %vm438 = vcmp.lt.f32.partialorder %v46, -0.6
  %vm439 = vcmp.lt.f32.partialorder %v47, -0.6
  %vm440 = vcmp.lt.f32.partialorder %v48, -0.6
  %vm441 = vcmp.lt.f32.partialorder %v49, -0.6
  %vm442 = vcmp.lt.f32.partialorder %v50, -0.6
  %vm443 = vmand %vm411, %vm427
  %vm444 = vmand %vm412, %vm428
  %vm445 = vmand %vm413, %vm429
  %vm446 = vmand %vm414, %vm430
  %vm447 = vmand %vm415, %vm431
  %vm448 = vmand %vm416, %vm432
  %vm449 = vmand %vm417, %vm433
  %vm450 = vmand %vm418, %vm434
  %vm451 = vmand %vm419, %vm435
  %vm452 = vmand %vm420, %vm436
  %vm453 = vmand %vm421, %vm437
  %vm454 = vmand %vm422, %vm438
  %vm455 = vmand %vm423, %vm439
  %vm456 = vmand %vm424, %vm440
  %vm457 = vmand %vm425, %vm441
  %vm458 = vmand %vm426, %vm442
  %v459 = vsel %vm443, 1, 0
  %v460 = vsel %vm444, 1, 0
  %v461 = vsel %vm445, 1, 0
  %v462 = vsel %vm446, 1, 0
  %v463 = vsel %vm447, 1, 0
  %v464 = vsel %vm448, 1, 0
  %v465 = vsel %vm449, 1, 0
  %v466 = vsel %vm450, 1, 0
  %v467 = vsel %vm451, 1, 0
  %v468 = vsel %vm452, 1, 0
  %v469 = vsel %vm453, 1, 0
  %v470 = vsel %vm454, 1, 0
  %v471 = vsel %vm455, 1, 0
  %v472 = vsel %vm456, 1, 0
  %v473 = vsel %vm457, 1, 0
  %v474 = vsel %vm458, 1, 0
  %v475 = vcvt.s32.f32 %v459
  %v476 = vcvt.s32.f32 %v460
  %v477 = vcvt.s32.f32 %v461
  %v478 = vcvt.s32.f32 %v462
  %v479 = vcvt.s32.f32 %v463
  %v480 = vcvt.s32.f32 %v464
  %v481 = vcvt.s32.f32 %v465
  %v482 = vcvt.s32.f32 %v466
  %v483 = vcvt.s32.f32 %v467
  %v484 = vcvt.s32.f32 %v468
  %v485 = vcvt.s32.f32 %v469
  %v486 = vcvt.s32.f32 %v470
  %v487 = vcvt.s32.f32 %v471
  %v488 = vcvt.s32.f32 %v472
  %v489 = vcvt.s32.f32 %v473
  %v490 = vcvt.s32.f32 %v474
  %vm491 = vcmp.ge.f32.partialorder %v35, -0.6
  %vm492 = vcmp.ge.f32.partialorder %v36, -0.6
  %vm493 = vcmp.ge.f32.partialorder %v37, -0.6
  %vm494 = vcmp.ge.f32.partialorder %v38, -0.6
  %vm495 = vcmp.ge.f32.partialorder %v39, -0.6
  %vm496 = vcmp.ge.f32.partialorder %v40, -0.6
  %vm497 = vcmp.ge.f32.partialorder %v41, -0.6
  %vm498 = vcmp.ge.f32.partialorder %v42, -0.6
  %vm499 = vcmp.ge.f32.partialorder %v43, -0.6
  %vm500 = vcmp.ge.f32.partialorder %v44, -0.6
  %vm501 = vcmp.ge.f32.partialorder %v45, -0.6
  %vm502 = vcmp.ge.f32.partialorder %v46, -0.6
  %vm503 = vcmp.ge.f32.partialorder %v47, -0.6
  %vm504 = vcmp.ge.f32.partialorder %v48, -0.6
  %vm505 = vcmp.ge.f32.partialorder %v49, -0.6
  %vm506 = vcmp.ge.f32.partialorder %v50, -0.6
  %vm507 = vcmp.lt.f32.partialorder %v35, -0.2
  %vm508 = vcmp.lt.f32.partialorder %v36, -0.2
  %vm509 = vcmp.lt.f32.partialorder %v37, -0.2
  %vm510 = vcmp.lt.f32.partialorder %v38, -0.2
  %vm511 = vcmp.lt.f32.partialorder %v39, -0.2
  %vm512 = vcmp.lt.f32.partialorder %v40, -0.2
  %vm513 = vcmp.lt.f32.partialorder %v41, -0.2
  %vm514 = vcmp.lt.f32.partialorder %v42, -0.2
  %vm515 = vcmp.lt.f32.partialorder %v43, -0.2
  %vm516 = vcmp.lt.f32.partialorder %v44, -0.2
  %vm517 = vcmp.lt.f32.partialorder %v45, -0.2
  %vm518 = vcmp.lt.f32.partialorder %v46, -0.2
  %vm519 = vcmp.lt.f32.partialorder %v47, -0.2
  %vm520 = vcmp.lt.f32.partialorder %v48, -0.2
  %vm521 = vcmp.lt.f32.partialorder %v49, -0.2
  %vm522 = vcmp.lt.f32.partialorder %v50, -0.2
  %vm523 = vmand %vm491, %vm507
  %vm524 = vmand %vm492, %vm508
  %vm525 = vmand %vm493, %vm509
  %vm526 = vmand %vm494, %vm510
  %vm527 = vmand %vm495, %vm511
  %vm528 = vmand %vm496, %vm512
  %vm529 = vmand %vm497, %vm513
  %vm530 = vmand %vm498, %vm514
  %vm531 = vmand %vm499, %vm515
  %vm532 = vmand %vm500, %vm516
  %vm533 = vmand %vm501, %vm517
  %vm534 = vmand %vm502, %vm518
  %vm535 = vmand %vm503, %vm519
  %vm536 = vmand %vm504, %vm520
  %vm537 = vmand %vm505, %vm521
  %vm538 = vmand %vm506, %vm522
  %v539 = vsel %vm523, 1, 0
  %v540 = vsel %vm524, 1, 0
  %v541 = vsel %vm525, 1, 0
  %v542 = vsel %vm526, 1, 0
  %v543 = vsel %vm527, 1, 0
  %v544 = vsel %vm528, 1, 0
  %v545 = vsel %vm529, 1, 0
  %v546 = vsel %vm530, 1, 0
  %v547 = vsel %vm531, 1, 0
  %v548 = vsel %vm532, 1, 0
  %v549 = vsel %vm533, 1, 0
  %v550 = vsel %vm534, 1, 0
  %v551 = vsel %vm535, 1, 0
  %v552 = vsel %vm536, 1, 0
  %v553 = vsel %vm537, 1, 0
  %v554 = vsel %vm538, 1, 0
  %v555 = vcvt.s32.f32 %v539
  %v556 = vcvt.s32.f32 %v540
  %v557 = vcvt.s32.f32 %v541
  %v558 = vcvt.s32.f32 %v542
  %v559 = vcvt.s32.f32 %v543
  %v560 = vcvt.s32.f32 %v544
  %v561 = vcvt.s32.f32 %v545
  %v562 = vcvt.s32.f32 %v546
  %v563 = vcvt.s32.f32 %v547
  %v564 = vcvt.s32.f32 %v548
  %v565 = vcvt.s32.f32 %v549
  %v566 = vcvt.s32.f32 %v550
  %v567 = vcvt.s32.f32 %v551
  %v568 = vcvt.s32.f32 %v552
  %v569 = vcvt.s32.f32 %v553
  %v570 = vcvt.s32.f32 %v554
  %vm571 = vcmp.ge.f32.partialorder %v35, -0.2
  %vm572 = vcmp.ge.f32.partialorder %v36, -0.2
  %vm573 = vcmp.ge.f32.partialorder %v37, -0.2
  %vm574 = vcmp.ge.f32.partialorder %v38, -0.2
  %vm575 = vcmp.ge.f32.partialorder %v39, -0.2
  %vm576 = vcmp.ge.f32.partialorder %v40, -0.2
  %vm577 = vcmp.ge.f32.partialorder %v41, -0.2
  %vm578 = vcmp.ge.f32.partialorder %v42, -0.2
  %vm579 = vcmp.ge.f32.partialorder %v43, -0.2
  %vm580 = vcmp.ge.f32.partialorder %v44, -0.2
  %vm581 = vcmp.ge.f32.partialorder %v45, -0.2
  %vm582 = vcmp.ge.f32.partialorder %v46, -0.2
  %vm583 = vcmp.ge.f32.partialorder %v47, -0.2
  %vm584 = vcmp.ge.f32.partialorder %v48, -0.2
  %vm585 = vcmp.ge.f32.partialorder %v49, -0.2
  %vm586 = vcmp.ge.f32.partialorder %v50, -0.2
  %vm587 = vcmp.lt.f32.partialorder %v35, 0.2
  %vm588 = vcmp.lt.f32.partialorder %v36, 0.2
  %vm589 = vcmp.lt.f32.partialorder %v37, 0.2
  %vm590 = vcmp.lt.f32.partialorder %v38, 0.2
  %vm591 = vcmp.lt.f32.partialorder %v39, 0.2
  %vm592 = vcmp.lt.f32.partialorder %v40, 0.2
  %vm593 = vcmp.lt.f32.partialorder %v41, 0.2
  %vm594 = vcmp.lt.f32.partialorder %v42, 0.2
  %vm595 = vcmp.lt.f32.partialorder %v43, 0.2
  %vm596 = vcmp.lt.f32.partialorder %v44, 0.2
  %vm597 = vcmp.lt.f32.partialorder %v45, 0.2
  %vm598 = vcmp.lt.f32.partialorder %v46, 0.2
  %vm599 = vcmp.lt.f32.partialorder %v47, 0.2
  %vm600 = vcmp.lt.f32.partialorder %v48, 0.2
  %vm601 = vcmp.lt.f32.partialorder %v49, 0.2
  %vm602 = vcmp.lt.f32.partialorder %v50, 0.2
  %vm603 = vmand %vm571, %vm587
  %vm604 = vmand %vm572, %vm588
  %vm605 = vmand %vm573, %vm589
  %vm606 = vmand %vm574, %vm590
  %vm607 = vmand %vm575, %vm591
  %vm608 = vmand %vm576, %vm592
  %vm609 = vmand %vm577, %vm593
  %vm610 = vmand %vm578, %vm594
  %vm611 = vmand %vm579, %vm595
  %vm612 = vmand %vm580, %vm596
  %vm613 = vmand %vm581, %vm597
  %vm614 = vmand %vm582, %vm598
  %vm615 = vmand %vm583, %vm599
  %vm616 = vmand %vm584, %vm600
  %vm617 = vmand %vm585, %vm601
  %vm618 = vmand %vm586, %vm602
  %v619 = vsel %vm603, 1, 0
  %v620 = vsel %vm604, 1, 0
  %v621 = vsel %vm605, 1, 0
  %v622 = vsel %vm606, 1, 0
  %v623 = vsel %vm607, 1, 0
  %v624 = vsel %vm608, 1, 0
  %v625 = vsel %vm609, 1, 0
  %v626 = vsel %vm610, 1, 0
  %v627 = vsel %vm611, 1, 0
  %v628 = vsel %vm612, 1, 0
  %v629 = vsel %vm613, 1, 0
  %v630 = vsel %vm614, 1, 0
  %v631 = vsel %vm615, 1, 0
  %v632 = vsel %vm616, 1, 0
  %v633 = vsel %vm617, 1, 0
  %v634 = vsel %vm618, 1, 0
  %v635 = vcvt.s32.f32 %v619
  %v636 = vcvt.s32.f32 %v620
  %v637 = vcvt.s32.f32 %v621
  %v638 = vcvt.s32.f32 %v622
  %v639 = vcvt.s32.f32 %v623
  %v640 = vcvt.s32.f32 %v624
  %v641 = vcvt.s32.f32 %v625
  %v642 = vcvt.s32.f32 %v626
  %v643 = vcvt.s32.f32 %v627
  %v644 = vcvt.s32.f32 %v628
  %v645 = vcvt.s32.f32 %v629
  %v646 = vcvt.s32.f32 %v630
  %v647 = vcvt.s32.f32 %v631
  %v648 = vcvt.s32.f32 %v632
  %v649 = vcvt.s32.f32 %v633
  %v650 = vcvt.s32.f32 %v634
  %vm651 = vcmp.ge.f32.partialorder %v35, 0.2
  %vm652 = vcmp.ge.f32.partialorder %v36, 0.2
  %vm653 = vcmp.ge.f32.partialorder %v37, 0.2
  %vm654 = vcmp.ge.f32.partialorder %v38, 0.2
  %vm655 = vcmp.ge.f32.partialorder %v39, 0.2
  %vm656 = vcmp.ge.f32.partialorder %v40, 0.2
  %vm657 = vcmp.ge.f32.partialorder %v41, 0.2
  %vm658 = vcmp.ge.f32.partialorder %v42, 0.2
  %vm659 = vcmp.ge.f32.partialorder %v43, 0.2
  %vm660 = vcmp.ge.f32.partialorder %v44, 0.2
  %vm661 = vcmp.ge.f32.partialorder %v45, 0.2
  %vm662 = vcmp.ge.f32.partialorder %v46, 0.2
  %vm663 = vcmp.ge.f32.partialorder %v47, 0.2
  %vm664 = vcmp.ge.f32.partialorder %v48, 0.2
  %vm665 = vcmp.ge.f32.partialorder %v49, 0.2
  %vm666 = vcmp.ge.f32.partialorder %v50, 0.2
  %vm667 = vcmp.lt.f32.partialorder %v35, 0.6
  %vm668 = vcmp.lt.f32.partialorder %v36, 0.6
  %vm669 = vcmp.lt.f32.partialorder %v37, 0.6
  %vm670 = vcmp.lt.f32.partialorder %v38, 0.6
  %vm671 = vcmp.lt.f32.partialorder %v39, 0.6
  %vm672 = vcmp.lt.f32.partialorder %v40, 0.6
  %vm673 = vcmp.lt.f32.partialorder %v41, 0.6
  %vm674 = vcmp.lt.f32.partialorder %v42, 0.6
  %vm675 = vcmp.lt.f32.partialorder %v43, 0.6
  %vm676 = vcmp.lt.f32.partialorder %v44, 0.6
  %vm677 = vcmp.lt.f32.partialorder %v45, 0.6
  %vm678 = vcmp.lt.f32.partialorder %v46, 0.6
  %vm679 = vcmp.lt.f32.partialorder %v47, 0.6
  %vm680 = vcmp.lt.f32.partialorder %v48, 0.6
  %vm681 = vcmp.lt.f32.partialorder %v49, 0.6
  %vm682 = vcmp.lt.f32.partialorder %v50, 0.6
  %vm683 = vmand %vm651, %vm667
  %vm684 = vmand %vm652, %vm668
  %vm685 = vmand %vm653, %vm669
  %vm686 = vmand %vm654, %vm670
  %vm687 = vmand %vm655, %vm671
  %vm688 = vmand %vm656, %vm672
  %vm689 = vmand %vm657, %vm673
  %vm690 = vmand %vm658, %vm674
  %vm691 = vmand %vm659, %vm675
  %vm692 = vmand %vm660, %vm676
  %vm693 = vmand %vm661, %vm677
  %vm694 = vmand %vm662, %vm678
  %vm695 = vmand %vm663, %vm679
  %vm696 = vmand %vm664, %vm680
  %vm697 = vmand %vm665, %vm681
  %vm698 = vmand %vm666, %vm682
  %v699 = vsel %vm683, 1, 0
  %v700 = vsel %vm684, 1, 0
  %v701 = vsel %vm685, 1, 0
  %v702 = vsel %vm686, 1, 0
  %v703 = vsel %vm687, 1, 0
  %v704 = vsel %vm688, 1, 0
  %v705 = vsel %vm689, 1, 0
  %v706 = vsel %vm690, 1, 0
  %v707 = vsel %vm691, 1, 0
  %v708 = vsel %vm692, 1, 0
  %v709 = vsel %vm693, 1, 0
  %v710 = vsel %vm694, 1, 0
  %v711 = vsel %vm695, 1, 0
  %v712 = vsel %vm696, 1, 0
  %v713 = vsel %vm697, 1, 0
  %v714 = vsel %vm698, 1, 0
  %v715 = vcvt.s32.f32 %v699
  %v716 = vcvt.s32.f32 %v700
  %v717 = vcvt.s32.f32 %v701
  %v718 = vcvt.s32.f32 %v702
  %v719 = vcvt.s32.f32 %v703
  %v720 = vcvt.s32.f32 %v704
  %v721 = vcvt.s32.f32 %v705
  %v722 = vcvt.s32.f32 %v706
  %v723 = vcvt.s32.f32 %v707
  %v724 = vcvt.s32.f32 %v708
  %v725 = vcvt.s32.f32 %v709
  %v726 = vcvt.s32.f32 %v710
  %v727 = vcvt.s32.f32 %v711
  %v728 = vcvt.s32.f32 %v712
  %v729 = vcvt.s32.f32 %v713
  %v730 = vcvt.s32.f32 %v714
  %vm731 = vcmp.ge.f32.partialorder %v35, 0.6
  %vm732 = vcmp.ge.f32.partialorder %v36, 0.6
  %vm733 = vcmp.ge.f32.partialorder %v37, 0.6
  %vm734 = vcmp.ge.f32.partialorder %v38, 0.6
  %vm735 = vcmp.ge.f32.partialorder %v39, 0.6
  %vm736 = vcmp.ge.f32.partialorder %v40, 0.6
  %vm737 = vcmp.ge.f32.partialorder %v41, 0.6
  %vm738 = vcmp.ge.f32.partialorder %v42, 0.6
  %vm739 = vcmp.ge.f32.partialorder %v43, 0.6
  %vm740 = vcmp.ge.f32.partialorder %v44, 0.6
  %vm741 = vcmp.ge.f32.partialorder %v45, 0.6
  %vm742 = vcmp.ge.f32.partialorder %v46, 0.6
  %vm743 = vcmp.ge.f32.partialorder %v47, 0.6
  %vm744 = vcmp.ge.f32.partialorder %v48, 0.6
  %vm745 = vcmp.ge.f32.partialorder %v49, 0.6
  %vm746 = vcmp.ge.f32.partialorder %v50, 0.6
  %vm747 = vcmp.lt.f32.partialorder %v35, 1.0
  %vm748 = vcmp.lt.f32.partialorder %v36, 1.0
  %vm749 = vcmp.lt.f32.partialorder %v37, 1.0
  %vm750 = vcmp.lt.f32.partialorder %v38, 1.0
  %vm751 = vcmp.lt.f32.partialorder %v39, 1.0
  %vm752 = vcmp.lt.f32.partialorder %v40, 1.0
  %vm753 = vcmp.lt.f32.partialorder %v41, 1.0
  %vm754 = vcmp.lt.f32.partialorder %v42, 1.0
  %vm755 = vcmp.lt.f32.partialorder %v43, 1.0
  %vm756 = vcmp.lt.f32.partialorder %v44, 1.0
  %vm757 = vcmp.lt.f32.partialorder %v45, 1.0
  %vm758 = vcmp.lt.f32.partialorder %v46, 1.0
  %vm759 = vcmp.lt.f32.partialorder %v47, 1.0
  %vm760 = vcmp.lt.f32.partialorder %v48, 1.0
  %vm761 = vcmp.lt.f32.partialorder %v49, 1.0
  %vm762 = vcmp.lt.f32.partialorder %v50, 1.0
  %vm763 = vmand %vm731, %vm747
  %vm764 = vmand %vm732, %vm748
  %vm765 = vmand %vm733, %vm749
  %vm766 = vmand %vm734, %vm750
  %vm767 = vmand %vm735, %vm751
  %vm768 = vmand %vm736, %vm752
  %vm769 = vmand %vm737, %vm753
  %vm770 = vmand %vm738, %vm754
  %vm771 = vmand %vm739, %vm755
  %vm772 = vmand %vm740, %vm756
  %vm773 = vmand %vm741, %vm757
  %vm774 = vmand %vm742, %vm758
  %vm775 = vmand %vm743, %vm759
  %vm776 = vmand %vm744, %vm760
  %vm777 = vmand %vm745, %vm761
  %vm778 = vmand %vm746, %vm762
  %v779 = vsel %vm763, 1, 0
  %v780 = vsel %vm764, 1, 0
  %v781 = vsel %vm765, 1, 0
  %v782 = vsel %vm766, 1, 0
  %v783 = vsel %vm767, 1, 0
  %v784 = vsel %vm768, 1, 0
  %v785 = vsel %vm769, 1, 0
  %v786 = vsel %vm770, 1, 0
  %v787 = vsel %vm771, 1, 0
  %v788 = vsel %vm772, 1, 0
  %v789 = vsel %vm773, 1, 0
  %v790 = vsel %vm774, 1, 0
  %v791 = vsel %vm775, 1, 0
  %v792 = vsel %vm776, 1, 0
  %v793 = vsel %vm777, 1, 0
  %v794 = vsel %vm778, 1, 0
  %v795 = vcvt.s32.f32 %v779
  %v796 = vcvt.s32.f32 %v780
  %v797 = vcvt.s32.f32 %v781
  %v798 = vcvt.s32.f32 %v782
  %v799 = vcvt.s32.f32 %v783
  %v800 = vcvt.s32.f32 %v784
  %v801 = vcvt.s32.f32 %v785
  %v802 = vcvt.s32.f32 %v786
  %v803 = vcvt.s32.f32 %v787
  %v804 = vcvt.s32.f32 %v788
  %v805 = vcvt.s32.f32 %v789
  %v806 = vcvt.s32.f32 %v790
  %v807 = vcvt.s32.f32 %v791
  %v808 = vcvt.s32.f32 %v792
  %v809 = vcvt.s32.f32 %v793
  %v810 = vcvt.s32.f32 %v794
  %vm811 = vcmp.ge.f32.partialorder %v35, 1.0
  %vm812 = vcmp.ge.f32.partialorder %v36, 1.0
  %vm813 = vcmp.ge.f32.partialorder %v37, 1.0
  %vm814 = vcmp.ge.f32.partialorder %v38, 1.0
  %vm815 = vcmp.ge.f32.partialorder %v39, 1.0
  %vm816 = vcmp.ge.f32.partialorder %v40, 1.0
  %vm817 = vcmp.ge.f32.partialorder %v41, 1.0
  %vm818 = vcmp.ge.f32.partialorder %v42, 1.0
  %vm819 = vcmp.ge.f32.partialorder %v43, 1.0
  %vm820 = vcmp.ge.f32.partialorder %v44, 1.0
  %vm821 = vcmp.ge.f32.partialorder %v45, 1.0
  %vm822 = vcmp.ge.f32.partialorder %v46, 1.0
  %vm823 = vcmp.ge.f32.partialorder %v47, 1.0
  %vm824 = vcmp.ge.f32.partialorder %v48, 1.0
  %vm825 = vcmp.ge.f32.partialorder %v49, 1.0
  %vm826 = vcmp.ge.f32.partialorder %v50, 1.0
  %vm827 = vcmp.lt.f32.partialorder %v35, 1.4
  %vm828 = vcmp.lt.f32.partialorder %v36, 1.4
  %vm829 = vcmp.lt.f32.partialorder %v37, 1.4
  %vm830 = vcmp.lt.f32.partialorder %v38, 1.4
  %vm831 = vcmp.lt.f32.partialorder %v39, 1.4
  %vm832 = vcmp.lt.f32.partialorder %v40, 1.4
  %vm833 = vcmp.lt.f32.partialorder %v41, 1.4
  %vm834 = vcmp.lt.f32.partialorder %v42, 1.4
  %vm835 = vcmp.lt.f32.partialorder %v43, 1.4
  %vm836 = vcmp.lt.f32.partialorder %v44, 1.4
  %vm837 = vcmp.lt.f32.partialorder %v45, 1.4
  %vm838 = vcmp.lt.f32.partialorder %v46, 1.4
  %vm839 = vcmp.lt.f32.partialorder %v47, 1.4
  %vm840 = vcmp.lt.f32.partialorder %v48, 1.4
  %vm841 = vcmp.lt.f32.partialorder %v49, 1.4
  %vm842 = vcmp.lt.f32.partialorder %v50, 1.4
  %vm843 = vmand %vm811, %vm827
  %vm844 = vmand %vm812, %vm828
  %vm845 = vmand %vm813, %vm829
  %vm846 = vmand %vm814, %vm830
  %vm847 = vmand %vm815, %vm831
  %vm848 = vmand %vm816, %vm832
  %vm849 = vmand %vm817, %vm833
  %vm850 = vmand %vm818, %vm834
  %vm851 = vmand %vm819, %vm835
  %vm852 = vmand %vm820, %vm836
  %vm853 = vmand %vm821, %vm837
  %vm854 = vmand %vm822, %vm838
  %vm855 = vmand %vm823, %vm839
  %vm856 = vmand %vm824, %vm840
  %vm857 = vmand %vm825, %vm841
  %vm858 = vmand %vm826, %vm842
  %v859 = vsel %vm843, 1, 0
  %v860 = vsel %vm844, 1, 0
  %v861 = vsel %vm845, 1, 0
  %v862 = vsel %vm846, 1, 0
  %v863 = vsel %vm847, 1, 0
  %v864 = vsel %vm848, 1, 0
  %v865 = vsel %vm849, 1, 0
  %v866 = vsel %vm850, 1, 0
  %v867 = vsel %vm851, 1, 0
  %v868 = vsel %vm852, 1, 0
  %v869 = vsel %vm853, 1, 0
  %v870 = vsel %vm854, 1, 0
  %v871 = vsel %vm855, 1, 0
  %v872 = vsel %vm856, 1, 0
  %v873 = vsel %vm857, 1, 0
  %v874 = vsel %vm858, 1, 0
  %v875 = vcvt.s32.f32 %v859
  %v876 = vcvt.s32.f32 %v860
  %v877 = vcvt.s32.f32 %v861
  %v878 = vcvt.s32.f32 %v862
  %v879 = vcvt.s32.f32 %v863
  %v880 = vcvt.s32.f32 %v864
  %v881 = vcvt.s32.f32 %v865
  %v882 = vcvt.s32.f32 %v866
  %v883 = vcvt.s32.f32 %v867
  %v884 = vcvt.s32.f32 %v868
  %v885 = vcvt.s32.f32 %v869
  %v886 = vcvt.s32.f32 %v870
  %v887 = vcvt.s32.f32 %v871
  %v888 = vcvt.s32.f32 %v872
  %v889 = vcvt.s32.f32 %v873
  %v890 = vcvt.s32.f32 %v874
  %vm891 = vcmp.ge.f32.partialorder %v35, 1.4
  %vm892 = vcmp.ge.f32.partialorder %v36, 1.4
  %vm893 = vcmp.ge.f32.partialorder %v37, 1.4
  %vm894 = vcmp.ge.f32.partialorder %v38, 1.4
  %vm895 = vcmp.ge.f32.partialorder %v39, 1.4
  %vm896 = vcmp.ge.f32.partialorder %v40, 1.4
  %vm897 = vcmp.ge.f32.partialorder %v41, 1.4
  %vm898 = vcmp.ge.f32.partialorder %v42, 1.4
  %vm899 = vcmp.ge.f32.partialorder %v43, 1.4
  %vm900 = vcmp.ge.f32.partialorder %v44, 1.4
  %vm901 = vcmp.ge.f32.partialorder %v45, 1.4
  %vm902 = vcmp.ge.f32.partialorder %v46, 1.4
  %vm903 = vcmp.ge.f32.partialorder %v47, 1.4
  %vm904 = vcmp.ge.f32.partialorder %v48, 1.4
  %vm905 = vcmp.ge.f32.partialorder %v49, 1.4
  %vm906 = vcmp.ge.f32.partialorder %v50, 1.4
  %vm907 = vcmp.lt.f32.partialorder %v35, 1.8
  %vm908 = vcmp.lt.f32.partialorder %v36, 1.8
  %vm909 = vcmp.lt.f32.partialorder %v37, 1.8
  %vm910 = vcmp.lt.f32.partialorder %v38, 1.8
  %vm911 = vcmp.lt.f32.partialorder %v39, 1.8
  %vm912 = vcmp.lt.f32.partialorder %v40, 1.8
  %vm913 = vcmp.lt.f32.partialorder %v41, 1.8
  %vm914 = vcmp.lt.f32.partialorder %v42, 1.8
  %vm915 = vcmp.lt.f32.partialorder %v43, 1.8
  %vm916 = vcmp.lt.f32.partialorder %v44, 1.8
  %vm917 = vcmp.lt.f32.partialorder %v45, 1.8
  %vm918 = vcmp.lt.f32.partialorder %v46, 1.8
  %vm919 = vcmp.lt.f32.partialorder %v47, 1.8
  %vm920 = vcmp.lt.f32.partialorder %v48, 1.8
  %vm921 = vcmp.lt.f32.partialorder %v49, 1.8
  %vm922 = vcmp.lt.f32.partialorder %v50, 1.8
  %vm923 = vmand %vm891, %vm907
  %vm924 = vmand %vm892, %vm908
  %vm925 = vmand %vm893, %vm909
  %vm926 = vmand %vm894, %vm910
  %vm927 = vmand %vm895, %vm911
  %vm928 = vmand %vm896, %vm912
  %vm929 = vmand %vm897, %vm913
  %vm930 = vmand %vm898, %vm914
  %vm931 = vmand %vm899, %vm915
  %vm932 = vmand %vm900, %vm916
  %vm933 = vmand %vm901, %vm917
  %vm934 = vmand %vm902, %vm918
  %vm935 = vmand %vm903, %vm919
  %vm936 = vmand %vm904, %vm920
  %vm937 = vmand %vm905, %vm921
  %vm938 = vmand %vm906, %vm922
  %v939 = vsel %vm923, 1, 0
  %v940 = vsel %vm924, 1, 0
  %v941 = vsel %vm925, 1, 0
  %v942 = vsel %vm926, 1, 0
  %v943 = vsel %vm927, 1, 0
  %v944 = vsel %vm928, 1, 0
  %v945 = vsel %vm929, 1, 0
  %v946 = vsel %vm930, 1, 0
  %v947 = vsel %vm931, 1, 0
  %v948 = vsel %vm932, 1, 0
  %v949 = vsel %vm933, 1, 0
  %v950 = vsel %vm934, 1, 0
  %v951 = vsel %vm935, 1, 0
  %v952 = vsel %vm936, 1, 0
  %v953 = vsel %vm937, 1, 0
  %v954 = vsel %vm938, 1, 0
  %v955 = vcvt.s32.f32 %v939
  %v956 = vcvt.s32.f32 %v940
  %v957 = vcvt.s32.f32 %v941
  %v958 = vcvt.s32.f32 %v942
  %v959 = vcvt.s32.f32 %v943
  %v960 = vcvt.s32.f32 %v944
  %v961 = vcvt.s32.f32 %v945
  %v962 = vcvt.s32.f32 %v946
  %v963 = vcvt.s32.f32 %v947
  %v964 = vcvt.s32.f32 %v948
  %v965 = vcvt.s32.f32 %v949
  %v966 = vcvt.s32.f32 %v950
  %v967 = vcvt.s32.f32 %v951
  %v968 = vcvt.s32.f32 %v952
  %v969 = vcvt.s32.f32 %v953
  %v970 = vcvt.s32.f32 %v954
  %vm971 = vcmp.ge.f32.partialorder %v35, 1.8
  %vm972 = vcmp.ge.f32.partialorder %v36, 1.8
  %vm973 = vcmp.ge.f32.partialorder %v37, 1.8
  %vm974 = vcmp.ge.f32.partialorder %v38, 1.8
  %vm975 = vcmp.ge.f32.partialorder %v39, 1.8
  %vm976 = vcmp.ge.f32.partialorder %v40, 1.8
  %vm977 = vcmp.ge.f32.partialorder %v41, 1.8
  %vm978 = vcmp.ge.f32.partialorder %v42, 1.8
  %vm979 = vcmp.ge.f32.partialorder %v43, 1.8
  %vm980 = vcmp.ge.f32.partialorder %v44, 1.8
  %vm981 = vcmp.ge.f32.partialorder %v45, 1.8
  %vm982 = vcmp.ge.f32.partialorder %v46, 1.8
  %vm983 = vcmp.ge.f32.partialorder %v47, 1.8
  %vm984 = vcmp.ge.f32.partialorder %v48, 1.8
  %vm985 = vcmp.ge.f32.partialorder %v49, 1.8
  %vm986 = vcmp.ge.f32.partialorder %v50, 1.8
  %vm987 = vcmp.lt.f32.partialorder %v35, 2.2
  %vm988 = vcmp.lt.f32.partialorder %v36, 2.2
  %vm989 = vcmp.lt.f32.partialorder %v37, 2.2
  %vm990 = vcmp.lt.f32.partialorder %v38, 2.2
  %vm991 = vcmp.lt.f32.partialorder %v39, 2.2
  %vm992 = vcmp.lt.f32.partialorder %v40, 2.2
  %vm993 = vcmp.lt.f32.partialorder %v41, 2.2
  %vm994 = vcmp.lt.f32.partialorder %v42, 2.2
  %vm995 = vcmp.lt.f32.partialorder %v43, 2.2
  %vm996 = vcmp.lt.f32.partialorder %v44, 2.2
  %vm997 = vcmp.lt.f32.partialorder %v45, 2.2
  %vm998 = vcmp.lt.f32.partialorder %v46, 2.2
  %vm999 = vcmp.lt.f32.partialorder %v47, 2.2
  %vm1000 = vcmp.lt.f32.partialorder %v48, 2.2
  %vm1001 = vcmp.lt.f32.partialorder %v49, 2.2
  %vm1002 = vcmp.lt.f32.partialorder %v50, 2.2
  %vm1003 = vmand %vm971, %vm987
  %vm1004 = vmand %vm972, %vm988
  %vm1005 = vmand %vm973, %vm989
  %vm1006 = vmand %vm974, %vm990
  %vm1007 = vmand %vm975, %vm991
  %vm1008 = vmand %vm976, %vm992
  %vm1009 = vmand %vm977, %vm993
  %vm1010 = vmand %vm978, %vm994
  %vm1011 = vmand %vm979, %vm995
  %vm1012 = vmand %vm980, %vm996
  %vm1013 = vmand %vm981, %vm997
  %vm1014 = vmand %vm982, %vm998
  %vm1015 = vmand %vm983, %vm999
  %vm1016 = vmand %vm984, %vm1000
  %vm1017 = vmand %vm985, %vm1001
  %vm1018 = vmand %vm986, %vm1002
  %v1019 = vsel %vm1003, 1, 0
  %v1020 = vsel %vm1004, 1, 0
  %v1021 = vsel %vm1005, 1, 0
  %v1022 = vsel %vm1006, 1, 0
  %v1023 = vsel %vm1007, 1, 0
  %v1024 = vsel %vm1008, 1, 0
  %v1025 = vsel %vm1009, 1, 0
  %v1026 = vsel %vm1010, 1, 0
  %v1027 = vsel %vm1011, 1, 0
  %v1028 = vsel %vm1012, 1, 0
  %v1029 = vsel %vm1013, 1, 0
  %v1030 = vsel %vm1014, 1, 0
  %v1031 = vsel %vm1015, 1, 0
  %v1032 = vsel %vm1016, 1, 0
  %v1033 = vsel %vm1017, 1, 0
  %v1034 = vsel %vm1018, 1, 0
  %v1035 = vcvt.s32.f32 %v1019
  %v1036 = vcvt.s32.f32 %v1020
  %v1037 = vcvt.s32.f32 %v1021
  %v1038 = vcvt.s32.f32 %v1022
  %v1039 = vcvt.s32.f32 %v1023
  %v1040 = vcvt.s32.f32 %v1024
  %v1041 = vcvt.s32.f32 %v1025
  %v1042 = vcvt.s32.f32 %v1026
  %v1043 = vcvt.s32.f32 %v1027
  %v1044 = vcvt.s32.f32 %v1028
  %v1045 = vcvt.s32.f32 %v1029
  %v1046 = vcvt.s32.f32 %v1030
  %v1047 = vcvt.s32.f32 %v1031
  %v1048 = vcvt.s32.f32 %v1032
  %v1049 = vcvt.s32.f32 %v1033
  %v1050 = vcvt.s32.f32 %v1034
  %v1051 = vsub.f32 %v35, -2.2
  %v1052 = vsub.f32 %v36, -2.2
  %v1053 = vsub.f32 %v37, -2.2
  %v1054 = vsub.f32 %v38, -2.2
  %v1055 = vsub.f32 %v39, -2.2
  %v1056 = vsub.f32 %v40, -2.2
  %v1057 = vsub.f32 %v41, -2.2
  %v1058 = vsub.f32 %v42, -2.2
  %v1059 = vsub.f32 %v43, -2.2
  %v1060 = vsub.f32 %v44, -2.2
  %v1061 = vsub.f32 %v45, -2.2
  %v1062 = vsub.f32 %v46, -2.2
  %v1063 = vsub.f32 %v47, -2.2
  %v1064 = vsub.f32 %v48, -2.2
  %v1065 = vsub.f32 %v49, -2.2
  %v1066 = vsub.f32 %v50, -2.2
  %v1067 = vmul.f32 %v1051, 2.5
  %v1068 = vmul.f32 %v1052, 2.5
  %v1069 = vmul.f32 %v1053, 2.5
  %v1070 = vmul.f32 %v1054, 2.5
  %v1071 = vmul.f32 %v1055, 2.5
  %v1072 = vmul.f32 %v1056, 2.5
  %v1073 = vmul.f32 %v1057, 2.5
  %v1074 = vmul.f32 %v1058, 2.5
  %v1075 = vmul.f32 %v1059, 2.5
  %v1076 = vmul.f32 %v1060, 2.5
  %v1077 = vmul.f32 %v1061, 2.5
  %v1078 = vmul.f32 %v1062, 2.5
  %v1079 = vmul.f32 %v1063, 2.5
  %v1080 = vmul.f32 %v1064, 2.5
  %v1081 = vmul.f32 %v1065, 2.5
  %v1082 = vmul.f32 %v1066, 2.5
  %v1083 = vmul.f32 %v1067, %v235
  %v1084 = vmul.f32 %v1068, %v236
  %v1085 = vmul.f32 %v1069, %v237
  %v1086 = vmul.f32 %v1070, %v238
  %v1087 = vmul.f32 %v1071, %v239
  %v1088 = vmul.f32 %v1072, %v240
  %v1089 = vmul.f32 %v1073, %v241
  %v1090 = vmul.f32 %v1074, %v242
  %v1091 = vmul.f32 %v1075, %v243
  %v1092 = vmul.f32 %v1076, %v244
  %v1093 = vmul.f32 %v1077, %v245
  %v1094 = vmul.f32 %v1078, %v246
  %v1095 = vmul.f32 %v1079, %v247
  %v1096 = vmul.f32 %v1080, %v248
  %v1097 = vmul.f32 %v1081, %v249
  %v1098 = vmul.f32 %v1082, %v250
  %v1099 = vsub.f32 -1.4, %v35
  %v1100 = vsub.f32 -1.4, %v36
  %v1101 = vsub.f32 -1.4, %v37
  %v1102 = vsub.f32 -1.4, %v38
  %v1103 = vsub.f32 -1.4, %v39
  %v1104 = vsub.f32 -1.4, %v40
  %v1105 = vsub.f32 -1.4, %v41
  %v1106 = vsub.f32 -1.4, %v42
  %v1107 = vsub.f32 -1.4, %v43
  %v1108 = vsub.f32 -1.4, %v44
  %v1109 = vsub.f32 -1.4, %v45
  %v1110 = vsub.f32 -1.4, %v46
  %v1111 = vsub.f32 -1.4, %v47
  %v1112 = vsub.f32 -1.4, %v48
  %v1113 = vsub.f32 -1.4, %v49
  %v1114 = vsub.f32 -1.4, %v50
  %v1115 = vmul.f32 %v1099, 2.5
  %v1116 = vmul.f32 %v1100, 2.5
  %v1117 = vmul.f32 %v1101, 2.5
  %v1118 = vmul.f32 %v1102, 2.5
  %v1119 = vmul.f32 %v1103, 2.5
  %v1120 = vmul.f32 %v1104, 2.5
  %v1121 = vmul.f32 %v1105, 2.5
  %v1122 = vmul.f32 %v1106, 2.5
  %v1123 = vmul.f32 %v1107, 2.5
  %v1124 = vmul.f32 %v1108, 2.5
  %v1125 = vmul.f32 %v1109, 2.5
  %v1126 = vmul.f32 %v1110, 2.5
  %v1127 = vmul.f32 %v1111, 2.5
  %v1128 = vmul.f32 %v1112, 2.5
  %v1129 = vmul.f32 %v1113, 2.5
  %v1130 = vmul.f32 %v1114, 2.5
  %v1131 = vmul.f32 %v1115, %v315
  %v1132 = vmul.f32 %v1116, %v316
  %v1133 = vmul.f32 %v1117, %v317
  %v1134 = vmul.f32 %v1118, %v318
  %v1135 = vmul.f32 %v1119, %v319
  %v1136 = vmul.f32 %v1120, %v320
  %v1137 = vmul.f32 %v1121, %v321
  %v1138 = vmul.f32 %v1122, %v322
  %v1139 = vmul.f32 %v1123, %v323
  %v1140 = vmul.f32 %v1124, %v324
  %v1141 = vmul.f32 %v1125, %v325
  %v1142 = vmul.f32 %v1126, %v326
  %v1143 = vmul.f32 %v1127, %v327
  %v1144 = vmul.f32 %v1128, %v328
  %v1145 = vmul.f32 %v1129, %v329
  %v1146 = vmul.f32 %v1130, %v330
  %v1147 = vadd.f32 %v1083, %v1131
  %v1148 = vadd.f32 %v1084, %v1132
  %v1149 = vadd.f32 %v1085, %v1133
  %v1150 = vadd.f32 %v1086, %v1134
  %v1151 = vadd.f32 %v1087, %v1135
  %v1152 = vadd.f32 %v1088, %v1136
  %v1153 = vadd.f32 %v1089, %v1137
  %v1154 = vadd.f32 %v1090, %v1138
  %v1155 = vadd.f32 %v1091, %v1139
  %v1156 = vadd.f32 %v1092, %v1140
  %v1157 = vadd.f32 %v1093, %v1141
  %v1158 = vadd.f32 %v1094, %v1142
  %v1159 = vadd.f32 %v1095, %v1143
  %v1160 = vadd.f32 %v1096, %v1144
  %v1161 = vadd.f32 %v1097, %v1145
  %v1162 = vadd.f32 %v1098, %v1146
  %v1163 = vsub.f32 %v35, -1.8
  %v1164 = vsub.f32 %v36, -1.8
  %v1165 = vsub.f32 %v37, -1.8
  %v1166 = vsub.f32 %v38, -1.8
  %v1167 = vsub.f32 %v39, -1.8
  %v1168 = vsub.f32 %v40, -1.8
  %v1169 = vsub.f32 %v41, -1.8
  %v1170 = vsub.f32 %v42, -1.8
  %v1171 = vsub.f32 %v43, -1.8
  %v1172 = vsub.f32 %v44, -1.8
  %v1173 = vsub.f32 %v45, -1.8
  %v1174 = vsub.f32 %v46, -1.8
  %v1175 = vsub.f32 %v47, -1.8
  %v1176 = vsub.f32 %v48, -1.8
  %v1177 = vsub.f32 %v49, -1.8
  %v1178 = vsub.f32 %v50, -1.8
  %v1179 = vmul.f32 %v1163, 2.5
  %v1180 = vmul.f32 %v1164, 2.5
  %v1181 = vmul.f32 %v1165, 2.5
  %v1182 = vmul.f32 %v1166, 2.5
  %v1183 = vmul.f32 %v1167, 2.5
  %v1184 = vmul.f32 %v1168, 2.5
  %v1185 = vmul.f32 %v1169, 2.5
  %v1186 = vmul.f32 %v1170, 2.5
  %v1187 = vmul.f32 %v1171, 2.5
  %v1188 = vmul.f32 %v1172, 2.5
  %v1189 = vmul.f32 %v1173, 2.5
  %v1190 = vmul.f32 %v1174, 2.5
  %v1191 = vmul.f32 %v1175, 2.5
  %v1192 = vmul.f32 %v1176, 2.5
  %v1193 = vmul.f32 %v1177, 2.5
  %v1194 = vmul.f32 %v1178, 2.5
  %v1195 = vmul.f32 %v1179, %v315
  %v1196 = vmul.f32 %v1180, %v316
  %v1197 = vmul.f32 %v1181, %v317
  %v1198 = vmul.f32 %v1182, %v318
  %v1199 = vmul.f32 %v1183, %v319
  %v1200 = vmul.f32 %v1184, %v320
  %v1201 = vmul.f32 %v1185, %v321
  %v1202 = vmul.f32 %v1186, %v322
  %v1203 = vmul.f32 %v1187, %v323
  %v1204 = vmul.f32 %v1188, %v324
  %v1205 = vmul.f32 %v1189, %v325
  %v1206 = vmul.f32 %v1190, %v326
  %v1207 = vmul.f32 %v1191, %v327
  %v1208 = vmul.f32 %v1192, %v328
  %v1209 = vmul.f32 %v1193, %v329
  %v1210 = vmul.f32 %v1194, %v330
  %v1211 = vsub.f32 -1.0, %v35
  %v1212 = vsub.f32 -1.0, %v36
  %v1213 = vsub.f32 -1.0, %v37
  %v1214 = vsub.f32 -1.0, %v38
  %v1215 = vsub.f32 -1.0, %v39
  %v1216 = vsub.f32 -1.0, %v40
  %v1217 = vsub.f32 -1.0, %v41
  %v1218 = vsub.f32 -1.0, %v42
  %v1219 = vsub.f32 -1.0, %v43
  %v1220 = vsub.f32 -1.0, %v44
  %v1221 = vsub.f32 -1.0, %v45
  %v1222 = vsub.f32 -1.0, %v46
  %v1223 = vsub.f32 -1.0, %v47
  %v1224 = vsub.f32 -1.0, %v48
  %v1225 = vsub.f32 -1.0, %v49
  %v1226 = vsub.f32 -1.0, %v50
  %v1227 = vmul.f32 %v1211, 2.5
  %v1228 = vmul.f32 %v1212, 2.5
  %v1229 = vmul.f32 %v1213, 2.5
  %v1230 = vmul.f32 %v1214, 2.5
  %v1231 = vmul.f32 %v1215, 2.5
  %v1232 = vmul.f32 %v1216, 2.5
  %v1233 = vmul.f32 %v1217, 2.5
  %v1234 = vmul.f32 %v1218, 2.5
  %v1235 = vmul.f32 %v1219, 2.5
  %v1236 = vmul.f32 %v1220, 2.5
  %v1237 = vmul.f32 %v1221, 2.5
  %v1238 = vmul.f32 %v1222, 2.5
  %v1239 = vmul.f32 %v1223, 2.5
  %v1240 = vmul.f32 %v1224, 2.5
  %v1241 = vmul.f32 %v1225, 2.5
  %v1242 = vmul.f32 %v1226, 2.5
  %v1243 = vmul.f32 %v1227, %v395
  %v1244 = vmul.f32 %v1228, %v396
  %v1245 = vmul.f32 %v1229, %v397
  %v1246 = vmul.f32 %v1230, %v398
  %v1247 = vmul.f32 %v1231, %v399
  %v1248 = vmul.f32 %v1232, %v400
  %v1249 = vmul.f32 %v1233, %v401
  %v1250 = vmul.f32 %v1234, %v402
  %v1251 = vmul.f32 %v1235, %v403
  %v1252 = vmul.f32 %v1236, %v404
  %v1253 = vmul.f32 %v1237, %v405
  %v1254 = vmul.f32 %v1238, %v406
  %v1255 = vmul.f32 %v1239, %v407
  %v1256 = vmul.f32 %v1240, %v408
  %v1257 = vmul.f32 %v1241, %v409
  %v1258 = vmul.f32 %v1242, %v410
  %v1259 = vadd.f32 %v1195, %v1243
  %v1260 = vadd.f32 %v1196, %v1244
  %v1261 = vadd.f32 %v1197, %v1245
  %v1262 = vadd.f32 %v1198, %v1246
  %v1263 = vadd.f32 %v1199, %v1247
  %v1264 = vadd.f32 %v1200, %v1248
  %v1265 = vadd.f32 %v1201, %v1249
  %v1266 = vadd.f32 %v1202, %v1250
  %v1267 = vadd.f32 %v1203, %v1251
  %v1268 = vadd.f32 %v1204, %v1252
  %v1269 = vadd.f32 %v1205, %v1253
  %v1270 = vadd.f32 %v1206, %v1254
  %v1271 = vadd.f32 %v1207, %v1255
  %v1272 = vadd.f32 %v1208, %v1256
  %v1273 = vadd.f32 %v1209, %v1257
  %v1274 = vadd.f32 %v1210, %v1258
  %v1275 = vsub.f32 %v35, -1.4
  %v1276 = vsub.f32 %v36, -1.4
  %v1277 = vsub.f32 %v37, -1.4
  %v1278 = vsub.f32 %v38, -1.4
  %v1279 = vsub.f32 %v39, -1.4
  %v1280 = vsub.f32 %v40, -1.4
  %v1281 = vsub.f32 %v41, -1.4
  %v1282 = vsub.f32 %v42, -1.4
  %v1283 = vsub.f32 %v43, -1.4
  %v1284 = vsub.f32 %v44, -1.4
  %v1285 = vsub.f32 %v45, -1.4
  %v1286 = vsub.f32 %v46, -1.4
  %v1287 = vsub.f32 %v47, -1.4
  %v1288 = vsub.f32 %v48, -1.4
  %v1289 = vsub.f32 %v49, -1.4
  %v1290 = vsub.f32 %v50, -1.4
  %v1291 = vmul.f32 %v1275, 2.5
  %v1292 = vmul.f32 %v1276, 2.5
  %v1293 = vmul.f32 %v1277, 2.5
  %v1294 = vmul.f32 %v1278, 2.5
  %v1295 = vmul.f32 %v1279, 2.5
  %v1296 = vmul.f32 %v1280, 2.5
  %v1297 = vmul.f32 %v1281, 2.5
  %v1298 = vmul.f32 %v1282, 2.5
  %v1299 = vmul.f32 %v1283, 2.5
  %v1300 = vmul.f32 %v1284, 2.5
  %v1301 = vmul.f32 %v1285, 2.5
  %v1302 = vmul.f32 %v1286, 2.5
  %v1303 = vmul.f32 %v1287, 2.5
  %v1304 = vmul.f32 %v1288, 2.5
  %v1305 = vmul.f32 %v1289, 2.5
  %v1306 = vmul.f32 %v1290, 2.5
  %v1307 = vmul.f32 %v1291, %v395
  %v1308 = vmul.f32 %v1292, %v396
  %v1309 = vmul.f32 %v1293, %v397
  %v1310 = vmul.f32 %v1294, %v398
  %v1311 = vmul.f32 %v1295, %v399
  %v1312 = vmul.f32 %v1296, %v400
  %v1313 = vmul.f32 %v1297, %v401
  %v1314 = vmul.f32 %v1298, %v402
  %v1315 = vmul.f32 %v1299, %v403
  %v1316 = vmul.f32 %v1300, %v404
  %v1317 = vmul.f32 %v1301, %v405
  %v1318 = vmul.f32 %v1302, %v406
  %v1319 = vmul.f32 %v1303, %v407
  %v1320 = vmul.f32 %v1304, %v408
  %v1321 = vmul.f32 %v1305, %v409
  %v1322 = vmul.f32 %v1306, %v410
  %v1323 = vsub.f32 -0.6, %v35
  %v1324 = vsub.f32 -0.6, %v36
  %v1325 = vsub.f32 -0.6, %v37
  %v1326 = vsub.f32 -0.6, %v38
  %v1327 = vsub.f32 -0.6, %v39
  %v1328 = vsub.f32 -0.6, %v40
  %v1329 = vsub.f32 -0.6, %v41
  %v1330 = vsub.f32 -0.6, %v42
  %v1331 = vsub.f32 -0.6, %v43
  %v1332 = vsub.f32 -0.6, %v44
  %v1333 = vsub.f32 -0.6, %v45
  %v1334 = vsub.f32 -0.6, %v46
  %v1335 = vsub.f32 -0.6, %v47
  %v1336 = vsub.f32 -0.6, %v48
  %v1337 = vsub.f32 -0.6, %v49
  %v1338 = vsub.f32 -0.6, %v50
  %v1339 = vmul.f32 %v1323, 2.5
  %v1340 = vmul.f32 %v1324, 2.5
  %v1341 = vmul.f32 %v1325, 2.5
  %v1342 = vmul.f32 %v1326, 2.5
  %v1343 = vmul.f32 %v1327, 2.5
  %v1344 = vmul.f32 %v1328, 2.5
  %v1345 = vmul.f32 %v1329, 2.5
  %v1346 = vmul.f32 %v1330, 2.5
  %v1347 = vmul.f32 %v1331, 2.5
  %v1348 = vmul.f32 %v1332, 2.5
  %v1349 = vmul.f32 %v1333, 2.5
  %v1350 = vmul.f32 %v1334, 2.5
  %v1351 = vmul.f32 %v1335, 2.5
  %v1352 = vmul.f32 %v1336, 2.5
  %v1353 = vmul.f32 %v1337, 2.5
  %v1354 = vmul.f32 %v1338, 2.5
  %v1355 = vmul.f32 %v1339, %v475
  %v1356 = vmul.f32 %v1340, %v476
  %v1357 = vmul.f32 %v1341, %v477
  %v1358 = vmul.f32 %v1342, %v478
  %v1359 = vmul.f32 %v1343, %v479
  %v1360 = vmul.f32 %v1344, %v480
  %v1361 = vmul.f32 %v1345, %v481
  %v1362 = vmul.f32 %v1346, %v482
  %v1363 = vmul.f32 %v1347, %v483
  %v1364 = vmul.f32 %v1348, %v484
  %v1365 = vmul.f32 %v1349, %v485
  %v1366 = vmul.f32 %v1350, %v486
  %v1367 = vmul.f32 %v1351, %v487
  %v1368 = vmul.f32 %v1352, %v488
  %v1369 = vmul.f32 %v1353, %v489
  %v1370 = vmul.f32 %v1354, %v490
  %v1371 = vadd.f32 %v1307, %v1355
  %v1372 = vadd.f32 %v1308, %v1356
  %v1373 = vadd.f32 %v1309, %v1357
  %v1374 = vadd.f32 %v1310, %v1358
  %v1375 = vadd.f32 %v1311, %v1359
  %v1376 = vadd.f32 %v1312, %v1360
  %v1377 = vadd.f32 %v1313, %v1361
  %v1378 = vadd.f32 %v1314, %v1362
  %v1379 = vadd.f32 %v1315, %v1363
  %v1380 = vadd.f32 %v1316, %v1364
  %v1381 = vadd.f32 %v1317, %v1365
  %v1382 = vadd.f32 %v1318, %v1366
  %v1383 = vadd.f32 %v1319, %v1367
  %v1384 = vadd.f32 %v1320, %v1368
  %v1385 = vadd.f32 %v1321, %v1369
  %v1386 = vadd.f32 %v1322, %v1370
  %v1387 = vsub.f32 %v35, -1.0
  %v1388 = vsub.f32 %v36, -1.0
  %v1389 = vsub.f32 %v37, -1.0
  %v1390 = vsub.f32 %v38, -1.0
  %v1391 = vsub.f32 %v39, -1.0
  %v1392 = vsub.f32 %v40, -1.0
  %v1393 = vsub.f32 %v41, -1.0
  %v1394 = vsub.f32 %v42, -1.0
  %v1395 = vsub.f32 %v43, -1.0
  %v1396 = vsub.f32 %v44, -1.0
  %v1397 = vsub.f32 %v45, -1.0
  %v1398 = vsub.f32 %v46, -1.0
  %v1399 = vsub.f32 %v47, -1.0
  %v1400 = vsub.f32 %v48, -1.0
  %v1401 = vsub.f32 %v49, -1.0
  %v1402 = vsub.f32 %v50, -1.0
  %v1403 = vmul.f32 %v1387, 2.5
  %v1404 = vmul.f32 %v1388, 2.5
  %v1405 = vmul.f32 %v1389, 2.5
  %v1406 = vmul.f32 %v1390, 2.5
  %v1407 = vmul.f32 %v1391, 2.5
  %v1408 = vmul.f32 %v1392, 2.5
  %v1409 = vmul.f32 %v1393, 2.5
  %v1410 = vmul.f32 %v1394, 2.5
  %v1411 = vmul.f32 %v1395, 2.5
  %v1412 = vmul.f32 %v1396, 2.5
  %v1413 = vmul.f32 %v1397, 2.5
  %v1414 = vmul.f32 %v1398, 2.5
  %v1415 = vmul.f32 %v1399, 2.5
  %v1416 = vmul.f32 %v1400, 2.5
  %v1417 = vmul.f32 %v1401, 2.5
  %v1418 = vmul.f32 %v1402, 2.5
  %v1419 = vmul.f32 %v1403, %v475
  %v1420 = vmul.f32 %v1404, %v476
  %v1421 = vmul.f32 %v1405, %v477
  %v1422 = vmul.f32 %v1406, %v478
  %v1423 = vmul.f32 %v1407, %v479
  %v1424 = vmul.f32 %v1408, %v480
  %v1425 = vmul.f32 %v1409, %v481
  %v1426 = vmul.f32 %v1410, %v482
  %v1427 = vmul.f32 %v1411, %v483
  %v1428 = vmul.f32 %v1412, %v484
  %v1429 = vmul.f32 %v1413, %v485
  %v1430 = vmul.f32 %v1414, %v486
  %v1431 = vmul.f32 %v1415, %v487
  %v1432 = vmul.f32 %v1416, %v488
  %v1433 = vmul.f32 %v1417, %v489
  %v1434 = vmul.f32 %v1418, %v490
  %v1435 = vsub.f32 -0.2, %v35
  %v1436 = vsub.f32 -0.2, %v36
  %v1437 = vsub.f32 -0.2, %v37
  %v1438 = vsub.f32 -0.2, %v38
  %v1439 = vsub.f32 -0.2, %v39
  %v1440 = vsub.f32 -0.2, %v40
  %v1441 = vsub.f32 -0.2, %v41
  %v1442 = vsub.f32 -0.2, %v42
  %v1443 = vsub.f32 -0.2, %v43
  %v1444 = vsub.f32 -0.2, %v44
  %v1445 = vsub.f32 -0.2, %v45
  %v1446 = vsub.f32 -0.2, %v46
  %v1447 = vsub.f32 -0.2, %v47
  %v1448 = vsub.f32 -0.2, %v48
  %v1449 = vsub.f32 -0.2, %v49
  %v1450 = vsub.f32 -0.2, %v50
  %v1451 = vmul.f32 %v1435, 2.5
  %v1452 = vmul.f32 %v1436, 2.5
  %v1453 = vmul.f32 %v1437, 2.5
  %v1454 = vmul.f32 %v1438, 2.5
  %v1455 = vmul.f32 %v1439, 2.5
  %v1456 = vmul.f32 %v1440, 2.5
  %v1457 = vmul.f32 %v1441, 2.5
  %v1458 = vmul.f32 %v1442, 2.5
  %v1459 = vmul.f32 %v1443, 2.5
  %v1460 = vmul.f32 %v1444, 2.5
  %v1461 = vmul.f32 %v1445, 2.5
  %v1462 = vmul.f32 %v1446, 2.5
  %v1463 = vmul.f32 %v1447, 2.5
  %v1464 = vmul.f32 %v1448, 2.5
  %v1465 = vmul.f32 %v1449, 2.5
  %v1466 = vmul.f32 %v1450, 2.5
  %v1467 = vmul.f32 %v1451, %v555
  %v1468 = vmul.f32 %v1452, %v556
  %v1469 = vmul.f32 %v1453, %v557
  %v1470 = vmul.f32 %v1454, %v558
  %v1471 = vmul.f32 %v1455, %v559
  %v1472 = vmul.f32 %v1456, %v560
  %v1473 = vmul.f32 %v1457, %v561
  %v1474 = vmul.f32 %v1458, %v562
  %v1475 = vmul.f32 %v1459, %v563
  %v1476 = vmul.f32 %v1460, %v564
  %v1477 = vmul.f32 %v1461, %v565
  %v1478 = vmul.f32 %v1462, %v566
  %v1479 = vmul.f32 %v1463, %v567
  %v1480 = vmul.f32 %v1464, %v568
  %v1481 = vmul.f32 %v1465, %v569
  %v1482 = vmul.f32 %v1466, %v570
  %v1483 = vadd.f32 %v1419, %v1467
  %v1484 = vadd.f32 %v1420, %v1468
  %v1485 = vadd.f32 %v1421, %v1469
  %v1486 = vadd.f32 %v1422, %v1470
  %v1487 = vadd.f32 %v1423, %v1471
  %v1488 = vadd.f32 %v1424, %v1472
  %v1489 = vadd.f32 %v1425, %v1473
  %v1490 = vadd.f32 %v1426, %v1474
  %v1491 = vadd.f32 %v1427, %v1475
  %v1492 = vadd.f32 %v1428, %v1476
  %v1493 = vadd.f32 %v1429, %v1477
  %v1494 = vadd.f32 %v1430, %v1478
  %v1495 = vadd.f32 %v1431, %v1479
  %v1496 = vadd.f32 %v1432, %v1480
  %v1497 = vadd.f32 %v1433, %v1481
  %v1498 = vadd.f32 %v1434, %v1482
  %v1499 = vsub.f32 %v35, -0.6
  %v1500 = vsub.f32 %v36, -0.6
  %v1501 = vsub.f32 %v37, -0.6
  %v1502 = vsub.f32 %v38, -0.6
  %v1503 = vsub.f32 %v39, -0.6
  %v1504 = vsub.f32 %v40, -0.6
  %v1505 = vsub.f32 %v41, -0.6
  %v1506 = vsub.f32 %v42, -0.6
  %v1507 = vsub.f32 %v43, -0.6
  %v1508 = vsub.f32 %v44, -0.6
  %v1509 = vsub.f32 %v45, -0.6
  %v1510 = vsub.f32 %v46, -0.6
  %v1511 = vsub.f32 %v47, -0.6
  %v1512 = vsub.f32 %v48, -0.6
  %v1513 = vsub.f32 %v49, -0.6
  %v1514 = vsub.f32 %v50, -0.6
  %v1515 = vmul.f32 %v1499, 2.5
  %v1516 = vmul.f32 %v1500, 2.5
  %v1517 = vmul.f32 %v1501, 2.5
  %v1518 = vmul.f32 %v1502, 2.5
  %v1519 = vmul.f32 %v1503, 2.5
  %v1520 = vmul.f32 %v1504, 2.5
  %v1521 = vmul.f32 %v1505, 2.5
  %v1522 = vmul.f32 %v1506, 2.5
  %v1523 = vmul.f32 %v1507, 2.5
  %v1524 = vmul.f32 %v1508, 2.5
  %v1525 = vmul.f32 %v1509, 2.5
  %v1526 = vmul.f32 %v1510, 2.5
  %v1527 = vmul.f32 %v1511, 2.5
  %v1528 = vmul.f32 %v1512, 2.5
  %v1529 = vmul.f32 %v1513, 2.5
  %v1530 = vmul.f32 %v1514, 2.5
  %v1531 = vmul.f32 %v1515, %v555
  %v1532 = vmul.f32 %v1516, %v556
  %v1533 = vmul.f32 %v1517, %v557
  %v1534 = vmul.f32 %v1518, %v558
  %v1535 = vmul.f32 %v1519, %v559
  %v1536 = vmul.f32 %v1520, %v560
  %v1537 = vmul.f32 %v1521, %v561
  %v1538 = vmul.f32 %v1522, %v562
  %v1539 = vmul.f32 %v1523, %v563
  %v1540 = vmul.f32 %v1524, %v564
  %v1541 = vmul.f32 %v1525, %v565
  %v1542 = vmul.f32 %v1526, %v566
  %v1543 = vmul.f32 %v1527, %v567
  %v1544 = vmul.f32 %v1528, %v568
  %v1545 = vmul.f32 %v1529, %v569
  %v1546 = vmul.f32 %v1530, %v570
  %v1547 = vsub.f32 0.2, %v35
  %v1548 = vsub.f32 0.2, %v36
  %v1549 = vsub.f32 0.2, %v37
  %v1550 = vsub.f32 0.2, %v38
  %v1551 = vsub.f32 0.2, %v39
  %v1552 = vsub.f32 0.2, %v40
  %v1553 = vsub.f32 0.2, %v41
  %v1554 = vsub.f32 0.2, %v42
  %v1555 = vsub.f32 0.2, %v43
  %v1556 = vsub.f32 0.2, %v44
  %v1557 = vsub.f32 0.2, %v45
  %v1558 = vsub.f32 0.2, %v46
  %v1559 = vsub.f32 0.2, %v47
  %v1560 = vsub.f32 0.2, %v48
  %v1561 = vsub.f32 0.2, %v49
  %v1562 = vsub.f32 0.2, %v50
  %v1563 = vmul.f32 %v1547, 2.5
  %v1564 = vmul.f32 %v1548, 2.5
  %v1565 = vmul.f32 %v1549, 2.5
  %v1566 = vmul.f32 %v1550, 2.5
  %v1567 = vmul.f32 %v1551, 2.5
  %v1568 = vmul.f32 %v1552, 2.5
  %v1569 = vmul.f32 %v1553, 2.5
  %v1570 = vmul.f32 %v1554, 2.5
  %v1571 = vmul.f32 %v1555, 2.5
  %v1572 = vmul.f32 %v1556, 2.5
  %v1573 = vmul.f32 %v1557, 2.5
  %v1574 = vmul.f32 %v1558, 2.5
  %v1575 = vmul.f32 %v1559, 2.5
  %v1576 = vmul.f32 %v1560, 2.5
  %v1577 = vmul.f32 %v1561, 2.5
  %v1578 = vmul.f32 %v1562, 2.5
  %v1579 = vmul.f32 %v1563, %v635
  %v1580 = vmul.f32 %v1564, %v636
  %v1581 = vmul.f32 %v1565, %v637
  %v1582 = vmul.f32 %v1566, %v638
  %v1583 = vmul.f32 %v1567, %v639
  %v1584 = vmul.f32 %v1568, %v640
  %v1585 = vmul.f32 %v1569, %v641
  %v1586 = vmul.f32 %v1570, %v642
  %v1587 = vmul.f32 %v1571, %v643
  %v1588 = vmul.f32 %v1572, %v644
  %v1589 = vmul.f32 %v1573, %v645
  %v1590 = vmul.f32 %v1574, %v646
  %v1591 = vmul.f32 %v1575, %v647
  %v1592 = vmul.f32 %v1576, %v648
  %v1593 = vmul.f32 %v1577, %v649
  %v1594 = vmul.f32 %v1578, %v650
  %v1595 = vadd.f32 %v1531, %v1579
  %v1596 = vadd.f32 %v1532, %v1580
  %v1597 = vadd.f32 %v1533, %v1581
  %v1598 = vadd.f32 %v1534, %v1582
  %v1599 = vadd.f32 %v1535, %v1583
  %v1600 = vadd.f32 %v1536, %v1584
  %v1601 = vadd.f32 %v1537, %v1585
  %v1602 = vadd.f32 %v1538, %v1586
  %v1603 = vadd.f32 %v1539, %v1587
  %v1604 = vadd.f32 %v1540, %v1588
  %v1605 = vadd.f32 %v1541, %v1589
  %v1606 = vadd.f32 %v1542, %v1590
  %v1607 = vadd.f32 %v1543, %v1591
  %v1608 = vadd.f32 %v1544, %v1592
  %v1609 = vadd.f32 %v1545, %v1593
  %v1610 = vadd.f32 %v1546, %v1594
  %v1611 = vsub.f32 %v35, -0.2
  %v1612 = vsub.f32 %v36, -0.2
  %v1613 = vsub.f32 %v37, -0.2
  %v1614 = vsub.f32 %v38, -0.2
  %v1615 = vsub.f32 %v39, -0.2
  %v1616 = vsub.f32 %v40, -0.2
  %v1617 = vsub.f32 %v41, -0.2
  %v1618 = vsub.f32 %v42, -0.2
  %v1619 = vsub.f32 %v43, -0.2
  %v1620 = vsub.f32 %v44, -0.2
  %v1621 = vsub.f32 %v45, -0.2
  %v1622 = vsub.f32 %v46, -0.2
  %v1623 = vsub.f32 %v47, -0.2
  %v1624 = vsub.f32 %v48, -0.2
  %v1625 = vsub.f32 %v49, -0.2
  %v1626 = vsub.f32 %v50, -0.2
  %v1627 = vmul.f32 %v1611, 2.5
  %v1628 = vmul.f32 %v1612, 2.5
  %v1629 = vmul.f32 %v1613, 2.5
  %v1630 = vmul.f32 %v1614, 2.5
  %v1631 = vmul.f32 %v1615, 2.5
  %v1632 = vmul.f32 %v1616, 2.5
  %v1633 = vmul.f32 %v1617, 2.5
  %v1634 = vmul.f32 %v1618, 2.5
  %v1635 = vmul.f32 %v1619, 2.5
  %v1636 = vmul.f32 %v1620, 2.5
  %v1637 = vmul.f32 %v1621, 2.5
  %v1638 = vmul.f32 %v1622, 2.5
  %v1639 = vmul.f32 %v1623, 2.5
  %v1640 = vmul.f32 %v1624, 2.5
  %v1641 = vmul.f32 %v1625, 2.5
  %v1642 = vmul.f32 %v1626, 2.5
  %v1643 = vmul.f32 %v1627, %v635
  %v1644 = vmul.f32 %v1628, %v636
  %v1645 = vmul.f32 %v1629, %v637
  %v1646 = vmul.f32 %v1630, %v638
  %v1647 = vmul.f32 %v1631, %v639
  %v1648 = vmul.f32 %v1632, %v640
  %v1649 = vmul.f32 %v1633, %v641
  %v1650 = vmul.f32 %v1634, %v642
  %v1651 = vmul.f32 %v1635, %v643
  %v1652 = vmul.f32 %v1636, %v644
  %v1653 = vmul.f32 %v1637, %v645
  %v1654 = vmul.f32 %v1638, %v646
  %v1655 = vmul.f32 %v1639, %v647
  %v1656 = vmul.f32 %v1640, %v648
  %v1657 = vmul.f32 %v1641, %v649
  %v1658 = vmul.f32 %v1642, %v650
  %v1659 = vsub.f32 0.6, %v35
  %v1660 = vsub.f32 0.6, %v36
  %v1661 = vsub.f32 0.6, %v37
  %v1662 = vsub.f32 0.6, %v38
  %v1663 = vsub.f32 0.6, %v39
  %v1664 = vsub.f32 0.6, %v40
  %v1665 = vsub.f32 0.6, %v41
  %v1666 = vsub.f32 0.6, %v42
  %v1667 = vsub.f32 0.6, %v43
  %v1668 = vsub.f32 0.6, %v44
  %v1669 = vsub.f32 0.6, %v45
  %v1670 = vsub.f32 0.6, %v46
  %v1671 = vsub.f32 0.6, %v47
  %v1672 = vsub.f32 0.6, %v48
  %v1673 = vsub.f32 0.6, %v49
  %v1674 = vsub.f32 0.6, %v50
  %v1675 = vmul.f32 %v1659, 2.5
  %v1676 = vmul.f32 %v1660, 2.5
  %v1677 = vmul.f32 %v1661, 2.5
  %v1678 = vmul.f32 %v1662, 2.5
  %v1679 = vmul.f32 %v1663, 2.5
  %v1680 = vmul.f32 %v1664, 2.5
  %v1681 = vmul.f32 %v1665, 2.5
  %v1682 = vmul.f32 %v1666, 2.5
  %v1683 = vmul.f32 %v1667, 2.5
  %v1684 = vmul.f32 %v1668, 2.5
  %v1685 = vmul.f32 %v1669, 2.5
  %v1686 = vmul.f32 %v1670, 2.5
  %v1687 = vmul.f32 %v1671, 2.5
  %v1688 = vmul.f32 %v1672, 2.5
  %v1689 = vmul.f32 %v1673, 2.5
  %v1690 = vmul.f32 %v1674, 2.5
  %v1691 = vmul.f32 %v1675, %v715
  %v1692 = vmul.f32 %v1676, %v716
  %v1693 = vmul.f32 %v1677, %v717
  %v1694 = vmul.f32 %v1678, %v718
  %v1695 = vmul.f32 %v1679, %v719
  %v1696 = vmul.f32 %v1680, %v720
  %v1697 = vmul.f32 %v1681, %v721
  %v1698 = vmul.f32 %v1682, %v722
  %v1699 = vmul.f32 %v1683, %v723
  %v1700 = vmul.f32 %v1684, %v724
  %v1701 = vmul.f32 %v1685, %v725
  %v1702 = vmul.f32 %v1686, %v726
  %v1703 = vmul.f32 %v1687, %v727
  %v1704 = vmul.f32 %v1688, %v728
  %v1705 = vmul.f32 %v1689, %v729
  %v1706 = vmul.f32 %v1690, %v730
  %v1707 = vadd.f32 %v1643, %v1691
  %v1708 = vadd.f32 %v1644, %v1692
  %v1709 = vadd.f32 %v1645, %v1693
  %v1710 = vadd.f32 %v1646, %v1694
  %v1711 = vadd.f32 %v1647, %v1695
  %v1712 = vadd.f32 %v1648, %v1696
  %v1713 = vadd.f32 %v1649, %v1697
  %v1714 = vadd.f32 %v1650, %v1698
  %v1715 = vadd.f32 %v1651, %v1699
  %v1716 = vadd.f32 %v1652, %v1700
  %v1717 = vadd.f32 %v1653, %v1701
  %v1718 = vadd.f32 %v1654, %v1702
  %v1719 = vadd.f32 %v1655, %v1703
  %v1720 = vadd.f32 %v1656, %v1704
  %v1721 = vadd.f32 %v1657, %v1705
  %v1722 = vadd.f32 %v1658, %v1706
  %v1723 = vsub.f32 %v35, 0.2
  %v1724 = vsub.f32 %v36, 0.2
  %v1725 = vsub.f32 %v37, 0.2
  %v1726 = vsub.f32 %v38, 0.2
  %v1727 = vsub.f32 %v39, 0.2
  %v1728 = vsub.f32 %v40, 0.2
  %v1729 = vsub.f32 %v41, 0.2
  %v1730 = vsub.f32 %v42, 0.2
  %v1731 = vsub.f32 %v43, 0.2
  %v1732 = vsub.f32 %v44, 0.2
  %v1733 = vsub.f32 %v45, 0.2
  %v1734 = vsub.f32 %v46, 0.2
  %v1735 = vsub.f32 %v47, 0.2
  %v1736 = vsub.f32 %v48, 0.2
  %v1737 = vsub.f32 %v49, 0.2
  %v1738 = vsub.f32 %v50, 0.2
  %v1739 = vmul.f32 %v1723, 2.5
  %v1740 = vmul.f32 %v1724, 2.5
  %v1741 = vmul.f32 %v1725, 2.5
  %v1742 = vmul.f32 %v1726, 2.5
  %v1743 = vmul.f32 %v1727, 2.5
  %v1744 = vmul.f32 %v1728, 2.5
  %v1745 = vmul.f32 %v1729, 2.5
  %v1746 = vmul.f32 %v1730, 2.5
  %v1747 = vmul.f32 %v1731, 2.5
  %v1748 = vmul.f32 %v1732, 2.5
  %v1749 = vmul.f32 %v1733, 2.5
  %v1750 = vmul.f32 %v1734, 2.5
  %v1751 = vmul.f32 %v1735, 2.5
  %v1752 = vmul.f32 %v1736, 2.5
  %v1753 = vmul.f32 %v1737, 2.5
  %v1754 = vmul.f32 %v1738, 2.5
  %v1755 = vmul.f32 %v1739, %v715
  %v1756 = vmul.f32 %v1740, %v716
  %v1757 = vmul.f32 %v1741, %v717
  %v1758 = vmul.f32 %v1742, %v718
  %v1759 = vmul.f32 %v1743, %v719
  %v1760 = vmul.f32 %v1744, %v720
  %v1761 = vmul.f32 %v1745, %v721
  %v1762 = vmul.f32 %v1746, %v722
  %v1763 = vmul.f32 %v1747, %v723
  %v1764 = vmul.f32 %v1748, %v724
  %v1765 = vmul.f32 %v1749, %v725
  %v1766 = vmul.f32 %v1750, %v726
  %v1767 = vmul.f32 %v1751, %v727
  %v1768 = vmul.f32 %v1752, %v728
  %v1769 = vmul.f32 %v1753, %v729
  %v1770 = vmul.f32 %v1754, %v730
  %v1771 = vsub.f32 1.0, %v35
  %v1772 = vsub.f32 1.0, %v36
  %v1773 = vsub.f32 1.0, %v37
  %v1774 = vsub.f32 1.0, %v38
  %v1775 = vsub.f32 1.0, %v39
  %v1776 = vsub.f32 1.0, %v40
  %v1777 = vsub.f32 1.0, %v41
  %v1778 = vsub.f32 1.0, %v42
  %v1779 = vsub.f32 1.0, %v43
  %v1780 = vsub.f32 1.0, %v44
  %v1781 = vsub.f32 1.0, %v45
  %v1782 = vsub.f32 1.0, %v46
  %v1783 = vsub.f32 1.0, %v47
  %v1784 = vsub.f32 1.0, %v48
  %v1785 = vsub.f32 1.0, %v49
  %v1786 = vsub.f32 1.0, %v50
  %v1787 = vmul.f32 %v1771, 2.5
  %v1788 = vmul.f32 %v1772, 2.5
  %v1789 = vmul.f32 %v1773, 2.5
  %v1790 = vmul.f32 %v1774, 2.5
  %v1791 = vmul.f32 %v1775, 2.5
  %v1792 = vmul.f32 %v1776, 2.5
  %v1793 = vmul.f32 %v1777, 2.5
  %v1794 = vmul.f32 %v1778, 2.5
  %v1795 = vmul.f32 %v1779, 2.5
  %v1796 = vmul.f32 %v1780, 2.5
  %v1797 = vmul.f32 %v1781, 2.5
  %v1798 = vmul.f32 %v1782, 2.5
  %v1799 = vmul.f32 %v1783, 2.5
  %v1800 = vmul.f32 %v1784, 2.5
  %v1801 = vmul.f32 %v1785, 2.5
  %v1802 = vmul.f32 %v1786, 2.5
  %v1803 = vmul.f32 %v1787, %v795
  %v1804 = vmul.f32 %v1788, %v796
  %v1805 = vmul.f32 %v1789, %v797
  %v1806 = vmul.f32 %v1790, %v798
  %v1807 = vmul.f32 %v1791, %v799
  %v1808 = vmul.f32 %v1792, %v800
  %v1809 = vmul.f32 %v1793, %v801
  %v1810 = vmul.f32 %v1794, %v802
  %v1811 = vmul.f32 %v1795, %v803
  %v1812 = vmul.f32 %v1796, %v804
  %v1813 = vmul.f32 %v1797, %v805
  %v1814 = vmul.f32 %v1798, %v806
  %v1815 = vmul.f32 %v1799, %v807
  %v1816 = vmul.f32 %v1800, %v808
  %v1817 = vmul.f32 %v1801, %v809
  %v1818 = vmul.f32 %v1802, %v810
  %v1819 = vadd.f32 %v1755, %v1803
  %v1820 = vadd.f32 %v1756, %v1804
  %v1821 = vadd.f32 %v1757, %v1805
  %v1822 = vadd.f32 %v1758, %v1806
  %v1823 = vadd.f32 %v1759, %v1807
  %v1824 = vadd.f32 %v1760, %v1808
  %v1825 = vadd.f32 %v1761, %v1809
  %v1826 = vadd.f32 %v1762, %v1810
  %v1827 = vadd.f32 %v1763, %v1811
  %v1828 = vadd.f32 %v1764, %v1812
  %v1829 = vadd.f32 %v1765, %v1813
  %v1830 = vadd.f32 %v1766, %v1814
  %v1831 = vadd.f32 %v1767, %v1815
  %v1832 = vadd.f32 %v1768, %v1816
  %v1833 = vadd.f32 %v1769, %v1817
  %v1834 = vadd.f32 %v1770, %v1818
  %v1835 = vsub.f32 %v35, 0.6
  %v1836 = vsub.f32 %v36, 0.6
  %v1837 = vsub.f32 %v37, 0.6
  %v1838 = vsub.f32 %v38, 0.6
  %v1839 = vsub.f32 %v39, 0.6
  %v1840 = vsub.f32 %v40, 0.6
  %v1841 = vsub.f32 %v41, 0.6
  %v1842 = vsub.f32 %v42, 0.6
  %v1843 = vsub.f32 %v43, 0.6
  %v1844 = vsub.f32 %v44, 0.6
  %v1845 = vsub.f32 %v45, 0.6
  %v1846 = vsub.f32 %v46, 0.6
  %v1847 = vsub.f32 %v47, 0.6
  %v1848 = vsub.f32 %v48, 0.6
  %v1849 = vsub.f32 %v49, 0.6
  %v1850 = vsub.f32 %v50, 0.6
  %v1851 = vmul.f32 %v1835, 2.5
  %v1852 = vmul.f32 %v1836, 2.5
  %v1853 = vmul.f32 %v1837, 2.5
  %v1854 = vmul.f32 %v1838, 2.5
  %v1855 = vmul.f32 %v1839, 2.5
  %v1856 = vmul.f32 %v1840, 2.5
  %v1857 = vmul.f32 %v1841, 2.5
  %v1858 = vmul.f32 %v1842, 2.5
  %v1859 = vmul.f32 %v1843, 2.5
  %v1860 = vmul.f32 %v1844, 2.5
  %v1861 = vmul.f32 %v1845, 2.5
  %v1862 = vmul.f32 %v1846, 2.5
  %v1863 = vmul.f32 %v1847, 2.5
  %v1864 = vmul.f32 %v1848, 2.5
  %v1865 = vmul.f32 %v1849, 2.5
  %v1866 = vmul.f32 %v1850, 2.5
  %v1867 = vmul.f32 %v1851, %v795
  %v1868 = vmul.f32 %v1852, %v796
  %v1869 = vmul.f32 %v1853, %v797
  %v1870 = vmul.f32 %v1854, %v798
  %v1871 = vmul.f32 %v1855, %v799
  %v1872 = vmul.f32 %v1856, %v800
  %v1873 = vmul.f32 %v1857, %v801
  %v1874 = vmul.f32 %v1858, %v802
  %v1875 = vmul.f32 %v1859, %v803
  %v1876 = vmul.f32 %v1860, %v804
  %v1877 = vmul.f32 %v1861, %v805
  %v1878 = vmul.f32 %v1862, %v806
  %v1879 = vmul.f32 %v1863, %v807
  %v1880 = vmul.f32 %v1864, %v808
  %v1881 = vmul.f32 %v1865, %v809
  %v1882 = vmul.f32 %v1866, %v810
  %v1883 = vsub.f32 1.4, %v35
  %v1884 = vsub.f32 1.4, %v36
  %v1885 = vsub.f32 1.4, %v37
  %v1886 = vsub.f32 1.4, %v38
  %v1887 = vsub.f32 1.4, %v39
  %v1888 = vsub.f32 1.4, %v40
  %v1889 = vsub.f32 1.4, %v41
  %v1890 = vsub.f32 1.4, %v42
  %v1891 = vsub.f32 1.4, %v43
  %v1892 = vsub.f32 1.4, %v44
  %v1893 = vsub.f32 1.4, %v45
  %v1894 = vsub.f32 1.4, %v46
  %v1895 = vsub.f32 1.4, %v47
  %v1896 = vsub.f32 1.4, %v48
  %v1897 = vsub.f32 1.4, %v49
  %v1898 = vsub.f32 1.4, %v50
  %v1899 = vmul.f32 %v1883, 2.5
  %v1900 = vmul.f32 %v1884, 2.5
  %v1901 = vmul.f32 %v1885, 2.5
  %v1902 = vmul.f32 %v1886, 2.5
  %v1903 = vmul.f32 %v1887, 2.5
  %v1904 = vmul.f32 %v1888, 2.5
  %v1905 = vmul.f32 %v1889, 2.5
  %v1906 = vmul.f32 %v1890, 2.5
  %v1907 = vmul.f32 %v1891, 2.5
  %v1908 = vmul.f32 %v1892, 2.5
  %v1909 = vmul.f32 %v1893, 2.5
  %v1910 = vmul.f32 %v1894, 2.5
  %v1911 = vmul.f32 %v1895, 2.5
  %v1912 = vmul.f32 %v1896, 2.5
  %v1913 = vmul.f32 %v1897, 2.5
  %v1914 = vmul.f32 %v1898, 2.5
  %v1915 = vmul.f32 %v1899, %v875
  %v1916 = vmul.f32 %v1900, %v876
  %v1917 = vmul.f32 %v1901, %v877
  %v1918 = vmul.f32 %v1902, %v878
  %v1919 = vmul.f32 %v1903, %v879
  %v1920 = vmul.f32 %v1904, %v880
  %v1921 = vmul.f32 %v1905, %v881
  %v1922 = vmul.f32 %v1906, %v882
  %v1923 = vmul.f32 %v1907, %v883
  %v1924 = vmul.f32 %v1908, %v884
  %v1925 = vmul.f32 %v1909, %v885
  %v1926 = vmul.f32 %v1910, %v886
  %v1927 = vmul.f32 %v1911, %v887
  %v1928 = vmul.f32 %v1912, %v888
  %v1929 = vmul.f32 %v1913, %v889
  %v1930 = vmul.f32 %v1914, %v890
  %v1931 = vadd.f32 %v1867, %v1915
  %v1932 = vadd.f32 %v1868, %v1916
  %v1933 = vadd.f32 %v1869, %v1917
  %v1934 = vadd.f32 %v1870, %v1918
  %v1935 = vadd.f32 %v1871, %v1919
  %v1936 = vadd.f32 %v1872, %v1920
  %v1937 = vadd.f32 %v1873, %v1921
  %v1938 = vadd.f32 %v1874, %v1922
  %v1939 = vadd.f32 %v1875, %v1923
  %v1940 = vadd.f32 %v1876, %v1924
  %v1941 = vadd.f32 %v1877, %v1925
  %v1942 = vadd.f32 %v1878, %v1926
  %v1943 = vadd.f32 %v1879, %v1927
  %v1944 = vadd.f32 %v1880, %v1928
  %v1945 = vadd.f32 %v1881, %v1929
  %v1946 = vadd.f32 %v1882, %v1930
  %v1947 = vsub.f32 %v35, 1.0
  %v1948 = vsub.f32 %v36, 1.0
  %v1949 = vsub.f32 %v37, 1.0
  %v1950 = vsub.f32 %v38, 1.0
  %v1951 = vsub.f32 %v39, 1.0
  %v1952 = vsub.f32 %v40, 1.0
  %v1953 = vsub.f32 %v41, 1.0
  %v1954 = vsub.f32 %v42, 1.0
  %v1955 = vsub.f32 %v43, 1.0
  %v1956 = vsub.f32 %v44, 1.0
  %v1957 = vsub.f32 %v45, 1.0
  %v1958 = vsub.f32 %v46, 1.0
  %v1959 = vsub.f32 %v47, 1.0
  %v1960 = vsub.f32 %v48, 1.0
  %v1961 = vsub.f32 %v49, 1.0
  %v1962 = vsub.f32 %v50, 1.0
  %v1963 = vmul.f32 %v1947, 2.5
  %v1964 = vmul.f32 %v1948, 2.5
  %v1965 = vmul.f32 %v1949, 2.5
  %v1966 = vmul.f32 %v1950, 2.5
  %v1967 = vmul.f32 %v1951, 2.5
  %v1968 = vmul.f32 %v1952, 2.5
  %v1969 = vmul.f32 %v1953, 2.5
  %v1970 = vmul.f32 %v1954, 2.5
  %v1971 = vmul.f32 %v1955, 2.5
  %v1972 = vmul.f32 %v1956, 2.5
  %v1973 = vmul.f32 %v1957, 2.5
  %v1974 = vmul.f32 %v1958, 2.5
  %v1975 = vmul.f32 %v1959, 2.5
  %v1976 = vmul.f32 %v1960, 2.5
  %v1977 = vmul.f32 %v1961, 2.5
  %v1978 = vmul.f32 %v1962, 2.5
  %v1979 = vmul.f32 %v1963, %v875
  %v1980 = vmul.f32 %v1964, %v876
  %v1981 = vmul.f32 %v1965, %v877
  %v1982 = vmul.f32 %v1966, %v878
  %v1983 = vmul.f32 %v1967, %v879
  %v1984 = vmul.f32 %v1968, %v880
  %v1985 = vmul.f32 %v1969, %v881
  %v1986 = vmul.f32 %v1970, %v882
  %v1987 = vmul.f32 %v1971, %v883
  %v1988 = vmul.f32 %v1972, %v884
  %v1989 = vmul.f32 %v1973, %v885
  %v1990 = vmul.f32 %v1974, %v886
  %v1991 = vmul.f32 %v1975, %v887
  %v1992 = vmul.f32 %v1976, %v888
  %v1993 = vmul.f32 %v1977, %v889
  %v1994 = vmul.f32 %v1978, %v890
  %v1995 = vsub.f32 1.8, %v35
  %v1996 = vsub.f32 1.8, %v36
  %v1997 = vsub.f32 1.8, %v37
  %v1998 = vsub.f32 1.8, %v38
  %v1999 = vsub.f32 1.8, %v39
  %v2000 = vsub.f32 1.8, %v40
  %v2001 = vsub.f32 1.8, %v41
  %v2002 = vsub.f32 1.8, %v42
  %v2003 = vsub.f32 1.8, %v43
  %v2004 = vsub.f32 1.8, %v44
  %v2005 = vsub.f32 1.8, %v45
  %v2006 = vsub.f32 1.8, %v46
  %v2007 = vsub.f32 1.8, %v47
  %v2008 = vsub.f32 1.8, %v48
  %v2009 = vsub.f32 1.8, %v49
  %v2010 = vsub.f32 1.8, %v50
  %v2011 = vmul.f32 %v1995, 2.5
  %v2012 = vmul.f32 %v1996, 2.5
  %v2013 = vmul.f32 %v1997, 2.5
  %v2014 = vmul.f32 %v1998, 2.5
  %v2015 = vmul.f32 %v1999, 2.5
  %v2016 = vmul.f32 %v2000, 2.5
  %v2017 = vmul.f32 %v2001, 2.5
  %v2018 = vmul.f32 %v2002, 2.5
  %v2019 = vmul.f32 %v2003, 2.5
  %v2020 = vmul.f32 %v2004, 2.5
  %v2021 = vmul.f32 %v2005, 2.5
  %v2022 = vmul.f32 %v2006, 2.5
  %v2023 = vmul.f32 %v2007, 2.5
  %v2024 = vmul.f32 %v2008, 2.5
  %v2025 = vmul.f32 %v2009, 2.5
  %v2026 = vmul.f32 %v2010, 2.5
  %v2027 = vmul.f32 %v2011, %v955
  %v2028 = vmul.f32 %v2012, %v956
  %v2029 = vmul.f32 %v2013, %v957
  %v2030 = vmul.f32 %v2014, %v958
  %v2031 = vmul.f32 %v2015, %v959
  %v2032 = vmul.f32 %v2016, %v960
  %v2033 = vmul.f32 %v2017, %v961
  %v2034 = vmul.f32 %v2018, %v962
  %v2035 = vmul.f32 %v2019, %v963
  %v2036 = vmul.f32 %v2020, %v964
  %v2037 = vmul.f32 %v2021, %v965
  %v2038 = vmul.f32 %v2022, %v966
  %v2039 = vmul.f32 %v2023, %v967
  %v2040 = vmul.f32 %v2024, %v968
  %v2041 = vmul.f32 %v2025, %v969
  %v2042 = vmul.f32 %v2026, %v970
  %v2043 = vadd.f32 %v1979, %v2027
  %v2044 = vadd.f32 %v1980, %v2028
  %v2045 = vadd.f32 %v1981, %v2029
  %v2046 = vadd.f32 %v1982, %v2030
  %v2047 = vadd.f32 %v1983, %v2031
  %v2048 = vadd.f32 %v1984, %v2032
  %v2049 = vadd.f32 %v1985, %v2033
  %v2050 = vadd.f32 %v1986, %v2034
  %v2051 = vadd.f32 %v1987, %v2035
  %v2052 = vadd.f32 %v1988, %v2036
  %v2053 = vadd.f32 %v1989, %v2037
  %v2054 = vadd.f32 %v1990, %v2038
  %v2055 = vadd.f32 %v1991, %v2039
  %v2056 = vadd.f32 %v1992, %v2040
  %v2057 = vadd.f32 %v1993, %v2041
  %v2058 = vadd.f32 %v1994, %v2042
  %v2059 = vsub.f32 %v35, 1.4
  %v2060 = vsub.f32 %v36, 1.4
  %v2061 = vsub.f32 %v37, 1.4
  %v2062 = vsub.f32 %v38, 1.4
  %v2063 = vsub.f32 %v39, 1.4
  %v2064 = vsub.f32 %v40, 1.4
  %v2065 = vsub.f32 %v41, 1.4
  %v2066 = vsub.f32 %v42, 1.4
  %v2067 = vsub.f32 %v43, 1.4
  %v2068 = vsub.f32 %v44, 1.4
  %v2069 = vsub.f32 %v45, 1.4
  %v2070 = vsub.f32 %v46, 1.4
  %v2071 = vsub.f32 %v47, 1.4
  %v2072 = vsub.f32 %v48, 1.4
  %v2073 = vsub.f32 %v49, 1.4
  %v2074 = vsub.f32 %v50, 1.4
  %v2075 = vmul.f32 %v2059, 2.5
  %v2076 = vmul.f32 %v2060, 2.5
  %v2077 = vmul.f32 %v2061, 2.5
  %v2078 = vmul.f32 %v2062, 2.5
  %v2079 = vmul.f32 %v2063, 2.5
  %v2080 = vmul.f32 %v2064, 2.5
  %v2081 = vmul.f32 %v2065, 2.5
  %v2082 = vmul.f32 %v2066, 2.5
  %v2083 = vmul.f32 %v2067, 2.5
  %v2084 = vmul.f32 %v2068, 2.5
  %v2085 = vmul.f32 %v2069, 2.5
  %v2086 = vmul.f32 %v2070, 2.5
  %v2087 = vmul.f32 %v2071, 2.5
  %v2088 = vmul.f32 %v2072, 2.5
  %v2089 = vmul.f32 %v2073, 2.5
  %v2090 = vmul.f32 %v2074, 2.5
  %v2091 = vmul.f32 %v2075, %v955
  %v2092 = vmul.f32 %v2076, %v956
  %v2093 = vmul.f32 %v2077, %v957
  %v2094 = vmul.f32 %v2078, %v958
  %v2095 = vmul.f32 %v2079, %v959
  %v2096 = vmul.f32 %v2080, %v960
  %v2097 = vmul.f32 %v2081, %v961
  %v2098 = vmul.f32 %v2082, %v962
  %v2099 = vmul.f32 %v2083, %v963
  %v2100 = vmul.f32 %v2084, %v964
  %v2101 = vmul.f32 %v2085, %v965
  %v2102 = vmul.f32 %v2086, %v966
  %v2103 = vmul.f32 %v2087, %v967
  %v2104 = vmul.f32 %v2088, %v968
  %v2105 = vmul.f32 %v2089, %v969
  %v2106 = vmul.f32 %v2090, %v970
  %v2107 = vsub.f32 2.2, %v35
  %v2108 = vsub.f32 2.2, %v36
  %v2109 = vsub.f32 2.2, %v37
  %v2110 = vsub.f32 2.2, %v38
  %v2111 = vsub.f32 2.2, %v39
  %v2112 = vsub.f32 2.2, %v40
  %v2113 = vsub.f32 2.2, %v41
  %v2114 = vsub.f32 2.2, %v42
  %v2115 = vsub.f32 2.2, %v43
  %v2116 = vsub.f32 2.2, %v44
  %v2117 = vsub.f32 2.2, %v45
  %v2118 = vsub.f32 2.2, %v46
  %v2119 = vsub.f32 2.2, %v47
  %v2120 = vsub.f32 2.2, %v48
  %v2121 = vsub.f32 2.2, %v49
  %v2122 = vsub.f32 2.2, %v50
  %v2123 = vmul.f32 %v2107, 2.5
  %v2124 = vmul.f32 %v2108, 2.5
  %v2125 = vmul.f32 %v2109, 2.5
  %v2126 = vmul.f32 %v2110, 2.5
  %v2127 = vmul.f32 %v2111, 2.5
  %v2128 = vmul.f32 %v2112, 2.5
  %v2129 = vmul.f32 %v2113, 2.5
  %v2130 = vmul.f32 %v2114, 2.5
  %v2131 = vmul.f32 %v2115, 2.5
  %v2132 = vmul.f32 %v2116, 2.5
  %v2133 = vmul.f32 %v2117, 2.5
  %v2134 = vmul.f32 %v2118, 2.5
  %v2135 = vmul.f32 %v2119, 2.5
  %v2136 = vmul.f32 %v2120, 2.5
  %v2137 = vmul.f32 %v2121, 2.5
  %v2138 = vmul.f32 %v2122, 2.5
  %v2139 = vmul.f32 %v2123, %v1035
  %v2140 = vmul.f32 %v2124, %v1036
  %v2141 = vmul.f32 %v2125, %v1037
  %v2142 = vmul.f32 %v2126, %v1038
  %v2143 = vmul.f32 %v2127, %v1039
  %v2144 = vmul.f32 %v2128, %v1040
  %v2145 = vmul.f32 %v2129, %v1041
  %v2146 = vmul.f32 %v2130, %v1042
  %v2147 = vmul.f32 %v2131, %v1043
  %v2148 = vmul.f32 %v2132, %v1044
  %v2149 = vmul.f32 %v2133, %v1045
  %v2150 = vmul.f32 %v2134, %v1046
  %v2151 = vmul.f32 %v2135, %v1047
  %v2152 = vmul.f32 %v2136, %v1048
  %v2153 = vmul.f32 %v2137, %v1049
  %v2154 = vmul.f32 %v2138, %v1050
  %v2155 = vadd.f32 %v2091, %v2139
  %v2156 = vadd.f32 %v2092, %v2140
  %v2157 = vadd.f32 %v2093, %v2141
  %v2158 = vadd.f32 %v2094, %v2142
  %v2159 = vadd.f32 %v2095, %v2143
  %v2160 = vadd.f32 %v2096, %v2144
  %v2161 = vadd.f32 %v2097, %v2145
  %v2162 = vadd.f32 %v2098, %v2146
  %v2163 = vadd.f32 %v2099, %v2147
  %v2164 = vadd.f32 %v2100, %v2148
  %v2165 = vadd.f32 %v2101, %v2149
  %v2166 = vadd.f32 %v2102, %v2150
  %v2167 = vadd.f32 %v2103, %v2151
  %v2168 = vadd.f32 %v2104, %v2152
  %v2169 = vadd.f32 %v2105, %v2153
  %v2170 = vadd.f32 %v2106, %v2154
  %v2171 = vmul.f32 %v1051, 1.25
  %v2172 = vmul.f32 %v1052, 1.25
  %v2173 = vmul.f32 %v1053, 1.25
  %v2174 = vmul.f32 %v1054, 1.25
  %v2175 = vmul.f32 %v1055, 1.25
  %v2176 = vmul.f32 %v1056, 1.25
  %v2177 = vmul.f32 %v1057, 1.25
  %v2178 = vmul.f32 %v1058, 1.25
  %v2179 = vmul.f32 %v1059, 1.25
  %v2180 = vmul.f32 %v1060, 1.25
  %v2181 = vmul.f32 %v1061, 1.25
  %v2182 = vmul.f32 %v1062, 1.25
  %v2183 = vmul.f32 %v1063, 1.25
  %v2184 = vmul.f32 %v1064, 1.25
  %v2185 = vmul.f32 %v1065, 1.25
  %v2186 = vmul.f32 %v1066, 1.25
  %v2187 = vmul.f32 %v2171, %v1147
  %v2188 = vmul.f32 %v2172, %v1148
  %v2189 = vmul.f32 %v2173, %v1149
  %v2190 = vmul.f32 %v2174, %v1150
  %v2191 = vmul.f32 %v2175, %v1151
  %v2192 = vmul.f32 %v2176, %v1152
  %v2193 = vmul.f32 %v2177, %v1153
  %v2194 = vmul.f32 %v2178, %v1154
  %v2195 = vmul.f32 %v2179, %v1155
  %v2196 = vmul.f32 %v2180, %v1156
  %v2197 = vmul.f32 %v2181, %v1157
  %v2198 = vmul.f32 %v2182, %v1158
  %v2199 = vmul.f32 %v2183, %v1159
  %v2200 = vmul.f32 %v2184, %v1160
  %v2201 = vmul.f32 %v2185, %v1161
  %v2202 = vmul.f32 %v2186, %v1162
  %v2203 = vmul.f32 %v1211, 1.25
  %v2204 = vmul.f32 %v1212, 1.25
  %v2205 = vmul.f32 %v1213, 1.25
  %v2206 = vmul.f32 %v1214, 1.25
  %v2207 = vmul.f32 %v1215, 1.25
  %v2208 = vmul.f32 %v1216, 1.25
  %v2209 = vmul.f32 %v1217, 1.25
  %v2210 = vmul.f32 %v1218, 1.25
  %v2211 = vmul.f32 %v1219, 1.25
  %v2212 = vmul.f32 %v1220, 1.25
  %v2213 = vmul.f32 %v1221, 1.25
  %v2214 = vmul.f32 %v1222, 1.25
  %v2215 = vmul.f32 %v1223, 1.25
  %v2216 = vmul.f32 %v1224, 1.25
  %v2217 = vmul.f32 %v1225, 1.25
  %v2218 = vmul.f32 %v1226, 1.25
  %v2219 = vmul.f32 %v2203, %v1259
  %v2220 = vmul.f32 %v2204, %v1260
  %v2221 = vmul.f32 %v2205, %v1261
  %v2222 = vmul.f32 %v2206, %v1262
  %v2223 = vmul.f32 %v2207, %v1263
  %v2224 = vmul.f32 %v2208, %v1264
  %v2225 = vmul.f32 %v2209, %v1265
  %v2226 = vmul.f32 %v2210, %v1266
  %v2227 = vmul.f32 %v2211, %v1267
  %v2228 = vmul.f32 %v2212, %v1268
  %v2229 = vmul.f32 %v2213, %v1269
  %v2230 = vmul.f32 %v2214, %v1270
  %v2231 = vmul.f32 %v2215, %v1271
  %v2232 = vmul.f32 %v2216, %v1272
  %v2233 = vmul.f32 %v2217, %v1273
  %v2234 = vmul.f32 %v2218, %v1274
  %v2235 = vadd.f32 %v2187, %v2219
  %v2236 = vadd.f32 %v2188, %v2220
  %v2237 = vadd.f32 %v2189, %v2221
  %v2238 = vadd.f32 %v2190, %v2222
  %v2239 = vadd.f32 %v2191, %v2223
  %v2240 = vadd.f32 %v2192, %v2224
  %v2241 = vadd.f32 %v2193, %v2225
  %v2242 = vadd.f32 %v2194, %v2226
  %v2243 = vadd.f32 %v2195, %v2227
  %v2244 = vadd.f32 %v2196, %v2228
  %v2245 = vadd.f32 %v2197, %v2229
  %v2246 = vadd.f32 %v2198, %v2230
  %v2247 = vadd.f32 %v2199, %v2231
  %v2248 = vadd.f32 %v2200, %v2232
  %v2249 = vadd.f32 %v2201, %v2233
  %v2250 = vadd.f32 %v2202, %v2234
  %v2251 = vmul.f32 %v1163, 1.25
  %v2252 = vmul.f32 %v1164, 1.25
  %v2253 = vmul.f32 %v1165, 1.25
  %v2254 = vmul.f32 %v1166, 1.25
  %v2255 = vmul.f32 %v1167, 1.25
  %v2256 = vmul.f32 %v1168, 1.25
  %v2257 = vmul.f32 %v1169, 1.25
  %v2258 = vmul.f32 %v1170, 1.25
  %v2259 = vmul.f32 %v1171, 1.25
  %v2260 = vmul.f32 %v1172, 1.25
  %v2261 = vmul.f32 %v1173, 1.25
  %v2262 = vmul.f32 %v1174, 1.25
  %v2263 = vmul.f32 %v1175, 1.25
  %v2264 = vmul.f32 %v1176, 1.25
  %v2265 = vmul.f32 %v1177, 1.25
  %v2266 = vmul.f32 %v1178, 1.25
  %v2267 = vmul.f32 %v2251, %v1259
  %v2268 = vmul.f32 %v2252, %v1260
  %v2269 = vmul.f32 %v2253, %v1261
  %v2270 = vmul.f32 %v2254, %v1262
  %v2271 = vmul.f32 %v2255, %v1263
  %v2272 = vmul.f32 %v2256, %v1264
  %v2273 = vmul.f32 %v2257, %v1265
  %v2274 = vmul.f32 %v2258, %v1266
  %v2275 = vmul.f32 %v2259, %v1267
  %v2276 = vmul.f32 %v2260, %v1268
  %v2277 = vmul.f32 %v2261, %v1269
  %v2278 = vmul.f32 %v2262, %v1270
  %v2279 = vmul.f32 %v2263, %v1271
  %v2280 = vmul.f32 %v2264, %v1272
  %v2281 = vmul.f32 %v2265, %v1273
  %v2282 = vmul.f32 %v2266, %v1274
  %v2283 = vmul.f32 %v1323, 1.25
  %v2284 = vmul.f32 %v1324, 1.25
  %v2285 = vmul.f32 %v1325, 1.25
  %v2286 = vmul.f32 %v1326, 1.25
  %v2287 = vmul.f32 %v1327, 1.25
  %v2288 = vmul.f32 %v1328, 1.25
  %v2289 = vmul.f32 %v1329, 1.25
  %v2290 = vmul.f32 %v1330, 1.25
  %v2291 = vmul.f32 %v1331, 1.25
  %v2292 = vmul.f32 %v1332, 1.25
  %v2293 = vmul.f32 %v1333, 1.25
  %v2294 = vmul.f32 %v1334, 1.25
  %v2295 = vmul.f32 %v1335, 1.25
  %v2296 = vmul.f32 %v1336, 1.25
  %v2297 = vmul.f32 %v1337, 1.25
  %v2298 = vmul.f32 %v1338, 1.25
  %v2299 = vmul.f32 %v2283, %v1371
  %v2300 = vmul.f32 %v2284, %v1372
  %v2301 = vmul.f32 %v2285, %v1373
  %v2302 = vmul.f32 %v2286, %v1374
  %v2303 = vmul.f32 %v2287, %v1375
  %v2304 = vmul.f32 %v2288, %v1376
  %v2305 = vmul.f32 %v2289, %v1377
  %v2306 = vmul.f32 %v2290, %v1378
  %v2307 = vmul.f32 %v2291, %v1379
  %v2308 = vmul.f32 %v2292, %v1380
  %v2309 = vmul.f32 %v2293, %v1381
  %v2310 = vmul.f32 %v2294, %v1382
  %v2311 = vmul.f32 %v2295, %v1383
  %v2312 = vmul.f32 %v2296, %v1384
  %v2313 = vmul.f32 %v2297, %v1385
  %v2314 = vmul.f32 %v2298, %v1386
  %v2315 = vadd.f32 %v2267, %v2299
  %v2316 = vadd.f32 %v2268, %v2300
  %v2317 = vadd.f32 %v2269, %v2301
  %v2318 = vadd.f32 %v2270, %v2302
  %v2319 = vadd.f32 %v2271, %v2303
  %v2320 = vadd.f32 %v2272, %v2304
  %v2321 = vadd.f32 %v2273, %v2305
  %v2322 = vadd.f32 %v2274, %v2306
  %v2323 = vadd.f32 %v2275, %v2307
  %v2324 = vadd.f32 %v2276, %v2308
  %v2325 = vadd.f32 %v2277, %v2309
  %v2326 = vadd.f32 %v2278, %v2310
  %v2327 = vadd.f32 %v2279, %v2311
  %v2328 = vadd.f32 %v2280, %v2312
  %v2329 = vadd.f32 %v2281, %v2313
  %v2330 = vadd.f32 %v2282, %v2314
  %v2331 = vmul.f32 %v1275, 1.25
  %v2332 = vmul.f32 %v1276, 1.25
  %v2333 = vmul.f32 %v1277, 1.25
  %v2334 = vmul.f32 %v1278, 1.25
  %v2335 = vmul.f32 %v1279, 1.25
  %v2336 = vmul.f32 %v1280, 1.25
  %v2337 = vmul.f32 %v1281, 1.25
  %v2338 = vmul.f32 %v1282, 1.25
  %v2339 = vmul.f32 %v1283, 1.25
  %v2340 = vmul.f32 %v1284, 1.25
  %v2341 = vmul.f32 %v1285, 1.25
  %v2342 = vmul.f32 %v1286, 1.25
  %v2343 = vmul.f32 %v1287, 1.25
  %v2344 = vmul.f32 %v1288, 1.25
  %v2345 = vmul.f32 %v1289, 1.25
  %v2346 = vmul.f32 %v1290, 1.25
  %v2347 = vmul.f32 %v2331, %v1371
  %v2348 = vmul.f32 %v2332, %v1372
  %v2349 = vmul.f32 %v2333, %v1373
  %v2350 = vmul.f32 %v2334, %v1374
  %v2351 = vmul.f32 %v2335, %v1375
  %v2352 = vmul.f32 %v2336, %v1376
  %v2353 = vmul.f32 %v2337, %v1377
  %v2354 = vmul.f32 %v2338, %v1378
  %v2355 = vmul.f32 %v2339, %v1379
  %v2356 = vmul.f32 %v2340, %v1380
  %v2357 = vmul.f32 %v2341, %v1381
  %v2358 = vmul.f32 %v2342, %v1382
  %v2359 = vmul.f32 %v2343, %v1383
  %v2360 = vmul.f32 %v2344, %v1384
  %v2361 = vmul.f32 %v2345, %v1385
  %v2362 = vmul.f32 %v2346, %v1386
  %v2363 = vmul.f32 %v1435, 1.25
  %v2364 = vmul.f32 %v1436, 1.25
  %v2365 = vmul.f32 %v1437, 1.25
  %v2366 = vmul.f32 %v1438, 1.25
  %v2367 = vmul.f32 %v1439, 1.25
  %v2368 = vmul.f32 %v1440, 1.25
  %v2369 = vmul.f32 %v1441, 1.25
  %v2370 = vmul.f32 %v1442, 1.25
  %v2371 = vmul.f32 %v1443, 1.25
  %v2372 = vmul.f32 %v1444, 1.25
  %v2373 = vmul.f32 %v1445, 1.25
  %v2374 = vmul.f32 %v1446, 1.25
  %v2375 = vmul.f32 %v1447, 1.25
  %v2376 = vmul.f32 %v1448, 1.25
  %v2377 = vmul.f32 %v1449, 1.25
  %v2378 = vmul.f32 %v1450, 1.25
  %v2379 = vmul.f32 %v2363, %v1483
  %v2380 = vmul.f32 %v2364, %v1484
  %v2381 = vmul.f32 %v2365, %v1485
  %v2382 = vmul.f32 %v2366, %v1486
  %v2383 = vmul.f32 %v2367, %v1487
  %v2384 = vmul.f32 %v2368, %v1488
  %v2385 = vmul.f32 %v2369, %v1489
  %v2386 = vmul.f32 %v2370, %v1490
  %v2387 = vmul.f32 %v2371, %v1491
  %v2388 = vmul.f32 %v2372, %v1492
  %v2389 = vmul.f32 %v2373, %v1493
  %v2390 = vmul.f32 %v2374, %v1494
  %v2391 = vmul.f32 %v2375, %v1495
  %v2392 = vmul.f32 %v2376, %v1496
  %v2393 = vmul.f32 %v2377, %v1497
  %v2394 = vmul.f32 %v2378, %v1498
  %v2395 = vadd.f32 %v2347, %v2379
  %v2396 = vadd.f32 %v2348, %v2380
  %v2397 = vadd.f32 %v2349, %v2381
  %v2398 = vadd.f32 %v2350, %v2382
  %v2399 = vadd.f32 %v2351, %v2383
  %v2400 = vadd.f32 %v2352, %v2384
  %v2401 = vadd.f32 %v2353, %v2385
  %v2402 = vadd.f32 %v2354, %v2386
  %v2403 = vadd.f32 %v2355, %v2387
  %v2404 = vadd.f32 %v2356, %v2388
  %v2405 = vadd.f32 %v2357, %v2389
  %v2406 = vadd.f32 %v2358, %v2390
  %v2407 = vadd.f32 %v2359, %v2391
  %v2408 = vadd.f32 %v2360, %v2392
  %v2409 = vadd.f32 %v2361, %v2393
  %v2410 = vadd.f32 %v2362, %v2394
  %v2411 = vmul.f32 %v1387, 1.25
  %v2412 = vmul.f32 %v1388, 1.25
  %v2413 = vmul.f32 %v1389, 1.25
  %v2414 = vmul.f32 %v1390, 1.25
  %v2415 = vmul.f32 %v1391, 1.25
  %v2416 = vmul.f32 %v1392, 1.25
  %v2417 = vmul.f32 %v1393, 1.25
  %v2418 = vmul.f32 %v1394, 1.25
  %v2419 = vmul.f32 %v1395, 1.25
  %v2420 = vmul.f32 %v1396, 1.25
  %v2421 = vmul.f32 %v1397, 1.25
  %v2422 = vmul.f32 %v1398, 1.25
  %v2423 = vmul.f32 %v1399, 1.25
  %v2424 = vmul.f32 %v1400, 1.25
  %v2425 = vmul.f32 %v1401, 1.25
  %v2426 = vmul.f32 %v1402, 1.25
  %v2427 = vmul.f32 %v2411, %v1483
  %v2428 = vmul.f32 %v2412, %v1484
  %v2429 = vmul.f32 %v2413, %v1485
  %v2430 = vmul.f32 %v2414, %v1486
  %v2431 = vmul.f32 %v2415, %v1487
  %v2432 = vmul.f32 %v2416, %v1488
  %v2433 = vmul.f32 %v2417, %v1489
  %v2434 = vmul.f32 %v2418, %v1490
  %v2435 = vmul.f32 %v2419, %v1491
  %v2436 = vmul.f32 %v2420, %v1492
  %v2437 = vmul.f32 %v2421, %v1493
  %v2438 = vmul.f32 %v2422, %v1494
  %v2439 = vmul.f32 %v2423, %v1495
  %v2440 = vmul.f32 %v2424, %v1496
  %v2441 = vmul.f32 %v2425, %v1497
  %v2442 = vmul.f32 %v2426, %v1498
  %v2443 = vmul.f32 %v1547, 1.25
  %v2444 = vmul.f32 %v1548, 1.25
  %v2445 = vmul.f32 %v1549, 1.25
  %v2446 = vmul.f32 %v1550, 1.25
  %v2447 = vmul.f32 %v1551, 1.25
  %v2448 = vmul.f32 %v1552, 1.25
  %v2449 = vmul.f32 %v1553, 1.25
  %v2450 = vmul.f32 %v1554, 1.25
  %v2451 = vmul.f32 %v1555, 1.25
  %v2452 = vmul.f32 %v1556, 1.25
  %v2453 = vmul.f32 %v1557, 1.25
  %v2454 = vmul.f32 %v1558, 1.25
  %v2455 = vmul.f32 %v1559, 1.25
  %v2456 = vmul.f32 %v1560, 1.25
  %v2457 = vmul.f32 %v1561, 1.25
  %v2458 = vmul.f32 %v1562, 1.25
  %v2459 = vmul.f32 %v2443, %v1595
  %v2460 = vmul.f32 %v2444, %v1596
  %v2461 = vmul.f32 %v2445, %v1597
  %v2462 = vmul.f32 %v2446, %v1598
  %v2463 = vmul.f32 %v2447, %v1599
  %v2464 = vmul.f32 %v2448, %v1600
  %v2465 = vmul.f32 %v2449, %v1601
  %v2466 = vmul.f32 %v2450, %v1602
  %v2467 = vmul.f32 %v2451, %v1603
  %v2468 = vmul.f32 %v2452, %v1604
  %v2469 = vmul.f32 %v2453, %v1605
  %v2470 = vmul.f32 %v2454, %v1606
  %v2471 = vmul.f32 %v2455, %v1607
  %v2472 = vmul.f32 %v2456, %v1608
  %v2473 = vmul.f32 %v2457, %v1609
  %v2474 = vmul.f32 %v2458, %v1610
  %v2475 = vadd.f32 %v2427, %v2459
  %v2476 = vadd.f32 %v2428, %v2460
  %v2477 = vadd.f32 %v2429, %v2461
  %v2478 = vadd.f32 %v2430, %v2462
  %v2479 = vadd.f32 %v2431, %v2463
  %v2480 = vadd.f32 %v2432, %v2464
  %v2481 = vadd.f32 %v2433, %v2465
  %v2482 = vadd.f32 %v2434, %v2466
  %v2483 = vadd.f32 %v2435, %v2467
  %v2484 = vadd.f32 %v2436, %v2468
  %v2485 = vadd.f32 %v2437, %v2469
  %v2486 = vadd.f32 %v2438, %v2470
  %v2487 = vadd.f32 %v2439, %v2471
  %v2488 = vadd.f32 %v2440, %v2472
  %v2489 = vadd.f32 %v2441, %v2473
  %v2490 = vadd.f32 %v2442, %v2474
  %v2491 = vmul.f32 %v1499, 1.25
  %v2492 = vmul.f32 %v1500, 1.25
  %v2493 = vmul.f32 %v1501, 1.25
  %v2494 = vmul.f32 %v1502, 1.25
  %v2495 = vmul.f32 %v1503, 1.25
  %v2496 = vmul.f32 %v1504, 1.25
  %v2497 = vmul.f32 %v1505, 1.25
  %v2498 = vmul.f32 %v1506, 1.25
  %v2499 = vmul.f32 %v1507, 1.25
  %v2500 = vmul.f32 %v1508, 1.25
  %v2501 = vmul.f32 %v1509, 1.25
  %v2502 = vmul.f32 %v1510, 1.25
  %v2503 = vmul.f32 %v1511, 1.25
  %v2504 = vmul.f32 %v1512, 1.25
  %v2505 = vmul.f32 %v1513, 1.25
  %v2506 = vmul.f32 %v1514, 1.25
  %v2507 = vmul.f32 %v2491, %v1595
  %v2508 = vmul.f32 %v2492, %v1596
  %v2509 = vmul.f32 %v2493, %v1597
  %v2510 = vmul.f32 %v2494, %v1598
  %v2511 = vmul.f32 %v2495, %v1599
  %v2512 = vmul.f32 %v2496, %v1600
  %v2513 = vmul.f32 %v2497, %v1601
  %v2514 = vmul.f32 %v2498, %v1602
  %v2515 = vmul.f32 %v2499, %v1603
  %v2516 = vmul.f32 %v2500, %v1604
  %v2517 = vmul.f32 %v2501, %v1605
  %v2518 = vmul.f32 %v2502, %v1606
  %v2519 = vmul.f32 %v2503, %v1607
  %v2520 = vmul.f32 %v2504, %v1608
  %v2521 = vmul.f32 %v2505, %v1609
  %v2522 = vmul.f32 %v2506, %v1610
  %v2523 = vmul.f32 %v1659, 1.25
  %v2524 = vmul.f32 %v1660, 1.25
  %v2525 = vmul.f32 %v1661, 1.25
  %v2526 = vmul.f32 %v1662, 1.25
  %v2527 = vmul.f32 %v1663, 1.25
  %v2528 = vmul.f32 %v1664, 1.25
  %v2529 = vmul.f32 %v1665, 1.25
  %v2530 = vmul.f32 %v1666, 1.25
  %v2531 = vmul.f32 %v1667, 1.25
  %v2532 = vmul.f32 %v1668, 1.25
  %v2533 = vmul.f32 %v1669, 1.25
  %v2534 = vmul.f32 %v1670, 1.25
  %v2535 = vmul.f32 %v1671, 1.25
  %v2536 = vmul.f32 %v1672, 1.25
  %v2537 = vmul.f32 %v1673, 1.25
  %v2538 = vmul.f32 %v1674, 1.25
  %v2539 = vmul.f32 %v2523, %v1707
  %v2540 = vmul.f32 %v2524, %v1708
  %v2541 = vmul.f32 %v2525, %v1709
  %v2542 = vmul.f32 %v2526, %v1710
  %v2543 = vmul.f32 %v2527, %v1711
  %v2544 = vmul.f32 %v2528, %v1712
  %v2545 = vmul.f32 %v2529, %v1713
  %v2546 = vmul.f32 %v2530, %v1714
  %v2547 = vmul.f32 %v2531, %v1715
  %v2548 = vmul.f32 %v2532, %v1716
  %v2549 = vmul.f32 %v2533, %v1717
  %v2550 = vmul.f32 %v2534, %v1718
  %v2551 = vmul.f32 %v2535, %v1719
  %v2552 = vmul.f32 %v2536, %v1720
  %v2553 = vmul.f32 %v2537, %v1721
  %v2554 = vmul.f32 %v2538, %v1722
  %v2555 = vadd.f32 %v2507, %v2539
  %v2556 = vadd.f32 %v2508, %v2540
  %v2557 = vadd.f32 %v2509, %v2541
  %v2558 = vadd.f32 %v2510, %v2542
  %v2559 = vadd.f32 %v2511, %v2543
  %v2560 = vadd.f32 %v2512, %v2544
  %v2561 = vadd.f32 %v2513, %v2545
  %v2562 = vadd.f32 %v2514, %v2546
  %v2563 = vadd.f32 %v2515, %v2547
  %v2564 = vadd.f32 %v2516, %v2548
  %v2565 = vadd.f32 %v2517, %v2549
  %v2566 = vadd.f32 %v2518, %v2550
  %v2567 = vadd.f32 %v2519, %v2551
  %v2568 = vadd.f32 %v2520, %v2552
  %v2569 = vadd.f32 %v2521, %v2553
  %v2570 = vadd.f32 %v2522, %v2554
  %v2571 = vmul.f32 %v1611, 1.25
  %v2572 = vmul.f32 %v1612, 1.25
  %v2573 = vmul.f32 %v1613, 1.25
  %v2574 = vmul.f32 %v1614, 1.25
  %v2575 = vmul.f32 %v1615, 1.25
  %v2576 = vmul.f32 %v1616, 1.25
  %v2577 = vmul.f32 %v1617, 1.25
  %v2578 = vmul.f32 %v1618, 1.25
  %v2579 = vmul.f32 %v1619, 1.25
  %v2580 = vmul.f32 %v1620, 1.25
  %v2581 = vmul.f32 %v1621, 1.25
  %v2582 = vmul.f32 %v1622, 1.25
  %v2583 = vmul.f32 %v1623, 1.25
  %v2584 = vmul.f32 %v1624, 1.25
  %v2585 = vmul.f32 %v1625, 1.25
  %v2586 = vmul.f32 %v1626, 1.25
  %v2587 = vmul.f32 %v2571, %v1707
  %v2588 = vmul.f32 %v2572, %v1708
  %v2589 = vmul.f32 %v2573, %v1709
  %v2590 = vmul.f32 %v2574, %v1710
  %v2591 = vmul.f32 %v2575, %v1711
  %v2592 = vmul.f32 %v2576, %v1712
  %v2593 = vmul.f32 %v2577, %v1713
  %v2594 = vmul.f32 %v2578, %v1714
  %v2595 = vmul.f32 %v2579, %v1715
  %v2596 = vmul.f32 %v2580, %v1716
  %v2597 = vmul.f32 %v2581, %v1717
  %v2598 = vmul.f32 %v2582, %v1718
  %v2599 = vmul.f32 %v2583, %v1719
  %v2600 = vmul.f32 %v2584, %v1720
  %v2601 = vmul.f32 %v2585, %v1721
  %v2602 = vmul.f32 %v2586, %v1722
  %v2603 = vmul.f32 %v1771, 1.25
  %v2604 = vmul.f32 %v1772, 1.25
  %v2605 = vmul.f32 %v1773, 1.25
  %v2606 = vmul.f32 %v1774, 1.25
  %v2607 = vmul.f32 %v1775, 1.25
  %v2608 = vmul.f32 %v1776, 1.25
  %v2609 = vmul.f32 %v1777, 1.25
  %v2610 = vmul.f32 %v1778, 1.25
  %v2611 = vmul.f32 %v1779, 1.25
  %v2612 = vmul.f32 %v1780, 1.25
  %v2613 = vmul.f32 %v1781, 1.25
  %v2614 = vmul.f32 %v1782, 1.25
  %v2615 = vmul.f32 %v1783, 1.25
  %v2616 = vmul.f32 %v1784, 1.25
  %v2617 = vmul.f32 %v1785, 1.25
  %v2618 = vmul.f32 %v1786, 1.25
  %v2619 = vmul.f32 %v2603, %v1819
  %v2620 = vmul.f32 %v2604, %v1820
  %v2621 = vmul.f32 %v2605, %v1821
  %v2622 = vmul.f32 %v2606, %v1822
  %v2623 = vmul.f32 %v2607, %v1823
  %v2624 = vmul.f32 %v2608, %v1824
  %v2625 = vmul.f32 %v2609, %v1825
  %v2626 = vmul.f32 %v2610, %v1826
  %v2627 = vmul.f32 %v2611, %v1827
  %v2628 = vmul.f32 %v2612, %v1828
  %v2629 = vmul.f32 %v2613, %v1829
  %v2630 = vmul.f32 %v2614, %v1830
  %v2631 = vmul.f32 %v2615, %v1831
  %v2632 = vmul.f32 %v2616, %v1832
  %v2633 = vmul.f32 %v2617, %v1833
  %v2634 = vmul.f32 %v2618, %v1834
  %v2635 = vadd.f32 %v2587, %v2619
  %v2636 = vadd.f32 %v2588, %v2620
  %v2637 = vadd.f32 %v2589, %v2621
  %v2638 = vadd.f32 %v2590, %v2622
  %v2639 = vadd.f32 %v2591, %v2623
  %v2640 = vadd.f32 %v2592, %v2624
  %v2641 = vadd.f32 %v2593, %v2625
  %v2642 = vadd.f32 %v2594, %v2626
  %v2643 = vadd.f32 %v2595, %v2627
  %v2644 = vadd.f32 %v2596, %v2628
  %v2645 = vadd.f32 %v2597, %v2629
  %v2646 = vadd.f32 %v2598, %v2630
  %v2647 = vadd.f32 %v2599, %v2631
  %v2648 = vadd.f32 %v2600, %v2632
  %v2649 = vadd.f32 %v2601, %v2633
  %v2650 = vadd.f32 %v2602, %v2634
  %v2651 = vmul.f32 %v1723, 1.25
  %v2652 = vmul.f32 %v1724, 1.25
  %v2653 = vmul.f32 %v1725, 1.25
  %v2654 = vmul.f32 %v1726, 1.25
  %v2655 = vmul.f32 %v1727, 1.25
  %v2656 = vmul.f32 %v1728, 1.25
  %v2657 = vmul.f32 %v1729, 1.25
  %v2658 = vmul.f32 %v1730, 1.25
  %v2659 = vmul.f32 %v1731, 1.25
  %v2660 = vmul.f32 %v1732, 1.25
  %v2661 = vmul.f32 %v1733, 1.25
  %v2662 = vmul.f32 %v1734, 1.25
  %v2663 = vmul.f32 %v1735, 1.25
  %v2664 = vmul.f32 %v1736, 1.25
  %v2665 = vmul.f32 %v1737, 1.25
  %v2666 = vmul.f32 %v1738, 1.25
  %v2667 = vmul.f32 %v2651, %v1819
  %v2668 = vmul.f32 %v2652, %v1820
  %v2669 = vmul.f32 %v2653, %v1821
  %v2670 = vmul.f32 %v2654, %v1822
  %v2671 = vmul.f32 %v2655, %v1823
  %v2672 = vmul.f32 %v2656, %v1824
  %v2673 = vmul.f32 %v2657, %v1825
  %v2674 = vmul.f32 %v2658, %v1826
  %v2675 = vmul.f32 %v2659, %v1827
  %v2676 = vmul.f32 %v2660, %v1828
  %v2677 = vmul.f32 %v2661, %v1829
  %v2678 = vmul.f32 %v2662, %v1830
  %v2679 = vmul.f32 %v2663, %v1831
  %v2680 = vmul.f32 %v2664, %v1832
  %v2681 = vmul.f32 %v2665, %v1833
  %v2682 = vmul.f32 %v2666, %v1834
  %v2683 = vmul.f32 %v1883, 1.25
  %v2684 = vmul.f32 %v1884, 1.25
  %v2685 = vmul.f32 %v1885, 1.25
  %v2686 = vmul.f32 %v1886, 1.25
  %v2687 = vmul.f32 %v1887, 1.25
  %v2688 = vmul.f32 %v1888, 1.25
  %v2689 = vmul.f32 %v1889, 1.25
  %v2690 = vmul.f32 %v1890, 1.25
  %v2691 = vmul.f32 %v1891, 1.25
  %v2692 = vmul.f32 %v1892, 1.25
  %v2693 = vmul.f32 %v1893, 1.25
  %v2694 = vmul.f32 %v1894, 1.25
  %v2695 = vmul.f32 %v1895, 1.25
  %v2696 = vmul.f32 %v1896, 1.25
  %v2697 = vmul.f32 %v1897, 1.25
  %v2698 = vmul.f32 %v1898, 1.25
  %v2699 = vmul.f32 %v2683, %v1931
  %v2700 = vmul.f32 %v2684, %v1932
  %v2701 = vmul.f32 %v2685, %v1933
  %v2702 = vmul.f32 %v2686, %v1934
  %v2703 = vmul.f32 %v2687, %v1935
  %v2704 = vmul.f32 %v2688, %v1936
  %v2705 = vmul.f32 %v2689, %v1937
  %v2706 = vmul.f32 %v2690, %v1938
  %v2707 = vmul.f32 %v2691, %v1939
  %v2708 = vmul.f32 %v2692, %v1940
  %v2709 = vmul.f32 %v2693, %v1941
  %v2710 = vmul.f32 %v2694, %v1942
  %v2711 = vmul.f32 %v2695, %v1943
  %v2712 = vmul.f32 %v2696, %v1944
  %v2713 = vmul.f32 %v2697, %v1945
  %v2714 = vmul.f32 %v2698, %v1946
  %v2715 = vadd.f32 %v2667, %v2699
  %v2716 = vadd.f32 %v2668, %v2700
  %v2717 = vadd.f32 %v2669, %v2701
  %v2718 = vadd.f32 %v2670, %v2702
  %v2719 = vadd.f32 %v2671, %v2703
  %v2720 = vadd.f32 %v2672, %v2704
  %v2721 = vadd.f32 %v2673, %v2705
  %v2722 = vadd.f32 %v2674, %v2706
  %v2723 = vadd.f32 %v2675, %v2707
  %v2724 = vadd.f32 %v2676, %v2708
  %v2725 = vadd.f32 %v2677, %v2709
  %v2726 = vadd.f32 %v2678, %v2710
  %v2727 = vadd.f32 %v2679, %v2711
  %v2728 = vadd.f32 %v2680, %v2712
  %v2729 = vadd.f32 %v2681, %v2713
  %v2730 = vadd.f32 %v2682, %v2714
  %v2731 = vmul.f32 %v1835, 1.25
  %v2732 = vmul.f32 %v1836, 1.25
  %v2733 = vmul.f32 %v1837, 1.25
  %v2734 = vmul.f32 %v1838, 1.25
  %v2735 = vmul.f32 %v1839, 1.25
  %v2736 = vmul.f32 %v1840, 1.25
  %v2737 = vmul.f32 %v1841, 1.25
  %v2738 = vmul.f32 %v1842, 1.25
  %v2739 = vmul.f32 %v1843, 1.25
  %v2740 = vmul.f32 %v1844, 1.25
  %v2741 = vmul.f32 %v1845, 1.25
  %v2742 = vmul.f32 %v1846, 1.25
  %v2743 = vmul.f32 %v1847, 1.25
  %v2744 = vmul.f32 %v1848, 1.25
  %v2745 = vmul.f32 %v1849, 1.25
  %v2746 = vmul.f32 %v1850, 1.25
  %v2747 = vmul.f32 %v2731, %v1931
  %v2748 = vmul.f32 %v2732, %v1932
  %v2749 = vmul.f32 %v2733, %v1933
  %v2750 = vmul.f32 %v2734, %v1934
  %v2751 = vmul.f32 %v2735, %v1935
  %v2752 = vmul.f32 %v2736, %v1936
  %v2753 = vmul.f32 %v2737, %v1937
  %v2754 = vmul.f32 %v2738, %v1938
  %v2755 = vmul.f32 %v2739, %v1939
  %v2756 = vmul.f32 %v2740, %v1940
  %v2757 = vmul.f32 %v2741, %v1941
  %v2758 = vmul.f32 %v2742, %v1942
  %v2759 = vmul.f32 %v2743, %v1943
  %v2760 = vmul.f32 %v2744, %v1944
  %v2761 = vmul.f32 %v2745, %v1945
  %v2762 = vmul.f32 %v2746, %v1946
  %v2763 = vmul.f32 %v1995, 1.25
  %v2764 = vmul.f32 %v1996, 1.25
  %v2765 = vmul.f32 %v1997, 1.25
  %v2766 = vmul.f32 %v1998, 1.25
  %v2767 = vmul.f32 %v1999, 1.25
  %v2768 = vmul.f32 %v2000, 1.25
  %v2769 = vmul.f32 %v2001, 1.25
  %v2770 = vmul.f32 %v2002, 1.25
  %v2771 = vmul.f32 %v2003, 1.25
  %v2772 = vmul.f32 %v2004, 1.25
  %v2773 = vmul.f32 %v2005, 1.25
  %v2774 = vmul.f32 %v2006, 1.25
  %v2775 = vmul.f32 %v2007, 1.25
  %v2776 = vmul.f32 %v2008, 1.25
  %v2777 = vmul.f32 %v2009, 1.25
  %v2778 = vmul.f32 %v2010, 1.25
  %v2779 = vmul.f32 %v2763, %v2043
  %v2780 = vmul.f32 %v2764, %v2044
  %v2781 = vmul.f32 %v2765, %v2045
  %v2782 = vmul.f32 %v2766, %v2046
  %v2783 = vmul.f32 %v2767, %v2047
  %v2784 = vmul.f32 %v2768, %v2048
  %v2785 = vmul.f32 %v2769, %v2049
  %v2786 = vmul.f32 %v2770, %v2050
  %v2787 = vmul.f32 %v2771, %v2051
  %v2788 = vmul.f32 %v2772, %v2052
  %v2789 = vmul.f32 %v2773, %v2053
  %v2790 = vmul.f32 %v2774, %v2054
  %v2791 = vmul.f32 %v2775, %v2055
  %v2792 = vmul.f32 %v2776, %v2056
  %v2793 = vmul.f32 %v2777, %v2057
  %v2794 = vmul.f32 %v2778, %v2058
  %v2795 = vadd.f32 %v2747, %v2779
  %v2796 = vadd.f32 %v2748, %v2780
  %v2797 = vadd.f32 %v2749, %v2781
  %v2798 = vadd.f32 %v2750, %v2782
  %v2799 = vadd.f32 %v2751, %v2783
  %v2800 = vadd.f32 %v2752, %v2784
  %v2801 = vadd.f32 %v2753, %v2785
  %v2802 = vadd.f32 %v2754, %v2786
  %v2803 = vadd.f32 %v2755, %v2787
  %v2804 = vadd.f32 %v2756, %v2788
  %v2805 = vadd.f32 %v2757, %v2789
  %v2806 = vadd.f32 %v2758, %v2790
  %v2807 = vadd.f32 %v2759, %v2791
  %v2808 = vadd.f32 %v2760, %v2792
  %v2809 = vadd.f32 %v2761, %v2793
  %v2810 = vadd.f32 %v2762, %v2794
  %v2811 = vmul.f32 %v1947, 1.25
  %v2812 = vmul.f32 %v1948, 1.25
  %v2813 = vmul.f32 %v1949, 1.25
  %v2814 = vmul.f32 %v1950, 1.25
  %v2815 = vmul.f32 %v1951, 1.25
  %v2816 = vmul.f32 %v1952, 1.25
  %v2817 = vmul.f32 %v1953, 1.25
  %v2818 = vmul.f32 %v1954, 1.25
  %v2819 = vmul.f32 %v1955, 1.25
  %v2820 = vmul.f32 %v1956, 1.25
  %v2821 = vmul.f32 %v1957, 1.25
  %v2822 = vmul.f32 %v1958, 1.25
  %v2823 = vmul.f32 %v1959, 1.25
  %v2824 = vmul.f32 %v1960, 1.25
  %v2825 = vmul.f32 %v1961, 1.25
  %v2826 = vmul.f32 %v1962, 1.25
  %v2827 = vmul.f32 %v2811, %v2043
  %v2828 = vmul.f32 %v2812, %v2044
  %v2829 = vmul.f32 %v2813, %v2045
  %v2830 = vmul.f32 %v2814, %v2046
  %v2831 = vmul.f32 %v2815, %v2047
  %v2832 = vmul.f32 %v2816, %v2048
  %v2833 = vmul.f32 %v2817, %v2049
  %v2834 = vmul.f32 %v2818, %v2050
  %v2835 = vmul.f32 %v2819, %v2051
  %v2836 = vmul.f32 %v2820, %v2052
  %v2837 = vmul.f32 %v2821, %v2053
  %v2838 = vmul.f32 %v2822, %v2054
  %v2839 = vmul.f32 %v2823, %v2055
  %v2840 = vmul.f32 %v2824, %v2056
  %v2841 = vmul.f32 %v2825, %v2057
  %v2842 = vmul.f32 %v2826, %v2058
  %v2843 = vmul.f32 %v2107, 1.25
  %v2844 = vmul.f32 %v2108, 1.25
  %v2845 = vmul.f32 %v2109, 1.25
  %v2846 = vmul.f32 %v2110, 1.25
  %v2847 = vmul.f32 %v2111, 1.25
  %v2848 = vmul.f32 %v2112, 1.25
  %v2849 = vmul.f32 %v2113, 1.25
  %v2850 = vmul.f32 %v2114, 1.25
  %v2851 = vmul.f32 %v2115, 1.25
  %v2852 = vmul.f32 %v2116, 1.25
  %v2853 = vmul.f32 %v2117, 1.25
  %v2854 = vmul.f32 %v2118, 1.25
  %v2855 = vmul.f32 %v2119, 1.25
  %v2856 = vmul.f32 %v2120, 1.25
  %v2857 = vmul.f32 %v2121, 1.25
  %v2858 = vmul.f32 %v2122, 1.25
  %v2859 = vmul.f32 %v2843, %v2155
  %v2860 = vmul.f32 %v2844, %v2156
  %v2861 = vmul.f32 %v2845, %v2157
  %v2862 = vmul.f32 %v2846, %v2158
  %v2863 = vmul.f32 %v2847, %v2159
  %v2864 = vmul.f32 %v2848, %v2160
  %v2865 = vmul.f32 %v2849, %v2161
  %v2866 = vmul.f32 %v2850, %v2162
  %v2867 = vmul.f32 %v2851, %v2163
  %v2868 = vmul.f32 %v2852, %v2164
  %v2869 = vmul.f32 %v2853, %v2165
  %v2870 = vmul.f32 %v2854, %v2166
  %v2871 = vmul.f32 %v2855, %v2167
  %v2872 = vmul.f32 %v2856, %v2168
  %v2873 = vmul.f32 %v2857, %v2169
  %v2874 = vmul.f32 %v2858, %v2170
  %v2875 = vadd.f32 %v2827, %v2859
  %v2876 = vadd.f32 %v2828, %v2860
  %v2877 = vadd.f32 %v2829, %v2861
  %v2878 = vadd.f32 %v2830, %v2862
  %v2879 = vadd.f32 %v2831, %v2863
  %v2880 = vadd.f32 %v2832, %v2864
  %v2881 = vadd.f32 %v2833, %v2865
  %v2882 = vadd.f32 %v2834, %v2866
  %v2883 = vadd.f32 %v2835, %v2867
  %v2884 = vadd.f32 %v2836, %v2868
  %v2885 = vadd.f32 %v2837, %v2869
  %v2886 = vadd.f32 %v2838, %v2870
  %v2887 = vadd.f32 %v2839, %v2871
  %v2888 = vadd.f32 %v2840, %v2872
  %v2889 = vadd.f32 %v2841, %v2873
  %v2890 = vadd.f32 %v2842, %v2874
  %v2891 = vmul.f32 %v1051, 0.8333333
  %v2892 = vmul.f32 %v1052, 0.8333333
  %v2893 = vmul.f32 %v1053, 0.8333333
  %v2894 = vmul.f32 %v1054, 0.8333333
  %v2895 = vmul.f32 %v1055, 0.8333333
  %v2896 = vmul.f32 %v1056, 0.8333333
  %v2897 = vmul.f32 %v1057, 0.8333333
  %v2898 = vmul.f32 %v1058, 0.8333333
  %v2899 = vmul.f32 %v1059, 0.8333333
  %v2900 = vmul.f32 %v1060, 0.8333333
  %v2901 = vmul.f32 %v1061, 0.8333333
  %v2902 = vmul.f32 %v1062, 0.8333333
  %v2903 = vmul.f32 %v1063, 0.8333333
  %v2904 = vmul.f32 %v1064, 0.8333333
  %v2905 = vmul.f32 %v1065, 0.8333333
  %v2906 = vmul.f32 %v1066, 0.8333333
  %v2907 = vmul.f32 %v2891, %v2235
  %v2908 = vmul.f32 %v2892, %v2236
  %v2909 = vmul.f32 %v2893, %v2237
  %v2910 = vmul.f32 %v2894, %v2238
  %v2911 = vmul.f32 %v2895, %v2239
  %v2912 = vmul.f32 %v2896, %v2240
  %v2913 = vmul.f32 %v2897, %v2241
  %v2914 = vmul.f32 %v2898, %v2242
  %v2915 = vmul.f32 %v2899, %v2243
  %v2916 = vmul.f32 %v2900, %v2244
  %v2917 = vmul.f32 %v2901, %v2245
  %v2918 = vmul.f32 %v2902, %v2246
  %v2919 = vmul.f32 %v2903, %v2247
  %v2920 = vmul.f32 %v2904, %v2248
  %v2921 = vmul.f32 %v2905, %v2249
  %v2922 = vmul.f32 %v2906, %v2250
  %v2923 = vmul.f32 %v1323, 0.8333333
  %v2924 = vmul.f32 %v1324, 0.8333333
  %v2925 = vmul.f32 %v1325, 0.8333333
  %v2926 = vmul.f32 %v1326, 0.8333333
  %v2927 = vmul.f32 %v1327, 0.8333333
  %v2928 = vmul.f32 %v1328, 0.8333333
  %v2929 = vmul.f32 %v1329, 0.8333333
  %v2930 = vmul.f32 %v1330, 0.8333333
  %v2931 = vmul.f32 %v1331, 0.8333333
  %v2932 = vmul.f32 %v1332, 0.8333333
  %v2933 = vmul.f32 %v1333, 0.8333333
  %v2934 = vmul.f32 %v1334, 0.8333333
  %v2935 = vmul.f32 %v1335, 0.8333333
  %v2936 = vmul.f32 %v1336, 0.8333333
  %v2937 = vmul.f32 %v1337, 0.8333333
  %v2938 = vmul.f32 %v1338, 0.8333333
  %v2939 = vmul.f32 %v2923, %v2315
  %v2940 = vmul.f32 %v2924, %v2316
  %v2941 = vmul.f32 %v2925, %v2317
  %v2942 = vmul.f32 %v2926, %v2318
  %v2943 = vmul.f32 %v2927, %v2319
  %v2944 = vmul.f32 %v2928, %v2320
  %v2945 = vmul.f32 %v2929, %v2321
  %v2946 = vmul.f32 %v2930, %v2322
  %v2947 = vmul.f32 %v2931, %v2323
  %v2948 = vmul.f32 %v2932, %v2324
  %v2949 = vmul.f32 %v2933, %v2325
  %v2950 = vmul.f32 %v2934, %v2326
  %v2951 = vmul.f32 %v2935, %v2327
  %v2952 = vmul.f32 %v2936, %v2328
  %v2953 = vmul.f32 %v2937, %v2329
  %v2954 = vmul.f32 %v2938, %v2330
  %v2955 = vadd.f32 %v2907, %v2939
  %v2956 = vadd.f32 %v2908, %v2940
  %v2957 = vadd.f32 %v2909, %v2941
  %v2958 = vadd.f32 %v2910, %v2942
  %v2959 = vadd.f32 %v2911, %v2943
  %v2960 = vadd.f32 %v2912, %v2944
  %v2961 = vadd.f32 %v2913, %v2945
  %v2962 = vadd.f32 %v2914, %v2946
  %v2963 = vadd.f32 %v2915, %v2947
  %v2964 = vadd.f32 %v2916, %v2948
  %v2965 = vadd.f32 %v2917, %v2949
  %v2966 = vadd.f32 %v2918, %v2950
  %v2967 = vadd.f32 %v2919, %v2951
  %v2968 = vadd.f32 %v2920, %v2952
  %v2969 = vadd.f32 %v2921, %v2953
  %v2970 = vadd.f32 %v2922, %v2954
  %v2971 = vmul.f32 %v1163, 0.8333333
  %v2972 = vmul.f32 %v1164, 0.8333333
  %v2973 = vmul.f32 %v1165, 0.8333333
  %v2974 = vmul.f32 %v1166, 0.8333333
  %v2975 = vmul.f32 %v1167, 0.8333333
  %v2976 = vmul.f32 %v1168, 0.8333333
  %v2977 = vmul.f32 %v1169, 0.8333333
  %v2978 = vmul.f32 %v1170, 0.8333333
  %v2979 = vmul.f32 %v1171, 0.8333333
  %v2980 = vmul.f32 %v1172, 0.8333333
  %v2981 = vmul.f32 %v1173, 0.8333333
  %v2982 = vmul.f32 %v1174, 0.8333333
  %v2983 = vmul.f32 %v1175, 0.8333333
  %v2984 = vmul.f32 %v1176, 0.8333333
  %v2985 = vmul.f32 %v1177, 0.8333333
  %v2986 = vmul.f32 %v1178, 0.8333333
  %v2987 = vmul.f32 %v2971, %v2315
  %v2988 = vmul.f32 %v2972, %v2316
  %v2989 = vmul.f32 %v2973, %v2317
  %v2990 = vmul.f32 %v2974, %v2318
  %v2991 = vmul.f32 %v2975, %v2319
  %v2992 = vmul.f32 %v2976, %v2320
  %v2993 = vmul.f32 %v2977, %v2321
  %v2994 = vmul.f32 %v2978, %v2322
  %v2995 = vmul.f32 %v2979, %v2323
  %v2996 = vmul.f32 %v2980, %v2324
  %v2997 = vmul.f32 %v2981, %v2325
  %v2998 = vmul.f32 %v2982, %v2326
  %v2999 = vmul.f32 %v2983, %v2327
  %v3000 = vmul.f32 %v2984, %v2328
  %v3001 = vmul.f32 %v2985, %v2329
  %v3002 = vmul.f32 %v2986, %v2330
  %v3003 = vmul.f32 %v1435, 0.8333333
  %v3004 = vmul.f32 %v1436, 0.8333333
  %v3005 = vmul.f32 %v1437, 0.8333333
  %v3006 = vmul.f32 %v1438, 0.8333333
  %v3007 = vmul.f32 %v1439, 0.8333333
  %v3008 = vmul.f32 %v1440, 0.8333333
  %v3009 = vmul.f32 %v1441, 0.8333333
  %v3010 = vmul.f32 %v1442, 0.8333333
  %v3011 = vmul.f32 %v1443, 0.8333333
  %v3012 = vmul.f32 %v1444, 0.8333333
  %v3013 = vmul.f32 %v1445, 0.8333333
  %v3014 = vmul.f32 %v1446, 0.8333333
  %v3015 = vmul.f32 %v1447, 0.8333333
  %v3016 = vmul.f32 %v1448, 0.8333333
  %v3017 = vmul.f32 %v1449, 0.8333333
  %v3018 = vmul.f32 %v1450, 0.8333333
  %v3019 = vmul.f32 %v3003, %v2395
  %v3020 = vmul.f32 %v3004, %v2396
  %v3021 = vmul.f32 %v3005, %v2397
  %v3022 = vmul.f32 %v3006, %v2398
  %v3023 = vmul.f32 %v3007, %v2399
  %v3024 = vmul.f32 %v3008, %v2400
  %v3025 = vmul.f32 %v3009, %v2401
  %v3026 = vmul.f32 %v3010, %v2402
  %v3027 = vmul.f32 %v3011, %v2403
  %v3028 = vmul.f32 %v3012, %v2404
  %v3029 = vmul.f32 %v3013, %v2405
  %v3030 = vmul.f32 %v3014, %v2406
  %v3031 = vmul.f32 %v3015, %v2407
  %v3032 = vmul.f32 %v3016, %v2408
  %v3033 = vmul.f32 %v3017, %v2409
  %v3034 = vmul.f32 %v3018, %v2410
  %v3035 = vadd.f32 %v2987, %v3019
  %v3036 = vadd.f32 %v2988, %v3020
  %v3037 = vadd.f32 %v2989, %v3021
  %v3038 = vadd.f32 %v2990, %v3022
  %v3039 = vadd.f32 %v2991, %v3023
  %v3040 = vadd.f32 %v2992, %v3024
  %v3041 = vadd.f32 %v2993, %v3025
  %v3042 = vadd.f32 %v2994, %v3026
  %v3043 = vadd.f32 %v2995, %v3027
  %v3044 = vadd.f32 %v2996, %v3028
  %v3045 = vadd.f32 %v2997, %v3029
  %v3046 = vadd.f32 %v2998, %v3030
  %v3047 = vadd.f32 %v2999, %v3031
  %v3048 = vadd.f32 %v3000, %v3032
  %v3049 = vadd.f32 %v3001, %v3033
  %v3050 = vadd.f32 %v3002, %v3034
  %v3051 = vmul.f32 %v1275, 0.8333333
  %v3052 = vmul.f32 %v1276, 0.8333333
  %v3053 = vmul.f32 %v1277, 0.8333333
  %v3054 = vmul.f32 %v1278, 0.8333333
  %v3055 = vmul.f32 %v1279, 0.8333333
  %v3056 = vmul.f32 %v1280, 0.8333333
  %v3057 = vmul.f32 %v1281, 0.8333333
  %v3058 = vmul.f32 %v1282, 0.8333333
  %v3059 = vmul.f32 %v1283, 0.8333333
  %v3060 = vmul.f32 %v1284, 0.8333333
  %v3061 = vmul.f32 %v1285, 0.8333333
  %v3062 = vmul.f32 %v1286, 0.8333333
  %v3063 = vmul.f32 %v1287, 0.8333333
  %v3064 = vmul.f32 %v1288, 0.8333333
  %v3065 = vmul.f32 %v1289, 0.8333333
  %v3066 = vmul.f32 %v1290, 0.8333333
  %v3067 = vmul.f32 %v3051, %v2395
  %v3068 = vmul.f32 %v3052, %v2396
  %v3069 = vmul.f32 %v3053, %v2397
  %v3070 = vmul.f32 %v3054, %v2398
  %v3071 = vmul.f32 %v3055, %v2399
  %v3072 = vmul.f32 %v3056, %v2400
  %v3073 = vmul.f32 %v3057, %v2401
  %v3074 = vmul.f32 %v3058, %v2402
  %v3075 = vmul.f32 %v3059, %v2403
  %v3076 = vmul.f32 %v3060, %v2404
  %v3077 = vmul.f32 %v3061, %v2405
  %v3078 = vmul.f32 %v3062, %v2406
  %v3079 = vmul.f32 %v3063, %v2407
  %v3080 = vmul.f32 %v3064, %v2408
  %v3081 = vmul.f32 %v3065, %v2409
  %v3082 = vmul.f32 %v3066, %v2410
  %v3083 = vmul.f32 %v1547, 0.8333333
  %v3084 = vmul.f32 %v1548, 0.8333333
  %v3085 = vmul.f32 %v1549, 0.8333333
  %v3086 = vmul.f32 %v1550, 0.8333333
  %v3087 = vmul.f32 %v1551, 0.8333333
  %v3088 = vmul.f32 %v1552, 0.8333333
  %v3089 = vmul.f32 %v1553, 0.8333333
  %v3090 = vmul.f32 %v1554, 0.8333333
  %v3091 = vmul.f32 %v1555, 0.8333333
  %v3092 = vmul.f32 %v1556, 0.8333333
  %v3093 = vmul.f32 %v1557, 0.8333333
  %v3094 = vmul.f32 %v1558, 0.8333333
  %v3095 = vmul.f32 %v1559, 0.8333333
  %v3096 = vmul.f32 %v1560, 0.8333333
  %v3097 = vmul.f32 %v1561, 0.8333333
  %v3098 = vmul.f32 %v1562, 0.8333333
  %v3099 = vmul.f32 %v3083, %v2475
  %v3100 = vmul.f32 %v3084, %v2476
  %v3101 = vmul.f32 %v3085, %v2477
  %v3102 = vmul.f32 %v3086, %v2478
  %v3103 = vmul.f32 %v3087, %v2479
  %v3104 = vmul.f32 %v3088, %v2480
  %v3105 = vmul.f32 %v3089, %v2481
  %v3106 = vmul.f32 %v3090, %v2482
  %v3107 = vmul.f32 %v3091, %v2483
  %v3108 = vmul.f32 %v3092, %v2484
  %v3109 = vmul.f32 %v3093, %v2485
  %v3110 = vmul.f32 %v3094, %v2486
  %v3111 = vmul.f32 %v3095, %v2487
  %v3112 = vmul.f32 %v3096, %v2488
  %v3113 = vmul.f32 %v3097, %v2489
  %v3114 = vmul.f32 %v3098, %v2490
  %v3115 = vadd.f32 %v3067, %v3099
  %v3116 = vadd.f32 %v3068, %v3100
  %v3117 = vadd.f32 %v3069, %v3101
  %v3118 = vadd.f32 %v3070, %v3102
  %v3119 = vadd.f32 %v3071, %v3103
  %v3120 = vadd.f32 %v3072, %v3104
  %v3121 = vadd.f32 %v3073, %v3105
  %v3122 = vadd.f32 %v3074, %v3106
  %v3123 = vadd.f32 %v3075, %v3107
  %v3124 = vadd.f32 %v3076, %v3108
  %v3125 = vadd.f32 %v3077, %v3109
  %v3126 = vadd.f32 %v3078, %v3110
  %v3127 = vadd.f32 %v3079, %v3111
  %v3128 = vadd.f32 %v3080, %v3112
  %v3129 = vadd.f32 %v3081, %v3113
  %v3130 = vadd.f32 %v3082, %v3114
  %v3131 = vmul.f32 %v1387, 0.8333333
  %v3132 = vmul.f32 %v1388, 0.8333333
  %v3133 = vmul.f32 %v1389, 0.8333333
  %v3134 = vmul.f32 %v1390, 0.8333333
  %v3135 = vmul.f32 %v1391, 0.8333333
  %v3136 = vmul.f32 %v1392, 0.8333333
  %v3137 = vmul.f32 %v1393, 0.8333333
  %v3138 = vmul.f32 %v1394, 0.8333333
  %v3139 = vmul.f32 %v1395, 0.8333333
  %v3140 = vmul.f32 %v1396, 0.8333333
  %v3141 = vmul.f32 %v1397, 0.8333333
  %v3142 = vmul.f32 %v1398, 0.8333333
  %v3143 = vmul.f32 %v1399, 0.8333333
  %v3144 = vmul.f32 %v1400, 0.8333333
  %v3145 = vmul.f32 %v1401, 0.8333333
  %v3146 = vmul.f32 %v1402, 0.8333333
  %v3147 = vmul.f32 %v3131, %v2475
  %v3148 = vmul.f32 %v3132, %v2476
  %v3149 = vmul.f32 %v3133, %v2477
  %v3150 = vmul.f32 %v3134, %v2478
  %v3151 = vmul.f32 %v3135, %v2479
  %v3152 = vmul.f32 %v3136, %v2480
  %v3153 = vmul.f32 %v3137, %v2481
  %v3154 = vmul.f32 %v3138, %v2482
  %v3155 = vmul.f32 %v3139, %v2483
  %v3156 = vmul.f32 %v3140, %v2484
  %v3157 = vmul.f32 %v3141, %v2485
  %v3158 = vmul.f32 %v3142, %v2486
  %v3159 = vmul.f32 %v3143, %v2487
  %v3160 = vmul.f32 %v3144, %v2488
  %v3161 = vmul.f32 %v3145, %v2489
  %v3162 = vmul.f32 %v3146, %v2490
  %v3163 = vmul.f32 %v1659, 0.8333333
  %v3164 = vmul.f32 %v1660, 0.8333333
  %v3165 = vmul.f32 %v1661, 0.8333333
  %v3166 = vmul.f32 %v1662, 0.8333333
  %v3167 = vmul.f32 %v1663, 0.8333333
  %v3168 = vmul.f32 %v1664, 0.8333333
  %v3169 = vmul.f32 %v1665, 0.8333333
  %v3170 = vmul.f32 %v1666, 0.8333333
  %v3171 = vmul.f32 %v1667, 0.8333333
  %v3172 = vmul.f32 %v1668, 0.8333333
  %v3173 = vmul.f32 %v1669, 0.8333333
  %v3174 = vmul.f32 %v1670, 0.8333333
  %v3175 = vmul.f32 %v1671, 0.8333333
  %v3176 = vmul.f32 %v1672, 0.8333333
  %v3177 = vmul.f32 %v1673, 0.8333333
  %v3178 = vmul.f32 %v1674, 0.8333333
  %v3179 = vmul.f32 %v3163, %v2555
  %v3180 = vmul.f32 %v3164, %v2556
  %v3181 = vmul.f32 %v3165, %v2557
  %v3182 = vmul.f32 %v3166, %v2558
  %v3183 = vmul.f32 %v3167, %v2559
  %v3184 = vmul.f32 %v3168, %v2560
  %v3185 = vmul.f32 %v3169, %v2561
  %v3186 = vmul.f32 %v3170, %v2562
  %v3187 = vmul.f32 %v3171, %v2563
  %v3188 = vmul.f32 %v3172, %v2564
  %v3189 = vmul.f32 %v3173, %v2565
  %v3190 = vmul.f32 %v3174, %v2566
  %v3191 = vmul.f32 %v3175, %v2567
  %v3192 = vmul.f32 %v3176, %v2568
  %v3193 = vmul.f32 %v3177, %v2569
  %v3194 = vmul.f32 %v3178, %v2570
  %v3195 = vadd.f32 %v3147, %v3179
  %v3196 = vadd.f32 %v3148, %v3180
  %v3197 = vadd.f32 %v3149, %v3181
  %v3198 = vadd.f32 %v3150, %v3182
  %v3199 = vadd.f32 %v3151, %v3183
  %v3200 = vadd.f32 %v3152, %v3184
  %v3201 = vadd.f32 %v3153, %v3185
  %v3202 = vadd.f32 %v3154, %v3186
  %v3203 = vadd.f32 %v3155, %v3187
  %v3204 = vadd.f32 %v3156, %v3188
  %v3205 = vadd.f32 %v3157, %v3189
  %v3206 = vadd.f32 %v3158, %v3190
  %v3207 = vadd.f32 %v3159, %v3191
  %v3208 = vadd.f32 %v3160, %v3192
  %v3209 = vadd.f32 %v3161, %v3193
  %v3210 = vadd.f32 %v3162, %v3194
  %v3211 = vmul.f32 %v1499, 0.8333333
  %v3212 = vmul.f32 %v1500, 0.8333333
  %v3213 = vmul.f32 %v1501, 0.8333333
  %v3214 = vmul.f32 %v1502, 0.8333333
  %v3215 = vmul.f32 %v1503, 0.8333333
  %v3216 = vmul.f32 %v1504, 0.8333333
  %v3217 = vmul.f32 %v1505, 0.8333333
  %v3218 = vmul.f32 %v1506, 0.8333333
  %v3219 = vmul.f32 %v1507, 0.8333333
  %v3220 = vmul.f32 %v1508, 0.8333333
  %v3221 = vmul.f32 %v1509, 0.8333333
  %v3222 = vmul.f32 %v1510, 0.8333333
  %v3223 = vmul.f32 %v1511, 0.8333333
  %v3224 = vmul.f32 %v1512, 0.8333333
  %v3225 = vmul.f32 %v1513, 0.8333333
  %v3226 = vmul.f32 %v1514, 0.8333333
  %v3227 = vmul.f32 %v3211, %v2555
  %v3228 = vmul.f32 %v3212, %v2556
  %v3229 = vmul.f32 %v3213, %v2557
  %v3230 = vmul.f32 %v3214, %v2558
  %v3231 = vmul.f32 %v3215, %v2559
  %v3232 = vmul.f32 %v3216, %v2560
  %v3233 = vmul.f32 %v3217, %v2561
  %v3234 = vmul.f32 %v3218, %v2562
  %v3235 = vmul.f32 %v3219, %v2563
  %v3236 = vmul.f32 %v3220, %v2564
  %v3237 = vmul.f32 %v3221, %v2565
  %v3238 = vmul.f32 %v3222, %v2566
  %v3239 = vmul.f32 %v3223, %v2567
  %v3240 = vmul.f32 %v3224, %v2568
  %v3241 = vmul.f32 %v3225, %v2569
  %v3242 = vmul.f32 %v3226, %v2570
  %v3243 = vmul.f32 %v1771, 0.8333333
  %v3244 = vmul.f32 %v1772, 0.8333333
  %v3245 = vmul.f32 %v1773, 0.8333333
  %v3246 = vmul.f32 %v1774, 0.8333333
  %v3247 = vmul.f32 %v1775, 0.8333333
  %v3248 = vmul.f32 %v1776, 0.8333333
  %v3249 = vmul.f32 %v1777, 0.8333333
  %v3250 = vmul.f32 %v1778, 0.8333333
  %v3251 = vmul.f32 %v1779, 0.8333333
  %v3252 = vmul.f32 %v1780, 0.8333333
  %v3253 = vmul.f32 %v1781, 0.8333333
  %v3254 = vmul.f32 %v1782, 0.8333333
  %v3255 = vmul.f32 %v1783, 0.8333333
  %v3256 = vmul.f32 %v1784, 0.8333333
  %v3257 = vmul.f32 %v1785, 0.8333333
  %v3258 = vmul.f32 %v1786, 0.8333333
  %v3259 = vmul.f32 %v3243, %v2635
  %v3260 = vmul.f32 %v3244, %v2636
  %v3261 = vmul.f32 %v3245, %v2637
  %v3262 = vmul.f32 %v3246, %v2638
  %v3263 = vmul.f32 %v3247, %v2639
  %v3264 = vmul.f32 %v3248, %v2640
  %v3265 = vmul.f32 %v3249, %v2641
  %v3266 = vmul.f32 %v3250, %v2642
  %v3267 = vmul.f32 %v3251, %v2643
  %v3268 = vmul.f32 %v3252, %v2644
  %v3269 = vmul.f32 %v3253, %v2645
  %v3270 = vmul.f32 %v3254, %v2646
  %v3271 = vmul.f32 %v3255, %v2647
  %v3272 = vmul.f32 %v3256, %v2648
  %v3273 = vmul.f32 %v3257, %v2649
  %v3274 = vmul.f32 %v3258, %v2650
  %v3275 = vadd.f32 %v3227, %v3259
  %v3276 = vadd.f32 %v3228, %v3260
  %v3277 = vadd.f32 %v3229, %v3261
  %v3278 = vadd.f32 %v3230, %v3262
  %v3279 = vadd.f32 %v3231, %v3263
  %v3280 = vadd.f32 %v3232, %v3264
  %v3281 = vadd.f32 %v3233, %v3265
  %v3282 = vadd.f32 %v3234, %v3266
  %v3283 = vadd.f32 %v3235, %v3267
  %v3284 = vadd.f32 %v3236, %v3268
  %v3285 = vadd.f32 %v3237, %v3269
  %v3286 = vadd.f32 %v3238, %v3270
  %v3287 = vadd.f32 %v3239, %v3271
  %v3288 = vadd.f32 %v3240, %v3272
  %v3289 = vadd.f32 %v3241, %v3273
  %v3290 = vadd.f32 %v3242, %v3274
  %v3291 = vmul.f32 %v1611, 0.8333333
  %v3292 = vmul.f32 %v1612, 0.8333333
  %v3293 = vmul.f32 %v1613, 0.8333333
  %v3294 = vmul.f32 %v1614, 0.8333333
  %v3295 = vmul.f32 %v1615, 0.8333333
  %v3296 = vmul.f32 %v1616, 0.8333333
  %v3297 = vmul.f32 %v1617, 0.8333333
  %v3298 = vmul.f32 %v1618, 0.8333333
  %v3299 = vmul.f32 %v1619, 0.8333333
  %v3300 = vmul.f32 %v1620, 0.8333333
  %v3301 = vmul.f32 %v1621, 0.8333333
  %v3302 = vmul.f32 %v1622, 0.8333333
  %v3303 = vmul.f32 %v1623, 0.8333333
  %v3304 = vmul.f32 %v1624, 0.8333333
  %v3305 = vmul.f32 %v1625, 0.8333333
  %v3306 = vmul.f32 %v1626, 0.8333333
  %v3307 = vmul.f32 %v3291, %v2635
  %v3308 = vmul.f32 %v3292, %v2636
  %v3309 = vmul.f32 %v3293, %v2637
  %v3310 = vmul.f32 %v3294, %v2638
  %v3311 = vmul.f32 %v3295, %v2639
  %v3312 = vmul.f32 %v3296, %v2640
  %v3313 = vmul.f32 %v3297, %v2641
  %v3314 = vmul.f32 %v3298, %v2642
  %v3315 = vmul.f32 %v3299, %v2643
  %v3316 = vmul.f32 %v3300, %v2644
  %v3317 = vmul.f32 %v3301, %v2645
  %v3318 = vmul.f32 %v3302, %v2646
  %v3319 = vmul.f32 %v3303, %v2647
  %v3320 = vmul.f32 %v3304, %v2648
  %v3321 = vmul.f32 %v3305, %v2649
  %v3322 = vmul.f32 %v3306, %v2650
  %v3323 = vmul.f32 %v1883, 0.8333333
  %v3324 = vmul.f32 %v1884, 0.8333333
  %v3325 = vmul.f32 %v1885, 0.8333333
  %v3326 = vmul.f32 %v1886, 0.8333333
  %v3327 = vmul.f32 %v1887, 0.8333333
  %v3328 = vmul.f32 %v1888, 0.8333333
  %v3329 = vmul.f32 %v1889, 0.8333333
  %v3330 = vmul.f32 %v1890, 0.8333333
  %v3331 = vmul.f32 %v1891, 0.8333333
  %v3332 = vmul.f32 %v1892, 0.8333333
  %v3333 = vmul.f32 %v1893, 0.8333333
  %v3334 = vmul.f32 %v1894, 0.8333333
  %v3335 = vmul.f32 %v1895, 0.8333333
  %v3336 = vmul.f32 %v1896, 0.8333333
  %v3337 = vmul.f32 %v1897, 0.8333333
  %v3338 = vmul.f32 %v1898, 0.8333333
  %v3339 = vmul.f32 %v3323, %v2715
  %v3340 = vmul.f32 %v3324, %v2716
  %v3341 = vmul.f32 %v3325, %v2717
  %v3342 = vmul.f32 %v3326, %v2718
  %v3343 = vmul.f32 %v3327, %v2719
  %v3344 = vmul.f32 %v3328, %v2720
  %v3345 = vmul.f32 %v3329, %v2721
  %v3346 = vmul.f32 %v3330, %v2722
  %v3347 = vmul.f32 %v3331, %v2723
  %v3348 = vmul.f32 %v3332, %v2724
  %v3349 = vmul.f32 %v3333, %v2725
  %v3350 = vmul.f32 %v3334, %v2726
  %v3351 = vmul.f32 %v3335, %v2727
  %v3352 = vmul.f32 %v3336, %v2728
  %v3353 = vmul.f32 %v3337, %v2729
  %v3354 = vmul.f32 %v3338, %v2730
  %v3355 = vadd.f32 %v3307, %v3339
  %v3356 = vadd.f32 %v3308, %v3340
  %v3357 = vadd.f32 %v3309, %v3341
  %v3358 = vadd.f32 %v3310, %v3342
  %v3359 = vadd.f32 %v3311, %v3343
  %v3360 = vadd.f32 %v3312, %v3344
  %v3361 = vadd.f32 %v3313, %v3345
  %v3362 = vadd.f32 %v3314, %v3346
  %v3363 = vadd.f32 %v3315, %v3347
  %v3364 = vadd.f32 %v3316, %v3348
  %v3365 = vadd.f32 %v3317, %v3349
  %v3366 = vadd.f32 %v3318, %v3350
  %v3367 = vadd.f32 %v3319, %v3351
  %v3368 = vadd.f32 %v3320, %v3352
  %v3369 = vadd.f32 %v3321, %v3353
  %v3370 = vadd.f32 %v3322, %v3354
  %v3371 = vmul.f32 %v1723, 0.8333333
  %v3372 = vmul.f32 %v1724, 0.8333333
  %v3373 = vmul.f32 %v1725, 0.8333333
  %v3374 = vmul.f32 %v1726, 0.8333333
  %v3375 = vmul.f32 %v1727, 0.8333333
  %v3376 = vmul.f32 %v1728, 0.8333333
  %v3377 = vmul.f32 %v1729, 0.8333333
  %v3378 = vmul.f32 %v1730, 0.8333333
  %v3379 = vmul.f32 %v1731, 0.8333333
  %v3380 = vmul.f32 %v1732, 0.8333333
  %v3381 = vmul.f32 %v1733, 0.8333333
  %v3382 = vmul.f32 %v1734, 0.8333333
  %v3383 = vmul.f32 %v1735, 0.8333333
  %v3384 = vmul.f32 %v1736, 0.8333333
  %v3385 = vmul.f32 %v1737, 0.8333333
  %v3386 = vmul.f32 %v1738, 0.8333333
  %v3387 = vmul.f32 %v3371, %v2715
  %v3388 = vmul.f32 %v3372, %v2716
  %v3389 = vmul.f32 %v3373, %v2717
  %v3390 = vmul.f32 %v3374, %v2718
  %v3391 = vmul.f32 %v3375, %v2719
  %v3392 = vmul.f32 %v3376, %v2720
  %v3393 = vmul.f32 %v3377, %v2721
  %v3394 = vmul.f32 %v3378, %v2722
  %v3395 = vmul.f32 %v3379, %v2723
  %v3396 = vmul.f32 %v3380, %v2724
  %v3397 = vmul.f32 %v3381, %v2725
  %v3398 = vmul.f32 %v3382, %v2726
  %v3399 = vmul.f32 %v3383, %v2727
  %v3400 = vmul.f32 %v3384, %v2728
  %v3401 = vmul.f32 %v3385, %v2729
  %v3402 = vmul.f32 %v3386, %v2730
  %v3403 = vmul.f32 %v1995, 0.8333333
  %v3404 = vmul.f32 %v1996, 0.8333333
  %v3405 = vmul.f32 %v1997, 0.8333333
  %v3406 = vmul.f32 %v1998, 0.8333333
  %v3407 = vmul.f32 %v1999, 0.8333333
  %v3408 = vmul.f32 %v2000, 0.8333333
  %v3409 = vmul.f32 %v2001, 0.8333333
  %v3410 = vmul.f32 %v2002, 0.8333333
  %v3411 = vmul.f32 %v2003, 0.8333333
  %v3412 = vmul.f32 %v2004, 0.8333333
  %v3413 = vmul.f32 %v2005, 0.8333333
  %v3414 = vmul.f32 %v2006, 0.8333333
  %v3415 = vmul.f32 %v2007, 0.8333333
  %v3416 = vmul.f32 %v2008, 0.8333333
  %v3417 = vmul.f32 %v2009, 0.8333333
  %v3418 = vmul.f32 %v2010, 0.8333333
  %v3419 = vmul.f32 %v3403, %v2795
  %v3420 = vmul.f32 %v3404, %v2796
  %v3421 = vmul.f32 %v3405, %v2797
  %v3422 = vmul.f32 %v3406, %v2798
  %v3423 = vmul.f32 %v3407, %v2799
  %v3424 = vmul.f32 %v3408, %v2800
  %v3425 = vmul.f32 %v3409, %v2801
  %v3426 = vmul.f32 %v3410, %v2802
  %v3427 = vmul.f32 %v3411, %v2803
  %v3428 = vmul.f32 %v3412, %v2804
  %v3429 = vmul.f32 %v3413, %v2805
  %v3430 = vmul.f32 %v3414, %v2806
  %v3431 = vmul.f32 %v3415, %v2807
  %v3432 = vmul.f32 %v3416, %v2808
  %v3433 = vmul.f32 %v3417, %v2809
  %v3434 = vmul.f32 %v3418, %v2810
  %v3435 = vadd.f32 %v3387, %v3419
  %v3436 = vadd.f32 %v3388, %v3420
  %v3437 = vadd.f32 %v3389, %v3421
  %v3438 = vadd.f32 %v3390, %v3422
  %v3439 = vadd.f32 %v3391, %v3423
  %v3440 = vadd.f32 %v3392, %v3424
  %v3441 = vadd.f32 %v3393, %v3425
  %v3442 = vadd.f32 %v3394, %v3426
  %v3443 = vadd.f32 %v3395, %v3427
  %v3444 = vadd.f32 %v3396, %v3428
  %v3445 = vadd.f32 %v3397, %v3429
  %v3446 = vadd.f32 %v3398, %v3430
  %v3447 = vadd.f32 %v3399, %v3431
  %v3448 = vadd.f32 %v3400, %v3432
  %v3449 = vadd.f32 %v3401, %v3433
  %v3450 = vadd.f32 %v3402, %v3434
  %v3451 = vmul.f32 %v1835, 0.8333333
  %v3452 = vmul.f32 %v1836, 0.8333333
  %v3453 = vmul.f32 %v1837, 0.8333333
  %v3454 = vmul.f32 %v1838, 0.8333333
  %v3455 = vmul.f32 %v1839, 0.8333333
  %v3456 = vmul.f32 %v1840, 0.8333333
  %v3457 = vmul.f32 %v1841, 0.8333333
  %v3458 = vmul.f32 %v1842, 0.8333333
  %v3459 = vmul.f32 %v1843, 0.8333333
  %v3460 = vmul.f32 %v1844, 0.8333333
  %v3461 = vmul.f32 %v1845, 0.8333333
  %v3462 = vmul.f32 %v1846, 0.8333333
  %v3463 = vmul.f32 %v1847, 0.8333333
  %v3464 = vmul.f32 %v1848, 0.8333333
  %v3465 = vmul.f32 %v1849, 0.8333333
  %v3466 = vmul.f32 %v1850, 0.8333333
  %v3467 = vmul.f32 %v3451, %v2795
  %v3468 = vmul.f32 %v3452, %v2796
  %v3469 = vmul.f32 %v3453, %v2797
  %v3470 = vmul.f32 %v3454, %v2798
  %v3471 = vmul.f32 %v3455, %v2799
  %v3472 = vmul.f32 %v3456, %v2800
  %v3473 = vmul.f32 %v3457, %v2801
  %v3474 = vmul.f32 %v3458, %v2802
  %v3475 = vmul.f32 %v3459, %v2803
  %v3476 = vmul.f32 %v3460, %v2804
  %v3477 = vmul.f32 %v3461, %v2805
  %v3478 = vmul.f32 %v3462, %v2806
  %v3479 = vmul.f32 %v3463, %v2807
  %v3480 = vmul.f32 %v3464, %v2808
  %v3481 = vmul.f32 %v3465, %v2809
  %v3482 = vmul.f32 %v3466, %v2810
  %v3483 = vmul.f32 %v2107, 0.8333333
  %v3484 = vmul.f32 %v2108, 0.8333333
  %v3485 = vmul.f32 %v2109, 0.8333333
  %v3486 = vmul.f32 %v2110, 0.8333333
  %v3487 = vmul.f32 %v2111, 0.8333333
  %v3488 = vmul.f32 %v2112, 0.8333333
  %v3489 = vmul.f32 %v2113, 0.8333333
  %v3490 = vmul.f32 %v2114, 0.8333333
  %v3491 = vmul.f32 %v2115, 0.8333333
  %v3492 = vmul.f32 %v2116, 0.8333333
  %v3493 = vmul.f32 %v2117, 0.8333333
  %v3494 = vmul.f32 %v2118, 0.8333333
  %v3495 = vmul.f32 %v2119, 0.8333333
  %v3496 = vmul.f32 %v2120, 0.8333333
  %v3497 = vmul.f32 %v2121, 0.8333333
  %v3498 = vmul.f32 %v2122, 0.8333333
  %v3499 = vmul.f32 %v3483, %v2875
  %v3500 = vmul.f32 %v3484, %v2876
  %v3501 = vmul.f32 %v3485, %v2877
  %v3502 = vmul.f32 %v3486, %v2878
  %v3503 = vmul.f32 %v3487, %v2879
  %v3504 = vmul.f32 %v3488, %v2880
  %v3505 = vmul.f32 %v3489, %v2881
  %v3506 = vmul.f32 %v3490, %v2882
  %v3507 = vmul.f32 %v3491, %v2883
  %v3508 = vmul.f32 %v3492, %v2884
  %v3509 = vmul.f32 %v3493, %v2885
  %v3510 = vmul.f32 %v3494, %v2886
  %v3511 = vmul.f32 %v3495, %v2887
  %v3512 = vmul.f32 %v3496, %v2888
  %v3513 = vmul.f32 %v3497, %v2889
  %v3514 = vmul.f32 %v3498, %v2890
  %v3515 = vadd.f32 %v3467, %v3499
  %v3516 = vadd.f32 %v3468, %v3500
  %v3517 = vadd.f32 %v3469, %v3501
  %v3518 = vadd.f32 %v3470, %v3502
  %v3519 = vadd.f32 %v3471, %v3503
  %v3520 = vadd.f32 %v3472, %v3504
  %v3521 = vadd.f32 %v3473, %v3505
  %v3522 = vadd.f32 %v3474, %v3506
  %v3523 = vadd.f32 %v3475, %v3507
  %v3524 = vadd.f32 %v3476, %v3508
  %v3525 = vadd.f32 %v3477, %v3509
  %v3526 = vadd.f32 %v3478, %v3510
  %v3527 = vadd.f32 %v3479, %v3511
  %v3528 = vadd.f32 %v3480, %v3512
  %v3529 = vadd.f32 %v3481, %v3513
  %v3530 = vadd.f32 %v3482, %v3514
  %v3531 = vpack.c.bf16 %v2956, %v2955
  %v3532 = vpack.c.bf16 %v2958, %v2957
  %v3533 = vpack.c.bf16 %v2960, %v2959
  %v3534 = vpack.c.bf16 %v2962, %v2961
  %v3535 = vpack.c.bf16 %v2964, %v2963
  %v3536 = vpack.c.bf16 %v2966, %v2965
  %v3537 = vpack.c.bf16 %v2968, %v2967
  %v3538 = vpack.c.bf16 %v2970, %v2969
  %v3539 = vld [vmem:[%s2] sm:$0xf]
  %v3540 = vld [vmem:[%s2 + $0x4] sm:$0xf]
  %v3541 = vld [vmem:[%s2 + $0x8] sm:$0xf]
  %v3542 = vld [vmem:[%s2 + $0xc] sm:$0xf]
  %v3543 = vld [vmem:[%s2 + $0x10] sm:$0xf]
  %v3544 = vld [vmem:[%s2 + $0x14] sm:$0xf]
  %v3545 = vld [vmem:[%s2 + $0x18] sm:$0xf]
  %v3546 = vld [vmem:[%s2 + $0x1c] sm:$0xf]
  %v3547 = vld [vmem:[%s2 + $0x20] sm:$0xf]
  %v3548 = vld [vmem:[%s2 + $0x24] sm:$0xf]
  %v3549 = vld [vmem:[%s2 + $0x28] sm:$0xf]
  %v3550 = vld [vmem:[%s2 + $0x2c] sm:$0xf]
  %v3551 = vld [vmem:[%s2 + $0x30] sm:$0xf]
  %v3552 = vld [vmem:[%s2 + $0x34] sm:$0xf]
  %v3553 = vld [vmem:[%s2 + $0x38] sm:$0xf]
  %v3554 = vld [vmem:[%s2 + $0x3c] sm:$0xf]
  %v3571 = vunpack.c.l.b16 %v3539
  %v3572 = vunpack.c.l.b16 %v3540
  %v3573 = vunpack.c.l.b16 %v3541
  %v3574 = vunpack.c.l.b16 %v3542
  %v3575 = vunpack.c.l.b16 %v3543
  %v3576 = vunpack.c.l.b16 %v3544
  %v3577 = vunpack.c.l.b16 %v3545
  %v3578 = vunpack.c.l.b16 %v3546
  %v3579 = vunpack.c.l.b16 %v3547
  %v3580 = vunpack.c.l.b16 %v3548
  %v3581 = vunpack.c.l.b16 %v3549
  %v3582 = vunpack.c.l.b16 %v3550
  %v3583 = vunpack.c.l.b16 %v3551
  %v3584 = vunpack.c.l.b16 %v3552
  %v3585 = vunpack.c.l.b16 %v3553
  %v3586 = vunpack.c.l.b16 %v3554
  %v3587 = vpack.c.b16 %v3572, %v3571
  %v3588 = vpack.c.b16 %v3574, %v3573
  %v3589 = vpack.c.b16 %v3576, %v3575
  %v3590 = vpack.c.b16 %v3578, %v3577
  %v3591 = vpack.c.b16 %v3580, %v3579
  %v3592 = vpack.c.b16 %v3582, %v3581
  %v3593 = vpack.c.b16 %v3584, %v3583
  %v3594 = vpack.c.b16 %v3586, %v3585
  %3603 = vmatprep.subr.bf16.mxu0 0
  %3604 = vmatpush1.bf16.msra.mxu0 %v3587
  %3605 = vmatprep.subr.bf16.mxu0 0
  %3606 = vmatpush1.bf16.msra.mxu0 %v3588
  %3607 = vmatprep.subr.bf16.mxu0 0
  %3608 = vmatpush1.bf16.msra.mxu0 %v3589
  %3609 = vmatprep.subr.bf16.mxu0 0
  %3610 = vmatpush1.bf16.msra.mxu0 %v3590
  %3611 = vmatprep.subr.bf16.mxu0 0
  %3612 = vmatpush1.bf16.msra.mxu0 %v3591
  %3613 = vmatprep.subr.bf16.mxu0 0
  %3614 = vmatpush1.bf16.msra.mxu0 %v3592
  %3615 = vmatprep.subr.bf16.mxu0 0
  %3616 = vmatpush1.bf16.msra.mxu0 %v3593
  %3617 = vmatprep.subr.bf16.mxu0 0
  %3618 = vmatpush1.bf16.msra.mxu0 %v3594
  %3619 = vmatprep.subr.bf16.mxu0 0
  %3620 = vmatpush1.bf16.msra.mxu0 0
  %3621 = vmatprep.subr.bf16.mxu0 0
  %3622 = vmatpush1.bf16.msra.mxu0 0
  %3623 = vmatprep.subr.bf16.mxu0 0
  %3624 = vmatpush1.bf16.msra.mxu0 0
  %3625 = vmatprep.subr.bf16.mxu0 0
  %3626 = vmatpush1.bf16.msra.mxu0 0
  %3627 = vmatprep.subr.bf16.mxu0 0
  %3628 = vmatpush1.bf16.msra.mxu0 0
  %3629 = vmatprep.subr.bf16.mxu0 0
  %3630 = vmatpush1.bf16.msra.mxu0 0
  %3631 = vmatprep.subr.bf16.mxu0 0
  %3632 = vmatpush1.bf16.msra.mxu0 0
  %3633 = vmatprep.subr.bf16.mxu0 0
  %3634 = vmatpush1.bf16.msra.mxu0 0
  %3635 = vmatprep.mubr.bf16.mxu0 0
  %3636 = vmatmul.mubr.bf16.gmra.mrb[0].mxu0 %v3531
  %v3637 = vpop.f32.mrb[0].mxu0
  %v3638 = vadd.f32 0.0, %v3637
  %v3639 = vpop.f32.mrb[0].mxu0
  %v3640 = vpop.f32.mrb[0].mxu0
  %v3641 = vadd.f32 0.0, %v3640
  %v3642 = vpop.f32.mrb[0].mxu0
  %3643 = vmatprep.mubr.bf16.mxu0 0
  %3644 = vmatmul.mubr.bf16.gmra.mrb[0].mxu0 %v3532
  %v3645 = vpop.f32.mrb[0].mxu0
  %v3646 = vadd.f32 0.0, %v3645
  %v3647 = vpop.f32.mrb[0].mxu0
  %v3648 = vpop.f32.mrb[0].mxu0
  %v3649 = vadd.f32 0.0, %v3648
  %v3650 = vpop.f32.mrb[0].mxu0
  %3651 = vmatprep.mubr.bf16.mxu0 0
  %3652 = vmatmul.mubr.bf16.gmra.mrb[0].mxu0 %v3533
  %v3653 = vpop.f32.mrb[0].mxu0
  %v3654 = vadd.f32 0.0, %v3653
  %v3655 = vpop.f32.mrb[0].mxu0
  %v3656 = vpop.f32.mrb[0].mxu0
  %v3657 = vadd.f32 0.0, %v3656
  %v3658 = vpop.f32.mrb[0].mxu0
  %3659 = vmatprep.mubr.bf16.mxu0 0
  %3660 = vmatmul.mubr.bf16.gmra.mrb[0].mxu0 %v3534
  %v3661 = vpop.f32.mrb[0].mxu0
  %v3662 = vadd.f32 0.0, %v3661
  %v3663 = vpop.f32.mrb[0].mxu0
  %v3664 = vpop.f32.mrb[0].mxu0
  %v3665 = vadd.f32 0.0, %v3664
  %v3666 = vpop.f32.mrb[0].mxu0
  %3667 = vmatprep.mubr.bf16.mxu0 0
  %3668 = vmatmul.mubr.bf16.gmra.mrb[0].mxu0 %v3535
  %v3669 = vpop.f32.mrb[0].mxu0
  %v3670 = vadd.f32 0.0, %v3669
  %v3671 = vpop.f32.mrb[0].mxu0
  %v3672 = vpop.f32.mrb[0].mxu0
  %v3673 = vadd.f32 0.0, %v3672
  %v3674 = vpop.f32.mrb[0].mxu0
  %3675 = vmatprep.mubr.bf16.mxu0 0
  %3676 = vmatmul.mubr.bf16.gmra.mrb[0].mxu0 %v3536
  %v3677 = vpop.f32.mrb[0].mxu0
  %v3678 = vadd.f32 0.0, %v3677
  %v3679 = vpop.f32.mrb[0].mxu0
  %v3680 = vpop.f32.mrb[0].mxu0
  %v3681 = vadd.f32 0.0, %v3680
  %v3682 = vpop.f32.mrb[0].mxu0
  %3683 = vmatprep.mubr.bf16.mxu0 0
  %3684 = vmatmul.mubr.bf16.gmra.mrb[0].mxu0 %v3537
  %v3685 = vpop.f32.mrb[0].mxu0
  %v3686 = vadd.f32 0.0, %v3685
  %v3687 = vpop.f32.mrb[0].mxu0
  %v3688 = vpop.f32.mrb[0].mxu0
  %v3689 = vadd.f32 0.0, %v3688
  %v3690 = vpop.f32.mrb[0].mxu0
  %3691 = vmatprep.mubr.bf16.mxu0 0
  %3692 = vmatmul.mubr.bf16.gmra.mrb[0].mxu0 %v3538
  %v3693 = vpop.f32.mrb[0].mxu0
  %v3694 = vadd.f32 0.0, %v3693
  %v3695 = vpop.f32.mrb[0].mxu0
  %v3696 = vpop.f32.mrb[0].mxu0
  %v3697 = vadd.f32 0.0, %v3696
  %v3698 = vpop.f32.mrb[0].mxu0
  %3699 = vdwg.mxu0
  %v3716 = vunpack.c.l.b16 %v155
  %v3717 = vunpack.c.l.b16 %v156
  %v3718 = vunpack.c.l.b16 %v157
  %v3719 = vunpack.c.l.b16 %v158
  %v3720 = vunpack.c.l.b16 %v159
  %v3721 = vunpack.c.l.b16 %v160
  %v3722 = vunpack.c.l.b16 %v161
  %v3723 = vunpack.c.l.b16 %v162
  %v3724 = vunpack.c.l.b16 %v163
  %v3725 = vunpack.c.l.b16 %v164
  %v3726 = vunpack.c.l.b16 %v165
  %v3727 = vunpack.c.l.b16 %v166
  %v3728 = vunpack.c.l.b16 %v167
  %v3729 = vunpack.c.l.b16 %v168
  %v3730 = vunpack.c.l.b16 %v169
  %v3731 = vunpack.c.l.b16 %v170
  %v3732 = vpack.c.b16 %v3717, %v3716
  %v3733 = vpack.c.b16 %v3719, %v3718
  %v3734 = vpack.c.b16 %v3721, %v3720
  %v3735 = vpack.c.b16 %v3723, %v3722
  %v3736 = vpack.c.b16 %v3725, %v3724
  %v3737 = vpack.c.b16 %v3727, %v3726
  %v3738 = vpack.c.b16 %v3729, %v3728
  %v3739 = vpack.c.b16 %v3731, %v3730
  %3748 = vmatprep.subr.bf16.mxu0 0
  %3749 = vmatpush1.bf16.msra.mxu0 %v3732
  %3750 = vmatprep.subr.bf16.mxu0 0
  %3751 = vmatpush1.bf16.msra.mxu0 %v3733
  %3752 = vmatprep.subr.bf16.mxu0 0
  %3753 = vmatpush1.bf16.msra.mxu0 %v3734
  %3754 = vmatprep.subr.bf16.mxu0 0
  %3755 = vmatpush1.bf16.msra.mxu0 %v3735
  %3756 = vmatprep.subr.bf16.mxu0 0
  %3757 = vmatpush1.bf16.msra.mxu0 %v3736
  %3758 = vmatprep.subr.bf16.mxu0 0
  %3759 = vmatpush1.bf16.msra.mxu0 %v3737
  %3760 = vmatprep.subr.bf16.mxu0 0
  %3761 = vmatpush1.bf16.msra.mxu0 %v3738
  %3762 = vmatprep.subr.bf16.mxu0 0
  %3763 = vmatpush1.bf16.msra.mxu0 %v3739
  %3764 = vmatprep.subr.bf16.mxu0 0
  %3765 = vmatpush1.bf16.msra.mxu0 0
  %3766 = vmatprep.subr.bf16.mxu0 0
  %3767 = vmatpush1.bf16.msra.mxu0 0
  %3768 = vmatprep.subr.bf16.mxu0 0
  %3769 = vmatpush1.bf16.msra.mxu0 0
  %3770 = vmatprep.subr.bf16.mxu0 0
  %3771 = vmatpush1.bf16.msra.mxu0 0
  %3772 = vmatprep.subr.bf16.mxu0 0
  %3773 = vmatpush1.bf16.msra.mxu0 0
  %3774 = vmatprep.subr.bf16.mxu0 0
  %3775 = vmatpush1.bf16.msra.mxu0 0
  %3776 = vmatprep.subr.bf16.mxu0 0
  %3777 = vmatpush1.bf16.msra.mxu0 0
  %3778 = vmatprep.subr.bf16.mxu0 0
  %3779 = vmatpush1.bf16.msra.mxu0 0
  %3780 = vmatprep.mubr.bf16.mxu0 0
  %3781 = vmatmul.mubr.bf16.gmra.mrb[0].mxu0 %v147
  %v3782 = vpop.f32.mrb[0].mxu0
  %v3783 = vadd.f32 %v3638, %v3782
  %v3784 = vpop.f32.mrb[0].mxu0
  %v3785 = vpop.f32.mrb[0].mxu0
  %v3786 = vadd.f32 %v3641, %v3785
  %v3787 = vpop.f32.mrb[0].mxu0
  %3788 = vmatprep.mubr.bf16.mxu0 0
  %3789 = vmatmul.mubr.bf16.gmra.mrb[0].mxu0 %v148
  %v3790 = vpop.f32.mrb[0].mxu0
  %v3791 = vadd.f32 %v3646, %v3790
  %v3792 = vpop.f32.mrb[0].mxu0
  %v3793 = vpop.f32.mrb[0].mxu0
  %v3794 = vadd.f32 %v3649, %v3793
  %v3795 = vpop.f32.mrb[0].mxu0
  %3796 = vmatprep.mubr.bf16.mxu0 0
  %3797 = vmatmul.mubr.bf16.gmra.mrb[0].mxu0 %v149
  %v3798 = vpop.f32.mrb[0].mxu0
  %v3799 = vadd.f32 %v3654, %v3798
  %v3800 = vpop.f32.mrb[0].mxu0
  %v3801 = vpop.f32.mrb[0].mxu0
  %v3802 = vadd.f32 %v3657, %v3801
  %v3803 = vpop.f32.mrb[0].mxu0
  %3804 = vmatprep.mubr.bf16.mxu0 0
  %3805 = vmatmul.mubr.bf16.gmra.mrb[0].mxu0 %v150
  %v3806 = vpop.f32.mrb[0].mxu0
  %v3807 = vadd.f32 %v3662, %v3806
  %v3808 = vpop.f32.mrb[0].mxu0
  %v3809 = vpop.f32.mrb[0].mxu0
  %v3810 = vadd.f32 %v3665, %v3809
  %v3811 = vpop.f32.mrb[0].mxu0
  %3812 = vmatprep.mubr.bf16.mxu0 0
  %3813 = vmatmul.mubr.bf16.gmra.mrb[0].mxu0 %v151
  %v3814 = vpop.f32.mrb[0].mxu0
  %v3815 = vadd.f32 %v3670, %v3814
  %v3816 = vpop.f32.mrb[0].mxu0
  %v3817 = vpop.f32.mrb[0].mxu0
  %v3818 = vadd.f32 %v3673, %v3817
  %v3819 = vpop.f32.mrb[0].mxu0
  %3820 = vmatprep.mubr.bf16.mxu0 0
  %3821 = vmatmul.mubr.bf16.gmra.mrb[0].mxu0 %v152
  %v3822 = vpop.f32.mrb[0].mxu0
  %v3823 = vadd.f32 %v3678, %v3822
  %v3824 = vpop.f32.mrb[0].mxu0
  %v3825 = vpop.f32.mrb[0].mxu0
  %v3826 = vadd.f32 %v3681, %v3825
  %v3827 = vpop.f32.mrb[0].mxu0
  %3828 = vmatprep.mubr.bf16.mxu0 0
  %3829 = vmatmul.mubr.bf16.gmra.mrb[0].mxu0 %v153
  %v3830 = vpop.f32.mrb[0].mxu0
  %v3831 = vadd.f32 %v3686, %v3830
  %v3832 = vpop.f32.mrb[0].mxu0
  %v3833 = vpop.f32.mrb[0].mxu0
  %v3834 = vadd.f32 %v3689, %v3833
  %v3835 = vpop.f32.mrb[0].mxu0
  %3836 = vmatprep.mubr.bf16.mxu0 0
  %3837 = vmatmul.mubr.bf16.gmra.mrb[0].mxu0 %v154
  %v3838 = vpop.f32.mrb[0].mxu0
  %v3839 = vadd.f32 %v3694, %v3838
  %v3840 = vpop.f32.mrb[0].mxu0
  %v3841 = vpop.f32.mrb[0].mxu0
  %v3842 = vadd.f32 %v3697, %v3841
  %v3843 = vpop.f32.mrb[0].mxu0
  %3844 = vdwg.mxu0
  %v3845 = vpack.c.bf16 %v3036, %v3035
  %v3846 = vpack.c.bf16 %v3038, %v3037
  %v3847 = vpack.c.bf16 %v3040, %v3039
  %v3848 = vpack.c.bf16 %v3042, %v3041
  %v3849 = vpack.c.bf16 %v3044, %v3043
  %v3850 = vpack.c.bf16 %v3046, %v3045
  %v3851 = vpack.c.bf16 %v3048, %v3047
  %v3852 = vpack.c.bf16 %v3050, %v3049
  %s3853 = scalar_lea.vmem %s2, 64
  %v3854 = vld [vmem:[%s3853] sm:$0xf]
  %v3855 = vld [vmem:[%s3853 + $0x4] sm:$0xf]
  %v3856 = vld [vmem:[%s3853 + $0x8] sm:$0xf]
  %v3857 = vld [vmem:[%s3853 + $0xc] sm:$0xf]
  %v3858 = vld [vmem:[%s3853 + $0x10] sm:$0xf]
  %v3859 = vld [vmem:[%s3853 + $0x14] sm:$0xf]
  %v3860 = vld [vmem:[%s3853 + $0x18] sm:$0xf]
  %v3861 = vld [vmem:[%s3853 + $0x1c] sm:$0xf]
  %v3862 = vld [vmem:[%s3853 + $0x20] sm:$0xf]
  %v3863 = vld [vmem:[%s3853 + $0x24] sm:$0xf]
  %v3864 = vld [vmem:[%s3853 + $0x28] sm:$0xf]
  %v3865 = vld [vmem:[%s3853 + $0x2c] sm:$0xf]
  %v3866 = vld [vmem:[%s3853 + $0x30] sm:$0xf]
  %v3867 = vld [vmem:[%s3853 + $0x34] sm:$0xf]
  %v3868 = vld [vmem:[%s3853 + $0x38] sm:$0xf]
  %v3869 = vld [vmem:[%s3853 + $0x3c] sm:$0xf]
  %v3886 = vunpack.c.l.b16 %v3854
  %v3887 = vunpack.c.l.b16 %v3855
  %v3888 = vunpack.c.l.b16 %v3856
  %v3889 = vunpack.c.l.b16 %v3857
  %v3890 = vunpack.c.l.b16 %v3858
  %v3891 = vunpack.c.l.b16 %v3859
  %v3892 = vunpack.c.l.b16 %v3860
  %v3893 = vunpack.c.l.b16 %v3861
  %v3894 = vunpack.c.l.b16 %v3862
  %v3895 = vunpack.c.l.b16 %v3863
  %v3896 = vunpack.c.l.b16 %v3864
  %v3897 = vunpack.c.l.b16 %v3865
  %v3898 = vunpack.c.l.b16 %v3866
  %v3899 = vunpack.c.l.b16 %v3867
  %v3900 = vunpack.c.l.b16 %v3868
  %v3901 = vunpack.c.l.b16 %v3869
  %v3902 = vpack.c.b16 %v3887, %v3886
  %v3903 = vpack.c.b16 %v3889, %v3888
  %v3904 = vpack.c.b16 %v3891, %v3890
  %v3905 = vpack.c.b16 %v3893, %v3892
  %v3906 = vpack.c.b16 %v3895, %v3894
  %v3907 = vpack.c.b16 %v3897, %v3896
  %v3908 = vpack.c.b16 %v3899, %v3898
  %v3909 = vpack.c.b16 %v3901, %v3900
  %3918 = vmatprep.subr.bf16.mxu0 0
  %3919 = vmatpush1.bf16.msra.mxu0 %v3902
  %3920 = vmatprep.subr.bf16.mxu0 0
  %3921 = vmatpush1.bf16.msra.mxu0 %v3903
  %3922 = vmatprep.subr.bf16.mxu0 0
  %3923 = vmatpush1.bf16.msra.mxu0 %v3904
  %3924 = vmatprep.subr.bf16.mxu0 0
  %3925 = vmatpush1.bf16.msra.mxu0 %v3905
  %3926 = vmatprep.subr.bf16.mxu0 0
  %3927 = vmatpush1.bf16.msra.mxu0 %v3906
  %3928 = vmatprep.subr.bf16.mxu0 0
  %3929 = vmatpush1.bf16.msra.mxu0 %v3907
  %3930 = vmatprep.subr.bf16.mxu0 0
  %3931 = vmatpush1.bf16.msra.mxu0 %v3908
  %3932 = vmatprep.subr.bf16.mxu0 0
  %3933 = vmatpush1.bf16.msra.mxu0 %v3909
  %3934 = vmatprep.subr.bf16.mxu0 0
  %3935 = vmatpush1.bf16.msra.mxu0 0
  %3936 = vmatprep.subr.bf16.mxu0 0
  %3937 = vmatpush1.bf16.msra.mxu0 0
  %3938 = vmatprep.subr.bf16.mxu0 0
  %3939 = vmatpush1.bf16.msra.mxu0 0
  %3940 = vmatprep.subr.bf16.mxu0 0
  %3941 = vmatpush1.bf16.msra.mxu0 0
  %3942 = vmatprep.subr.bf16.mxu0 0
  %3943 = vmatpush1.bf16.msra.mxu0 0
  %3944 = vmatprep.subr.bf16.mxu0 0
  %3945 = vmatpush1.bf16.msra.mxu0 0
  %3946 = vmatprep.subr.bf16.mxu0 0
  %3947 = vmatpush1.bf16.msra.mxu0 0
  %3948 = vmatprep.subr.bf16.mxu0 0
  %3949 = vmatpush1.bf16.msra.mxu0 0
  %3950 = vmatprep.mubr.bf16.mxu0 0
  %3951 = vmatmul.mubr.bf16.gmra.mrb[0].mxu0 %v3845
  %v3952 = vpop.f32.mrb[0].mxu0
  %v3953 = vadd.f32 0.0, %v3952
  %v3954 = vpop.f32.mrb[0].mxu0
  %v3955 = vpop.f32.mrb[0].mxu0
  %v3956 = vadd.f32 0.0, %v3955
  %v3957 = vpop.f32.mrb[0].mxu0
  %3958 = vmatprep.mubr.bf16.mxu0 0
  %3959 = vmatmul.mubr.bf16.gmra.mrb[0].mxu0 %v3846
  %v3960 = vpop.f32.mrb[0].mxu0
  %v3961 = vadd.f32 0.0, %v3960
  %v3962 = vpop.f32.mrb[0].mxu0
  %v3963 = vpop.f32.mrb[0].mxu0
  %v3964 = vadd.f32 0.0, %v3963
  %v3965 = vpop.f32.mrb[0].mxu0
  %3966 = vmatprep.mubr.bf16.mxu0 0
  %3967 = vmatmul.mubr.bf16.gmra.mrb[0].mxu0 %v3847
  %v3968 = vpop.f32.mrb[0].mxu0
  %v3969 = vadd.f32 0.0, %v3968
  %v3970 = vpop.f32.mrb[0].mxu0
  %v3971 = vpop.f32.mrb[0].mxu0
  %v3972 = vadd.f32 0.0, %v3971
  %v3973 = vpop.f32.mrb[0].mxu0
  %3974 = vmatprep.mubr.bf16.mxu0 0
  %3975 = vmatmul.mubr.bf16.gmra.mrb[0].mxu0 %v3848
  %v3976 = vpop.f32.mrb[0].mxu0
  %v3977 = vadd.f32 0.0, %v3976
  %v3978 = vpop.f32.mrb[0].mxu0
  %v3979 = vpop.f32.mrb[0].mxu0
  %v3980 = vadd.f32 0.0, %v3979
  %v3981 = vpop.f32.mrb[0].mxu0
  %3982 = vmatprep.mubr.bf16.mxu0 0
  %3983 = vmatmul.mubr.bf16.gmra.mrb[0].mxu0 %v3849
  %v3984 = vpop.f32.mrb[0].mxu0
  %v3985 = vadd.f32 0.0, %v3984
  %v3986 = vpop.f32.mrb[0].mxu0
  %v3987 = vpop.f32.mrb[0].mxu0
  %v3988 = vadd.f32 0.0, %v3987
  %v3989 = vpop.f32.mrb[0].mxu0
  %3990 = vmatprep.mubr.bf16.mxu0 0
  %3991 = vmatmul.mubr.bf16.gmra.mrb[0].mxu0 %v3850
  %v3992 = vpop.f32.mrb[0].mxu0
  %v3993 = vadd.f32 0.0, %v3992
  %v3994 = vpop.f32.mrb[0].mxu0
  %v3995 = vpop.f32.mrb[0].mxu0
  %v3996 = vadd.f32 0.0, %v3995
  %v3997 = vpop.f32.mrb[0].mxu0
  %3998 = vmatprep.mubr.bf16.mxu0 0
  %3999 = vmatmul.mubr.bf16.gmra.mrb[0].mxu0 %v3851
  %v4000 = vpop.f32.mrb[0].mxu0
  %v4001 = vadd.f32 0.0, %v4000
  %v4002 = vpop.f32.mrb[0].mxu0
  %v4003 = vpop.f32.mrb[0].mxu0
  %v4004 = vadd.f32 0.0, %v4003
  %v4005 = vpop.f32.mrb[0].mxu0
  %4006 = vmatprep.mubr.bf16.mxu0 0
  %4007 = vmatmul.mubr.bf16.gmra.mrb[0].mxu0 %v3852
  %v4008 = vpop.f32.mrb[0].mxu0
  %v4009 = vadd.f32 0.0, %v4008
  %v4010 = vpop.f32.mrb[0].mxu0
  %v4011 = vpop.f32.mrb[0].mxu0
  %v4012 = vadd.f32 0.0, %v4011
  %v4013 = vpop.f32.mrb[0].mxu0
  %4014 = vdwg.mxu0
  %v4015 = vadd.f32 %v3783, %v3953
  %v4016 = vadd.f32 %v3786, %v3956
  %v4017 = vadd.f32 %v3791, %v3961
  %v4018 = vadd.f32 %v3794, %v3964
  %v4019 = vadd.f32 %v3799, %v3969
  %v4020 = vadd.f32 %v3802, %v3972
  %v4021 = vadd.f32 %v3807, %v3977
  %v4022 = vadd.f32 %v3810, %v3980
  %v4023 = vadd.f32 %v3815, %v3985
  %v4024 = vadd.f32 %v3818, %v3988
  %v4025 = vadd.f32 %v3823, %v3993
  %v4026 = vadd.f32 %v3826, %v3996
  %v4027 = vadd.f32 %v3831, %v4001
  %v4028 = vadd.f32 %v3834, %v4004
  %v4029 = vadd.f32 %v3839, %v4009
  %v4030 = vadd.f32 %v3842, %v4012
  %v4031 = vpack.c.bf16 %v3116, %v3115
  %v4032 = vpack.c.bf16 %v3118, %v3117
  %v4033 = vpack.c.bf16 %v3120, %v3119
  %v4034 = vpack.c.bf16 %v3122, %v3121
  %v4035 = vpack.c.bf16 %v3124, %v3123
  %v4036 = vpack.c.bf16 %v3126, %v3125
  %v4037 = vpack.c.bf16 %v3128, %v3127
  %v4038 = vpack.c.bf16 %v3130, %v3129
  %s4039 = scalar_lea.vmem %s2, 128
  %v4040 = vld [vmem:[%s4039] sm:$0xf]
  %v4041 = vld [vmem:[%s4039 + $0x4] sm:$0xf]
  %v4042 = vld [vmem:[%s4039 + $0x8] sm:$0xf]
  %v4043 = vld [vmem:[%s4039 + $0xc] sm:$0xf]
  %v4044 = vld [vmem:[%s4039 + $0x10] sm:$0xf]
  %v4045 = vld [vmem:[%s4039 + $0x14] sm:$0xf]
  %v4046 = vld [vmem:[%s4039 + $0x18] sm:$0xf]
  %v4047 = vld [vmem:[%s4039 + $0x1c] sm:$0xf]
  %v4048 = vld [vmem:[%s4039 + $0x20] sm:$0xf]
  %v4049 = vld [vmem:[%s4039 + $0x24] sm:$0xf]
  %v4050 = vld [vmem:[%s4039 + $0x28] sm:$0xf]
  %v4051 = vld [vmem:[%s4039 + $0x2c] sm:$0xf]
  %v4052 = vld [vmem:[%s4039 + $0x30] sm:$0xf]
  %v4053 = vld [vmem:[%s4039 + $0x34] sm:$0xf]
  %v4054 = vld [vmem:[%s4039 + $0x38] sm:$0xf]
  %v4055 = vld [vmem:[%s4039 + $0x3c] sm:$0xf]
  %v4072 = vunpack.c.l.b16 %v4040
  %v4073 = vunpack.c.l.b16 %v4041
  %v4074 = vunpack.c.l.b16 %v4042
  %v4075 = vunpack.c.l.b16 %v4043
  %v4076 = vunpack.c.l.b16 %v4044
  %v4077 = vunpack.c.l.b16 %v4045
  %v4078 = vunpack.c.l.b16 %v4046
  %v4079 = vunpack.c.l.b16 %v4047
  %v4080 = vunpack.c.l.b16 %v4048
  %v4081 = vunpack.c.l.b16 %v4049
  %v4082 = vunpack.c.l.b16 %v4050
  %v4083 = vunpack.c.l.b16 %v4051
  %v4084 = vunpack.c.l.b16 %v4052
  %v4085 = vunpack.c.l.b16 %v4053
  %v4086 = vunpack.c.l.b16 %v4054
  %v4087 = vunpack.c.l.b16 %v4055
  %v4088 = vpack.c.b16 %v4073, %v4072
  %v4089 = vpack.c.b16 %v4075, %v4074
  %v4090 = vpack.c.b16 %v4077, %v4076
  %v4091 = vpack.c.b16 %v4079, %v4078
  %v4092 = vpack.c.b16 %v4081, %v4080
  %v4093 = vpack.c.b16 %v4083, %v4082
  %v4094 = vpack.c.b16 %v4085, %v4084
  %v4095 = vpack.c.b16 %v4087, %v4086
  %4104 = vmatprep.subr.bf16.mxu0 0
  %4105 = vmatpush1.bf16.msra.mxu0 %v4088
  %4106 = vmatprep.subr.bf16.mxu0 0
  %4107 = vmatpush1.bf16.msra.mxu0 %v4089
  %4108 = vmatprep.subr.bf16.mxu0 0
  %4109 = vmatpush1.bf16.msra.mxu0 %v4090
  %4110 = vmatprep.subr.bf16.mxu0 0
  %4111 = vmatpush1.bf16.msra.mxu0 %v4091
  %4112 = vmatprep.subr.bf16.mxu0 0
  %4113 = vmatpush1.bf16.msra.mxu0 %v4092
  %4114 = vmatprep.subr.bf16.mxu0 0
  %4115 = vmatpush1.bf16.msra.mxu0 %v4093
  %4116 = vmatprep.subr.bf16.mxu0 0
  %4117 = vmatpush1.bf16.msra.mxu0 %v4094
  %4118 = vmatprep.subr.bf16.mxu0 0
  %4119 = vmatpush1.bf16.msra.mxu0 %v4095
  %4120 = vmatprep.subr.bf16.mxu0 0
  %4121 = vmatpush1.bf16.msra.mxu0 0
  %4122 = vmatprep.subr.bf16.mxu0 0
  %4123 = vmatpush1.bf16.msra.mxu0 0
  %4124 = vmatprep.subr.bf16.mxu0 0
  %4125 = vmatpush1.bf16.msra.mxu0 0
  %4126 = vmatprep.subr.bf16.mxu0 0
  %4127 = vmatpush1.bf16.msra.mxu0 0
  %4128 = vmatprep.subr.bf16.mxu0 0
  %4129 = vmatpush1.bf16.msra.mxu0 0
  %4130 = vmatprep.subr.bf16.mxu0 0
  %4131 = vmatpush1.bf16.msra.mxu0 0
  %4132 = vmatprep.subr.bf16.mxu0 0
  %4133 = vmatpush1.bf16.msra.mxu0 0
  %4134 = vmatprep.subr.bf16.mxu0 0
  %4135 = vmatpush1.bf16.msra.mxu0 0
  %4136 = vmatprep.mubr.bf16.mxu0 0
  %4137 = vmatmul.mubr.bf16.gmra.mrb[0].mxu0 %v4031
  %v4138 = vpop.f32.mrb[0].mxu0
  %v4139 = vadd.f32 0.0, %v4138
  %v4140 = vpop.f32.mrb[0].mxu0
  %v4141 = vpop.f32.mrb[0].mxu0
  %v4142 = vadd.f32 0.0, %v4141
  %v4143 = vpop.f32.mrb[0].mxu0
  %4144 = vmatprep.mubr.bf16.mxu0 0
  %4145 = vmatmul.mubr.bf16.gmra.mrb[0].mxu0 %v4032
  %v4146 = vpop.f32.mrb[0].mxu0
  %v4147 = vadd.f32 0.0, %v4146
  %v4148 = vpop.f32.mrb[0].mxu0
  %v4149 = vpop.f32.mrb[0].mxu0
  %v4150 = vadd.f32 0.0, %v4149
  %v4151 = vpop.f32.mrb[0].mxu0
  %4152 = vmatprep.mubr.bf16.mxu0 0
  %4153 = vmatmul.mubr.bf16.gmra.mrb[0].mxu0 %v4033
  %v4154 = vpop.f32.mrb[0].mxu0
  %v4155 = vadd.f32 0.0, %v4154
  %v4156 = vpop.f32.mrb[0].mxu0
  %v4157 = vpop.f32.mrb[0].mxu0
  %v4158 = vadd.f32 0.0, %v4157
  %v4159 = vpop.f32.mrb[0].mxu0
  %4160 = vmatprep.mubr.bf16.mxu0 0
  %4161 = vmatmul.mubr.bf16.gmra.mrb[0].mxu0 %v4034
  %v4162 = vpop.f32.mrb[0].mxu0
  %v4163 = vadd.f32 0.0, %v4162
  %v4164 = vpop.f32.mrb[0].mxu0
  %v4165 = vpop.f32.mrb[0].mxu0
  %v4166 = vadd.f32 0.0, %v4165
  %v4167 = vpop.f32.mrb[0].mxu0
  %4168 = vmatprep.mubr.bf16.mxu0 0
  %4169 = vmatmul.mubr.bf16.gmra.mrb[0].mxu0 %v4035
  %v4170 = vpop.f32.mrb[0].mxu0
  %v4171 = vadd.f32 0.0, %v4170
  %v4172 = vpop.f32.mrb[0].mxu0
  %v4173 = vpop.f32.mrb[0].mxu0
  %v4174 = vadd.f32 0.0, %v4173
  %v4175 = vpop.f32.mrb[0].mxu0
  %4176 = vmatprep.mubr.bf16.mxu0 0
  %4177 = vmatmul.mubr.bf16.gmra.mrb[0].mxu0 %v4036
  %v4178 = vpop.f32.mrb[0].mxu0
  %v4179 = vadd.f32 0.0, %v4178
  %v4180 = vpop.f32.mrb[0].mxu0
  %v4181 = vpop.f32.mrb[0].mxu0
  %v4182 = vadd.f32 0.0, %v4181
  %v4183 = vpop.f32.mrb[0].mxu0
  %4184 = vmatprep.mubr.bf16.mxu0 0
  %4185 = vmatmul.mubr.bf16.gmra.mrb[0].mxu0 %v4037
  %v4186 = vpop.f32.mrb[0].mxu0
  %v4187 = vadd.f32 0.0, %v4186
  %v4188 = vpop.f32.mrb[0].mxu0
  %v4189 = vpop.f32.mrb[0].mxu0
  %v4190 = vadd.f32 0.0, %v4189
  %v4191 = vpop.f32.mrb[0].mxu0
  %4192 = vmatprep.mubr.bf16.mxu0 0
  %4193 = vmatmul.mubr.bf16.gmra.mrb[0].mxu0 %v4038
  %v4194 = vpop.f32.mrb[0].mxu0
  %v4195 = vadd.f32 0.0, %v4194
  %v4196 = vpop.f32.mrb[0].mxu0
  %v4197 = vpop.f32.mrb[0].mxu0
  %v4198 = vadd.f32 0.0, %v4197
  %v4199 = vpop.f32.mrb[0].mxu0
  %4200 = vdwg.mxu0
  %v4201 = vadd.f32 %v4015, %v4139
  %v4202 = vadd.f32 %v4016, %v4142
  %v4203 = vadd.f32 %v4017, %v4147
  %v4204 = vadd.f32 %v4018, %v4150
  %v4205 = vadd.f32 %v4019, %v4155
  %v4206 = vadd.f32 %v4020, %v4158
  %v4207 = vadd.f32 %v4021, %v4163
  %v4208 = vadd.f32 %v4022, %v4166
  %v4209 = vadd.f32 %v4023, %v4171
  %v4210 = vadd.f32 %v4024, %v4174
  %v4211 = vadd.f32 %v4025, %v4179
  %v4212 = vadd.f32 %v4026, %v4182
  %v4213 = vadd.f32 %v4027, %v4187
  %v4214 = vadd.f32 %v4028, %v4190
  %v4215 = vadd.f32 %v4029, %v4195
  %v4216 = vadd.f32 %v4030, %v4198
  %v4217 = vpack.c.bf16 %v3196, %v3195
  %v4218 = vpack.c.bf16 %v3198, %v3197
  %v4219 = vpack.c.bf16 %v3200, %v3199
  %v4220 = vpack.c.bf16 %v3202, %v3201
  %v4221 = vpack.c.bf16 %v3204, %v3203
  %v4222 = vpack.c.bf16 %v3206, %v3205
  %v4223 = vpack.c.bf16 %v3208, %v3207
  %v4224 = vpack.c.bf16 %v3210, %v3209
  %s4225 = scalar_lea.vmem %s2, 192
  %v4226 = vld [vmem:[%s4225] sm:$0xf]
  %v4227 = vld [vmem:[%s4225 + $0x4] sm:$0xf]
  %v4228 = vld [vmem:[%s4225 + $0x8] sm:$0xf]
  %v4229 = vld [vmem:[%s4225 + $0xc] sm:$0xf]
  %v4230 = vld [vmem:[%s4225 + $0x10] sm:$0xf]
  %v4231 = vld [vmem:[%s4225 + $0x14] sm:$0xf]
  %v4232 = vld [vmem:[%s4225 + $0x18] sm:$0xf]
  %v4233 = vld [vmem:[%s4225 + $0x1c] sm:$0xf]
  %v4234 = vld [vmem:[%s4225 + $0x20] sm:$0xf]
  %v4235 = vld [vmem:[%s4225 + $0x24] sm:$0xf]
  %v4236 = vld [vmem:[%s4225 + $0x28] sm:$0xf]
  %v4237 = vld [vmem:[%s4225 + $0x2c] sm:$0xf]
  %v4238 = vld [vmem:[%s4225 + $0x30] sm:$0xf]
  %v4239 = vld [vmem:[%s4225 + $0x34] sm:$0xf]
  %v4240 = vld [vmem:[%s4225 + $0x38] sm:$0xf]
  %v4241 = vld [vmem:[%s4225 + $0x3c] sm:$0xf]
  %v4258 = vunpack.c.l.b16 %v4226
  %v4259 = vunpack.c.l.b16 %v4227
  %v4260 = vunpack.c.l.b16 %v4228
  %v4261 = vunpack.c.l.b16 %v4229
  %v4262 = vunpack.c.l.b16 %v4230
  %v4263 = vunpack.c.l.b16 %v4231
  %v4264 = vunpack.c.l.b16 %v4232
  %v4265 = vunpack.c.l.b16 %v4233
  %v4266 = vunpack.c.l.b16 %v4234
  %v4267 = vunpack.c.l.b16 %v4235
  %v4268 = vunpack.c.l.b16 %v4236
  %v4269 = vunpack.c.l.b16 %v4237
  %v4270 = vunpack.c.l.b16 %v4238
  %v4271 = vunpack.c.l.b16 %v4239
  %v4272 = vunpack.c.l.b16 %v4240
  %v4273 = vunpack.c.l.b16 %v4241
  %v4274 = vpack.c.b16 %v4259, %v4258
  %v4275 = vpack.c.b16 %v4261, %v4260
  %v4276 = vpack.c.b16 %v4263, %v4262
  %v4277 = vpack.c.b16 %v4265, %v4264
  %v4278 = vpack.c.b16 %v4267, %v4266
  %v4279 = vpack.c.b16 %v4269, %v4268
  %v4280 = vpack.c.b16 %v4271, %v4270
  %v4281 = vpack.c.b16 %v4273, %v4272
  %4290 = vmatprep.subr.bf16.mxu0 0
  %4291 = vmatpush1.bf16.msra.mxu0 %v4274
  %4292 = vmatprep.subr.bf16.mxu0 0
  %4293 = vmatpush1.bf16.msra.mxu0 %v4275
  %4294 = vmatprep.subr.bf16.mxu0 0
  %4295 = vmatpush1.bf16.msra.mxu0 %v4276
  %4296 = vmatprep.subr.bf16.mxu0 0
  %4297 = vmatpush1.bf16.msra.mxu0 %v4277
  %4298 = vmatprep.subr.bf16.mxu0 0
  %4299 = vmatpush1.bf16.msra.mxu0 %v4278
  %4300 = vmatprep.subr.bf16.mxu0 0
  %4301 = vmatpush1.bf16.msra.mxu0 %v4279
  %4302 = vmatprep.subr.bf16.mxu0 0
  %4303 = vmatpush1.bf16.msra.mxu0 %v4280
  %4304 = vmatprep.subr.bf16.mxu0 0
  %4305 = vmatpush1.bf16.msra.mxu0 %v4281
  %4306 = vmatprep.subr.bf16.mxu0 0
  %4307 = vmatpush1.bf16.msra.mxu0 0
  %4308 = vmatprep.subr.bf16.mxu0 0
  %4309 = vmatpush1.bf16.msra.mxu0 0
  %4310 = vmatprep.subr.bf16.mxu0 0
  %4311 = vmatpush1.bf16.msra.mxu0 0
  %4312 = vmatprep.subr.bf16.mxu0 0
  %4313 = vmatpush1.bf16.msra.mxu0 0
  %4314 = vmatprep.subr.bf16.mxu0 0
  %4315 = vmatpush1.bf16.msra.mxu0 0
  %4316 = vmatprep.subr.bf16.mxu0 0
  %4317 = vmatpush1.bf16.msra.mxu0 0
  %4318 = vmatprep.subr.bf16.mxu0 0
  %4319 = vmatpush1.bf16.msra.mxu0 0
  %4320 = vmatprep.subr.bf16.mxu0 0
  %4321 = vmatpush1.bf16.msra.mxu0 0
  %4322 = vmatprep.mubr.bf16.mxu0 0
  %4323 = vmatmul.mubr.bf16.gmra.mrb[0].mxu0 %v4217
  %v4324 = vpop.f32.mrb[0].mxu0
  %v4325 = vadd.f32 0.0, %v4324
  %v4326 = vpop.f32.mrb[0].mxu0
  %v4327 = vpop.f32.mrb[0].mxu0
  %v4328 = vadd.f32 0.0, %v4327
  %v4329 = vpop.f32.mrb[0].mxu0
  %4330 = vmatprep.mubr.bf16.mxu0 0
  %4331 = vmatmul.mubr.bf16.gmra.mrb[0].mxu0 %v4218
  %v4332 = vpop.f32.mrb[0].mxu0
  %v4333 = vadd.f32 0.0, %v4332
  %v4334 = vpop.f32.mrb[0].mxu0
  %v4335 = vpop.f32.mrb[0].mxu0
  %v4336 = vadd.f32 0.0, %v4335
  %v4337 = vpop.f32.mrb[0].mxu0
  %4338 = vmatprep.mubr.bf16.mxu0 0
  %4339 = vmatmul.mubr.bf16.gmra.mrb[0].mxu0 %v4219
  %v4340 = vpop.f32.mrb[0].mxu0
  %v4341 = vadd.f32 0.0, %v4340
  %v4342 = vpop.f32.mrb[0].mxu0
  %v4343 = vpop.f32.mrb[0].mxu0
  %v4344 = vadd.f32 0.0, %v4343
  %v4345 = vpop.f32.mrb[0].mxu0
  %4346 = vmatprep.mubr.bf16.mxu0 0
  %4347 = vmatmul.mubr.bf16.gmra.mrb[0].mxu0 %v4220
  %v4348 = vpop.f32.mrb[0].mxu0
  %v4349 = vadd.f32 0.0, %v4348
  %v4350 = vpop.f32.mrb[0].mxu0
  %v4351 = vpop.f32.mrb[0].mxu0
  %v4352 = vadd.f32 0.0, %v4351
  %v4353 = vpop.f32.mrb[0].mxu0
  %4354 = vmatprep.mubr.bf16.mxu0 0
  %4355 = vmatmul.mubr.bf16.gmra.mrb[0].mxu0 %v4221
  %v4356 = vpop.f32.mrb[0].mxu0
  %v4357 = vadd.f32 0.0, %v4356
  %v4358 = vpop.f32.mrb[0].mxu0
  %v4359 = vpop.f32.mrb[0].mxu0
  %v4360 = vadd.f32 0.0, %v4359
  %v4361 = vpop.f32.mrb[0].mxu0
  %4362 = vmatprep.mubr.bf16.mxu0 0
  %4363 = vmatmul.mubr.bf16.gmra.mrb[0].mxu0 %v4222
  %v4364 = vpop.f32.mrb[0].mxu0
  %v4365 = vadd.f32 0.0, %v4364
  %v4366 = vpop.f32.mrb[0].mxu0
  %v4367 = vpop.f32.mrb[0].mxu0
  %v4368 = vadd.f32 0.0, %v4367
  %v4369 = vpop.f32.mrb[0].mxu0
  %4370 = vmatprep.mubr.bf16.mxu0 0
  %4371 = vmatmul.mubr.bf16.gmra.mrb[0].mxu0 %v4223
  %v4372 = vpop.f32.mrb[0].mxu0
  %v4373 = vadd.f32 0.0, %v4372
  %v4374 = vpop.f32.mrb[0].mxu0
  %v4375 = vpop.f32.mrb[0].mxu0
  %v4376 = vadd.f32 0.0, %v4375
  %v4377 = vpop.f32.mrb[0].mxu0
  %4378 = vmatprep.mubr.bf16.mxu0 0
  %4379 = vmatmul.mubr.bf16.gmra.mrb[0].mxu0 %v4224
  %v4380 = vpop.f32.mrb[0].mxu0
  %v4381 = vadd.f32 0.0, %v4380
  %v4382 = vpop.f32.mrb[0].mxu0
  %v4383 = vpop.f32.mrb[0].mxu0
  %v4384 = vadd.f32 0.0, %v4383
  %v4385 = vpop.f32.mrb[0].mxu0
  %4386 = vdwg.mxu0
  %v4387 = vadd.f32 %v4201, %v4325
  %v4388 = vadd.f32 %v4202, %v4328
  %v4389 = vadd.f32 %v4203, %v4333
  %v4390 = vadd.f32 %v4204, %v4336
  %v4391 = vadd.f32 %v4205, %v4341
  %v4392 = vadd.f32 %v4206, %v4344
  %v4393 = vadd.f32 %v4207, %v4349
  %v4394 = vadd.f32 %v4208, %v4352
  %v4395 = vadd.f32 %v4209, %v4357
  %v4396 = vadd.f32 %v4210, %v4360
  %v4397 = vadd.f32 %v4211, %v4365
  %v4398 = vadd.f32 %v4212, %v4368
  %v4399 = vadd.f32 %v4213, %v4373
  %v4400 = vadd.f32 %v4214, %v4376
  %v4401 = vadd.f32 %v4215, %v4381
  %v4402 = vadd.f32 %v4216, %v4384
  %v4403 = vpack.c.bf16 %v3276, %v3275
  %v4404 = vpack.c.bf16 %v3278, %v3277
  %v4405 = vpack.c.bf16 %v3280, %v3279
  %v4406 = vpack.c.bf16 %v3282, %v3281
  %v4407 = vpack.c.bf16 %v3284, %v3283
  %v4408 = vpack.c.bf16 %v3286, %v3285
  %v4409 = vpack.c.bf16 %v3288, %v3287
  %v4410 = vpack.c.bf16 %v3290, %v3289
  %s4411 = scalar_lea.vmem %s2, 256
  %v4412 = vld [vmem:[%s4411] sm:$0xf]
  %v4413 = vld [vmem:[%s4411 + $0x4] sm:$0xf]
  %v4414 = vld [vmem:[%s4411 + $0x8] sm:$0xf]
  %v4415 = vld [vmem:[%s4411 + $0xc] sm:$0xf]
  %v4416 = vld [vmem:[%s4411 + $0x10] sm:$0xf]
  %v4417 = vld [vmem:[%s4411 + $0x14] sm:$0xf]
  %v4418 = vld [vmem:[%s4411 + $0x18] sm:$0xf]
  %v4419 = vld [vmem:[%s4411 + $0x1c] sm:$0xf]
  %v4420 = vld [vmem:[%s4411 + $0x20] sm:$0xf]
  %v4421 = vld [vmem:[%s4411 + $0x24] sm:$0xf]
  %v4422 = vld [vmem:[%s4411 + $0x28] sm:$0xf]
  %v4423 = vld [vmem:[%s4411 + $0x2c] sm:$0xf]
  %v4424 = vld [vmem:[%s4411 + $0x30] sm:$0xf]
  %v4425 = vld [vmem:[%s4411 + $0x34] sm:$0xf]
  %v4426 = vld [vmem:[%s4411 + $0x38] sm:$0xf]
  %v4427 = vld [vmem:[%s4411 + $0x3c] sm:$0xf]
  %v4444 = vunpack.c.l.b16 %v4412
  %v4445 = vunpack.c.l.b16 %v4413
  %v4446 = vunpack.c.l.b16 %v4414
  %v4447 = vunpack.c.l.b16 %v4415
  %v4448 = vunpack.c.l.b16 %v4416
  %v4449 = vunpack.c.l.b16 %v4417
  %v4450 = vunpack.c.l.b16 %v4418
  %v4451 = vunpack.c.l.b16 %v4419
  %v4452 = vunpack.c.l.b16 %v4420
  %v4453 = vunpack.c.l.b16 %v4421
  %v4454 = vunpack.c.l.b16 %v4422
  %v4455 = vunpack.c.l.b16 %v4423
  %v4456 = vunpack.c.l.b16 %v4424
  %v4457 = vunpack.c.l.b16 %v4425
  %v4458 = vunpack.c.l.b16 %v4426
  %v4459 = vunpack.c.l.b16 %v4427
  %v4460 = vpack.c.b16 %v4445, %v4444
  %v4461 = vpack.c.b16 %v4447, %v4446
  %v4462 = vpack.c.b16 %v4449, %v4448
  %v4463 = vpack.c.b16 %v4451, %v4450
  %v4464 = vpack.c.b16 %v4453, %v4452
  %v4465 = vpack.c.b16 %v4455, %v4454
  %v4466 = vpack.c.b16 %v4457, %v4456
  %v4467 = vpack.c.b16 %v4459, %v4458
  %4476 = vmatprep.subr.bf16.mxu0 0
  %4477 = vmatpush1.bf16.msra.mxu0 %v4460
  %4478 = vmatprep.subr.bf16.mxu0 0
  %4479 = vmatpush1.bf16.msra.mxu0 %v4461
  %4480 = vmatprep.subr.bf16.mxu0 0
  %4481 = vmatpush1.bf16.msra.mxu0 %v4462
  %4482 = vmatprep.subr.bf16.mxu0 0
  %4483 = vmatpush1.bf16.msra.mxu0 %v4463
  %4484 = vmatprep.subr.bf16.mxu0 0
  %4485 = vmatpush1.bf16.msra.mxu0 %v4464
  %4486 = vmatprep.subr.bf16.mxu0 0
  %4487 = vmatpush1.bf16.msra.mxu0 %v4465
  %4488 = vmatprep.subr.bf16.mxu0 0
  %4489 = vmatpush1.bf16.msra.mxu0 %v4466
  %4490 = vmatprep.subr.bf16.mxu0 0
  %4491 = vmatpush1.bf16.msra.mxu0 %v4467
  %4492 = vmatprep.subr.bf16.mxu0 0
  %4493 = vmatpush1.bf16.msra.mxu0 0
  %4494 = vmatprep.subr.bf16.mxu0 0
  %4495 = vmatpush1.bf16.msra.mxu0 0
  %4496 = vmatprep.subr.bf16.mxu0 0
  %4497 = vmatpush1.bf16.msra.mxu0 0
  %4498 = vmatprep.subr.bf16.mxu0 0
  %4499 = vmatpush1.bf16.msra.mxu0 0
  %4500 = vmatprep.subr.bf16.mxu0 0
  %4501 = vmatpush1.bf16.msra.mxu0 0
  %4502 = vmatprep.subr.bf16.mxu0 0
  %4503 = vmatpush1.bf16.msra.mxu0 0
  %4504 = vmatprep.subr.bf16.mxu0 0
  %4505 = vmatpush1.bf16.msra.mxu0 0
  %4506 = vmatprep.subr.bf16.mxu0 0
  %4507 = vmatpush1.bf16.msra.mxu0 0
  %4508 = vmatprep.mubr.bf16.mxu0 0
  %4509 = vmatmul.mubr.bf16.gmra.mrb[0].mxu0 %v4403
  %v4510 = vpop.f32.mrb[0].mxu0
  %v4511 = vadd.f32 0.0, %v4510
  %v4512 = vpop.f32.mrb[0].mxu0
  %v4513 = vpop.f32.mrb[0].mxu0
  %v4514 = vadd.f32 0.0, %v4513
  %v4515 = vpop.f32.mrb[0].mxu0
  %4516 = vmatprep.mubr.bf16.mxu0 0
  %4517 = vmatmul.mubr.bf16.gmra.mrb[0].mxu0 %v4404
  %v4518 = vpop.f32.mrb[0].mxu0
  %v4519 = vadd.f32 0.0, %v4518
  %v4520 = vpop.f32.mrb[0].mxu0
  %v4521 = vpop.f32.mrb[0].mxu0
  %v4522 = vadd.f32 0.0, %v4521
  %v4523 = vpop.f32.mrb[0].mxu0
  %4524 = vmatprep.mubr.bf16.mxu0 0
  %4525 = vmatmul.mubr.bf16.gmra.mrb[0].mxu0 %v4405
  %v4526 = vpop.f32.mrb[0].mxu0
  %v4527 = vadd.f32 0.0, %v4526
  %v4528 = vpop.f32.mrb[0].mxu0
  %v4529 = vpop.f32.mrb[0].mxu0
  %v4530 = vadd.f32 0.0, %v4529
  %v4531 = vpop.f32.mrb[0].mxu0
  %4532 = vmatprep.mubr.bf16.mxu0 0
  %4533 = vmatmul.mubr.bf16.gmra.mrb[0].mxu0 %v4406
  %v4534 = vpop.f32.mrb[0].mxu0
  %v4535 = vadd.f32 0.0, %v4534
  %v4536 = vpop.f32.mrb[0].mxu0
  %v4537 = vpop.f32.mrb[0].mxu0
  %v4538 = vadd.f32 0.0, %v4537
  %v4539 = vpop.f32.mrb[0].mxu0
  %4540 = vmatprep.mubr.bf16.mxu0 0
  %4541 = vmatmul.mubr.bf16.gmra.mrb[0].mxu0 %v4407
  %v4542 = vpop.f32.mrb[0].mxu0
  %v4543 = vadd.f32 0.0, %v4542
  %v4544 = vpop.f32.mrb[0].mxu0
  %v4545 = vpop.f32.mrb[0].mxu0
  %v4546 = vadd.f32 0.0, %v4545
  %v4547 = vpop.f32.mrb[0].mxu0
  %4548 = vmatprep.mubr.bf16.mxu0 0
  %4549 = vmatmul.mubr.bf16.gmra.mrb[0].mxu0 %v4408
  %v4550 = vpop.f32.mrb[0].mxu0
  %v4551 = vadd.f32 0.0, %v4550
  %v4552 = vpop.f32.mrb[0].mxu0
  %v4553 = vpop.f32.mrb[0].mxu0
  %v4554 = vadd.f32 0.0, %v4553
  %v4555 = vpop.f32.mrb[0].mxu0
  %4556 = vmatprep.mubr.bf16.mxu0 0
  %4557 = vmatmul.mubr.bf16.gmra.mrb[0].mxu0 %v4409
  %v4558 = vpop.f32.mrb[0].mxu0
  %v4559 = vadd.f32 0.0, %v4558
  %v4560 = vpop.f32.mrb[0].mxu0
  %v4561 = vpop.f32.mrb[0].mxu0
  %v4562 = vadd.f32 0.0, %v4561
  %v4563 = vpop.f32.mrb[0].mxu0
  %4564 = vmatprep.mubr.bf16.mxu0 0
  %4565 = vmatmul.mubr.bf16.gmra.mrb[0].mxu0 %v4410
  %v4566 = vpop.f32.mrb[0].mxu0
  %v4567 = vadd.f32 0.0, %v4566
  %v4568 = vpop.f32.mrb[0].mxu0
  %v4569 = vpop.f32.mrb[0].mxu0
  %v4570 = vadd.f32 0.0, %v4569
  %v4571 = vpop.f32.mrb[0].mxu0
  %4572 = vdwg.mxu0
  %v4573 = vadd.f32 %v4387, %v4511
  %v4574 = vadd.f32 %v4388, %v4514
  %v4575 = vadd.f32 %v4389, %v4519
  %v4576 = vadd.f32 %v4390, %v4522
  %v4577 = vadd.f32 %v4391, %v4527
  %v4578 = vadd.f32 %v4392, %v4530
  %v4579 = vadd.f32 %v4393, %v4535
  %v4580 = vadd.f32 %v4394, %v4538
  %v4581 = vadd.f32 %v4395, %v4543
  %v4582 = vadd.f32 %v4396, %v4546
  %v4583 = vadd.f32 %v4397, %v4551
  %v4584 = vadd.f32 %v4398, %v4554
  %v4585 = vadd.f32 %v4399, %v4559
  %v4586 = vadd.f32 %v4400, %v4562
  %v4587 = vadd.f32 %v4401, %v4567
  %v4588 = vadd.f32 %v4402, %v4570
  %v4589 = vpack.c.bf16 %v3356, %v3355
  %v4590 = vpack.c.bf16 %v3358, %v3357
  %v4591 = vpack.c.bf16 %v3360, %v3359
  %v4592 = vpack.c.bf16 %v3362, %v3361
  %v4593 = vpack.c.bf16 %v3364, %v3363
  %v4594 = vpack.c.bf16 %v3366, %v3365
  %v4595 = vpack.c.bf16 %v3368, %v3367
  %v4596 = vpack.c.bf16 %v3370, %v3369
  %s4597 = scalar_lea.vmem %s2, 320
  %v4598 = vld [vmem:[%s4597] sm:$0xf]
  %v4599 = vld [vmem:[%s4597 + $0x4] sm:$0xf]
  %v4600 = vld [vmem:[%s4597 + $0x8] sm:$0xf]
  %v4601 = vld [vmem:[%s4597 + $0xc] sm:$0xf]
  %v4602 = vld [vmem:[%s4597 + $0x10] sm:$0xf]
  %v4603 = vld [vmem:[%s4597 + $0x14] sm:$0xf]
  %v4604 = vld [vmem:[%s4597 + $0x18] sm:$0xf]
  %v4605 = vld [vmem:[%s4597 + $0x1c] sm:$0xf]
  %v4606 = vld [vmem:[%s4597 + $0x20] sm:$0xf]
  %v4607 = vld [vmem:[%s4597 + $0x24] sm:$0xf]
  %v4608 = vld [vmem:[%s4597 + $0x28] sm:$0xf]
  %v4609 = vld [vmem:[%s4597 + $0x2c] sm:$0xf]
  %v4610 = vld [vmem:[%s4597 + $0x30] sm:$0xf]
  %v4611 = vld [vmem:[%s4597 + $0x34] sm:$0xf]
  %v4612 = vld [vmem:[%s4597 + $0x38] sm:$0xf]
  %v4613 = vld [vmem:[%s4597 + $0x3c] sm:$0xf]
  %v4630 = vunpack.c.l.b16 %v4598
  %v4631 = vunpack.c.l.b16 %v4599
  %v4632 = vunpack.c.l.b16 %v4600
  %v4633 = vunpack.c.l.b16 %v4601
  %v4634 = vunpack.c.l.b16 %v4602
  %v4635 = vunpack.c.l.b16 %v4603
  %v4636 = vunpack.c.l.b16 %v4604
  %v4637 = vunpack.c.l.b16 %v4605
  %v4638 = vunpack.c.l.b16 %v4606
  %v4639 = vunpack.c.l.b16 %v4607
  %v4640 = vunpack.c.l.b16 %v4608
  %v4641 = vunpack.c.l.b16 %v4609
  %v4642 = vunpack.c.l.b16 %v4610
  %v4643 = vunpack.c.l.b16 %v4611
  %v4644 = vunpack.c.l.b16 %v4612
  %v4645 = vunpack.c.l.b16 %v4613
  %v4646 = vpack.c.b16 %v4631, %v4630
  %v4647 = vpack.c.b16 %v4633, %v4632
  %v4648 = vpack.c.b16 %v4635, %v4634
  %v4649 = vpack.c.b16 %v4637, %v4636
  %v4650 = vpack.c.b16 %v4639, %v4638
  %v4651 = vpack.c.b16 %v4641, %v4640
  %v4652 = vpack.c.b16 %v4643, %v4642
  %v4653 = vpack.c.b16 %v4645, %v4644
  %4662 = vmatprep.subr.bf16.mxu0 0
  %4663 = vmatpush1.bf16.msra.mxu0 %v4646
  %4664 = vmatprep.subr.bf16.mxu0 0
  %4665 = vmatpush1.bf16.msra.mxu0 %v4647
  %4666 = vmatprep.subr.bf16.mxu0 0
  %4667 = vmatpush1.bf16.msra.mxu0 %v4648
  %4668 = vmatprep.subr.bf16.mxu0 0
  %4669 = vmatpush1.bf16.msra.mxu0 %v4649
  %4670 = vmatprep.subr.bf16.mxu0 0
  %4671 = vmatpush1.bf16.msra.mxu0 %v4650
  %4672 = vmatprep.subr.bf16.mxu0 0
  %4673 = vmatpush1.bf16.msra.mxu0 %v4651
  %4674 = vmatprep.subr.bf16.mxu0 0
  %4675 = vmatpush1.bf16.msra.mxu0 %v4652
  %4676 = vmatprep.subr.bf16.mxu0 0
  %4677 = vmatpush1.bf16.msra.mxu0 %v4653
  %4678 = vmatprep.subr.bf16.mxu0 0
  %4679 = vmatpush1.bf16.msra.mxu0 0
  %4680 = vmatprep.subr.bf16.mxu0 0
  %4681 = vmatpush1.bf16.msra.mxu0 0
  %4682 = vmatprep.subr.bf16.mxu0 0
  %4683 = vmatpush1.bf16.msra.mxu0 0
  %4684 = vmatprep.subr.bf16.mxu0 0
  %4685 = vmatpush1.bf16.msra.mxu0 0
  %4686 = vmatprep.subr.bf16.mxu0 0
  %4687 = vmatpush1.bf16.msra.mxu0 0
  %4688 = vmatprep.subr.bf16.mxu0 0
  %4689 = vmatpush1.bf16.msra.mxu0 0
  %4690 = vmatprep.subr.bf16.mxu0 0
  %4691 = vmatpush1.bf16.msra.mxu0 0
  %4692 = vmatprep.subr.bf16.mxu0 0
  %4693 = vmatpush1.bf16.msra.mxu0 0
  %4694 = vmatprep.mubr.bf16.mxu0 0
  %4695 = vmatmul.mubr.bf16.gmra.mrb[0].mxu0 %v4589
  %v4696 = vpop.f32.mrb[0].mxu0
  %v4697 = vadd.f32 0.0, %v4696
  %v4698 = vpop.f32.mrb[0].mxu0
  %v4699 = vpop.f32.mrb[0].mxu0
  %v4700 = vadd.f32 0.0, %v4699
  %v4701 = vpop.f32.mrb[0].mxu0
  %4702 = vmatprep.mubr.bf16.mxu0 0
  %4703 = vmatmul.mubr.bf16.gmra.mrb[0].mxu0 %v4590
  %v4704 = vpop.f32.mrb[0].mxu0
  %v4705 = vadd.f32 0.0, %v4704
  %v4706 = vpop.f32.mrb[0].mxu0
  %v4707 = vpop.f32.mrb[0].mxu0
  %v4708 = vadd.f32 0.0, %v4707
  %v4709 = vpop.f32.mrb[0].mxu0
  %4710 = vmatprep.mubr.bf16.mxu0 0
  %4711 = vmatmul.mubr.bf16.gmra.mrb[0].mxu0 %v4591
  %v4712 = vpop.f32.mrb[0].mxu0
  %v4713 = vadd.f32 0.0, %v4712
  %v4714 = vpop.f32.mrb[0].mxu0
  %v4715 = vpop.f32.mrb[0].mxu0
  %v4716 = vadd.f32 0.0, %v4715
  %v4717 = vpop.f32.mrb[0].mxu0
  %4718 = vmatprep.mubr.bf16.mxu0 0
  %4719 = vmatmul.mubr.bf16.gmra.mrb[0].mxu0 %v4592
  %v4720 = vpop.f32.mrb[0].mxu0
  %v4721 = vadd.f32 0.0, %v4720
  %v4722 = vpop.f32.mrb[0].mxu0
  %v4723 = vpop.f32.mrb[0].mxu0
  %v4724 = vadd.f32 0.0, %v4723
  %v4725 = vpop.f32.mrb[0].mxu0
  %4726 = vmatprep.mubr.bf16.mxu0 0
  %4727 = vmatmul.mubr.bf16.gmra.mrb[0].mxu0 %v4593
  %v4728 = vpop.f32.mrb[0].mxu0
  %v4729 = vadd.f32 0.0, %v4728
  %v4730 = vpop.f32.mrb[0].mxu0
  %v4731 = vpop.f32.mrb[0].mxu0
  %v4732 = vadd.f32 0.0, %v4731
  %v4733 = vpop.f32.mrb[0].mxu0
  %4734 = vmatprep.mubr.bf16.mxu0 0
  %4735 = vmatmul.mubr.bf16.gmra.mrb[0].mxu0 %v4594
  %v4736 = vpop.f32.mrb[0].mxu0
  %v4737 = vadd.f32 0.0, %v4736
  %v4738 = vpop.f32.mrb[0].mxu0
  %v4739 = vpop.f32.mrb[0].mxu0
  %v4740 = vadd.f32 0.0, %v4739
  %v4741 = vpop.f32.mrb[0].mxu0
  %4742 = vmatprep.mubr.bf16.mxu0 0
  %4743 = vmatmul.mubr.bf16.gmra.mrb[0].mxu0 %v4595
  %v4744 = vpop.f32.mrb[0].mxu0
  %v4745 = vadd.f32 0.0, %v4744
  %v4746 = vpop.f32.mrb[0].mxu0
  %v4747 = vpop.f32.mrb[0].mxu0
  %v4748 = vadd.f32 0.0, %v4747
  %v4749 = vpop.f32.mrb[0].mxu0
  %4750 = vmatprep.mubr.bf16.mxu0 0
  %4751 = vmatmul.mubr.bf16.gmra.mrb[0].mxu0 %v4596
  %v4752 = vpop.f32.mrb[0].mxu0
  %v4753 = vadd.f32 0.0, %v4752
  %v4754 = vpop.f32.mrb[0].mxu0
  %v4755 = vpop.f32.mrb[0].mxu0
  %v4756 = vadd.f32 0.0, %v4755
  %v4757 = vpop.f32.mrb[0].mxu0
  %4758 = vdwg.mxu0
  %v4759 = vadd.f32 %v4573, %v4697
  %v4760 = vadd.f32 %v4574, %v4700
  %v4761 = vadd.f32 %v4575, %v4705
  %v4762 = vadd.f32 %v4576, %v4708
  %v4763 = vadd.f32 %v4577, %v4713
  %v4764 = vadd.f32 %v4578, %v4716
  %v4765 = vadd.f32 %v4579, %v4721
  %v4766 = vadd.f32 %v4580, %v4724
  %v4767 = vadd.f32 %v4581, %v4729
  %v4768 = vadd.f32 %v4582, %v4732
  %v4769 = vadd.f32 %v4583, %v4737
  %v4770 = vadd.f32 %v4584, %v4740
  %v4771 = vadd.f32 %v4585, %v4745
  %v4772 = vadd.f32 %v4586, %v4748
  %v4773 = vadd.f32 %v4587, %v4753
  %v4774 = vadd.f32 %v4588, %v4756
  %v4775 = vpack.c.bf16 %v3436, %v3435
  %v4776 = vpack.c.bf16 %v3438, %v3437
  %v4777 = vpack.c.bf16 %v3440, %v3439
  %v4778 = vpack.c.bf16 %v3442, %v3441
  %v4779 = vpack.c.bf16 %v3444, %v3443
  %v4780 = vpack.c.bf16 %v3446, %v3445
  %v4781 = vpack.c.bf16 %v3448, %v3447
  %v4782 = vpack.c.bf16 %v3450, %v3449
  %s4783 = scalar_lea.vmem %s2, 384
  %v4784 = vld [vmem:[%s4783] sm:$0xf]
  %v4785 = vld [vmem:[%s4783 + $0x4] sm:$0xf]
  %v4786 = vld [vmem:[%s4783 + $0x8] sm:$0xf]
  %v4787 = vld [vmem:[%s4783 + $0xc] sm:$0xf]
  %v4788 = vld [vmem:[%s4783 + $0x10] sm:$0xf]
  %v4789 = vld [vmem:[%s4783 + $0x14] sm:$0xf]
  %v4790 = vld [vmem:[%s4783 + $0x18] sm:$0xf]
  %v4791 = vld [vmem:[%s4783 + $0x1c] sm:$0xf]
  %v4792 = vld [vmem:[%s4783 + $0x20] sm:$0xf]
  %v4793 = vld [vmem:[%s4783 + $0x24] sm:$0xf]
  %v4794 = vld [vmem:[%s4783 + $0x28] sm:$0xf]
  %v4795 = vld [vmem:[%s4783 + $0x2c] sm:$0xf]
  %v4796 = vld [vmem:[%s4783 + $0x30] sm:$0xf]
  %v4797 = vld [vmem:[%s4783 + $0x34] sm:$0xf]
  %v4798 = vld [vmem:[%s4783 + $0x38] sm:$0xf]
  %v4799 = vld [vmem:[%s4783 + $0x3c] sm:$0xf]
  %v4816 = vunpack.c.l.b16 %v4784
  %v4817 = vunpack.c.l.b16 %v4785
  %v4818 = vunpack.c.l.b16 %v4786
  %v4819 = vunpack.c.l.b16 %v4787
  %v4820 = vunpack.c.l.b16 %v4788
  %v4821 = vunpack.c.l.b16 %v4789
  %v4822 = vunpack.c.l.b16 %v4790
  %v4823 = vunpack.c.l.b16 %v4791
  %v4824 = vunpack.c.l.b16 %v4792
  %v4825 = vunpack.c.l.b16 %v4793
  %v4826 = vunpack.c.l.b16 %v4794
  %v4827 = vunpack.c.l.b16 %v4795
  %v4828 = vunpack.c.l.b16 %v4796
  %v4829 = vunpack.c.l.b16 %v4797
  %v4830 = vunpack.c.l.b16 %v4798
  %v4831 = vunpack.c.l.b16 %v4799
  %v4832 = vpack.c.b16 %v4817, %v4816
  %v4833 = vpack.c.b16 %v4819, %v4818
  %v4834 = vpack.c.b16 %v4821, %v4820
  %v4835 = vpack.c.b16 %v4823, %v4822
  %v4836 = vpack.c.b16 %v4825, %v4824
  %v4837 = vpack.c.b16 %v4827, %v4826
  %v4838 = vpack.c.b16 %v4829, %v4828
  %v4839 = vpack.c.b16 %v4831, %v4830
  %4848 = vmatprep.subr.bf16.mxu0 0
  %4849 = vmatpush1.bf16.msra.mxu0 %v4832
  %4850 = vmatprep.subr.bf16.mxu0 0
  %4851 = vmatpush1.bf16.msra.mxu0 %v4833
  %4852 = vmatprep.subr.bf16.mxu0 0
  %4853 = vmatpush1.bf16.msra.mxu0 %v4834
  %4854 = vmatprep.subr.bf16.mxu0 0
  %4855 = vmatpush1.bf16.msra.mxu0 %v4835
  %4856 = vmatprep.subr.bf16.mxu0 0
  %4857 = vmatpush1.bf16.msra.mxu0 %v4836
  %4858 = vmatprep.subr.bf16.mxu0 0
  %4859 = vmatpush1.bf16.msra.mxu0 %v4837
  %4860 = vmatprep.subr.bf16.mxu0 0
  %4861 = vmatpush1.bf16.msra.mxu0 %v4838
  %4862 = vmatprep.subr.bf16.mxu0 0
  %4863 = vmatpush1.bf16.msra.mxu0 %v4839
  %4864 = vmatprep.subr.bf16.mxu0 0
  %4865 = vmatpush1.bf16.msra.mxu0 0
  %4866 = vmatprep.subr.bf16.mxu0 0
  %4867 = vmatpush1.bf16.msra.mxu0 0
  %4868 = vmatprep.subr.bf16.mxu0 0
  %4869 = vmatpush1.bf16.msra.mxu0 0
  %4870 = vmatprep.subr.bf16.mxu0 0
  %4871 = vmatpush1.bf16.msra.mxu0 0
  %4872 = vmatprep.subr.bf16.mxu0 0
  %4873 = vmatpush1.bf16.msra.mxu0 0
  %4874 = vmatprep.subr.bf16.mxu0 0
  %4875 = vmatpush1.bf16.msra.mxu0 0
  %4876 = vmatprep.subr.bf16.mxu0 0
  %4877 = vmatpush1.bf16.msra.mxu0 0
  %4878 = vmatprep.subr.bf16.mxu0 0
  %4879 = vmatpush1.bf16.msra.mxu0 0
  %4880 = vmatprep.mubr.bf16.mxu0 0
  %4881 = vmatmul.mubr.bf16.gmra.mrb[0].mxu0 %v4775
  %v4882 = vpop.f32.mrb[0].mxu0
  %v4883 = vadd.f32 0.0, %v4882
  %v4884 = vpop.f32.mrb[0].mxu0
  %v4885 = vpop.f32.mrb[0].mxu0
  %v4886 = vadd.f32 0.0, %v4885
  %v4887 = vpop.f32.mrb[0].mxu0
  %4888 = vmatprep.mubr.bf16.mxu0 0
  %4889 = vmatmul.mubr.bf16.gmra.mrb[0].mxu0 %v4776
  %v4890 = vpop.f32.mrb[0].mxu0
  %v4891 = vadd.f32 0.0, %v4890
  %v4892 = vpop.f32.mrb[0].mxu0
  %v4893 = vpop.f32.mrb[0].mxu0
  %v4894 = vadd.f32 0.0, %v4893
  %v4895 = vpop.f32.mrb[0].mxu0
  %4896 = vmatprep.mubr.bf16.mxu0 0
  %4897 = vmatmul.mubr.bf16.gmra.mrb[0].mxu0 %v4777
  %v4898 = vpop.f32.mrb[0].mxu0
  %v4899 = vadd.f32 0.0, %v4898
  %v4900 = vpop.f32.mrb[0].mxu0
  %v4901 = vpop.f32.mrb[0].mxu0
  %v4902 = vadd.f32 0.0, %v4901
  %v4903 = vpop.f32.mrb[0].mxu0
  %4904 = vmatprep.mubr.bf16.mxu0 0
  %4905 = vmatmul.mubr.bf16.gmra.mrb[0].mxu0 %v4778
  %v4906 = vpop.f32.mrb[0].mxu0
  %v4907 = vadd.f32 0.0, %v4906
  %v4908 = vpop.f32.mrb[0].mxu0
  %v4909 = vpop.f32.mrb[0].mxu0
  %v4910 = vadd.f32 0.0, %v4909
  %v4911 = vpop.f32.mrb[0].mxu0
  %4912 = vmatprep.mubr.bf16.mxu0 0
  %4913 = vmatmul.mubr.bf16.gmra.mrb[0].mxu0 %v4779
  %v4914 = vpop.f32.mrb[0].mxu0
  %v4915 = vadd.f32 0.0, %v4914
  %v4916 = vpop.f32.mrb[0].mxu0
  %v4917 = vpop.f32.mrb[0].mxu0
  %v4918 = vadd.f32 0.0, %v4917
  %v4919 = vpop.f32.mrb[0].mxu0
  %4920 = vmatprep.mubr.bf16.mxu0 0
  %4921 = vmatmul.mubr.bf16.gmra.mrb[0].mxu0 %v4780
  %v4922 = vpop.f32.mrb[0].mxu0
  %v4923 = vadd.f32 0.0, %v4922
  %v4924 = vpop.f32.mrb[0].mxu0
  %v4925 = vpop.f32.mrb[0].mxu0
  %v4926 = vadd.f32 0.0, %v4925
  %v4927 = vpop.f32.mrb[0].mxu0
  %4928 = vmatprep.mubr.bf16.mxu0 0
  %4929 = vmatmul.mubr.bf16.gmra.mrb[0].mxu0 %v4781
  %v4930 = vpop.f32.mrb[0].mxu0
  %v4931 = vadd.f32 0.0, %v4930
  %v4932 = vpop.f32.mrb[0].mxu0
  %v4933 = vpop.f32.mrb[0].mxu0
  %v4934 = vadd.f32 0.0, %v4933
  %v4935 = vpop.f32.mrb[0].mxu0
  %4936 = vmatprep.mubr.bf16.mxu0 0
  %4937 = vmatmul.mubr.bf16.gmra.mrb[0].mxu0 %v4782
  %v4938 = vpop.f32.mrb[0].mxu0
  %v4939 = vadd.f32 0.0, %v4938
  %v4940 = vpop.f32.mrb[0].mxu0
  %v4941 = vpop.f32.mrb[0].mxu0
  %v4942 = vadd.f32 0.0, %v4941
  %v4943 = vpop.f32.mrb[0].mxu0
  %4944 = vdwg.mxu0
  %v4945 = vadd.f32 %v4759, %v4883
  %v4946 = vadd.f32 %v4760, %v4886
  %v4947 = vadd.f32 %v4761, %v4891
  %v4948 = vadd.f32 %v4762, %v4894
  %v4949 = vadd.f32 %v4763, %v4899
  %v4950 = vadd.f32 %v4764, %v4902
  %v4951 = vadd.f32 %v4765, %v4907
  %v4952 = vadd.f32 %v4766, %v4910
  %v4953 = vadd.f32 %v4767, %v4915
  %v4954 = vadd.f32 %v4768, %v4918
  %v4955 = vadd.f32 %v4769, %v4923
  %v4956 = vadd.f32 %v4770, %v4926
  %v4957 = vadd.f32 %v4771, %v4931
  %v4958 = vadd.f32 %v4772, %v4934
  %v4959 = vadd.f32 %v4773, %v4939
  %v4960 = vadd.f32 %v4774, %v4942
  %v4961 = vpack.c.bf16 %v3516, %v3515
  %v4962 = vpack.c.bf16 %v3518, %v3517
  %v4963 = vpack.c.bf16 %v3520, %v3519
  %v4964 = vpack.c.bf16 %v3522, %v3521
  %v4965 = vpack.c.bf16 %v3524, %v3523
  %v4966 = vpack.c.bf16 %v3526, %v3525
  %v4967 = vpack.c.bf16 %v3528, %v3527
  %v4968 = vpack.c.bf16 %v3530, %v3529
  %s4969 = scalar_lea.vmem %s2, 448
  %v4970 = vld [vmem:[%s4969] sm:$0xf]
  %v4971 = vld [vmem:[%s4969 + $0x4] sm:$0xf]
  %v4972 = vld [vmem:[%s4969 + $0x8] sm:$0xf]
  %v4973 = vld [vmem:[%s4969 + $0xc] sm:$0xf]
  %v4974 = vld [vmem:[%s4969 + $0x10] sm:$0xf]
  %v4975 = vld [vmem:[%s4969 + $0x14] sm:$0xf]
  %v4976 = vld [vmem:[%s4969 + $0x18] sm:$0xf]
  %v4977 = vld [vmem:[%s4969 + $0x1c] sm:$0xf]
  %v4978 = vld [vmem:[%s4969 + $0x20] sm:$0xf]
  %v4979 = vld [vmem:[%s4969 + $0x24] sm:$0xf]
  %v4980 = vld [vmem:[%s4969 + $0x28] sm:$0xf]
  %v4981 = vld [vmem:[%s4969 + $0x2c] sm:$0xf]
  %v4982 = vld [vmem:[%s4969 + $0x30] sm:$0xf]
  %v4983 = vld [vmem:[%s4969 + $0x34] sm:$0xf]
  %v4984 = vld [vmem:[%s4969 + $0x38] sm:$0xf]
  %v4985 = vld [vmem:[%s4969 + $0x3c] sm:$0xf]
  %v5002 = vunpack.c.l.b16 %v4970
  %v5003 = vunpack.c.l.b16 %v4971
  %v5004 = vunpack.c.l.b16 %v4972
  %v5005 = vunpack.c.l.b16 %v4973
  %v5006 = vunpack.c.l.b16 %v4974
  %v5007 = vunpack.c.l.b16 %v4975
  %v5008 = vunpack.c.l.b16 %v4976
  %v5009 = vunpack.c.l.b16 %v4977
  %v5010 = vunpack.c.l.b16 %v4978
  %v5011 = vunpack.c.l.b16 %v4979
  %v5012 = vunpack.c.l.b16 %v4980
  %v5013 = vunpack.c.l.b16 %v4981
  %v5014 = vunpack.c.l.b16 %v4982
  %v5015 = vunpack.c.l.b16 %v4983
  %v5016 = vunpack.c.l.b16 %v4984
  %v5017 = vunpack.c.l.b16 %v4985
  %v5018 = vpack.c.b16 %v5003, %v5002
  %v5019 = vpack.c.b16 %v5005, %v5004
  %v5020 = vpack.c.b16 %v5007, %v5006
  %v5021 = vpack.c.b16 %v5009, %v5008
  %v5022 = vpack.c.b16 %v5011, %v5010
  %v5023 = vpack.c.b16 %v5013, %v5012
  %v5024 = vpack.c.b16 %v5015, %v5014
  %v5025 = vpack.c.b16 %v5017, %v5016
  %5034 = vmatprep.subr.bf16.mxu0 0
  %5035 = vmatpush1.bf16.msra.mxu0 %v5018
  %5036 = vmatprep.subr.bf16.mxu0 0
  %5037 = vmatpush1.bf16.msra.mxu0 %v5019
  %5038 = vmatprep.subr.bf16.mxu0 0
  %5039 = vmatpush1.bf16.msra.mxu0 %v5020
  %5040 = vmatprep.subr.bf16.mxu0 0
  %5041 = vmatpush1.bf16.msra.mxu0 %v5021
  %5042 = vmatprep.subr.bf16.mxu0 0
  %5043 = vmatpush1.bf16.msra.mxu0 %v5022
  %5044 = vmatprep.subr.bf16.mxu0 0
  %5045 = vmatpush1.bf16.msra.mxu0 %v5023
  %5046 = vmatprep.subr.bf16.mxu0 0
  %5047 = vmatpush1.bf16.msra.mxu0 %v5024
  %5048 = vmatprep.subr.bf16.mxu0 0
  %5049 = vmatpush1.bf16.msra.mxu0 %v5025
  %5050 = vmatprep.subr.bf16.mxu0 0
  %5051 = vmatpush1.bf16.msra.mxu0 0
  %5052 = vmatprep.subr.bf16.mxu0 0
  %5053 = vmatpush1.bf16.msra.mxu0 0
  %5054 = vmatprep.subr.bf16.mxu0 0
  %5055 = vmatpush1.bf16.msra.mxu0 0
  %5056 = vmatprep.subr.bf16.mxu0 0
  %5057 = vmatpush1.bf16.msra.mxu0 0
  %5058 = vmatprep.subr.bf16.mxu0 0
  %5059 = vmatpush1.bf16.msra.mxu0 0
  %5060 = vmatprep.subr.bf16.mxu0 0
  %5061 = vmatpush1.bf16.msra.mxu0 0
  %5062 = vmatprep.subr.bf16.mxu0 0
  %5063 = vmatpush1.bf16.msra.mxu0 0
  %5064 = vmatprep.subr.bf16.mxu0 0
  %5065 = vmatpush1.bf16.msra.mxu0 0
  %5066 = vmatprep.mubr.bf16.mxu0 0
  %5067 = vmatmul.mubr.bf16.gmra.mrb[0].mxu0 %v4961
  %v5068 = vpop.f32.mrb[0].mxu0
  %v5069 = vadd.f32 0.0, %v5068
  %v5070 = vpop.f32.mrb[0].mxu0
  %v5071 = vpop.f32.mrb[0].mxu0
  %v5072 = vadd.f32 0.0, %v5071
  %v5073 = vpop.f32.mrb[0].mxu0
  %5074 = vmatprep.mubr.bf16.mxu0 0
  %5075 = vmatmul.mubr.bf16.gmra.mrb[0].mxu0 %v4962
  %v5076 = vpop.f32.mrb[0].mxu0
  %v5077 = vadd.f32 0.0, %v5076
  %v5078 = vpop.f32.mrb[0].mxu0
  %v5079 = vpop.f32.mrb[0].mxu0
  %v5080 = vadd.f32 0.0, %v5079
  %v5081 = vpop.f32.mrb[0].mxu0
  %5082 = vmatprep.mubr.bf16.mxu0 0
  %5083 = vmatmul.mubr.bf16.gmra.mrb[0].mxu0 %v4963
  %v5084 = vpop.f32.mrb[0].mxu0
  %v5085 = vadd.f32 0.0, %v5084
  %v5086 = vpop.f32.mrb[0].mxu0
  %v5087 = vpop.f32.mrb[0].mxu0
  %v5088 = vadd.f32 0.0, %v5087
  %v5089 = vpop.f32.mrb[0].mxu0
  %5090 = vmatprep.mubr.bf16.mxu0 0
  %5091 = vmatmul.mubr.bf16.gmra.mrb[0].mxu0 %v4964
  %v5092 = vpop.f32.mrb[0].mxu0
  %v5093 = vadd.f32 0.0, %v5092
  %v5094 = vpop.f32.mrb[0].mxu0
  %v5095 = vpop.f32.mrb[0].mxu0
  %v5096 = vadd.f32 0.0, %v5095
  %v5097 = vpop.f32.mrb[0].mxu0
  %5098 = vmatprep.mubr.bf16.mxu0 0
  %5099 = vmatmul.mubr.bf16.gmra.mrb[0].mxu0 %v4965
  %v5100 = vpop.f32.mrb[0].mxu0
  %v5101 = vadd.f32 0.0, %v5100
  %v5102 = vpop.f32.mrb[0].mxu0
  %v5103 = vpop.f32.mrb[0].mxu0
  %v5104 = vadd.f32 0.0, %v5103
  %v5105 = vpop.f32.mrb[0].mxu0
  %5106 = vmatprep.mubr.bf16.mxu0 0
  %5107 = vmatmul.mubr.bf16.gmra.mrb[0].mxu0 %v4966
  %v5108 = vpop.f32.mrb[0].mxu0
  %v5109 = vadd.f32 0.0, %v5108
  %v5110 = vpop.f32.mrb[0].mxu0
  %v5111 = vpop.f32.mrb[0].mxu0
  %v5112 = vadd.f32 0.0, %v5111
  %v5113 = vpop.f32.mrb[0].mxu0
  %5114 = vmatprep.mubr.bf16.mxu0 0
  %5115 = vmatmul.mubr.bf16.gmra.mrb[0].mxu0 %v4967
  %v5116 = vpop.f32.mrb[0].mxu0
  %v5117 = vadd.f32 0.0, %v5116
  %v5118 = vpop.f32.mrb[0].mxu0
  %v5119 = vpop.f32.mrb[0].mxu0
  %v5120 = vadd.f32 0.0, %v5119
  %v5121 = vpop.f32.mrb[0].mxu0
  %5122 = vmatprep.mubr.bf16.mxu0 0
  %5123 = vmatmul.mubr.bf16.gmra.mrb[0].mxu0 %v4968
  %v5124 = vpop.f32.mrb[0].mxu0
  %v5125 = vadd.f32 0.0, %v5124
  %v5126 = vpop.f32.mrb[0].mxu0
  %v5127 = vpop.f32.mrb[0].mxu0
  %v5128 = vadd.f32 0.0, %v5127
  %v5129 = vpop.f32.mrb[0].mxu0
  %5130 = vdwg.mxu0
  %v5131 = vadd.f32 %v4945, %v5069
  %v5132 = vadd.f32 %v4946, %v5072
  %v5133 = vadd.f32 %v4947, %v5077
  %v5134 = vadd.f32 %v4948, %v5080
  %v5135 = vadd.f32 %v4949, %v5085
  %v5136 = vadd.f32 %v4950, %v5088
  %v5137 = vadd.f32 %v4951, %v5093
  %v5138 = vadd.f32 %v4952, %v5096
  %v5139 = vadd.f32 %v4953, %v5101
  %v5140 = vadd.f32 %v4954, %v5104
  %v5141 = vadd.f32 %v4955, %v5109
  %v5142 = vadd.f32 %v4956, %v5112
  %v5143 = vadd.f32 %v4957, %v5117
  %v5144 = vadd.f32 %v4958, %v5120
  %v5145 = vadd.f32 %v4959, %v5125
  %v5146 = vadd.f32 %v4960, %v5128
  %v5147 = vld [vmem:[#allocation2] sm:$0xff]
  %v5148 = vld [vmem:[#allocation2 + $0x8] sm:$0xff]
  %v5149 = vld [vmem:[#allocation2 + $0x10] sm:$0xff]
  %v5150 = vld [vmem:[#allocation2 + $0x18] sm:$0xff]
  %v5151 = vld [vmem:[#allocation2 + $0x20] sm:$0xff]
  %v5152 = vld [vmem:[#allocation2 + $0x28] sm:$0xff]
  %v5153 = vld [vmem:[#allocation2 + $0x30] sm:$0xff]
  %v5154 = vld [vmem:[#allocation2 + $0x38] sm:$0xff]
  %v5155 = vld [vmem:[#allocation2 + $0x40] sm:$0xff]
  %v5156 = vld [vmem:[#allocation2 + $0x48] sm:$0xff]
  %v5157 = vld [vmem:[#allocation2 + $0x50] sm:$0xff]
  %v5158 = vld [vmem:[#allocation2 + $0x58] sm:$0xff]
  %v5159 = vld [vmem:[#allocation2 + $0x60] sm:$0xff]
  %v5160 = vld [vmem:[#allocation2 + $0x68] sm:$0xff]
  %v5161 = vld [vmem:[#allocation2 + $0x70] sm:$0xff]
  %v5162 = vld [vmem:[#allocation2 + $0x78] sm:$0xff]
  %v5163 = vadd.f32 %v5147, %v5131
  %v5164 = vadd.f32 %v5148, %v5132
  %v5165 = vadd.f32 %v5149, %v5133
  %v5166 = vadd.f32 %v5150, %v5134
  %v5167 = vadd.f32 %v5151, %v5135
  %v5168 = vadd.f32 %v5152, %v5136
  %v5169 = vadd.f32 %v5153, %v5137
  %v5170 = vadd.f32 %v5154, %v5138
  %v5171 = vadd.f32 %v5155, %v5139
  %v5172 = vadd.f32 %v5156, %v5140
  %v5173 = vadd.f32 %v5157, %v5141
  %v5174 = vadd.f32 %v5158, %v5142
  %v5175 = vadd.f32 %v5159, %v5143
  %v5176 = vadd.f32 %v5160, %v5144
  %v5177 = vadd.f32 %v5161, %v5145
  %v5178 = vadd.f32 %v5162, %v5146
  %5179 = vst [vmem:[#allocation2] sm:$0xff] %v5163
  %5180 = vst [vmem:[#allocation2 + $0x8] sm:$0xff] %v5164
  %5181 = vst [vmem:[#allocation2 + $0x10] sm:$0xff] %v5165
  %5182 = vst [vmem:[#allocation2 + $0x18] sm:$0xff] %v5166
  %5183 = vst [vmem:[#allocation2 + $0x20] sm:$0xff] %v5167
  %5184 = vst [vmem:[#allocation2 + $0x28] sm:$0xff] %v5168
  %5185 = vst [vmem:[#allocation2 + $0x30] sm:$0xff] %v5169
  %5186 = vst [vmem:[#allocation2 + $0x38] sm:$0xff] %v5170
  %5187 = vst [vmem:[#allocation2 + $0x40] sm:$0xff] %v5171
  %5188 = vst [vmem:[#allocation2 + $0x48] sm:$0xff] %v5172
  %5189 = vst [vmem:[#allocation2 + $0x50] sm:$0xff] %v5173
  %5190 = vst [vmem:[#allocation2 + $0x58] sm:$0xff] %v5174
  %5191 = vst [vmem:[#allocation2 + $0x60] sm:$0xff] %v5175
  %5192 = vst [vmem:[#allocation2 + $0x68] sm:$0xff] %v5176
  %5193 = vst [vmem:[#allocation2 + $0x70] sm:$0xff] %v5177
  %5194 = vst [vmem:[#allocation2 + $0x78] sm:$0xff] %v5178
  // Predicated region
  $region18: #{gcn_with_kan_forward.6} parent=0 // pred_check
    %p5195 = pneg %p15
  $region19: #{gcn_with_kan_forward.6} parent=0 // pred_check_branch
    %5197 = sbr.rel (%p5195) target = $region21
  $region20: #{gcn_with_kan_forward.6} parent=0 // pred_region
    %v5198 = vld [vmem:[#allocation2] sm:$0xff]
    %v5199 = vld [vmem:[#allocation2 + $0x8] sm:$0xff]
    %v5200 = vld [vmem:[#allocation2 + $0x10] sm:$0xff]
    %v5201 = vld [vmem:[#allocation2 + $0x18] sm:$0xff]
    %v5202 = vld [vmem:[#allocation2 + $0x20] sm:$0xff]
    %v5203 = vld [vmem:[#allocation2 + $0x28] sm:$0xff]
    %v5204 = vld [vmem:[#allocation2 + $0x30] sm:$0xff]
    %v5205 = vld [vmem:[#allocation2 + $0x38] sm:$0xff]
    %v5206 = vld [vmem:[#allocation2 + $0x40] sm:$0xff]
    %v5207 = vld [vmem:[#allocation2 + $0x48] sm:$0xff]
    %v5208 = vld [vmem:[#allocation2 + $0x50] sm:$0xff]
    %v5209 = vld [vmem:[#allocation2 + $0x58] sm:$0xff]
    %v5210 = vld [vmem:[#allocation2 + $0x60] sm:$0xff]
    %v5211 = vld [vmem:[#allocation2 + $0x68] sm:$0xff]
    %v5212 = vld [vmem:[#allocation2 + $0x70] sm:$0xff]
    %v5213 = vld [vmem:[#allocation2 + $0x78] sm:$0xff]
    %v5214 = vpack.c.bf16 %v5199, %v5198
    %v5215 = vpack.c.bf16 %v5201, %v5200
    %v5216 = vpack.c.bf16 %v5203, %v5202
    %v5217 = vpack.c.bf16 %v5205, %v5204
    %v5218 = vpack.c.bf16 %v5207, %v5206
    %v5219 = vpack.c.bf16 %v5209, %v5208
    %v5220 = vpack.c.bf16 %v5211, %v5210
    %v5221 = vpack.c.bf16 %v5213, %v5212
    %v5230 = vunpack.c.l.b16 %v5214
    %v5231 = vunpack.c.h.b16 %v5214
    %v5232 = vunpack.c.l.b16 %v5215
    %v5233 = vunpack.c.h.b16 %v5215
    %v5234 = vunpack.c.l.b16 %v5216
    %v5235 = vunpack.c.h.b16 %v5216
    %v5236 = vunpack.c.l.b16 %v5217
    %v5237 = vunpack.c.h.b16 %v5217
    %v5238 = vunpack.c.l.b16 %v5218
    %v5239 = vunpack.c.h.b16 %v5218
    %v5240 = vunpack.c.l.b16 %v5219
    %v5241 = vunpack.c.h.b16 %v5219
    %v5242 = vunpack.c.l.b16 %v5220
    %v5243 = vunpack.c.h.b16 %v5220
    %v5244 = vunpack.c.l.b16 %v5221
    %v5245 = vunpack.c.h.b16 %v5221
    %v5246 = vpack.c.b16 %v5230, %v5230
    %v5247 = vpack.c.b16 %v5231, %v5231
    %v5248 = vpack.c.b16 %v5232, %v5232
    %v5249 = vpack.c.b16 %v5233, %v5233
    %v5250 = vpack.c.b16 %v5234, %v5234
    %v5251 = vpack.c.b16 %v5235, %v5235
    %v5252 = vpack.c.b16 %v5236, %v5236
    %v5253 = vpack.c.b16 %v5237, %v5237
    %v5254 = vpack.c.b16 %v5238, %v5238
    %v5255 = vpack.c.b16 %v5239, %v5239
    %v5256 = vpack.c.b16 %v5240, %v5240
    %v5257 = vpack.c.b16 %v5241, %v5241
    %v5258 = vpack.c.b16 %v5242, %v5242
    %v5259 = vpack.c.b16 %v5243, %v5243
    %v5260 = vpack.c.b16 %v5244, %v5244
    %v5261 = vpack.c.b16 %v5245, %v5245
    %5278 = vst [vmem:[%s3] sm:$0xf] %v5246
    %5279 = vst [vmem:[%s3 + $0x4] sm:$0xf] %v5247
    %5280 = vst [vmem:[%s3 + $0x8] sm:$0xf] %v5248
    %5281 = vst [vmem:[%s3 + $0xc] sm:$0xf] %v5249
    %5282 = vst [vmem:[%s3 + $0x10] sm:$0xf] %v5250
    %5283 = vst [vmem:[%s3 + $0x14] sm:$0xf] %v5251
    %5284 = vst [vmem:[%s3 + $0x18] sm:$0xf] %v5252
    %5285 = vst [vmem:[%s3 + $0x1c] sm:$0xf] %v5253
    %5286 = vst [vmem:[%s3 + $0x20] sm:$0xf] %v5254
    %5287 = vst [vmem:[%s3 + $0x24] sm:$0xf] %v5255
    %5288 = vst [vmem:[%s3 + $0x28] sm:$0xf] %v5256
    %5289 = vst [vmem:[%s3 + $0x2c] sm:$0xf] %v5257
    %5290 = vst [vmem:[%s3 + $0x30] sm:$0xf] %v5258
    %5291 = vst [vmem:[%s3 + $0x34] sm:$0xf] %v5259
    %5292 = vst [vmem:[%s3 + $0x38] sm:$0xf] %v5260
    %5293 = vst [vmem:[%s3 + $0x3c] sm:$0xf] %v5261
  $region21: #{gcn_with_kan_forward.6} parent=0 // pred_fallthru
    _
  // Predicated region
  $region22: #{gcn_with_kan_forward.6} parent=0 // pred_check
    _
  $region23: #{gcn_with_kan_forward.6} parent=0 // pred_check_branch
    %5295 = sbr.rel (0) target = $region25
  $region24: #{gcn_with_kan_forward.6} parent=0 // pred_region
    _
  $region25: #{gcn_with_kan_forward.6} parent=0 // pred_fallthru
    _
  // Predicated region
  $region26: #{gcn_with_kan_forward.6} parent=0 // pred_check
    _
  $region27: #{gcn_with_kan_forward.6} parent=0 // pred_check_branch
    %5297 = sbr.rel (0) target = $region29
  $region28: #{gcn_with_kan_forward.6} parent=0 // pred_region
    _
  $region29: #{gcn_with_kan_forward.6} parent=0 // pred_fallthru
    _

</llo_original>
